<compile_context>
chip_gen: v7x
topology: tpu7x:2x2x1
jax: 0.10.0
libtpu: 0.0.40
codegen_flags: <defaults>
</compile_context>

<pallas_src>
import functools

import jax
import jax.numpy as jnp
from jax.experimental import pallas as pl
from jax.experimental.pallas import tpu as pltpu

EPS = 1e-5


def _fused_bn_add_relu_conv_kernel(gb_ref, w_ref, x_ref, y_ref, o_ref, *, inv_m):
    """BN (batch stats) + residual add + relu + 1x1 conv, single pass.

    gb_ref: (C, 2) f32  -- gamma in column 0, beta in column 1.
    w_ref : (Cout, C) bf16 -- 1x1 conv weights.
    x_ref : (N, C, HW) f32 -- BN input.
    y_ref : (N, C, HW) f32 -- residual.
    o_ref : (N, Cout, HW) f32.
    """
    x = x_ref[...]                                                 # (N, C, HW)

    # --- BatchNorm batch statistics (two-pass / centered, biased var) ------
    mean = jnp.sum(jnp.sum(x, axis=2, keepdims=True),
                   axis=0, keepdims=True) * inv_m                  # (1, C, 1)
    xc = x - mean                                                  # centered
    var = jnp.sum(jnp.sum(xc * xc, axis=2, keepdims=True),
                  axis=0, keepdims=True) * inv_m                   # (1, C, 1)

    gamma = gb_ref[:, 0:1]                                         # (C, 1)
    beta = gb_ref[:, 1:2]                                          # (C, 1)
    scale = gamma * jax.lax.rsqrt(var + EPS)                       # (1, C, 1)

    # --- affine + residual add + relu (f32 on the VPU) ---------------------
    z = jnp.maximum(xc * scale + beta + y_ref[...], 0.0)           # (N, C, HW)
    zb = z.astype(jnp.bfloat16)                                    # MXU operand

    # --- 1x1 conv: (Cout, C) @ (C, HW) per sample on the MXU ---------------
    for b in range(zb.shape[0]):                                   # static small N
        o_ref[b] = jnp.dot(w_ref[...], zb[b],
                           preferred_element_type=jnp.float32)


def bn_add_relu_conv(x43, x46, gamma, beta, conv_w):
    """x43, x46: (N, C, H, W); gamma/beta: (C,); conv_w: (Cout, Cin, 1, 1)."""
    n, c, h, w = x43.shape
    cout = conv_w.shape[0]
    hw = h * w
    m = n * hw

    # Free (metadata-only) reshapes -- no HBM layout round trips.
    x3 = x43.reshape(n, c, hw)
    y3 = x46.reshape(n, c, hw)
    gb = jnp.stack([gamma.astype(jnp.float32),
                    beta.astype(jnp.float32)], axis=1)             # (C, 2)
    w_bf16 = conv_w.reshape(cout, c).astype(jnp.bfloat16)          # MXU bf16 operand

    out3 = pl.pallas_call(
        functools.partial(_fused_bn_add_relu_conv_kernel, inv_m=1.0 / m),
        out_shape=jax.ShapeDtypeStruct((n, cout, hw), jnp.float32),
        grid=(1,),
        in_specs=[
            pl.BlockSpec((c, 2), lambda i: (0, 0)),                # gamma|beta
            pl.BlockSpec((cout, c), lambda i: (0, 0)),             # conv weights
            pl.BlockSpec((n, c, hw), lambda i: (0, 0, 0)),         # x (full block)
            pl.BlockSpec((n, c, hw), lambda i: (0, 0, 0)),         # residual
        ],
        out_specs=pl.BlockSpec((n, cout, hw), lambda i: (0, 0, 0)),
        compiler_params=pltpu.CompilerParams(
            dimension_semantics=("arbitrary",)),
        cost_estimate=pl.CostEstimate(
            flops=2 * m * c * cout + 8 * m * c,
            transcendentals=c,
            bytes_accessed=(2 * m * c + m * cout) * 4 + c * cout * 2 + 8 * c),
    )(gb, w_bf16, x3, y3)

    # Free reshape back to NCHW.
    return out3.reshape(n, cout, h, w)


def reference(x43, x46, gamma, beta, conv_w):
    # Pure-f32 JAX reference of the same training-mode forward pass.
    mean = jnp.mean(x43, axis=(0, 2, 3), keepdims=True)
    var = jnp.mean((x43 - mean) ** 2, axis=(0, 2, 3), keepdims=True)
    bn = (x43 - mean) * jax.lax.rsqrt(var + EPS)
    bn = bn * gamma.reshape(1, -1, 1, 1) + beta.reshape(1, -1, 1, 1)
    z = jnp.maximum(bn + x46, 0.0)
    return jnp.einsum("oc,nchw->nohw", conv_w.reshape(conv_w.shape[0], -1), z)


if __name__ == "__main__":
    # Shapes from the original module: N=1, Cin=512, Cout=128, H=W=28.
    N, C_IN, C_OUT, H, W = 1, 512, 128, 28, 28

    key = jax.random.PRNGKey(0)
    k1, k2, k3, k4, k5 = jax.random.split(key, 5)

    x43 = jax.random.normal(k1, (N, C_IN, H, W), dtype=jnp.float32)
    x46 = jax.random.normal(k2, (N, C_IN, H, W), dtype=jnp.float32)
    gamma = 1.0 + 0.1 * jax.random.normal(k3, (C_IN,), dtype=jnp.float32)
    beta = 0.1 * jax.random.normal(k4, (C_IN,), dtype=jnp.float32)
    conv_w = jax.random.normal(k5, (C_OUT, C_IN, 1, 1), dtype=jnp.float32) * (C_IN ** -0.5)

    fn = jax.jit(bn_add_relu_conv)
    out = jax.block_until_ready(fn(x43, x46, gamma, beta, conv_w))

    ref = reference(x43, x46, gamma, beta, conv_w)
    assert out.shape == (N, C_OUT, H, W), out.shape
    # bf16 MXU operands (f32 accumulation, K=512) -> compare against the
    # pure-f32 reference with a bf16-appropriate tolerance.
    assert jnp.allclose(out, ref, atol=2e-2, rtol=2e-2), float(jnp.max(jnp.abs(out - ref)))

    # TODO(synk): running_mean/running_var momentum updates (training-time
    # buffer side effect of BatchNorm2d) are not part of the returned value
    # and are not produced here.
    print("KERNEL_OK")
</pallas_src>

<mosaic_0001>
module attributes {stable_mosaic.version = 11 : i64} {
  func.func @_fused_bn_add_relu_conv_kernel(%arg0: i32, %arg1: memref<512x2xf32, #tpu.memory_space<vmem>>, %arg2: memref<128x512xbf16, #tpu.memory_space<vmem>>, %arg3: memref<1x512x784xf32, #tpu.memory_space<vmem>>, %arg4: memref<1x512x784xf32, #tpu.memory_space<vmem>>, %arg5: memref<1x128x784xf32, #tpu.memory_space<vmem>>) attributes {dimension_semantics = [#tpu.dimension_semantics<arbitrary>], iteration_bounds = array<i64: 1>, scalar_prefetch = 0 : i64, scratch_operands = 0 : i64, tpu.core_type = #tpu.core_type<tc>, window_params = [{pipeline_mode = #tpu.pipeline_mode<synchronous>, transform_indices = @transform_0, window_bounds = array<i64: 512, 2>}, {pipeline_mode = #tpu.pipeline_mode<synchronous>, transform_indices = @transform_1, window_bounds = array<i64: 128, 512>}, {pipeline_mode = #tpu.pipeline_mode<synchronous>, transform_indices = @transform_2, window_bounds = array<i64: 1, 512, 784>}, {pipeline_mode = #tpu.pipeline_mode<synchronous>, transform_indices = @transform_3, window_bounds = array<i64: 1, 512, 784>}, {pipeline_mode = #tpu.pipeline_mode<synchronous>, transform_indices = @transform_4, window_bounds = array<i64: 1, 128, 784>}]} {
    %c0 = arith.constant 0 : index
    %c0_0 = arith.constant 0 : index
    %c0_1 = arith.constant 0 : index
    %0 = vector.load %arg3[%c0, %c0_0, %c0_1] : memref<1x512x784xf32, #tpu.memory_space<vmem>>, vector<1x512x784xf32>
    %cst = arith.constant dense<0.000000e+00> : vector<1x512xf32>
    %1 = vector.multi_reduction <add>, %0, %cst [2] : vector<1x512x784xf32> to vector<1x512xf32>
    %2 = vector.shape_cast %1 : vector<1x512xf32> to vector<1x512x1xf32>
    %cst_2 = arith.constant dense<0.000000e+00> : vector<512x1xf32>
    %3 = vector.multi_reduction <add>, %2, %cst_2 [0] : vector<1x512x1xf32> to vector<512x1xf32>
    %4 = vector.shape_cast %3 : vector<512x1xf32> to vector<1x512x1xf32>
    %cst_3 = arith.constant 0.00127551018 : f32
    %5 = vector.broadcast %cst_3 : f32 to vector<1x512x1xf32>
    %6 = arith.mulf %4, %5 : vector<1x512x1xf32>
    %7 = vector.broadcast %6 : vector<1x512x1xf32> to vector<1x512x784xf32>
    %8 = arith.subf %0, %7 : vector<1x512x784xf32>
    %9 = arith.mulf %8, %8 : vector<1x512x784xf32>
    %cst_4 = arith.constant dense<0.000000e+00> : vector<1x512xf32>
    %10 = vector.multi_reduction <add>, %9, %cst_4 [2] : vector<1x512x784xf32> to vector<1x512xf32>
    %11 = vector.shape_cast %10 : vector<1x512xf32> to vector<1x512x1xf32>
    %cst_5 = arith.constant dense<0.000000e+00> : vector<512x1xf32>
    %12 = vector.multi_reduction <add>, %11, %cst_5 [0] : vector<1x512x1xf32> to vector<512x1xf32>
    %13 = vector.shape_cast %12 : vector<512x1xf32> to vector<1x512x1xf32>
    %cst_6 = arith.constant 0.00127551018 : f32
    %14 = vector.broadcast %cst_6 : f32 to vector<1x512x1xf32>
    %15 = arith.mulf %13, %14 : vector<1x512x1xf32>
    %c0_7 = arith.constant 0 : index
    %c0_8 = arith.constant 0 : index
    %16 = vector.load %arg1[%c0_7, %c0_8] : memref<512x2xf32, #tpu.memory_space<vmem>>, vector<512x1xf32>
    %c0_9 = arith.constant 0 : index
    %c1 = arith.constant 1 : index
    %17 = vector.load %arg1[%c0_9, %c1] : memref<512x2xf32, #tpu.memory_space<vmem>>, vector<512x1xf32>
    %cst_10 = arith.constant 9.99999974E-6 : f32
    %18 = vector.broadcast %cst_10 : f32 to vector<1x512x1xf32>
    %19 = arith.addf %15, %18 : vector<1x512x1xf32>
    %20 = math.rsqrt %19 : vector<1x512x1xf32>
    %21 = vector.shape_cast %16 : vector<512x1xf32> to vector<1x512x1xf32>
    %22 = arith.mulf %21, %20 : vector<1x512x1xf32>
    %23 = vector.broadcast %22 : vector<1x512x1xf32> to vector<1x512x784xf32>
    %24 = arith.mulf %8, %23 : vector<1x512x784xf32>
    %25 = vector.shape_cast %17 : vector<512x1xf32> to vector<1x512x1xf32>
    %26 = vector.broadcast %25 : vector<1x512x1xf32> to vector<1x512x784xf32>
    %27 = arith.addf %24, %26 : vector<1x512x784xf32>
    %c0_11 = arith.constant 0 : index
    %c0_12 = arith.constant 0 : index
    %c0_13 = arith.constant 0 : index
    %28 = vector.load %arg4[%c0_11, %c0_12, %c0_13] : memref<1x512x784xf32, #tpu.memory_space<vmem>>, vector<1x512x784xf32>
    %29 = arith.addf %27, %28 : vector<1x512x784xf32>
    %cst_14 = arith.constant 0.000000e+00 : f32
    %30 = vector.broadcast %cst_14 : f32 to vector<1x512x784xf32>
    %31 = arith.maximumf %29, %30 : vector<1x512x784xf32>
    %32 = arith.truncf %31 : vector<1x512x784xf32> to vector<1x512x784xbf16>
    %c0_15 = arith.constant 0 : index
    %c0_16 = arith.constant 0 : index
    %33 = vector.load %arg2[%c0_15, %c0_16] : memref<128x512xbf16, #tpu.memory_space<vmem>>, vector<128x512xbf16>
    %34 = vector.shape_cast %32 : vector<1x512x784xbf16> to vector<512x784xbf16>
    %cst_17 = arith.constant dense<0.000000e+00> : vector<128x784xf32>
    %35 = tpu.matmul %33, %34, %cst_17 {dimension_numbers = #tpu.dot_dimension_numbers<[1], [0], [0], [1], [0, 0, 1, 1], [], []>} : vector<128x512xbf16>, vector<512x784xbf16>, vector<128x784xf32> -> vector<128x784xf32>
    %c0_18 = arith.constant 0 : index
    %c0_19 = arith.constant 0 : index
    %c0_20 = arith.constant 0 : index
    %36 = vector.load %arg5[%c0_18, %c0_19, %c0_20] : memref<1x128x784xf32, #tpu.memory_space<vmem>>, vector<1x128x784xf32>
    %37 = vector.shape_cast %36 : vector<1x128x784xf32> to vector<128x784xf32>
    %38 = vector.shape_cast %35 : vector<128x784xf32> to vector<1x128x784xf32>
    tpu.vector_store %arg5[%c0_18, %c0_19, %c0_20], %38 {strides = array<i32>} : memref<1x128x784xf32, #tpu.memory_space<vmem>>, vector<1x128x784xf32>,
    return
  }
  func.func @transform_0(%arg0: i32) -> (i32, i32) {
    %c0_i32 = arith.constant 0 : i32
    %c0_i32_0 = arith.constant 0 : i32
    %c0_i32_1 = arith.constant 0 : i32
    return %c0_i32, %c0_i32_0 : i32, i32
  }
  func.func @transform_1(%arg0: i32) -> (i32, i32) {
    %c0_i32 = arith.constant 0 : i32
    %c0_i32_0 = arith.constant 0 : i32
    %c0_i32_1 = arith.constant 0 : i32
    return %c0_i32, %c0_i32_0 : i32, i32
  }
  func.func @transform_2(%arg0: i32) -> (i32, i32, i32) {
    %c0_i32 = arith.constant 0 : i32
    %c0_i32_0 = arith.constant 0 : i32
    %c0_i32_1 = arith.constant 0 : i32
    %c0_i32_2 = arith.constant 0 : i32
    return %c0_i32, %c0_i32_0, %c0_i32_1 : i32, i32, i32
  }
  func.func @transform_3(%arg0: i32) -> (i32, i32, i32) {
    %c0_i32 = arith.constant 0 : i32
    %c0_i32_0 = arith.constant 0 : i32
    %c0_i32_1 = arith.constant 0 : i32
    %c0_i32_2 = arith.constant 0 : i32
    return %c0_i32, %c0_i32_0, %c0_i32_1 : i32, i32, i32
  }
  func.func @transform_4(%arg0: i32) -> (i32, i32, i32) {
    %c0_i32 = arith.constant 0 : i32
    %c0_i32_0 = arith.constant 0 : i32
    %c0_i32_1 = arith.constant 0 : i32
    %c0_i32_2 = arith.constant 0 : i32
    return %c0_i32, %c0_i32_0, %c0_i32_1 : i32, i32, i32
  }
}

</mosaic_0001>

<llo_original>
// kernel: bn_add_relu_conv.1
$region0: #{bn_add_relu_conv.1}
  #allocation0 [shape = 'u32[]', space=smem, size = 0x4, offset = 0x4, fixed_abs, tag = 'smem constant byte address 0x4 - core index']
  #allocation1 [shape = 'u32[144,128]{1,0:T(1,128)}', space=vmem, size = 0x12000, scoped, tag = 'internal scratch']
  %s0 = inlined_call_operand.vmem [shape: f32[512,2], index: 0, kind: input, shape index: {}]
  %s1 = inlined_call_operand.vmem [shape: bf16[128,512], index: 1, kind: input, shape index: {}]
  %s2 = inlined_call_operand.vmem [shape: f32[1,512,784], index: 2, kind: input, shape index: {}]
  %s3 = inlined_call_operand.vmem [shape: f32[1,512,784], index: 3, kind: input, shape index: {}]
  %s4 = inlined_call_operand.vmem [shape: f32[1,128,784], index: 4, kind: output, shape index: {}]
  %s5 = sld [smem:[#allocation0]]
  $region26: #{bn_add_relu_conv.1} parent=0
    _
  %s7 = ssub.s32 1, %s5
  %s8 = scalar_select 0, %s7, %s5
  // Predicated region
  $region2: #{bn_add_relu_conv.1} parent=0 // pred_check
    _
  $region3: #{bn_add_relu_conv.1} parent=0 // pred_check_branch
    %10 = sbr.rel (0) target = $region5
  $region4: #{bn_add_relu_conv.1} parent=0 // pred_region
    _
  $region5: #{bn_add_relu_conv.1} parent=0 // pred_fallthru
    _
  // Predicated region
  $region6: #{bn_add_relu_conv.1} parent=0 // pred_check
    _
  $region7: #{bn_add_relu_conv.1} parent=0 // pred_check_branch
    %12 = sbr.rel (0) target = $region9
  $region8: #{bn_add_relu_conv.1} parent=0 // pred_region
    _
  $region9: #{bn_add_relu_conv.1} parent=0 // pred_fallthru
    _
  // Predicated region
  $region10: #{bn_add_relu_conv.1} parent=0 // pred_check
    _
  $region11: #{bn_add_relu_conv.1} parent=0 // pred_check_branch
    %14 = sbr.rel (0) target = $region13
  $region12: #{bn_add_relu_conv.1} parent=0 // pred_region
    _
  $region13: #{bn_add_relu_conv.1} parent=0 // pred_fallthru
    _
  // Predicated region
  $region14: #{bn_add_relu_conv.1} parent=0 // pred_check
    _
  $region15: #{bn_add_relu_conv.1} parent=0 // pred_check_branch
    %16 = sbr.rel (0) target = $region17
  $region16: #{bn_add_relu_conv.1} parent=0 // pred_region
    _
  $region17: #{bn_add_relu_conv.1} parent=0 // pred_fallthru
    _
  %v18 = vld [vmem:[%s2] sm:$0xff]
  %v19 = vld [vmem:[%s2 + $0x8] sm:$0xff]
  %v20 = vld [vmem:[%s2 + $0x10] sm:$0xff]
  %v21 = vld [vmem:[%s2 + $0x18] sm:$0xff]
  %v22 = vld [vmem:[%s2 + $0x20] sm:$0xff]
  %v23 = vld [vmem:[%s2 + $0x28] sm:$0xff]
  %v24 = vld [vmem:[%s2 + $0x30] sm:$0xff]
  %v25 = vld [vmem:[%s2 + $0x38] sm:$0xff]
  %v26 = vld [vmem:[%s2 + $0x40] sm:$0xff]
  %v27 = vld [vmem:[%s2 + $0x48] sm:$0xff]
  %v28 = vld [vmem:[%s2 + $0x50] sm:$0xff]
  %v29 = vld [vmem:[%s2 + $0x58] sm:$0xff]
  %v30 = vld [vmem:[%s2 + $0x60] sm:$0xff]
  %v31 = vld [vmem:[%s2 + $0x68] sm:$0xff]
  %v32 = vld [vmem:[%s2 + $0x70] sm:$0xff]
  %v33 = vld [vmem:[%s2 + $0x78] sm:$0xff]
  %v34 = vld [vmem:[%s2 + $0x80] sm:$0xff]
  %v35 = vld [vmem:[%s2 + $0x88] sm:$0xff]
  %v36 = vld [vmem:[%s2 + $0x90] sm:$0xff]
  %v37 = vld [vmem:[%s2 + $0x98] sm:$0xff]
  %v38 = vld [vmem:[%s2 + $0xa0] sm:$0xff]
  %v39 = vld [vmem:[%s2 + $0xa8] sm:$0xff]
  %v40 = vld [vmem:[%s2 + $0xb0] sm:$0xff]
  %v41 = vld [vmem:[%s2 + $0xb8] sm:$0xff]
  %v42 = vld [vmem:[%s2 + $0xc0] sm:$0xff]
  %v43 = vld [vmem:[%s2 + $0xc8] sm:$0xff]
  %v44 = vld [vmem:[%s2 + $0xd0] sm:$0xff]
  %v45 = vld [vmem:[%s2 + $0xd8] sm:$0xff]
  %v46 = vld [vmem:[%s2 + $0xe0] sm:$0xff]
  %v47 = vld [vmem:[%s2 + $0xe8] sm:$0xff]
  %v48 = vld [vmem:[%s2 + $0xf0] sm:$0xff]
  %v49 = vld [vmem:[%s2 + $0xf8] sm:$0xff]
  %v50 = vld [vmem:[%s2 + $0x100] sm:$0xff]
  %v51 = vld [vmem:[%s2 + $0x108] sm:$0xff]
  %v52 = vld [vmem:[%s2 + $0x110] sm:$0xff]
  %v53 = vld [vmem:[%s2 + $0x118] sm:$0xff]
  %v54 = vld [vmem:[%s2 + $0x120] sm:$0xff]
  %v55 = vld [vmem:[%s2 + $0x128] sm:$0xff]
  %v56 = vld [vmem:[%s2 + $0x130] sm:$0xff]
  %v57 = vld [vmem:[%s2 + $0x138] sm:$0xff]
  %v58 = vld [vmem:[%s2 + $0x140] sm:$0xff]
  %v59 = vld [vmem:[%s2 + $0x148] sm:$0xff]
  %v60 = vld [vmem:[%s2 + $0x150] sm:$0xff]
  %v61 = vld [vmem:[%s2 + $0x158] sm:$0xff]
  %v62 = vld [vmem:[%s2 + $0x160] sm:$0xff]
  %v63 = vld [vmem:[%s2 + $0x168] sm:$0xff]
  %v64 = vld [vmem:[%s2 + $0x170] sm:$0xff]
  %v65 = vld [vmem:[%s2 + $0x178] sm:$0xff]
  %v66 = vld [vmem:[%s2 + $0x180] sm:$0xff]
  %v67 = vld [vmem:[%s2 + $0x188] sm:$0xff]
  %v68 = vld [vmem:[%s2 + $0x190] sm:$0xff]
  %v69 = vld [vmem:[%s2 + $0x198] sm:$0xff]
  %v70 = vld [vmem:[%s2 + $0x1a0] sm:$0xff]
  %v71 = vld [vmem:[%s2 + $0x1a8] sm:$0xff]
  %v72 = vld [vmem:[%s2 + $0x1b0] sm:$0xff]
  %v73 = vld [vmem:[%s2 + $0x1b8] sm:$0xff]
  %v74 = vld [vmem:[%s2 + $0x1c0] sm:$0xff]
  %v75 = vld [vmem:[%s2 + $0x1c8] sm:$0xff]
  %v76 = vld [vmem:[%s2 + $0x1d0] sm:$0xff]
  %v77 = vld [vmem:[%s2 + $0x1d8] sm:$0xff]
  %v78 = vld [vmem:[%s2 + $0x1e0] sm:$0xff]
  %v79 = vld [vmem:[%s2 + $0x1e8] sm:$0xff]
  %v80 = vld [vmem:[%s2 + $0x1f0] sm:$0xff]
  %v81 = vld [vmem:[%s2 + $0x1f8] sm:$0xff]
  %v82 = vld [vmem:[%s2 + $0x200] sm:$0xff]
  %v83 = vld [vmem:[%s2 + $0x208] sm:$0xff]
  %v84 = vld [vmem:[%s2 + $0x210] sm:$0xff]
  %v85 = vld [vmem:[%s2 + $0x218] sm:$0xff]
  %v86 = vld [vmem:[%s2 + $0x220] sm:$0xff]
  %v87 = vld [vmem:[%s2 + $0x228] sm:$0xff]
  %v88 = vld [vmem:[%s2 + $0x230] sm:$0xff]
  %v89 = vld [vmem:[%s2 + $0x238] sm:$0xff]
  %v90 = vld [vmem:[%s2 + $0x240] sm:$0xff]
  %v91 = vld [vmem:[%s2 + $0x248] sm:$0xff]
  %v92 = vld [vmem:[%s2 + $0x250] sm:$0xff]
  %v93 = vld [vmem:[%s2 + $0x258] sm:$0xff]
  %v94 = vld [vmem:[%s2 + $0x260] sm:$0xff]
  %v95 = vld [vmem:[%s2 + $0x268] sm:$0xff]
  %v96 = vld [vmem:[%s2 + $0x270] sm:$0xff]
  %v97 = vld [vmem:[%s2 + $0x278] sm:$0xff]
  %v98 = vld [vmem:[%s2 + $0x280] sm:$0xff]
  %v99 = vld [vmem:[%s2 + $0x288] sm:$0xff]
  %v100 = vld [vmem:[%s2 + $0x290] sm:$0xff]
  %v101 = vld [vmem:[%s2 + $0x298] sm:$0xff]
  %v102 = vld [vmem:[%s2 + $0x2a0] sm:$0xff]
  %v103 = vld [vmem:[%s2 + $0x2a8] sm:$0xff]
  %v104 = vld [vmem:[%s2 + $0x2b0] sm:$0xff]
  %v105 = vld [vmem:[%s2 + $0x2b8] sm:$0xff]
  %v106 = vld [vmem:[%s2 + $0x2c0] sm:$0xff]
  %v107 = vld [vmem:[%s2 + $0x2c8] sm:$0xff]
  %v108 = vld [vmem:[%s2 + $0x2d0] sm:$0xff]
  %v109 = vld [vmem:[%s2 + $0x2d8] sm:$0xff]
  %v110 = vld [vmem:[%s2 + $0x2e0] sm:$0xff]
  %v111 = vld [vmem:[%s2 + $0x2e8] sm:$0xff]
  %v112 = vld [vmem:[%s2 + $0x2f0] sm:$0xff]
  %v113 = vld [vmem:[%s2 + $0x2f8] sm:$0xff]
  %v114 = vld [vmem:[%s2 + $0x300] sm:$0xff]
  %v115 = vld [vmem:[%s2 + $0x308] sm:$0xff]
  %v116 = vld [vmem:[%s2 + $0x310] sm:$0xff]
  %v117 = vld [vmem:[%s2 + $0x318] sm:$0xff]
  %v118 = vld [vmem:[%s2 + $0x320] sm:$0xff]
  %v119 = vld [vmem:[%s2 + $0x328] sm:$0xff]
  %v120 = vld [vmem:[%s2 + $0x330] sm:$0xff]
  %v121 = vld [vmem:[%s2 + $0x338] sm:$0xff]
  %v122 = vld [vmem:[%s2 + $0x340] sm:$0xff]
  %v123 = vld [vmem:[%s2 + $0x348] sm:$0xff]
  %v124 = vld [vmem:[%s2 + $0x350] sm:$0xff]
  %v125 = vld [vmem:[%s2 + $0x358] sm:$0xff]
  %v126 = vld [vmem:[%s2 + $0x360] sm:$0xff]
  %v127 = vld [vmem:[%s2 + $0x368] sm:$0xff]
  %v128 = vld [vmem:[%s2 + $0x370] sm:$0xff]
  %v129 = vld [vmem:[%s2 + $0x378] sm:$0xff]
  %v130 = vld [vmem:[%s2 + $0x380] sm:$0xff]
  %v131 = vld [vmem:[%s2 + $0x388] sm:$0xff]
  %v132 = vld [vmem:[%s2 + $0x390] sm:$0xff]
  %v133 = vld [vmem:[%s2 + $0x398] sm:$0xff]
  %v134 = vld [vmem:[%s2 + $0x3a0] sm:$0xff]
  %v135 = vld [vmem:[%s2 + $0x3a8] sm:$0xff]
  %v136 = vld [vmem:[%s2 + $0x3b0] sm:$0xff]
  %v137 = vld [vmem:[%s2 + $0x3b8] sm:$0xff]
  %v138 = vld [vmem:[%s2 + $0x3c0] sm:$0xff]
  %v139 = vld [vmem:[%s2 + $0x3c8] sm:$0xff]
  %v140 = vld [vmem:[%s2 + $0x3d0] sm:$0xff]
  %v141 = vld [vmem:[%s2 + $0x3d8] sm:$0xff]
  %v142 = vld [vmem:[%s2 + $0x3e0] sm:$0xff]
  %v143 = vld [vmem:[%s2 + $0x3e8] sm:$0xff]
  %v144 = vld [vmem:[%s2 + $0x3f0] sm:$0xff]
  %v145 = vld [vmem:[%s2 + $0x3f8] sm:$0xff]
  %v146 = vld [vmem:[%s2 + $0x400] sm:$0xff]
  %v147 = vld [vmem:[%s2 + $0x408] sm:$0xff]
  %v148 = vld [vmem:[%s2 + $0x410] sm:$0xff]
  %v149 = vld [vmem:[%s2 + $0x418] sm:$0xff]
  %v150 = vld [vmem:[%s2 + $0x420] sm:$0xff]
  %v151 = vld [vmem:[%s2 + $0x428] sm:$0xff]
  %v152 = vld [vmem:[%s2 + $0x430] sm:$0xff]
  %v153 = vld [vmem:[%s2 + $0x438] sm:$0xff]
  %v154 = vld [vmem:[%s2 + $0x440] sm:$0xff]
  %v155 = vld [vmem:[%s2 + $0x448] sm:$0xff]
  %v156 = vld [vmem:[%s2 + $0x450] sm:$0xff]
  %v157 = vld [vmem:[%s2 + $0x458] sm:$0xff]
  %v158 = vld [vmem:[%s2 + $0x460] sm:$0xff]
  %v159 = vld [vmem:[%s2 + $0x468] sm:$0xff]
  %v160 = vld [vmem:[%s2 + $0x470] sm:$0xff]
  %v161 = vld [vmem:[%s2 + $0x478] sm:$0xff]
  %v162 = vld [vmem:[%s2 + $0x480] sm:$0xff]
  %v163 = vld [vmem:[%s2 + $0x488] sm:$0xff]
  %v164 = vld [vmem:[%s2 + $0x490] sm:$0xff]
  %v165 = vld [vmem:[%s2 + $0x498] sm:$0xff]
  %v166 = vld [vmem:[%s2 + $0x4a0] sm:$0xff]
  %v167 = vld [vmem:[%s2 + $0x4a8] sm:$0xff]
  %v168 = vld [vmem:[%s2 + $0x4b0] sm:$0xff]
  %v169 = vld [vmem:[%s2 + $0x4b8] sm:$0xff]
  %v170 = vld [vmem:[%s2 + $0x4c0] sm:$0xff]
  %v171 = vld [vmem:[%s2 + $0x4c8] sm:$0xff]
  %v172 = vld [vmem:[%s2 + $0x4d0] sm:$0xff]
  %v173 = vld [vmem:[%s2 + $0x4d8] sm:$0xff]
  %v174 = vld [vmem:[%s2 + $0x4e0] sm:$0xff]
  %v175 = vld [vmem:[%s2 + $0x4e8] sm:$0xff]
  %v176 = vld [vmem:[%s2 + $0x4f0] sm:$0xff]
  %v177 = vld [vmem:[%s2 + $0x4f8] sm:$0xff]
  %v178 = vld [vmem:[%s2 + $0x500] sm:$0xff]
  %v179 = vld [vmem:[%s2 + $0x508] sm:$0xff]
  %v180 = vld [vmem:[%s2 + $0x510] sm:$0xff]
  %v181 = vld [vmem:[%s2 + $0x518] sm:$0xff]
  %v182 = vld [vmem:[%s2 + $0x520] sm:$0xff]
  %v183 = vld [vmem:[%s2 + $0x528] sm:$0xff]
  %v184 = vld [vmem:[%s2 + $0x530] sm:$0xff]
  %v185 = vld [vmem:[%s2 + $0x538] sm:$0xff]
  %v186 = vld [vmem:[%s2 + $0x540] sm:$0xff]
  %v187 = vld [vmem:[%s2 + $0x548] sm:$0xff]
  %v188 = vld [vmem:[%s2 + $0x550] sm:$0xff]
  %v189 = vld [vmem:[%s2 + $0x558] sm:$0xff]
  %v190 = vld [vmem:[%s2 + $0x560] sm:$0xff]
  %v191 = vld [vmem:[%s2 + $0x568] sm:$0xff]
  %v192 = vld [vmem:[%s2 + $0x570] sm:$0xff]
  %v193 = vld [vmem:[%s2 + $0x578] sm:$0xff]
  %v194 = vld [vmem:[%s2 + $0x580] sm:$0xff]
  %v195 = vld [vmem:[%s2 + $0x588] sm:$0xff]
  %v196 = vld [vmem:[%s2 + $0x590] sm:$0xff]
  %v197 = vld [vmem:[%s2 + $0x598] sm:$0xff]
  %v198 = vld [vmem:[%s2 + $0x5a0] sm:$0xff]
  %v199 = vld [vmem:[%s2 + $0x5a8] sm:$0xff]
  %v200 = vld [vmem:[%s2 + $0x5b0] sm:$0xff]
  %v201 = vld [vmem:[%s2 + $0x5b8] sm:$0xff]
  %v202 = vld [vmem:[%s2 + $0x5c0] sm:$0xff]
  %v203 = vld [vmem:[%s2 + $0x5c8] sm:$0xff]
  %v204 = vld [vmem:[%s2 + $0x5d0] sm:$0xff]
  %v205 = vld [vmem:[%s2 + $0x5d8] sm:$0xff]
  %v206 = vld [vmem:[%s2 + $0x5e0] sm:$0xff]
  %v207 = vld [vmem:[%s2 + $0x5e8] sm:$0xff]
  %v208 = vld [vmem:[%s2 + $0x5f0] sm:$0xff]
  %v209 = vld [vmem:[%s2 + $0x5f8] sm:$0xff]
  %v210 = vld [vmem:[%s2 + $0x600] sm:$0xff]
  %v211 = vld [vmem:[%s2 + $0x608] sm:$0xff]
  %v212 = vld [vmem:[%s2 + $0x610] sm:$0xff]
  %v213 = vld [vmem:[%s2 + $0x618] sm:$0xff]
  %v214 = vld [vmem:[%s2 + $0x620] sm:$0xff]
  %v215 = vld [vmem:[%s2 + $0x628] sm:$0xff]
  %v216 = vld [vmem:[%s2 + $0x630] sm:$0xff]
  %v217 = vld [vmem:[%s2 + $0x638] sm:$0xff]
  %v218 = vld [vmem:[%s2 + $0x640] sm:$0xff]
  %v219 = vld [vmem:[%s2 + $0x648] sm:$0xff]
  %v220 = vld [vmem:[%s2 + $0x650] sm:$0xff]
  %v221 = vld [vmem:[%s2 + $0x658] sm:$0xff]
  %v222 = vld [vmem:[%s2 + $0x660] sm:$0xff]
  %v223 = vld [vmem:[%s2 + $0x668] sm:$0xff]
  %v224 = vld [vmem:[%s2 + $0x670] sm:$0xff]
  %v225 = vld [vmem:[%s2 + $0x678] sm:$0xff]
  %v226 = vld [vmem:[%s2 + $0x680] sm:$0xff]
  %v227 = vld [vmem:[%s2 + $0x688] sm:$0xff]
  %v228 = vld [vmem:[%s2 + $0x690] sm:$0xff]
  %v229 = vld [vmem:[%s2 + $0x698] sm:$0xff]
  %v230 = vld [vmem:[%s2 + $0x6a0] sm:$0xff]
  %v231 = vld [vmem:[%s2 + $0x6a8] sm:$0xff]
  %v232 = vld [vmem:[%s2 + $0x6b0] sm:$0xff]
  %v233 = vld [vmem:[%s2 + $0x6b8] sm:$0xff]
  %v234 = vld [vmem:[%s2 + $0x6c0] sm:$0xff]
  %v235 = vld [vmem:[%s2 + $0x6c8] sm:$0xff]
  %v236 = vld [vmem:[%s2 + $0x6d0] sm:$0xff]
  %v237 = vld [vmem:[%s2 + $0x6d8] sm:$0xff]
  %v238 = vld [vmem:[%s2 + $0x6e0] sm:$0xff]
  %v239 = vld [vmem:[%s2 + $0x6e8] sm:$0xff]
  %v240 = vld [vmem:[%s2 + $0x6f0] sm:$0xff]
  %v241 = vld [vmem:[%s2 + $0x6f8] sm:$0xff]
  %v242 = vld [vmem:[%s2 + $0x700] sm:$0xff]
  %v243 = vld [vmem:[%s2 + $0x708] sm:$0xff]
  %v244 = vld [vmem:[%s2 + $0x710] sm:$0xff]
  %v245 = vld [vmem:[%s2 + $0x718] sm:$0xff]
  %v246 = vld [vmem:[%s2 + $0x720] sm:$0xff]
  %v247 = vld [vmem:[%s2 + $0x728] sm:$0xff]
  %v248 = vld [vmem:[%s2 + $0x730] sm:$0xff]
  %v249 = vld [vmem:[%s2 + $0x738] sm:$0xff]
  %v250 = vld [vmem:[%s2 + $0x740] sm:$0xff]
  %v251 = vld [vmem:[%s2 + $0x748] sm:$0xff]
  %v252 = vld [vmem:[%s2 + $0x750] sm:$0xff]
  %v253 = vld [vmem:[%s2 + $0x758] sm:$0xff]
  %v254 = vld [vmem:[%s2 + $0x760] sm:$0xff]
  %v255 = vld [vmem:[%s2 + $0x768] sm:$0xff]
  %v256 = vld [vmem:[%s2 + $0x770] sm:$0xff]
  %v257 = vld [vmem:[%s2 + $0x778] sm:$0xff]
  %v258 = vld [vmem:[%s2 + $0x780] sm:$0xff]
  %v259 = vld [vmem:[%s2 + $0x788] sm:$0xff]
  %v260 = vld [vmem:[%s2 + $0x790] sm:$0xff]
  %v261 = vld [vmem:[%s2 + $0x798] sm:$0xff]
  %v262 = vld [vmem:[%s2 + $0x7a0] sm:$0xff]
  %v263 = vld [vmem:[%s2 + $0x7a8] sm:$0xff]
  %v264 = vld [vmem:[%s2 + $0x7b0] sm:$0xff]
  %v265 = vld [vmem:[%s2 + $0x7b8] sm:$0xff]
  %v266 = vld [vmem:[%s2 + $0x7c0] sm:$0xff]
  %v267 = vld [vmem:[%s2 + $0x7c8] sm:$0xff]
  %v268 = vld [vmem:[%s2 + $0x7d0] sm:$0xff]
  %v269 = vld [vmem:[%s2 + $0x7d8] sm:$0xff]
  %v270 = vld [vmem:[%s2 + $0x7e0] sm:$0xff]
  %v271 = vld [vmem:[%s2 + $0x7e8] sm:$0xff]
  %v272 = vld [vmem:[%s2 + $0x7f0] sm:$0xff]
  %v273 = vld [vmem:[%s2 + $0x7f8] sm:$0xff]
  %v274 = vld [vmem:[%s2 + $0x800] sm:$0xff]
  %v275 = vld [vmem:[%s2 + $0x808] sm:$0xff]
  %v276 = vld [vmem:[%s2 + $0x810] sm:$0xff]
  %v277 = vld [vmem:[%s2 + $0x818] sm:$0xff]
  %v278 = vld [vmem:[%s2 + $0x820] sm:$0xff]
  %v279 = vld [vmem:[%s2 + $0x828] sm:$0xff]
  %v280 = vld [vmem:[%s2 + $0x830] sm:$0xff]
  %v281 = vld [vmem:[%s2 + $0x838] sm:$0xff]
  %v282 = vld [vmem:[%s2 + $0x840] sm:$0xff]
  %v283 = vld [vmem:[%s2 + $0x848] sm:$0xff]
  %v284 = vld [vmem:[%s2 + $0x850] sm:$0xff]
  %v285 = vld [vmem:[%s2 + $0x858] sm:$0xff]
  %v286 = vld [vmem:[%s2 + $0x860] sm:$0xff]
  %v287 = vld [vmem:[%s2 + $0x868] sm:$0xff]
  %v288 = vld [vmem:[%s2 + $0x870] sm:$0xff]
  %v289 = vld [vmem:[%s2 + $0x878] sm:$0xff]
  %v290 = vld [vmem:[%s2 + $0x880] sm:$0xff]
  %v291 = vld [vmem:[%s2 + $0x888] sm:$0xff]
  %v292 = vld [vmem:[%s2 + $0x890] sm:$0xff]
  %v293 = vld [vmem:[%s2 + $0x898] sm:$0xff]
  %v294 = vld [vmem:[%s2 + $0x8a0] sm:$0xff]
  %v295 = vld [vmem:[%s2 + $0x8a8] sm:$0xff]
  %v296 = vld [vmem:[%s2 + $0x8b0] sm:$0xff]
  %v297 = vld [vmem:[%s2 + $0x8b8] sm:$0xff]
  %v298 = vld [vmem:[%s2 + $0x8c0] sm:$0xff]
  %v299 = vld [vmem:[%s2 + $0x8c8] sm:$0xff]
  %v300 = vld [vmem:[%s2 + $0x8d0] sm:$0xff]
  %v301 = vld [vmem:[%s2 + $0x8d8] sm:$0xff]
  %v302 = vld [vmem:[%s2 + $0x8e0] sm:$0xff]
  %v303 = vld [vmem:[%s2 + $0x8e8] sm:$0xff]
  %v304 = vld [vmem:[%s2 + $0x8f0] sm:$0xff]
  %v305 = vld [vmem:[%s2 + $0x8f8] sm:$0xff]
  %v306 = vld [vmem:[%s2 + $0x900] sm:$0xff]
  %v307 = vld [vmem:[%s2 + $0x908] sm:$0xff]
  %v308 = vld [vmem:[%s2 + $0x910] sm:$0xff]
  %v309 = vld [vmem:[%s2 + $0x918] sm:$0xff]
  %v310 = vld [vmem:[%s2 + $0x920] sm:$0xff]
  %v311 = vld [vmem:[%s2 + $0x928] sm:$0xff]
  %v312 = vld [vmem:[%s2 + $0x930] sm:$0xff]
  %v313 = vld [vmem:[%s2 + $0x938] sm:$0xff]
  %v314 = vld [vmem:[%s2 + $0x940] sm:$0xff]
  %v315 = vld [vmem:[%s2 + $0x948] sm:$0xff]
  %v316 = vld [vmem:[%s2 + $0x950] sm:$0xff]
  %v317 = vld [vmem:[%s2 + $0x958] sm:$0xff]
  %v318 = vld [vmem:[%s2 + $0x960] sm:$0xff]
  %v319 = vld [vmem:[%s2 + $0x968] sm:$0xff]
  %v320 = vld [vmem:[%s2 + $0x970] sm:$0xff]
  %v321 = vld [vmem:[%s2 + $0x978] sm:$0xff]
  %v322 = vld [vmem:[%s2 + $0x980] sm:$0xff]
  %v323 = vld [vmem:[%s2 + $0x988] sm:$0xff]
  %v324 = vld [vmem:[%s2 + $0x990] sm:$0xff]
  %v325 = vld [vmem:[%s2 + $0x998] sm:$0xff]
  %v326 = vld [vmem:[%s2 + $0x9a0] sm:$0xff]
  %v327 = vld [vmem:[%s2 + $0x9a8] sm:$0xff]
  %v328 = vld [vmem:[%s2 + $0x9b0] sm:$0xff]
  %v329 = vld [vmem:[%s2 + $0x9b8] sm:$0xff]
  %v330 = vld [vmem:[%s2 + $0x9c0] sm:$0xff]
  %v331 = vld [vmem:[%s2 + $0x9c8] sm:$0xff]
  %v332 = vld [vmem:[%s2 + $0x9d0] sm:$0xff]
  %v333 = vld [vmem:[%s2 + $0x9d8] sm:$0xff]
  %v334 = vld [vmem:[%s2 + $0x9e0] sm:$0xff]
  %v335 = vld [vmem:[%s2 + $0x9e8] sm:$0xff]
  %v336 = vld [vmem:[%s2 + $0x9f0] sm:$0xff]
  %v337 = vld [vmem:[%s2 + $0x9f8] sm:$0xff]
  %v338 = vld [vmem:[%s2 + $0xa00] sm:$0xff]
  %v339 = vld [vmem:[%s2 + $0xa08] sm:$0xff]
  %v340 = vld [vmem:[%s2 + $0xa10] sm:$0xff]
  %v341 = vld [vmem:[%s2 + $0xa18] sm:$0xff]
  %v342 = vld [vmem:[%s2 + $0xa20] sm:$0xff]
  %v343 = vld [vmem:[%s2 + $0xa28] sm:$0xff]
  %v344 = vld [vmem:[%s2 + $0xa30] sm:$0xff]
  %v345 = vld [vmem:[%s2 + $0xa38] sm:$0xff]
  %v346 = vld [vmem:[%s2 + $0xa40] sm:$0xff]
  %v347 = vld [vmem:[%s2 + $0xa48] sm:$0xff]
  %v348 = vld [vmem:[%s2 + $0xa50] sm:$0xff]
  %v349 = vld [vmem:[%s2 + $0xa58] sm:$0xff]
  %v350 = vld [vmem:[%s2 + $0xa60] sm:$0xff]
  %v351 = vld [vmem:[%s2 + $0xa68] sm:$0xff]
  %v352 = vld [vmem:[%s2 + $0xa70] sm:$0xff]
  %v353 = vld [vmem:[%s2 + $0xa78] sm:$0xff]
  %v354 = vld [vmem:[%s2 + $0xa80] sm:$0xff]
  %v355 = vld [vmem:[%s2 + $0xa88] sm:$0xff]
  %v356 = vld [vmem:[%s2 + $0xa90] sm:$0xff]
  %v357 = vld [vmem:[%s2 + $0xa98] sm:$0xff]
  %v358 = vld [vmem:[%s2 + $0xaa0] sm:$0xff]
  %v359 = vld [vmem:[%s2 + $0xaa8] sm:$0xff]
  %v360 = vld [vmem:[%s2 + $0xab0] sm:$0xff]
  %v361 = vld [vmem:[%s2 + $0xab8] sm:$0xff]
  %v362 = vld [vmem:[%s2 + $0xac0] sm:$0xff]
  %v363 = vld [vmem:[%s2 + $0xac8] sm:$0xff]
  %v364 = vld [vmem:[%s2 + $0xad0] sm:$0xff]
  %v365 = vld [vmem:[%s2 + $0xad8] sm:$0xff]
  %v366 = vld [vmem:[%s2 + $0xae0] sm:$0xff]
  %v367 = vld [vmem:[%s2 + $0xae8] sm:$0xff]
  %v368 = vld [vmem:[%s2 + $0xaf0] sm:$0xff]
  %v369 = vld [vmem:[%s2 + $0xaf8] sm:$0xff]
  %v370 = vld [vmem:[%s2 + $0xb00] sm:$0xff]
  %v371 = vld [vmem:[%s2 + $0xb08] sm:$0xff]
  %v372 = vld [vmem:[%s2 + $0xb10] sm:$0xff]
  %v373 = vld [vmem:[%s2 + $0xb18] sm:$0xff]
  %v374 = vld [vmem:[%s2 + $0xb20] sm:$0xff]
  %v375 = vld [vmem:[%s2 + $0xb28] sm:$0xff]
  %v376 = vld [vmem:[%s2 + $0xb30] sm:$0xff]
  %v377 = vld [vmem:[%s2 + $0xb38] sm:$0xff]
  %v378 = vld [vmem:[%s2 + $0xb40] sm:$0xff]
  %v379 = vld [vmem:[%s2 + $0xb48] sm:$0xff]
  %v380 = vld [vmem:[%s2 + $0xb50] sm:$0xff]
  %v381 = vld [vmem:[%s2 + $0xb58] sm:$0xff]
  %v382 = vld [vmem:[%s2 + $0xb60] sm:$0xff]
  %v383 = vld [vmem:[%s2 + $0xb68] sm:$0xff]
  %v384 = vld [vmem:[%s2 + $0xb70] sm:$0xff]
  %v385 = vld [vmem:[%s2 + $0xb78] sm:$0xff]
  %v386 = vld [vmem:[%s2 + $0xb80] sm:$0xff]
  %v387 = vld [vmem:[%s2 + $0xb88] sm:$0xff]
  %v388 = vld [vmem:[%s2 + $0xb90] sm:$0xff]
  %v389 = vld [vmem:[%s2 + $0xb98] sm:$0xff]
  %v390 = vld [vmem:[%s2 + $0xba0] sm:$0xff]
  %v391 = vld [vmem:[%s2 + $0xba8] sm:$0xff]
  %v392 = vld [vmem:[%s2 + $0xbb0] sm:$0xff]
  %v393 = vld [vmem:[%s2 + $0xbb8] sm:$0xff]
  %v394 = vld [vmem:[%s2 + $0xbc0] sm:$0xff]
  %v395 = vld [vmem:[%s2 + $0xbc8] sm:$0xff]
  %v396 = vld [vmem:[%s2 + $0xbd0] sm:$0xff]
  %v397 = vld [vmem:[%s2 + $0xbd8] sm:$0xff]
  %v398 = vld [vmem:[%s2 + $0xbe0] sm:$0xff]
  %v399 = vld [vmem:[%s2 + $0xbe8] sm:$0xff]
  %v400 = vld [vmem:[%s2 + $0xbf0] sm:$0xff]
  %v401 = vld [vmem:[%s2 + $0xbf8] sm:$0xff]
  %v402 = vld [vmem:[%s2 + $0xc00] sm:$0xff]
  %v403 = vld [vmem:[%s2 + $0xc08] sm:$0xff]
  %v404 = vld [vmem:[%s2 + $0xc10] sm:$0xff]
  %v405 = vld [vmem:[%s2 + $0xc18] sm:$0xff]
  %v406 = vld [vmem:[%s2 + $0xc20] sm:$0xff]
  %v407 = vld [vmem:[%s2 + $0xc28] sm:$0xff]
  %v408 = vld [vmem:[%s2 + $0xc30] sm:$0xff]
  %v409 = vld [vmem:[%s2 + $0xc38] sm:$0xff]
  %v410 = vld [vmem:[%s2 + $0xc40] sm:$0xff]
  %v411 = vld [vmem:[%s2 + $0xc48] sm:$0xff]
  %v412 = vld [vmem:[%s2 + $0xc50] sm:$0xff]
  %v413 = vld [vmem:[%s2 + $0xc58] sm:$0xff]
  %v414 = vld [vmem:[%s2 + $0xc60] sm:$0xff]
  %v415 = vld [vmem:[%s2 + $0xc68] sm:$0xff]
  %v416 = vld [vmem:[%s2 + $0xc70] sm:$0xff]
  %v417 = vld [vmem:[%s2 + $0xc78] sm:$0xff]
  %v418 = vld [vmem:[%s2 + $0xc80] sm:$0xff]
  %v419 = vld [vmem:[%s2 + $0xc88] sm:$0xff]
  %v420 = vld [vmem:[%s2 + $0xc90] sm:$0xff]
  %v421 = vld [vmem:[%s2 + $0xc98] sm:$0xff]
  %v422 = vld [vmem:[%s2 + $0xca0] sm:$0xff]
  %v423 = vld [vmem:[%s2 + $0xca8] sm:$0xff]
  %v424 = vld [vmem:[%s2 + $0xcb0] sm:$0xff]
  %v425 = vld [vmem:[%s2 + $0xcb8] sm:$0xff]
  %v426 = vld [vmem:[%s2 + $0xcc0] sm:$0xff]
  %v427 = vld [vmem:[%s2 + $0xcc8] sm:$0xff]
  %v428 = vld [vmem:[%s2 + $0xcd0] sm:$0xff]
  %v429 = vld [vmem:[%s2 + $0xcd8] sm:$0xff]
  %v430 = vld [vmem:[%s2 + $0xce0] sm:$0xff]
  %v431 = vld [vmem:[%s2 + $0xce8] sm:$0xff]
  %v432 = vld [vmem:[%s2 + $0xcf0] sm:$0xff]
  %v433 = vld [vmem:[%s2 + $0xcf8] sm:$0xff]
  %v434 = vld [vmem:[%s2 + $0xd00] sm:$0xff]
  %v435 = vld [vmem:[%s2 + $0xd08] sm:$0xff]
  %v436 = vld [vmem:[%s2 + $0xd10] sm:$0xff]
  %v437 = vld [vmem:[%s2 + $0xd18] sm:$0xff]
  %v438 = vld [vmem:[%s2 + $0xd20] sm:$0xff]
  %v439 = vld [vmem:[%s2 + $0xd28] sm:$0xff]
  %v440 = vld [vmem:[%s2 + $0xd30] sm:$0xff]
  %v441 = vld [vmem:[%s2 + $0xd38] sm:$0xff]
  %v442 = vld [vmem:[%s2 + $0xd40] sm:$0xff]
  %v443 = vld [vmem:[%s2 + $0xd48] sm:$0xff]
  %v444 = vld [vmem:[%s2 + $0xd50] sm:$0xff]
  %v445 = vld [vmem:[%s2 + $0xd58] sm:$0xff]
  %v446 = vld [vmem:[%s2 + $0xd60] sm:$0xff]
  %v447 = vld [vmem:[%s2 + $0xd68] sm:$0xff]
  %v448 = vld [vmem:[%s2 + $0xd70] sm:$0xff]
  %v449 = vld [vmem:[%s2 + $0xd78] sm:$0xff]
  %v450 = vld [vmem:[%s2 + $0xd80] sm:$0xff]
  %v451 = vld [vmem:[%s2 + $0xd88] sm:$0xff]
  %v452 = vld [vmem:[%s2 + $0xd90] sm:$0xff]
  %v453 = vld [vmem:[%s2 + $0xd98] sm:$0xff]
  %v454 = vld [vmem:[%s2 + $0xda0] sm:$0xff]
  %v455 = vld [vmem:[%s2 + $0xda8] sm:$0xff]
  %v456 = vld [vmem:[%s2 + $0xdb0] sm:$0xff]
  %v457 = vld [vmem:[%s2 + $0xdb8] sm:$0xff]
  %v458 = vld [vmem:[%s2 + $0xdc0] sm:$0xff]
  %v459 = vld [vmem:[%s2 + $0xdc8] sm:$0xff]
  %v460 = vld [vmem:[%s2 + $0xdd0] sm:$0xff]
  %v461 = vld [vmem:[%s2 + $0xdd8] sm:$0xff]
  %v462 = vld [vmem:[%s2 + $0xde0] sm:$0xff]
  %v463 = vld [vmem:[%s2 + $0xde8] sm:$0xff]
  %v464 = vld [vmem:[%s2 + $0xdf0] sm:$0xff]
  %v465 = vld [vmem:[%s2 + $0xdf8] sm:$0xff]
  %v466 = vadd.f32 %v18, %v19
  %v467 = vadd.f32 %v466, %v20
  %v468 = vadd.f32 %v467, %v21
  %v469 = vadd.f32 %v468, %v22
  %v470 = vadd.f32 %v469, %v23
  %vm471 = vcmask 130048
  %v472 = vsel %vm471, %v24, 0.0
  %v473 = vadd.f32 %v470, %v472
  %474 = vadd.xlane.f32.xlu0 %v473
  %v475 = vpop.xlane.xlu0 %474
  %v476 = vadd.f32 %v25, %v26
  %v477 = vadd.f32 %v476, %v27
  %v478 = vadd.f32 %v477, %v28
  %v479 = vadd.f32 %v478, %v29
  %v480 = vadd.f32 %v479, %v30
  %v481 = vsel %vm471, %v31, 0.0
  %v482 = vadd.f32 %v480, %v481
  %483 = vadd.xlane.f32.xlu0 %v482
  %v484 = vpop.xlane.xlu0 %483
  %v485 = vadd.f32 %v32, %v33
  %v486 = vadd.f32 %v485, %v34
  %v487 = vadd.f32 %v486, %v35
  %v488 = vadd.f32 %v487, %v36
  %v489 = vadd.f32 %v488, %v37
  %v490 = vsel %vm471, %v38, 0.0
  %v491 = vadd.f32 %v489, %v490
  %492 = vadd.xlane.f32.xlu0 %v491
  %v493 = vpop.xlane.xlu0 %492
  %v494 = vadd.f32 %v39, %v40
  %v495 = vadd.f32 %v494, %v41
  %v496 = vadd.f32 %v495, %v42
  %v497 = vadd.f32 %v496, %v43
  %v498 = vadd.f32 %v497, %v44
  %v499 = vsel %vm471, %v45, 0.0
  %v500 = vadd.f32 %v498, %v499
  %501 = vadd.xlane.f32.xlu0 %v500
  %v502 = vpop.xlane.xlu0 %501
  %v503 = vadd.f32 %v46, %v47
  %v504 = vadd.f32 %v503, %v48
  %v505 = vadd.f32 %v504, %v49
  %v506 = vadd.f32 %v505, %v50
  %v507 = vadd.f32 %v506, %v51
  %v508 = vsel %vm471, %v52, 0.0
  %v509 = vadd.f32 %v507, %v508
  %510 = vadd.xlane.f32.xlu0 %v509
  %v511 = vpop.xlane.xlu0 %510
  %v512 = vadd.f32 %v53, %v54
  %v513 = vadd.f32 %v512, %v55
  %v514 = vadd.f32 %v513, %v56
  %v515 = vadd.f32 %v514, %v57
  %v516 = vadd.f32 %v515, %v58
  %v517 = vsel %vm471, %v59, 0.0
  %v518 = vadd.f32 %v516, %v517
  %519 = vadd.xlane.f32.xlu0 %v518
  %v520 = vpop.xlane.xlu0 %519
  %v521 = vadd.f32 %v60, %v61
  %v522 = vadd.f32 %v521, %v62
  %v523 = vadd.f32 %v522, %v63
  %v524 = vadd.f32 %v523, %v64
  %v525 = vadd.f32 %v524, %v65
  %v526 = vsel %vm471, %v66, 0.0
  %v527 = vadd.f32 %v525, %v526
  %528 = vadd.xlane.f32.xlu0 %v527
  %v529 = vpop.xlane.xlu0 %528
  %v530 = vadd.f32 %v67, %v68
  %v531 = vadd.f32 %v530, %v69
  %v532 = vadd.f32 %v531, %v70
  %v533 = vadd.f32 %v532, %v71
  %v534 = vadd.f32 %v533, %v72
  %v535 = vsel %vm471, %v73, 0.0
  %v536 = vadd.f32 %v534, %v535
  %537 = vadd.xlane.f32.xlu0 %v536
  %v538 = vpop.xlane.xlu0 %537
  %v539 = vadd.f32 %v74, %v75
  %v540 = vadd.f32 %v539, %v76
  %v541 = vadd.f32 %v540, %v77
  %v542 = vadd.f32 %v541, %v78
  %v543 = vadd.f32 %v542, %v79
  %v544 = vsel %vm471, %v80, 0.0
  %v545 = vadd.f32 %v543, %v544
  %546 = vadd.xlane.f32.xlu0 %v545
  %v547 = vpop.xlane.xlu0 %546
  %v548 = vadd.f32 %v81, %v82
  %v549 = vadd.f32 %v548, %v83
  %v550 = vadd.f32 %v549, %v84
  %v551 = vadd.f32 %v550, %v85
  %v552 = vadd.f32 %v551, %v86
  %v553 = vsel %vm471, %v87, 0.0
  %v554 = vadd.f32 %v552, %v553
  %555 = vadd.xlane.f32.xlu0 %v554
  %v556 = vpop.xlane.xlu0 %555
  %v557 = vadd.f32 %v88, %v89
  %v558 = vadd.f32 %v557, %v90
  %v559 = vadd.f32 %v558, %v91
  %v560 = vadd.f32 %v559, %v92
  %v561 = vadd.f32 %v560, %v93
  %v562 = vsel %vm471, %v94, 0.0
  %v563 = vadd.f32 %v561, %v562
  %564 = vadd.xlane.f32.xlu0 %v563
  %v565 = vpop.xlane.xlu0 %564
  %v566 = vadd.f32 %v95, %v96
  %v567 = vadd.f32 %v566, %v97
  %v568 = vadd.f32 %v567, %v98
  %v569 = vadd.f32 %v568, %v99
  %v570 = vadd.f32 %v569, %v100
  %v571 = vsel %vm471, %v101, 0.0
  %v572 = vadd.f32 %v570, %v571
  %573 = vadd.xlane.f32.xlu0 %v572
  %v574 = vpop.xlane.xlu0 %573
  %v575 = vadd.f32 %v102, %v103
  %v576 = vadd.f32 %v575, %v104
  %v577 = vadd.f32 %v576, %v105
  %v578 = vadd.f32 %v577, %v106
  %v579 = vadd.f32 %v578, %v107
  %v580 = vsel %vm471, %v108, 0.0
  %v581 = vadd.f32 %v579, %v580
  %582 = vadd.xlane.f32.xlu0 %v581
  %v583 = vpop.xlane.xlu0 %582
  %v584 = vadd.f32 %v109, %v110
  %v585 = vadd.f32 %v584, %v111
  %v586 = vadd.f32 %v585, %v112
  %v587 = vadd.f32 %v586, %v113
  %v588 = vadd.f32 %v587, %v114
  %v589 = vsel %vm471, %v115, 0.0
  %v590 = vadd.f32 %v588, %v589
  %591 = vadd.xlane.f32.xlu0 %v590
  %v592 = vpop.xlane.xlu0 %591
  %v593 = vadd.f32 %v116, %v117
  %v594 = vadd.f32 %v593, %v118
  %v595 = vadd.f32 %v594, %v119
  %v596 = vadd.f32 %v595, %v120
  %v597 = vadd.f32 %v596, %v121
  %v598 = vsel %vm471, %v122, 0.0
  %v599 = vadd.f32 %v597, %v598
  %600 = vadd.xlane.f32.xlu0 %v599
  %v601 = vpop.xlane.xlu0 %600
  %v602 = vadd.f32 %v123, %v124
  %v603 = vadd.f32 %v602, %v125
  %v604 = vadd.f32 %v603, %v126
  %v605 = vadd.f32 %v604, %v127
  %v606 = vadd.f32 %v605, %v128
  %v607 = vsel %vm471, %v129, 0.0
  %v608 = vadd.f32 %v606, %v607
  %609 = vadd.xlane.f32.xlu0 %v608
  %v610 = vpop.xlane.xlu0 %609
  %v611 = vadd.f32 %v130, %v131
  %v612 = vadd.f32 %v611, %v132
  %v613 = vadd.f32 %v612, %v133
  %v614 = vadd.f32 %v613, %v134
  %v615 = vadd.f32 %v614, %v135
  %v616 = vsel %vm471, %v136, 0.0
  %v617 = vadd.f32 %v615, %v616
  %618 = vadd.xlane.f32.xlu0 %v617
  %v619 = vpop.xlane.xlu0 %618
  %v620 = vadd.f32 %v137, %v138
  %v621 = vadd.f32 %v620, %v139
  %v622 = vadd.f32 %v621, %v140
  %v623 = vadd.f32 %v622, %v141
  %v624 = vadd.f32 %v623, %v142
  %v625 = vsel %vm471, %v143, 0.0
  %v626 = vadd.f32 %v624, %v625
  %627 = vadd.xlane.f32.xlu0 %v626
  %v628 = vpop.xlane.xlu0 %627
  %v629 = vadd.f32 %v144, %v145
  %v630 = vadd.f32 %v629, %v146
  %v631 = vadd.f32 %v630, %v147
  %v632 = vadd.f32 %v631, %v148
  %v633 = vadd.f32 %v632, %v149
  %v634 = vsel %vm471, %v150, 0.0
  %v635 = vadd.f32 %v633, %v634
  %636 = vadd.xlane.f32.xlu0 %v635
  %v637 = vpop.xlane.xlu0 %636
  %v638 = vadd.f32 %v151, %v152
  %v639 = vadd.f32 %v638, %v153
  %v640 = vadd.f32 %v639, %v154
  %v641 = vadd.f32 %v640, %v155
  %v642 = vadd.f32 %v641, %v156
  %v643 = vsel %vm471, %v157, 0.0
  %v644 = vadd.f32 %v642, %v643
  %645 = vadd.xlane.f32.xlu0 %v644
  %v646 = vpop.xlane.xlu0 %645
  %v647 = vadd.f32 %v158, %v159
  %v648 = vadd.f32 %v647, %v160
  %v649 = vadd.f32 %v648, %v161
  %v650 = vadd.f32 %v649, %v162
  %v651 = vadd.f32 %v650, %v163
  %v652 = vsel %vm471, %v164, 0.0
  %v653 = vadd.f32 %v651, %v652
  %654 = vadd.xlane.f32.xlu0 %v653
  %v655 = vpop.xlane.xlu0 %654
  %v656 = vadd.f32 %v165, %v166
  %v657 = vadd.f32 %v656, %v167
  %v658 = vadd.f32 %v657, %v168
  %v659 = vadd.f32 %v658, %v169
  %v660 = vadd.f32 %v659, %v170
  %v661 = vsel %vm471, %v171, 0.0
  %v662 = vadd.f32 %v660, %v661
  %663 = vadd.xlane.f32.xlu0 %v662
  %v664 = vpop.xlane.xlu0 %663
  %v665 = vadd.f32 %v172, %v173
  %v666 = vadd.f32 %v665, %v174
  %v667 = vadd.f32 %v666, %v175
  %v668 = vadd.f32 %v667, %v176
  %v669 = vadd.f32 %v668, %v177
  %v670 = vsel %vm471, %v178, 0.0
  %v671 = vadd.f32 %v669, %v670
  %672 = vadd.xlane.f32.xlu0 %v671
  %v673 = vpop.xlane.xlu0 %672
  %v674 = vadd.f32 %v179, %v180
  %v675 = vadd.f32 %v674, %v181
  %v676 = vadd.f32 %v675, %v182
  %v677 = vadd.f32 %v676, %v183
  %v678 = vadd.f32 %v677, %v184
  %v679 = vsel %vm471, %v185, 0.0
  %v680 = vadd.f32 %v678, %v679
  %681 = vadd.xlane.f32.xlu0 %v680
  %v682 = vpop.xlane.xlu0 %681
  %v683 = vadd.f32 %v186, %v187
  %v684 = vadd.f32 %v683, %v188
  %v685 = vadd.f32 %v684, %v189
  %v686 = vadd.f32 %v685, %v190
  %v687 = vadd.f32 %v686, %v191
  %v688 = vsel %vm471, %v192, 0.0
  %v689 = vadd.f32 %v687, %v688
  %690 = vadd.xlane.f32.xlu0 %v689
  %v691 = vpop.xlane.xlu0 %690
  %v692 = vadd.f32 %v193, %v194
  %v693 = vadd.f32 %v692, %v195
  %v694 = vadd.f32 %v693, %v196
  %v695 = vadd.f32 %v694, %v197
  %v696 = vadd.f32 %v695, %v198
  %v697 = vsel %vm471, %v199, 0.0
  %v698 = vadd.f32 %v696, %v697
  %699 = vadd.xlane.f32.xlu0 %v698
  %v700 = vpop.xlane.xlu0 %699
  %v701 = vadd.f32 %v200, %v201
  %v702 = vadd.f32 %v701, %v202
  %v703 = vadd.f32 %v702, %v203
  %v704 = vadd.f32 %v703, %v204
  %v705 = vadd.f32 %v704, %v205
  %v706 = vsel %vm471, %v206, 0.0
  %v707 = vadd.f32 %v705, %v706
  %708 = vadd.xlane.f32.xlu0 %v707
  %v709 = vpop.xlane.xlu0 %708
  %v710 = vadd.f32 %v207, %v208
  %v711 = vadd.f32 %v710, %v209
  %v712 = vadd.f32 %v711, %v210
  %v713 = vadd.f32 %v712, %v211
  %v714 = vadd.f32 %v713, %v212
  %v715 = vsel %vm471, %v213, 0.0
  %v716 = vadd.f32 %v714, %v715
  %717 = vadd.xlane.f32.xlu0 %v716
  %v718 = vpop.xlane.xlu0 %717
  %v719 = vadd.f32 %v214, %v215
  %v720 = vadd.f32 %v719, %v216
  %v721 = vadd.f32 %v720, %v217
  %v722 = vadd.f32 %v721, %v218
  %v723 = vadd.f32 %v722, %v219
  %v724 = vsel %vm471, %v220, 0.0
  %v725 = vadd.f32 %v723, %v724
  %726 = vadd.xlane.f32.xlu0 %v725
  %v727 = vpop.xlane.xlu0 %726
  %v728 = vadd.f32 %v221, %v222
  %v729 = vadd.f32 %v728, %v223
  %v730 = vadd.f32 %v729, %v224
  %v731 = vadd.f32 %v730, %v225
  %v732 = vadd.f32 %v731, %v226
  %v733 = vsel %vm471, %v227, 0.0
  %v734 = vadd.f32 %v732, %v733
  %735 = vadd.xlane.f32.xlu0 %v734
  %v736 = vpop.xlane.xlu0 %735
  %v737 = vadd.f32 %v228, %v229
  %v738 = vadd.f32 %v737, %v230
  %v739 = vadd.f32 %v738, %v231
  %v740 = vadd.f32 %v739, %v232
  %v741 = vadd.f32 %v740, %v233
  %v742 = vsel %vm471, %v234, 0.0
  %v743 = vadd.f32 %v741, %v742
  %744 = vadd.xlane.f32.xlu0 %v743
  %v745 = vpop.xlane.xlu0 %744
  %v746 = vadd.f32 %v235, %v236
  %v747 = vadd.f32 %v746, %v237
  %v748 = vadd.f32 %v747, %v238
  %v749 = vadd.f32 %v748, %v239
  %v750 = vadd.f32 %v749, %v240
  %v751 = vsel %vm471, %v241, 0.0
  %v752 = vadd.f32 %v750, %v751
  %753 = vadd.xlane.f32.xlu0 %v752
  %v754 = vpop.xlane.xlu0 %753
  %v755 = vadd.f32 %v242, %v243
  %v756 = vadd.f32 %v755, %v244
  %v757 = vadd.f32 %v756, %v245
  %v758 = vadd.f32 %v757, %v246
  %v759 = vadd.f32 %v758, %v247
  %v760 = vsel %vm471, %v248, 0.0
  %v761 = vadd.f32 %v759, %v760
  %762 = vadd.xlane.f32.xlu0 %v761
  %v763 = vpop.xlane.xlu0 %762
  %v764 = vadd.f32 %v249, %v250
  %v765 = vadd.f32 %v764, %v251
  %v766 = vadd.f32 %v765, %v252
  %v767 = vadd.f32 %v766, %v253
  %v768 = vadd.f32 %v767, %v254
  %v769 = vsel %vm471, %v255, 0.0
  %v770 = vadd.f32 %v768, %v769
  %771 = vadd.xlane.f32.xlu0 %v770
  %v772 = vpop.xlane.xlu0 %771
  %v773 = vadd.f32 %v256, %v257
  %v774 = vadd.f32 %v773, %v258
  %v775 = vadd.f32 %v774, %v259
  %v776 = vadd.f32 %v775, %v260
  %v777 = vadd.f32 %v776, %v261
  %v778 = vsel %vm471, %v262, 0.0
  %v779 = vadd.f32 %v777, %v778
  %780 = vadd.xlane.f32.xlu0 %v779
  %v781 = vpop.xlane.xlu0 %780
  %v782 = vadd.f32 %v263, %v264
  %v783 = vadd.f32 %v782, %v265
  %v784 = vadd.f32 %v783, %v266
  %v785 = vadd.f32 %v784, %v267
  %v786 = vadd.f32 %v785, %v268
  %v787 = vsel %vm471, %v269, 0.0
  %v788 = vadd.f32 %v786, %v787
  %789 = vadd.xlane.f32.xlu0 %v788
  %v790 = vpop.xlane.xlu0 %789
  %v791 = vadd.f32 %v270, %v271
  %v792 = vadd.f32 %v791, %v272
  %v793 = vadd.f32 %v792, %v273
  %v794 = vadd.f32 %v793, %v274
  %v795 = vadd.f32 %v794, %v275
  %v796 = vsel %vm471, %v276, 0.0
  %v797 = vadd.f32 %v795, %v796
  %798 = vadd.xlane.f32.xlu0 %v797
  %v799 = vpop.xlane.xlu0 %798
  %v800 = vadd.f32 %v277, %v278
  %v801 = vadd.f32 %v800, %v279
  %v802 = vadd.f32 %v801, %v280
  %v803 = vadd.f32 %v802, %v281
  %v804 = vadd.f32 %v803, %v282
  %v805 = vsel %vm471, %v283, 0.0
  %v806 = vadd.f32 %v804, %v805
  %807 = vadd.xlane.f32.xlu0 %v806
  %v808 = vpop.xlane.xlu0 %807
  %v809 = vadd.f32 %v284, %v285
  %v810 = vadd.f32 %v809, %v286
  %v811 = vadd.f32 %v810, %v287
  %v812 = vadd.f32 %v811, %v288
  %v813 = vadd.f32 %v812, %v289
  %v814 = vsel %vm471, %v290, 0.0
  %v815 = vadd.f32 %v813, %v814
  %816 = vadd.xlane.f32.xlu0 %v815
  %v817 = vpop.xlane.xlu0 %816
  %v818 = vadd.f32 %v291, %v292
  %v819 = vadd.f32 %v818, %v293
  %v820 = vadd.f32 %v819, %v294
  %v821 = vadd.f32 %v820, %v295
  %v822 = vadd.f32 %v821, %v296
  %v823 = vsel %vm471, %v297, 0.0
  %v824 = vadd.f32 %v822, %v823
  %825 = vadd.xlane.f32.xlu0 %v824
  %v826 = vpop.xlane.xlu0 %825
  %v827 = vadd.f32 %v298, %v299
  %v828 = vadd.f32 %v827, %v300
  %v829 = vadd.f32 %v828, %v301
  %v830 = vadd.f32 %v829, %v302
  %v831 = vadd.f32 %v830, %v303
  %v832 = vsel %vm471, %v304, 0.0
  %v833 = vadd.f32 %v831, %v832
  %834 = vadd.xlane.f32.xlu0 %v833
  %v835 = vpop.xlane.xlu0 %834
  %v836 = vadd.f32 %v305, %v306
  %v837 = vadd.f32 %v836, %v307
  %v838 = vadd.f32 %v837, %v308
  %v839 = vadd.f32 %v838, %v309
  %v840 = vadd.f32 %v839, %v310
  %v841 = vsel %vm471, %v311, 0.0
  %v842 = vadd.f32 %v840, %v841
  %843 = vadd.xlane.f32.xlu0 %v842
  %v844 = vpop.xlane.xlu0 %843
  %v845 = vadd.f32 %v312, %v313
  %v846 = vadd.f32 %v845, %v314
  %v847 = vadd.f32 %v846, %v315
  %v848 = vadd.f32 %v847, %v316
  %v849 = vadd.f32 %v848, %v317
  %v850 = vsel %vm471, %v318, 0.0
  %v851 = vadd.f32 %v849, %v850
  %852 = vadd.xlane.f32.xlu0 %v851
  %v853 = vpop.xlane.xlu0 %852
  %v854 = vadd.f32 %v319, %v320
  %v855 = vadd.f32 %v854, %v321
  %v856 = vadd.f32 %v855, %v322
  %v857 = vadd.f32 %v856, %v323
  %v858 = vadd.f32 %v857, %v324
  %v859 = vsel %vm471, %v325, 0.0
  %v860 = vadd.f32 %v858, %v859
  %861 = vadd.xlane.f32.xlu0 %v860
  %v862 = vpop.xlane.xlu0 %861
  %v863 = vadd.f32 %v326, %v327
  %v864 = vadd.f32 %v863, %v328
  %v865 = vadd.f32 %v864, %v329
  %v866 = vadd.f32 %v865, %v330
  %v867 = vadd.f32 %v866, %v331
  %v868 = vsel %vm471, %v332, 0.0
  %v869 = vadd.f32 %v867, %v868
  %870 = vadd.xlane.f32.xlu0 %v869
  %v871 = vpop.xlane.xlu0 %870
  %v872 = vadd.f32 %v333, %v334
  %v873 = vadd.f32 %v872, %v335
  %v874 = vadd.f32 %v873, %v336
  %v875 = vadd.f32 %v874, %v337
  %v876 = vadd.f32 %v875, %v338
  %v877 = vsel %vm471, %v339, 0.0
  %v878 = vadd.f32 %v876, %v877
  %879 = vadd.xlane.f32.xlu0 %v878
  %v880 = vpop.xlane.xlu0 %879
  %v881 = vadd.f32 %v340, %v341
  %v882 = vadd.f32 %v881, %v342
  %v883 = vadd.f32 %v882, %v343
  %v884 = vadd.f32 %v883, %v344
  %v885 = vadd.f32 %v884, %v345
  %v886 = vsel %vm471, %v346, 0.0
  %v887 = vadd.f32 %v885, %v886
  %888 = vadd.xlane.f32.xlu0 %v887
  %v889 = vpop.xlane.xlu0 %888
  %v890 = vadd.f32 %v347, %v348
  %v891 = vadd.f32 %v890, %v349
  %v892 = vadd.f32 %v891, %v350
  %v893 = vadd.f32 %v892, %v351
  %v894 = vadd.f32 %v893, %v352
  %v895 = vsel %vm471, %v353, 0.0
  %v896 = vadd.f32 %v894, %v895
  %897 = vadd.xlane.f32.xlu0 %v896
  %v898 = vpop.xlane.xlu0 %897
  %v899 = vadd.f32 %v354, %v355
  %v900 = vadd.f32 %v899, %v356
  %v901 = vadd.f32 %v900, %v357
  %v902 = vadd.f32 %v901, %v358
  %v903 = vadd.f32 %v902, %v359
  %v904 = vsel %vm471, %v360, 0.0
  %v905 = vadd.f32 %v903, %v904
  %906 = vadd.xlane.f32.xlu0 %v905
  %v907 = vpop.xlane.xlu0 %906
  %v908 = vadd.f32 %v361, %v362
  %v909 = vadd.f32 %v908, %v363
  %v910 = vadd.f32 %v909, %v364
  %v911 = vadd.f32 %v910, %v365
  %v912 = vadd.f32 %v911, %v366
  %v913 = vsel %vm471, %v367, 0.0
  %v914 = vadd.f32 %v912, %v913
  %915 = vadd.xlane.f32.xlu0 %v914
  %v916 = vpop.xlane.xlu0 %915
  %v917 = vadd.f32 %v368, %v369
  %v918 = vadd.f32 %v917, %v370
  %v919 = vadd.f32 %v918, %v371
  %v920 = vadd.f32 %v919, %v372
  %v921 = vadd.f32 %v920, %v373
  %v922 = vsel %vm471, %v374, 0.0
  %v923 = vadd.f32 %v921, %v922
  %924 = vadd.xlane.f32.xlu0 %v923
  %v925 = vpop.xlane.xlu0 %924
  %v926 = vadd.f32 %v375, %v376
  %v927 = vadd.f32 %v926, %v377
  %v928 = vadd.f32 %v927, %v378
  %v929 = vadd.f32 %v928, %v379
  %v930 = vadd.f32 %v929, %v380
  %v931 = vsel %vm471, %v381, 0.0
  %v932 = vadd.f32 %v930, %v931
  %933 = vadd.xlane.f32.xlu0 %v932
  %v934 = vpop.xlane.xlu0 %933
  %v935 = vadd.f32 %v382, %v383
  %v936 = vadd.f32 %v935, %v384
  %v937 = vadd.f32 %v936, %v385
  %v938 = vadd.f32 %v937, %v386
  %v939 = vadd.f32 %v938, %v387
  %v940 = vsel %vm471, %v388, 0.0
  %v941 = vadd.f32 %v939, %v940
  %942 = vadd.xlane.f32.xlu0 %v941
  %v943 = vpop.xlane.xlu0 %942
  %v944 = vadd.f32 %v389, %v390
  %v945 = vadd.f32 %v944, %v391
  %v946 = vadd.f32 %v945, %v392
  %v947 = vadd.f32 %v946, %v393
  %v948 = vadd.f32 %v947, %v394
  %v949 = vsel %vm471, %v395, 0.0
  %v950 = vadd.f32 %v948, %v949
  %951 = vadd.xlane.f32.xlu0 %v950
  %v952 = vpop.xlane.xlu0 %951
  %v953 = vadd.f32 %v396, %v397
  %v954 = vadd.f32 %v953, %v398
  %v955 = vadd.f32 %v954, %v399
  %v956 = vadd.f32 %v955, %v400
  %v957 = vadd.f32 %v956, %v401
  %v958 = vsel %vm471, %v402, 0.0
  %v959 = vadd.f32 %v957, %v958
  %960 = vadd.xlane.f32.xlu0 %v959
  %v961 = vpop.xlane.xlu0 %960
  %v962 = vadd.f32 %v403, %v404
  %v963 = vadd.f32 %v962, %v405
  %v964 = vadd.f32 %v963, %v406
  %v965 = vadd.f32 %v964, %v407
  %v966 = vadd.f32 %v965, %v408
  %v967 = vsel %vm471, %v409, 0.0
  %v968 = vadd.f32 %v966, %v967
  %969 = vadd.xlane.f32.xlu0 %v968
  %v970 = vpop.xlane.xlu0 %969
  %v971 = vadd.f32 %v410, %v411
  %v972 = vadd.f32 %v971, %v412
  %v973 = vadd.f32 %v972, %v413
  %v974 = vadd.f32 %v973, %v414
  %v975 = vadd.f32 %v974, %v415
  %v976 = vsel %vm471, %v416, 0.0
  %v977 = vadd.f32 %v975, %v976
  %978 = vadd.xlane.f32.xlu0 %v977
  %v979 = vpop.xlane.xlu0 %978
  %v980 = vadd.f32 %v417, %v418
  %v981 = vadd.f32 %v980, %v419
  %v982 = vadd.f32 %v981, %v420
  %v983 = vadd.f32 %v982, %v421
  %v984 = vadd.f32 %v983, %v422
  %v985 = vsel %vm471, %v423, 0.0
  %v986 = vadd.f32 %v984, %v985
  %987 = vadd.xlane.f32.xlu0 %v986
  %v988 = vpop.xlane.xlu0 %987
  %v989 = vadd.f32 %v424, %v425
  %v990 = vadd.f32 %v989, %v426
  %v991 = vadd.f32 %v990, %v427
  %v992 = vadd.f32 %v991, %v428
  %v993 = vadd.f32 %v992, %v429
  %v994 = vsel %vm471, %v430, 0.0
  %v995 = vadd.f32 %v993, %v994
  %996 = vadd.xlane.f32.xlu0 %v995
  %v997 = vpop.xlane.xlu0 %996
  %v998 = vadd.f32 %v431, %v432
  %v999 = vadd.f32 %v998, %v433
  %v1000 = vadd.f32 %v999, %v434
  %v1001 = vadd.f32 %v1000, %v435
  %v1002 = vadd.f32 %v1001, %v436
  %v1003 = vsel %vm471, %v437, 0.0
  %v1004 = vadd.f32 %v1002, %v1003
  %1005 = vadd.xlane.f32.xlu0 %v1004
  %v1006 = vpop.xlane.xlu0 %1005
  %v1007 = vadd.f32 %v438, %v439
  %v1008 = vadd.f32 %v1007, %v440
  %v1009 = vadd.f32 %v1008, %v441
  %v1010 = vadd.f32 %v1009, %v442
  %v1011 = vadd.f32 %v1010, %v443
  %v1012 = vsel %vm471, %v444, 0.0
  %v1013 = vadd.f32 %v1011, %v1012
  %1014 = vadd.xlane.f32.xlu0 %v1013
  %v1015 = vpop.xlane.xlu0 %1014
  %v1016 = vadd.f32 %v445, %v446
  %v1017 = vadd.f32 %v1016, %v447
  %v1018 = vadd.f32 %v1017, %v448
  %v1019 = vadd.f32 %v1018, %v449
  %v1020 = vadd.f32 %v1019, %v450
  %v1021 = vsel %vm471, %v451, 0.0
  %v1022 = vadd.f32 %v1020, %v1021
  %1023 = vadd.xlane.f32.xlu0 %v1022
  %v1024 = vpop.xlane.xlu0 %1023
  %v1025 = vadd.f32 %v452, %v453
  %v1026 = vadd.f32 %v1025, %v454
  %v1027 = vadd.f32 %v1026, %v455
  %v1028 = vadd.f32 %v1027, %v456
  %v1029 = vadd.f32 %v1028, %v457
  %v1030 = vsel %vm471, %v458, 0.0
  %v1031 = vadd.f32 %v1029, %v1030
  %1032 = vadd.xlane.f32.xlu0 %v1031
  %v1033 = vpop.xlane.xlu0 %1032
  %v1034 = vadd.f32 %v459, %v460
  %v1035 = vadd.f32 %v1034, %v461
  %v1036 = vadd.f32 %v1035, %v462
  %v1037 = vadd.f32 %v1036, %v463
  %v1038 = vadd.f32 %v1037, %v464
  %v1039 = vsel %vm471, %v465, 0.0
  %v1040 = vadd.f32 %v1038, %v1039
  %1041 = vadd.xlane.f32.xlu0 %v1040
  %v1042 = vpop.xlane.xlu0 %1041
  %v1043 = vadd.f32 %v475, 0.0
  %v1044 = vadd.f32 %v484, 0.0
  %v1045 = vadd.f32 %v493, 0.0
  %v1046 = vadd.f32 %v502, 0.0
  %v1047 = vadd.f32 %v511, 0.0
  %v1048 = vadd.f32 %v520, 0.0
  %v1049 = vadd.f32 %v529, 0.0
  %v1050 = vadd.f32 %v538, 0.0
  %v1051 = vadd.f32 %v547, 0.0
  %v1052 = vadd.f32 %v556, 0.0
  %v1053 = vadd.f32 %v565, 0.0
  %v1054 = vadd.f32 %v574, 0.0
  %v1055 = vadd.f32 %v583, 0.0
  %v1056 = vadd.f32 %v592, 0.0
  %v1057 = vadd.f32 %v601, 0.0
  %v1058 = vadd.f32 %v610, 0.0
  %v1059 = vadd.f32 %v619, 0.0
  %v1060 = vadd.f32 %v628, 0.0
  %v1061 = vadd.f32 %v637, 0.0
  %v1062 = vadd.f32 %v646, 0.0
  %v1063 = vadd.f32 %v655, 0.0
  %v1064 = vadd.f32 %v664, 0.0
  %v1065 = vadd.f32 %v673, 0.0
  %v1066 = vadd.f32 %v682, 0.0
  %v1067 = vadd.f32 %v691, 0.0
  %v1068 = vadd.f32 %v700, 0.0
  %v1069 = vadd.f32 %v709, 0.0
  %v1070 = vadd.f32 %v718, 0.0
  %v1071 = vadd.f32 %v727, 0.0
  %v1072 = vadd.f32 %v736, 0.0
  %v1073 = vadd.f32 %v745, 0.0
  %v1074 = vadd.f32 %v754, 0.0
  %v1075 = vadd.f32 %v763, 0.0
  %v1076 = vadd.f32 %v772, 0.0
  %v1077 = vadd.f32 %v781, 0.0
  %v1078 = vadd.f32 %v790, 0.0
  %v1079 = vadd.f32 %v799, 0.0
  %v1080 = vadd.f32 %v808, 0.0
  %v1081 = vadd.f32 %v817, 0.0
  %v1082 = vadd.f32 %v826, 0.0
  %v1083 = vadd.f32 %v835, 0.0
  %v1084 = vadd.f32 %v844, 0.0
  %v1085 = vadd.f32 %v853, 0.0
  %v1086 = vadd.f32 %v862, 0.0
  %v1087 = vadd.f32 %v871, 0.0
  %v1088 = vadd.f32 %v880, 0.0
  %v1089 = vadd.f32 %v889, 0.0
  %v1090 = vadd.f32 %v898, 0.0
  %v1091 = vadd.f32 %v907, 0.0
  %v1092 = vadd.f32 %v916, 0.0
  %v1093 = vadd.f32 %v925, 0.0
  %v1094 = vadd.f32 %v934, 0.0
  %v1095 = vadd.f32 %v943, 0.0
  %v1096 = vadd.f32 %v952, 0.0
  %v1097 = vadd.f32 %v961, 0.0
  %v1098 = vadd.f32 %v970, 0.0
  %v1099 = vadd.f32 %v979, 0.0
  %v1100 = vadd.f32 %v988, 0.0
  %v1101 = vadd.f32 %v997, 0.0
  %v1102 = vadd.f32 %v1006, 0.0
  %v1103 = vadd.f32 %v1015, 0.0
  %v1104 = vadd.f32 %v1024, 0.0
  %v1105 = vadd.f32 %v1033, 0.0
  %v1106 = vadd.f32 %v1042, 0.0
  %v1107 = vmul.f32 %v1043, 0.0012755102
  %v1108 = vmul.f32 %v1044, 0.0012755102
  %v1109 = vmul.f32 %v1045, 0.0012755102
  %v1110 = vmul.f32 %v1046, 0.0012755102
  %v1111 = vmul.f32 %v1047, 0.0012755102
  %v1112 = vmul.f32 %v1048, 0.0012755102
  %v1113 = vmul.f32 %v1049, 0.0012755102
  %v1114 = vmul.f32 %v1050, 0.0012755102
  %v1115 = vmul.f32 %v1051, 0.0012755102
  %v1116 = vmul.f32 %v1052, 0.0012755102
  %v1117 = vmul.f32 %v1053, 0.0012755102
  %v1118 = vmul.f32 %v1054, 0.0012755102
  %v1119 = vmul.f32 %v1055, 0.0012755102
  %v1120 = vmul.f32 %v1056, 0.0012755102
  %v1121 = vmul.f32 %v1057, 0.0012755102
  %v1122 = vmul.f32 %v1058, 0.0012755102
  %v1123 = vmul.f32 %v1059, 0.0012755102
  %v1124 = vmul.f32 %v1060, 0.0012755102
  %v1125 = vmul.f32 %v1061, 0.0012755102
  %v1126 = vmul.f32 %v1062, 0.0012755102
  %v1127 = vmul.f32 %v1063, 0.0012755102
  %v1128 = vmul.f32 %v1064, 0.0012755102
  %v1129 = vmul.f32 %v1065, 0.0012755102
  %v1130 = vmul.f32 %v1066, 0.0012755102
  %v1131 = vmul.f32 %v1067, 0.0012755102
  %v1132 = vmul.f32 %v1068, 0.0012755102
  %v1133 = vmul.f32 %v1069, 0.0012755102
  %v1134 = vmul.f32 %v1070, 0.0012755102
  %v1135 = vmul.f32 %v1071, 0.0012755102
  %v1136 = vmul.f32 %v1072, 0.0012755102
  %v1137 = vmul.f32 %v1073, 0.0012755102
  %v1138 = vmul.f32 %v1074, 0.0012755102
  %v1139 = vmul.f32 %v1075, 0.0012755102
  %v1140 = vmul.f32 %v1076, 0.0012755102
  %v1141 = vmul.f32 %v1077, 0.0012755102
  %v1142 = vmul.f32 %v1078, 0.0012755102
  %v1143 = vmul.f32 %v1079, 0.0012755102
  %v1144 = vmul.f32 %v1080, 0.0012755102
  %v1145 = vmul.f32 %v1081, 0.0012755102
  %v1146 = vmul.f32 %v1082, 0.0012755102
  %v1147 = vmul.f32 %v1083, 0.0012755102
  %v1148 = vmul.f32 %v1084, 0.0012755102
  %v1149 = vmul.f32 %v1085, 0.0012755102
  %v1150 = vmul.f32 %v1086, 0.0012755102
  %v1151 = vmul.f32 %v1087, 0.0012755102
  %v1152 = vmul.f32 %v1088, 0.0012755102
  %v1153 = vmul.f32 %v1089, 0.0012755102
  %v1154 = vmul.f32 %v1090, 0.0012755102
  %v1155 = vmul.f32 %v1091, 0.0012755102
  %v1156 = vmul.f32 %v1092, 0.0012755102
  %v1157 = vmul.f32 %v1093, 0.0012755102
  %v1158 = vmul.f32 %v1094, 0.0012755102
  %v1159 = vmul.f32 %v1095, 0.0012755102
  %v1160 = vmul.f32 %v1096, 0.0012755102
  %v1161 = vmul.f32 %v1097, 0.0012755102
  %v1162 = vmul.f32 %v1098, 0.0012755102
  %v1163 = vmul.f32 %v1099, 0.0012755102
  %v1164 = vmul.f32 %v1100, 0.0012755102
  %v1165 = vmul.f32 %v1101, 0.0012755102
  %v1166 = vmul.f32 %v1102, 0.0012755102
  %v1167 = vmul.f32 %v1103, 0.0012755102
  %v1168 = vmul.f32 %v1104, 0.0012755102
  %v1169 = vmul.f32 %v1105, 0.0012755102
  %v1170 = vmul.f32 %v1106, 0.0012755102
  %v1171 = vsub.f32 %v18, %v1107
  %v1172 = vsub.f32 %v19, %v1107
  %v1173 = vsub.f32 %v20, %v1107
  %v1174 = vsub.f32 %v21, %v1107
  %v1175 = vsub.f32 %v22, %v1107
  %v1176 = vsub.f32 %v23, %v1107
  %v1177 = vsub.f32 %v24, %v1107
  %v1178 = vsub.f32 %v25, %v1108
  %v1179 = vsub.f32 %v26, %v1108
  %v1180 = vsub.f32 %v27, %v1108
  %v1181 = vsub.f32 %v28, %v1108
  %v1182 = vsub.f32 %v29, %v1108
  %v1183 = vsub.f32 %v30, %v1108
  %v1184 = vsub.f32 %v31, %v1108
  %v1185 = vsub.f32 %v32, %v1109
  %v1186 = vsub.f32 %v33, %v1109
  %v1187 = vsub.f32 %v34, %v1109
  %v1188 = vsub.f32 %v35, %v1109
  %v1189 = vsub.f32 %v36, %v1109
  %v1190 = vsub.f32 %v37, %v1109
  %v1191 = vsub.f32 %v38, %v1109
  %v1192 = vsub.f32 %v39, %v1110
  %v1193 = vsub.f32 %v40, %v1110
  %v1194 = vsub.f32 %v41, %v1110
  %v1195 = vsub.f32 %v42, %v1110
  %v1196 = vsub.f32 %v43, %v1110
  %v1197 = vsub.f32 %v44, %v1110
  %v1198 = vsub.f32 %v45, %v1110
  %v1199 = vsub.f32 %v46, %v1111
  %v1200 = vsub.f32 %v47, %v1111
  %v1201 = vsub.f32 %v48, %v1111
  %v1202 = vsub.f32 %v49, %v1111
  %v1203 = vsub.f32 %v50, %v1111
  %v1204 = vsub.f32 %v51, %v1111
  %v1205 = vsub.f32 %v52, %v1111
  %v1206 = vsub.f32 %v53, %v1112
  %v1207 = vsub.f32 %v54, %v1112
  %v1208 = vsub.f32 %v55, %v1112
  %v1209 = vsub.f32 %v56, %v1112
  %v1210 = vsub.f32 %v57, %v1112
  %v1211 = vsub.f32 %v58, %v1112
  %v1212 = vsub.f32 %v59, %v1112
  %v1213 = vsub.f32 %v60, %v1113
  %v1214 = vsub.f32 %v61, %v1113
  %v1215 = vsub.f32 %v62, %v1113
  %v1216 = vsub.f32 %v63, %v1113
  %v1217 = vsub.f32 %v64, %v1113
  %v1218 = vsub.f32 %v65, %v1113
  %v1219 = vsub.f32 %v66, %v1113
  %v1220 = vsub.f32 %v67, %v1114
  %v1221 = vsub.f32 %v68, %v1114
  %v1222 = vsub.f32 %v69, %v1114
  %v1223 = vsub.f32 %v70, %v1114
  %v1224 = vsub.f32 %v71, %v1114
  %v1225 = vsub.f32 %v72, %v1114
  %v1226 = vsub.f32 %v73, %v1114
  %v1227 = vsub.f32 %v74, %v1115
  %v1228 = vsub.f32 %v75, %v1115
  %v1229 = vsub.f32 %v76, %v1115
  %v1230 = vsub.f32 %v77, %v1115
  %v1231 = vsub.f32 %v78, %v1115
  %v1232 = vsub.f32 %v79, %v1115
  %v1233 = vsub.f32 %v80, %v1115
  %v1234 = vsub.f32 %v81, %v1116
  %v1235 = vsub.f32 %v82, %v1116
  %v1236 = vsub.f32 %v83, %v1116
  %v1237 = vsub.f32 %v84, %v1116
  %v1238 = vsub.f32 %v85, %v1116
  %v1239 = vsub.f32 %v86, %v1116
  %v1240 = vsub.f32 %v87, %v1116
  %v1241 = vsub.f32 %v88, %v1117
  %v1242 = vsub.f32 %v89, %v1117
  %v1243 = vsub.f32 %v90, %v1117
  %v1244 = vsub.f32 %v91, %v1117
  %v1245 = vsub.f32 %v92, %v1117
  %v1246 = vsub.f32 %v93, %v1117
  %v1247 = vsub.f32 %v94, %v1117
  %v1248 = vsub.f32 %v95, %v1118
  %v1249 = vsub.f32 %v96, %v1118
  %v1250 = vsub.f32 %v97, %v1118
  %v1251 = vsub.f32 %v98, %v1118
  %v1252 = vsub.f32 %v99, %v1118
  %v1253 = vsub.f32 %v100, %v1118
  %v1254 = vsub.f32 %v101, %v1118
  %v1255 = vsub.f32 %v102, %v1119
  %v1256 = vsub.f32 %v103, %v1119
  %v1257 = vsub.f32 %v104, %v1119
  %v1258 = vsub.f32 %v105, %v1119
  %v1259 = vsub.f32 %v106, %v1119
  %v1260 = vsub.f32 %v107, %v1119
  %v1261 = vsub.f32 %v108, %v1119
  %v1262 = vsub.f32 %v109, %v1120
  %v1263 = vsub.f32 %v110, %v1120
  %v1264 = vsub.f32 %v111, %v1120
  %v1265 = vsub.f32 %v112, %v1120
  %v1266 = vsub.f32 %v113, %v1120
  %v1267 = vsub.f32 %v114, %v1120
  %v1268 = vsub.f32 %v115, %v1120
  %v1269 = vsub.f32 %v116, %v1121
  %v1270 = vsub.f32 %v117, %v1121
  %v1271 = vsub.f32 %v118, %v1121
  %v1272 = vsub.f32 %v119, %v1121
  %v1273 = vsub.f32 %v120, %v1121
  %v1274 = vsub.f32 %v121, %v1121
  %v1275 = vsub.f32 %v122, %v1121
  %v1276 = vsub.f32 %v123, %v1122
  %v1277 = vsub.f32 %v124, %v1122
  %v1278 = vsub.f32 %v125, %v1122
  %v1279 = vsub.f32 %v126, %v1122
  %v1280 = vsub.f32 %v127, %v1122
  %v1281 = vsub.f32 %v128, %v1122
  %v1282 = vsub.f32 %v129, %v1122
  %v1283 = vsub.f32 %v130, %v1123
  %v1284 = vsub.f32 %v131, %v1123
  %v1285 = vsub.f32 %v132, %v1123
  %v1286 = vsub.f32 %v133, %v1123
  %v1287 = vsub.f32 %v134, %v1123
  %v1288 = vsub.f32 %v135, %v1123
  %v1289 = vsub.f32 %v136, %v1123
  %v1290 = vsub.f32 %v137, %v1124
  %v1291 = vsub.f32 %v138, %v1124
  %v1292 = vsub.f32 %v139, %v1124
  %v1293 = vsub.f32 %v140, %v1124
  %v1294 = vsub.f32 %v141, %v1124
  %v1295 = vsub.f32 %v142, %v1124
  %v1296 = vsub.f32 %v143, %v1124
  %v1297 = vsub.f32 %v144, %v1125
  %v1298 = vsub.f32 %v145, %v1125
  %v1299 = vsub.f32 %v146, %v1125
  %v1300 = vsub.f32 %v147, %v1125
  %v1301 = vsub.f32 %v148, %v1125
  %v1302 = vsub.f32 %v149, %v1125
  %v1303 = vsub.f32 %v150, %v1125
  %v1304 = vsub.f32 %v151, %v1126
  %v1305 = vsub.f32 %v152, %v1126
  %v1306 = vsub.f32 %v153, %v1126
  %v1307 = vsub.f32 %v154, %v1126
  %v1308 = vsub.f32 %v155, %v1126
  %v1309 = vsub.f32 %v156, %v1126
  %v1310 = vsub.f32 %v157, %v1126
  %v1311 = vsub.f32 %v158, %v1127
  %v1312 = vsub.f32 %v159, %v1127
  %v1313 = vsub.f32 %v160, %v1127
  %v1314 = vsub.f32 %v161, %v1127
  %v1315 = vsub.f32 %v162, %v1127
  %v1316 = vsub.f32 %v163, %v1127
  %v1317 = vsub.f32 %v164, %v1127
  %v1318 = vsub.f32 %v165, %v1128
  %v1319 = vsub.f32 %v166, %v1128
  %v1320 = vsub.f32 %v167, %v1128
  %v1321 = vsub.f32 %v168, %v1128
  %v1322 = vsub.f32 %v169, %v1128
  %v1323 = vsub.f32 %v170, %v1128
  %v1324 = vsub.f32 %v171, %v1128
  %v1325 = vsub.f32 %v172, %v1129
  %v1326 = vsub.f32 %v173, %v1129
  %v1327 = vsub.f32 %v174, %v1129
  %v1328 = vsub.f32 %v175, %v1129
  %v1329 = vsub.f32 %v176, %v1129
  %v1330 = vsub.f32 %v177, %v1129
  %v1331 = vsub.f32 %v178, %v1129
  %v1332 = vsub.f32 %v179, %v1130
  %v1333 = vsub.f32 %v180, %v1130
  %v1334 = vsub.f32 %v181, %v1130
  %v1335 = vsub.f32 %v182, %v1130
  %v1336 = vsub.f32 %v183, %v1130
  %v1337 = vsub.f32 %v184, %v1130
  %v1338 = vsub.f32 %v185, %v1130
  %v1339 = vsub.f32 %v186, %v1131
  %v1340 = vsub.f32 %v187, %v1131
  %v1341 = vsub.f32 %v188, %v1131
  %v1342 = vsub.f32 %v189, %v1131
  %v1343 = vsub.f32 %v190, %v1131
  %v1344 = vsub.f32 %v191, %v1131
  %v1345 = vsub.f32 %v192, %v1131
  %v1346 = vsub.f32 %v193, %v1132
  %v1347 = vsub.f32 %v194, %v1132
  %v1348 = vsub.f32 %v195, %v1132
  %v1349 = vsub.f32 %v196, %v1132
  %v1350 = vsub.f32 %v197, %v1132
  %v1351 = vsub.f32 %v198, %v1132
  %v1352 = vsub.f32 %v199, %v1132
  %v1353 = vsub.f32 %v200, %v1133
  %v1354 = vsub.f32 %v201, %v1133
  %v1355 = vsub.f32 %v202, %v1133
  %v1356 = vsub.f32 %v203, %v1133
  %v1357 = vsub.f32 %v204, %v1133
  %v1358 = vsub.f32 %v205, %v1133
  %v1359 = vsub.f32 %v206, %v1133
  %v1360 = vsub.f32 %v207, %v1134
  %v1361 = vsub.f32 %v208, %v1134
  %v1362 = vsub.f32 %v209, %v1134
  %v1363 = vsub.f32 %v210, %v1134
  %v1364 = vsub.f32 %v211, %v1134
  %v1365 = vsub.f32 %v212, %v1134
  %v1366 = vsub.f32 %v213, %v1134
  %v1367 = vsub.f32 %v214, %v1135
  %v1368 = vsub.f32 %v215, %v1135
  %v1369 = vsub.f32 %v216, %v1135
  %v1370 = vsub.f32 %v217, %v1135
  %v1371 = vsub.f32 %v218, %v1135
  %v1372 = vsub.f32 %v219, %v1135
  %v1373 = vsub.f32 %v220, %v1135
  %v1374 = vsub.f32 %v221, %v1136
  %v1375 = vsub.f32 %v222, %v1136
  %v1376 = vsub.f32 %v223, %v1136
  %v1377 = vsub.f32 %v224, %v1136
  %v1378 = vsub.f32 %v225, %v1136
  %v1379 = vsub.f32 %v226, %v1136
  %v1380 = vsub.f32 %v227, %v1136
  %v1381 = vsub.f32 %v228, %v1137
  %v1382 = vsub.f32 %v229, %v1137
  %v1383 = vsub.f32 %v230, %v1137
  %v1384 = vsub.f32 %v231, %v1137
  %v1385 = vsub.f32 %v232, %v1137
  %v1386 = vsub.f32 %v233, %v1137
  %v1387 = vsub.f32 %v234, %v1137
  %v1388 = vsub.f32 %v235, %v1138
  %v1389 = vsub.f32 %v236, %v1138
  %v1390 = vsub.f32 %v237, %v1138
  %v1391 = vsub.f32 %v238, %v1138
  %v1392 = vsub.f32 %v239, %v1138
  %v1393 = vsub.f32 %v240, %v1138
  %v1394 = vsub.f32 %v241, %v1138
  %v1395 = vsub.f32 %v242, %v1139
  %v1396 = vsub.f32 %v243, %v1139
  %v1397 = vsub.f32 %v244, %v1139
  %v1398 = vsub.f32 %v245, %v1139
  %v1399 = vsub.f32 %v246, %v1139
  %v1400 = vsub.f32 %v247, %v1139
  %v1401 = vsub.f32 %v248, %v1139
  %v1402 = vsub.f32 %v249, %v1140
  %v1403 = vsub.f32 %v250, %v1140
  %v1404 = vsub.f32 %v251, %v1140
  %v1405 = vsub.f32 %v252, %v1140
  %v1406 = vsub.f32 %v253, %v1140
  %v1407 = vsub.f32 %v254, %v1140
  %v1408 = vsub.f32 %v255, %v1140
  %v1409 = vsub.f32 %v256, %v1141
  %v1410 = vsub.f32 %v257, %v1141
  %v1411 = vsub.f32 %v258, %v1141
  %v1412 = vsub.f32 %v259, %v1141
  %v1413 = vsub.f32 %v260, %v1141
  %v1414 = vsub.f32 %v261, %v1141
  %v1415 = vsub.f32 %v262, %v1141
  %v1416 = vsub.f32 %v263, %v1142
  %v1417 = vsub.f32 %v264, %v1142
  %v1418 = vsub.f32 %v265, %v1142
  %v1419 = vsub.f32 %v266, %v1142
  %v1420 = vsub.f32 %v267, %v1142
  %v1421 = vsub.f32 %v268, %v1142
  %v1422 = vsub.f32 %v269, %v1142
  %v1423 = vsub.f32 %v270, %v1143
  %v1424 = vsub.f32 %v271, %v1143
  %v1425 = vsub.f32 %v272, %v1143
  %v1426 = vsub.f32 %v273, %v1143
  %v1427 = vsub.f32 %v274, %v1143
  %v1428 = vsub.f32 %v275, %v1143
  %v1429 = vsub.f32 %v276, %v1143
  %v1430 = vsub.f32 %v277, %v1144
  %v1431 = vsub.f32 %v278, %v1144
  %v1432 = vsub.f32 %v279, %v1144
  %v1433 = vsub.f32 %v280, %v1144
  %v1434 = vsub.f32 %v281, %v1144
  %v1435 = vsub.f32 %v282, %v1144
  %v1436 = vsub.f32 %v283, %v1144
  %v1437 = vsub.f32 %v284, %v1145
  %v1438 = vsub.f32 %v285, %v1145
  %v1439 = vsub.f32 %v286, %v1145
  %v1440 = vsub.f32 %v287, %v1145
  %v1441 = vsub.f32 %v288, %v1145
  %v1442 = vsub.f32 %v289, %v1145
  %v1443 = vsub.f32 %v290, %v1145
  %v1444 = vsub.f32 %v291, %v1146
  %v1445 = vsub.f32 %v292, %v1146
  %v1446 = vsub.f32 %v293, %v1146
  %v1447 = vsub.f32 %v294, %v1146
  %v1448 = vsub.f32 %v295, %v1146
  %v1449 = vsub.f32 %v296, %v1146
  %v1450 = vsub.f32 %v297, %v1146
  %v1451 = vsub.f32 %v298, %v1147
  %v1452 = vsub.f32 %v299, %v1147
  %v1453 = vsub.f32 %v300, %v1147
  %v1454 = vsub.f32 %v301, %v1147
  %v1455 = vsub.f32 %v302, %v1147
  %v1456 = vsub.f32 %v303, %v1147
  %v1457 = vsub.f32 %v304, %v1147
  %v1458 = vsub.f32 %v305, %v1148
  %v1459 = vsub.f32 %v306, %v1148
  %v1460 = vsub.f32 %v307, %v1148
  %v1461 = vsub.f32 %v308, %v1148
  %v1462 = vsub.f32 %v309, %v1148
  %v1463 = vsub.f32 %v310, %v1148
  %v1464 = vsub.f32 %v311, %v1148
  %v1465 = vsub.f32 %v312, %v1149
  %v1466 = vsub.f32 %v313, %v1149
  %v1467 = vsub.f32 %v314, %v1149
  %v1468 = vsub.f32 %v315, %v1149
  %v1469 = vsub.f32 %v316, %v1149
  %v1470 = vsub.f32 %v317, %v1149
  %v1471 = vsub.f32 %v318, %v1149
  %v1472 = vsub.f32 %v319, %v1150
  %v1473 = vsub.f32 %v320, %v1150
  %v1474 = vsub.f32 %v321, %v1150
  %v1475 = vsub.f32 %v322, %v1150
  %v1476 = vsub.f32 %v323, %v1150
  %v1477 = vsub.f32 %v324, %v1150
  %v1478 = vsub.f32 %v325, %v1150
  %v1479 = vsub.f32 %v326, %v1151
  %v1480 = vsub.f32 %v327, %v1151
  %v1481 = vsub.f32 %v328, %v1151
  %v1482 = vsub.f32 %v329, %v1151
  %v1483 = vsub.f32 %v330, %v1151
  %v1484 = vsub.f32 %v331, %v1151
  %v1485 = vsub.f32 %v332, %v1151
  %v1486 = vsub.f32 %v333, %v1152
  %v1487 = vsub.f32 %v334, %v1152
  %v1488 = vsub.f32 %v335, %v1152
  %v1489 = vsub.f32 %v336, %v1152
  %v1490 = vsub.f32 %v337, %v1152
  %v1491 = vsub.f32 %v338, %v1152
  %v1492 = vsub.f32 %v339, %v1152
  %v1493 = vsub.f32 %v340, %v1153
  %v1494 = vsub.f32 %v341, %v1153
  %v1495 = vsub.f32 %v342, %v1153
  %v1496 = vsub.f32 %v343, %v1153
  %v1497 = vsub.f32 %v344, %v1153
  %v1498 = vsub.f32 %v345, %v1153
  %v1499 = vsub.f32 %v346, %v1153
  %v1500 = vsub.f32 %v347, %v1154
  %v1501 = vsub.f32 %v348, %v1154
  %v1502 = vsub.f32 %v349, %v1154
  %v1503 = vsub.f32 %v350, %v1154
  %v1504 = vsub.f32 %v351, %v1154
  %v1505 = vsub.f32 %v352, %v1154
  %v1506 = vsub.f32 %v353, %v1154
  %v1507 = vsub.f32 %v354, %v1155
  %v1508 = vsub.f32 %v355, %v1155
  %v1509 = vsub.f32 %v356, %v1155
  %v1510 = vsub.f32 %v357, %v1155
  %v1511 = vsub.f32 %v358, %v1155
  %v1512 = vsub.f32 %v359, %v1155
  %v1513 = vsub.f32 %v360, %v1155
  %v1514 = vsub.f32 %v361, %v1156
  %v1515 = vsub.f32 %v362, %v1156
  %v1516 = vsub.f32 %v363, %v1156
  %v1517 = vsub.f32 %v364, %v1156
  %v1518 = vsub.f32 %v365, %v1156
  %v1519 = vsub.f32 %v366, %v1156
  %v1520 = vsub.f32 %v367, %v1156
  %v1521 = vsub.f32 %v368, %v1157
  %v1522 = vsub.f32 %v369, %v1157
  %v1523 = vsub.f32 %v370, %v1157
  %v1524 = vsub.f32 %v371, %v1157
  %v1525 = vsub.f32 %v372, %v1157
  %v1526 = vsub.f32 %v373, %v1157
  %v1527 = vsub.f32 %v374, %v1157
  %v1528 = vsub.f32 %v375, %v1158
  %v1529 = vsub.f32 %v376, %v1158
  %v1530 = vsub.f32 %v377, %v1158
  %v1531 = vsub.f32 %v378, %v1158
  %v1532 = vsub.f32 %v379, %v1158
  %v1533 = vsub.f32 %v380, %v1158
  %v1534 = vsub.f32 %v381, %v1158
  %v1535 = vsub.f32 %v382, %v1159
  %v1536 = vsub.f32 %v383, %v1159
  %v1537 = vsub.f32 %v384, %v1159
  %v1538 = vsub.f32 %v385, %v1159
  %v1539 = vsub.f32 %v386, %v1159
  %v1540 = vsub.f32 %v387, %v1159
  %v1541 = vsub.f32 %v388, %v1159
  %v1542 = vsub.f32 %v389, %v1160
  %v1543 = vsub.f32 %v390, %v1160
  %v1544 = vsub.f32 %v391, %v1160
  %v1545 = vsub.f32 %v392, %v1160
  %v1546 = vsub.f32 %v393, %v1160
  %v1547 = vsub.f32 %v394, %v1160
  %v1548 = vsub.f32 %v395, %v1160
  %v1549 = vsub.f32 %v396, %v1161
  %v1550 = vsub.f32 %v397, %v1161
  %v1551 = vsub.f32 %v398, %v1161
  %v1552 = vsub.f32 %v399, %v1161
  %v1553 = vsub.f32 %v400, %v1161
  %v1554 = vsub.f32 %v401, %v1161
  %v1555 = vsub.f32 %v402, %v1161
  %v1556 = vsub.f32 %v403, %v1162
  %v1557 = vsub.f32 %v404, %v1162
  %v1558 = vsub.f32 %v405, %v1162
  %v1559 = vsub.f32 %v406, %v1162
  %v1560 = vsub.f32 %v407, %v1162
  %v1561 = vsub.f32 %v408, %v1162
  %v1562 = vsub.f32 %v409, %v1162
  %v1563 = vsub.f32 %v410, %v1163
  %v1564 = vsub.f32 %v411, %v1163
  %v1565 = vsub.f32 %v412, %v1163
  %v1566 = vsub.f32 %v413, %v1163
  %v1567 = vsub.f32 %v414, %v1163
  %v1568 = vsub.f32 %v415, %v1163
  %v1569 = vsub.f32 %v416, %v1163
  %v1570 = vsub.f32 %v417, %v1164
  %v1571 = vsub.f32 %v418, %v1164
  %v1572 = vsub.f32 %v419, %v1164
  %v1573 = vsub.f32 %v420, %v1164
  %v1574 = vsub.f32 %v421, %v1164
  %v1575 = vsub.f32 %v422, %v1164
  %v1576 = vsub.f32 %v423, %v1164
  %v1577 = vsub.f32 %v424, %v1165
  %v1578 = vsub.f32 %v425, %v1165
  %v1579 = vsub.f32 %v426, %v1165
  %v1580 = vsub.f32 %v427, %v1165
  %v1581 = vsub.f32 %v428, %v1165
  %v1582 = vsub.f32 %v429, %v1165
  %v1583 = vsub.f32 %v430, %v1165
  %v1584 = vsub.f32 %v431, %v1166
  %v1585 = vsub.f32 %v432, %v1166
  %v1586 = vsub.f32 %v433, %v1166
  %v1587 = vsub.f32 %v434, %v1166
  %v1588 = vsub.f32 %v435, %v1166
  %v1589 = vsub.f32 %v436, %v1166
  %v1590 = vsub.f32 %v437, %v1166
  %v1591 = vsub.f32 %v438, %v1167
  %v1592 = vsub.f32 %v439, %v1167
  %v1593 = vsub.f32 %v440, %v1167
  %v1594 = vsub.f32 %v441, %v1167
  %v1595 = vsub.f32 %v442, %v1167
  %v1596 = vsub.f32 %v443, %v1167
  %v1597 = vsub.f32 %v444, %v1167
  %v1598 = vsub.f32 %v445, %v1168
  %v1599 = vsub.f32 %v446, %v1168
  %v1600 = vsub.f32 %v447, %v1168
  %v1601 = vsub.f32 %v448, %v1168
  %v1602 = vsub.f32 %v449, %v1168
  %v1603 = vsub.f32 %v450, %v1168
  %v1604 = vsub.f32 %v451, %v1168
  %v1605 = vsub.f32 %v452, %v1169
  %v1606 = vsub.f32 %v453, %v1169
  %v1607 = vsub.f32 %v454, %v1169
  %v1608 = vsub.f32 %v455, %v1169
  %v1609 = vsub.f32 %v456, %v1169
  %v1610 = vsub.f32 %v457, %v1169
  %v1611 = vsub.f32 %v458, %v1169
  %v1612 = vsub.f32 %v459, %v1170
  %v1613 = vsub.f32 %v460, %v1170
  %v1614 = vsub.f32 %v461, %v1170
  %v1615 = vsub.f32 %v462, %v1170
  %v1616 = vsub.f32 %v463, %v1170
  %v1617 = vsub.f32 %v464, %v1170
  %v1618 = vsub.f32 %v465, %v1170
  %v1619 = vmul.f32 %v1171, %v1171
  %v1620 = vmul.f32 %v1172, %v1172
  %v1621 = vmul.f32 %v1173, %v1173
  %v1622 = vmul.f32 %v1174, %v1174
  %v1623 = vmul.f32 %v1175, %v1175
  %v1624 = vmul.f32 %v1176, %v1176
  %v1625 = vmul.f32 %v1177, %v1177
  %v1626 = vmul.f32 %v1178, %v1178
  %v1627 = vmul.f32 %v1179, %v1179
  %v1628 = vmul.f32 %v1180, %v1180
  %v1629 = vmul.f32 %v1181, %v1181
  %v1630 = vmul.f32 %v1182, %v1182
  %v1631 = vmul.f32 %v1183, %v1183
  %v1632 = vmul.f32 %v1184, %v1184
  %v1633 = vmul.f32 %v1185, %v1185
  %v1634 = vmul.f32 %v1186, %v1186
  %v1635 = vmul.f32 %v1187, %v1187
  %v1636 = vmul.f32 %v1188, %v1188
  %v1637 = vmul.f32 %v1189, %v1189
  %v1638 = vmul.f32 %v1190, %v1190
  %v1639 = vmul.f32 %v1191, %v1191
  %v1640 = vmul.f32 %v1192, %v1192
  %v1641 = vmul.f32 %v1193, %v1193
  %v1642 = vmul.f32 %v1194, %v1194
  %v1643 = vmul.f32 %v1195, %v1195
  %v1644 = vmul.f32 %v1196, %v1196
  %v1645 = vmul.f32 %v1197, %v1197
  %v1646 = vmul.f32 %v1198, %v1198
  %v1647 = vmul.f32 %v1199, %v1199
  %v1648 = vmul.f32 %v1200, %v1200
  %v1649 = vmul.f32 %v1201, %v1201
  %v1650 = vmul.f32 %v1202, %v1202
  %v1651 = vmul.f32 %v1203, %v1203
  %v1652 = vmul.f32 %v1204, %v1204
  %v1653 = vmul.f32 %v1205, %v1205
  %v1654 = vmul.f32 %v1206, %v1206
  %v1655 = vmul.f32 %v1207, %v1207
  %v1656 = vmul.f32 %v1208, %v1208
  %v1657 = vmul.f32 %v1209, %v1209
  %v1658 = vmul.f32 %v1210, %v1210
  %v1659 = vmul.f32 %v1211, %v1211
  %v1660 = vmul.f32 %v1212, %v1212
  %v1661 = vmul.f32 %v1213, %v1213
  %v1662 = vmul.f32 %v1214, %v1214
  %v1663 = vmul.f32 %v1215, %v1215
  %v1664 = vmul.f32 %v1216, %v1216
  %v1665 = vmul.f32 %v1217, %v1217
  %v1666 = vmul.f32 %v1218, %v1218
  %v1667 = vmul.f32 %v1219, %v1219
  %v1668 = vmul.f32 %v1220, %v1220
  %v1669 = vmul.f32 %v1221, %v1221
  %v1670 = vmul.f32 %v1222, %v1222
  %v1671 = vmul.f32 %v1223, %v1223
  %v1672 = vmul.f32 %v1224, %v1224
  %v1673 = vmul.f32 %v1225, %v1225
  %v1674 = vmul.f32 %v1226, %v1226
  %v1675 = vmul.f32 %v1227, %v1227
  %v1676 = vmul.f32 %v1228, %v1228
  %v1677 = vmul.f32 %v1229, %v1229
  %v1678 = vmul.f32 %v1230, %v1230
  %v1679 = vmul.f32 %v1231, %v1231
  %v1680 = vmul.f32 %v1232, %v1232
  %v1681 = vmul.f32 %v1233, %v1233
  %v1682 = vmul.f32 %v1234, %v1234
  %v1683 = vmul.f32 %v1235, %v1235
  %v1684 = vmul.f32 %v1236, %v1236
  %v1685 = vmul.f32 %v1237, %v1237
  %v1686 = vmul.f32 %v1238, %v1238
  %v1687 = vmul.f32 %v1239, %v1239
  %v1688 = vmul.f32 %v1240, %v1240
  %v1689 = vmul.f32 %v1241, %v1241
  %v1690 = vmul.f32 %v1242, %v1242
  %v1691 = vmul.f32 %v1243, %v1243
  %v1692 = vmul.f32 %v1244, %v1244
  %v1693 = vmul.f32 %v1245, %v1245
  %v1694 = vmul.f32 %v1246, %v1246
  %v1695 = vmul.f32 %v1247, %v1247
  %v1696 = vmul.f32 %v1248, %v1248
  %v1697 = vmul.f32 %v1249, %v1249
  %v1698 = vmul.f32 %v1250, %v1250
  %v1699 = vmul.f32 %v1251, %v1251
  %v1700 = vmul.f32 %v1252, %v1252
  %v1701 = vmul.f32 %v1253, %v1253
  %v1702 = vmul.f32 %v1254, %v1254
  %v1703 = vmul.f32 %v1255, %v1255
  %v1704 = vmul.f32 %v1256, %v1256
  %v1705 = vmul.f32 %v1257, %v1257
  %v1706 = vmul.f32 %v1258, %v1258
  %v1707 = vmul.f32 %v1259, %v1259
  %v1708 = vmul.f32 %v1260, %v1260
  %v1709 = vmul.f32 %v1261, %v1261
  %v1710 = vmul.f32 %v1262, %v1262
  %v1711 = vmul.f32 %v1263, %v1263
  %v1712 = vmul.f32 %v1264, %v1264
  %v1713 = vmul.f32 %v1265, %v1265
  %v1714 = vmul.f32 %v1266, %v1266
  %v1715 = vmul.f32 %v1267, %v1267
  %v1716 = vmul.f32 %v1268, %v1268
  %v1717 = vmul.f32 %v1269, %v1269
  %v1718 = vmul.f32 %v1270, %v1270
  %v1719 = vmul.f32 %v1271, %v1271
  %v1720 = vmul.f32 %v1272, %v1272
  %v1721 = vmul.f32 %v1273, %v1273
  %v1722 = vmul.f32 %v1274, %v1274
  %v1723 = vmul.f32 %v1275, %v1275
  %v1724 = vmul.f32 %v1276, %v1276
  %v1725 = vmul.f32 %v1277, %v1277
  %v1726 = vmul.f32 %v1278, %v1278
  %v1727 = vmul.f32 %v1279, %v1279
  %v1728 = vmul.f32 %v1280, %v1280
  %v1729 = vmul.f32 %v1281, %v1281
  %v1730 = vmul.f32 %v1282, %v1282
  %v1731 = vmul.f32 %v1283, %v1283
  %v1732 = vmul.f32 %v1284, %v1284
  %v1733 = vmul.f32 %v1285, %v1285
  %v1734 = vmul.f32 %v1286, %v1286
  %v1735 = vmul.f32 %v1287, %v1287
  %v1736 = vmul.f32 %v1288, %v1288
  %v1737 = vmul.f32 %v1289, %v1289
  %v1738 = vmul.f32 %v1290, %v1290
  %v1739 = vmul.f32 %v1291, %v1291
  %v1740 = vmul.f32 %v1292, %v1292
  %v1741 = vmul.f32 %v1293, %v1293
  %v1742 = vmul.f32 %v1294, %v1294
  %v1743 = vmul.f32 %v1295, %v1295
  %v1744 = vmul.f32 %v1296, %v1296
  %v1745 = vmul.f32 %v1297, %v1297
  %v1746 = vmul.f32 %v1298, %v1298
  %v1747 = vmul.f32 %v1299, %v1299
  %v1748 = vmul.f32 %v1300, %v1300
  %v1749 = vmul.f32 %v1301, %v1301
  %v1750 = vmul.f32 %v1302, %v1302
  %v1751 = vmul.f32 %v1303, %v1303
  %v1752 = vmul.f32 %v1304, %v1304
  %v1753 = vmul.f32 %v1305, %v1305
  %v1754 = vmul.f32 %v1306, %v1306
  %v1755 = vmul.f32 %v1307, %v1307
  %v1756 = vmul.f32 %v1308, %v1308
  %v1757 = vmul.f32 %v1309, %v1309
  %v1758 = vmul.f32 %v1310, %v1310
  %v1759 = vmul.f32 %v1311, %v1311
  %v1760 = vmul.f32 %v1312, %v1312
  %v1761 = vmul.f32 %v1313, %v1313
  %v1762 = vmul.f32 %v1314, %v1314
  %v1763 = vmul.f32 %v1315, %v1315
  %v1764 = vmul.f32 %v1316, %v1316
  %v1765 = vmul.f32 %v1317, %v1317
  %v1766 = vmul.f32 %v1318, %v1318
  %v1767 = vmul.f32 %v1319, %v1319
  %v1768 = vmul.f32 %v1320, %v1320
  %v1769 = vmul.f32 %v1321, %v1321
  %v1770 = vmul.f32 %v1322, %v1322
  %v1771 = vmul.f32 %v1323, %v1323
  %v1772 = vmul.f32 %v1324, %v1324
  %v1773 = vmul.f32 %v1325, %v1325
  %v1774 = vmul.f32 %v1326, %v1326
  %v1775 = vmul.f32 %v1327, %v1327
  %v1776 = vmul.f32 %v1328, %v1328
  %v1777 = vmul.f32 %v1329, %v1329
  %v1778 = vmul.f32 %v1330, %v1330
  %v1779 = vmul.f32 %v1331, %v1331
  %v1780 = vmul.f32 %v1332, %v1332
  %v1781 = vmul.f32 %v1333, %v1333
  %v1782 = vmul.f32 %v1334, %v1334
  %v1783 = vmul.f32 %v1335, %v1335
  %v1784 = vmul.f32 %v1336, %v1336
  %v1785 = vmul.f32 %v1337, %v1337
  %v1786 = vmul.f32 %v1338, %v1338
  %v1787 = vmul.f32 %v1339, %v1339
  %v1788 = vmul.f32 %v1340, %v1340
  %v1789 = vmul.f32 %v1341, %v1341
  %v1790 = vmul.f32 %v1342, %v1342
  %v1791 = vmul.f32 %v1343, %v1343
  %v1792 = vmul.f32 %v1344, %v1344
  %v1793 = vmul.f32 %v1345, %v1345
  %v1794 = vmul.f32 %v1346, %v1346
  %v1795 = vmul.f32 %v1347, %v1347
  %v1796 = vmul.f32 %v1348, %v1348
  %v1797 = vmul.f32 %v1349, %v1349
  %v1798 = vmul.f32 %v1350, %v1350
  %v1799 = vmul.f32 %v1351, %v1351
  %v1800 = vmul.f32 %v1352, %v1352
  %v1801 = vmul.f32 %v1353, %v1353
  %v1802 = vmul.f32 %v1354, %v1354
  %v1803 = vmul.f32 %v1355, %v1355
  %v1804 = vmul.f32 %v1356, %v1356
  %v1805 = vmul.f32 %v1357, %v1357
  %v1806 = vmul.f32 %v1358, %v1358
  %v1807 = vmul.f32 %v1359, %v1359
  %v1808 = vmul.f32 %v1360, %v1360
  %v1809 = vmul.f32 %v1361, %v1361
  %v1810 = vmul.f32 %v1362, %v1362
  %v1811 = vmul.f32 %v1363, %v1363
  %v1812 = vmul.f32 %v1364, %v1364
  %v1813 = vmul.f32 %v1365, %v1365
  %v1814 = vmul.f32 %v1366, %v1366
  %v1815 = vmul.f32 %v1367, %v1367
  %v1816 = vmul.f32 %v1368, %v1368
  %v1817 = vmul.f32 %v1369, %v1369
  %v1818 = vmul.f32 %v1370, %v1370
  %v1819 = vmul.f32 %v1371, %v1371
  %v1820 = vmul.f32 %v1372, %v1372
  %v1821 = vmul.f32 %v1373, %v1373
  %v1822 = vmul.f32 %v1374, %v1374
  %v1823 = vmul.f32 %v1375, %v1375
  %v1824 = vmul.f32 %v1376, %v1376
  %v1825 = vmul.f32 %v1377, %v1377
  %v1826 = vmul.f32 %v1378, %v1378
  %v1827 = vmul.f32 %v1379, %v1379
  %v1828 = vmul.f32 %v1380, %v1380
  %v1829 = vmul.f32 %v1381, %v1381
  %v1830 = vmul.f32 %v1382, %v1382
  %v1831 = vmul.f32 %v1383, %v1383
  %v1832 = vmul.f32 %v1384, %v1384
  %v1833 = vmul.f32 %v1385, %v1385
  %v1834 = vmul.f32 %v1386, %v1386
  %v1835 = vmul.f32 %v1387, %v1387
  %v1836 = vmul.f32 %v1388, %v1388
  %v1837 = vmul.f32 %v1389, %v1389
  %v1838 = vmul.f32 %v1390, %v1390
  %v1839 = vmul.f32 %v1391, %v1391
  %v1840 = vmul.f32 %v1392, %v1392
  %v1841 = vmul.f32 %v1393, %v1393
  %v1842 = vmul.f32 %v1394, %v1394
  %v1843 = vmul.f32 %v1395, %v1395
  %v1844 = vmul.f32 %v1396, %v1396
  %v1845 = vmul.f32 %v1397, %v1397
  %v1846 = vmul.f32 %v1398, %v1398
  %v1847 = vmul.f32 %v1399, %v1399
  %v1848 = vmul.f32 %v1400, %v1400
  %v1849 = vmul.f32 %v1401, %v1401
  %v1850 = vmul.f32 %v1402, %v1402
  %v1851 = vmul.f32 %v1403, %v1403
  %v1852 = vmul.f32 %v1404, %v1404
  %v1853 = vmul.f32 %v1405, %v1405
  %v1854 = vmul.f32 %v1406, %v1406
  %v1855 = vmul.f32 %v1407, %v1407
  %v1856 = vmul.f32 %v1408, %v1408
  %v1857 = vmul.f32 %v1409, %v1409
  %v1858 = vmul.f32 %v1410, %v1410
  %v1859 = vmul.f32 %v1411, %v1411
  %v1860 = vmul.f32 %v1412, %v1412
  %v1861 = vmul.f32 %v1413, %v1413
  %v1862 = vmul.f32 %v1414, %v1414
  %v1863 = vmul.f32 %v1415, %v1415
  %v1864 = vmul.f32 %v1416, %v1416
  %v1865 = vmul.f32 %v1417, %v1417
  %v1866 = vmul.f32 %v1418, %v1418
  %v1867 = vmul.f32 %v1419, %v1419
  %v1868 = vmul.f32 %v1420, %v1420
  %v1869 = vmul.f32 %v1421, %v1421
  %v1870 = vmul.f32 %v1422, %v1422
  %v1871 = vmul.f32 %v1423, %v1423
  %v1872 = vmul.f32 %v1424, %v1424
  %v1873 = vmul.f32 %v1425, %v1425
  %v1874 = vmul.f32 %v1426, %v1426
  %v1875 = vmul.f32 %v1427, %v1427
  %v1876 = vmul.f32 %v1428, %v1428
  %v1877 = vmul.f32 %v1429, %v1429
  %v1878 = vmul.f32 %v1430, %v1430
  %v1879 = vmul.f32 %v1431, %v1431
  %v1880 = vmul.f32 %v1432, %v1432
  %v1881 = vmul.f32 %v1433, %v1433
  %v1882 = vmul.f32 %v1434, %v1434
  %v1883 = vmul.f32 %v1435, %v1435
  %v1884 = vmul.f32 %v1436, %v1436
  %v1885 = vmul.f32 %v1437, %v1437
  %v1886 = vmul.f32 %v1438, %v1438
  %v1887 = vmul.f32 %v1439, %v1439
  %v1888 = vmul.f32 %v1440, %v1440
  %v1889 = vmul.f32 %v1441, %v1441
  %v1890 = vmul.f32 %v1442, %v1442
  %v1891 = vmul.f32 %v1443, %v1443
  %v1892 = vmul.f32 %v1444, %v1444
  %v1893 = vmul.f32 %v1445, %v1445
  %v1894 = vmul.f32 %v1446, %v1446
  %v1895 = vmul.f32 %v1447, %v1447
  %v1896 = vmul.f32 %v1448, %v1448
  %v1897 = vmul.f32 %v1449, %v1449
  %v1898 = vmul.f32 %v1450, %v1450
  %v1899 = vmul.f32 %v1451, %v1451
  %v1900 = vmul.f32 %v1452, %v1452
  %v1901 = vmul.f32 %v1453, %v1453
  %v1902 = vmul.f32 %v1454, %v1454
  %v1903 = vmul.f32 %v1455, %v1455
  %v1904 = vmul.f32 %v1456, %v1456
  %v1905 = vmul.f32 %v1457, %v1457
  %v1906 = vmul.f32 %v1458, %v1458
  %v1907 = vmul.f32 %v1459, %v1459
  %v1908 = vmul.f32 %v1460, %v1460
  %v1909 = vmul.f32 %v1461, %v1461
  %v1910 = vmul.f32 %v1462, %v1462
  %v1911 = vmul.f32 %v1463, %v1463
  %v1912 = vmul.f32 %v1464, %v1464
  %v1913 = vmul.f32 %v1465, %v1465
  %v1914 = vmul.f32 %v1466, %v1466
  %v1915 = vmul.f32 %v1467, %v1467
  %v1916 = vmul.f32 %v1468, %v1468
  %v1917 = vmul.f32 %v1469, %v1469
  %v1918 = vmul.f32 %v1470, %v1470
  %v1919 = vmul.f32 %v1471, %v1471
  %v1920 = vmul.f32 %v1472, %v1472
  %v1921 = vmul.f32 %v1473, %v1473
  %v1922 = vmul.f32 %v1474, %v1474
  %v1923 = vmul.f32 %v1475, %v1475
  %v1924 = vmul.f32 %v1476, %v1476
  %v1925 = vmul.f32 %v1477, %v1477
  %v1926 = vmul.f32 %v1478, %v1478
  %v1927 = vmul.f32 %v1479, %v1479
  %v1928 = vmul.f32 %v1480, %v1480
  %v1929 = vmul.f32 %v1481, %v1481
  %v1930 = vmul.f32 %v1482, %v1482
  %v1931 = vmul.f32 %v1483, %v1483
  %v1932 = vmul.f32 %v1484, %v1484
  %v1933 = vmul.f32 %v1485, %v1485
  %v1934 = vmul.f32 %v1486, %v1486
  %v1935 = vmul.f32 %v1487, %v1487
  %v1936 = vmul.f32 %v1488, %v1488
  %v1937 = vmul.f32 %v1489, %v1489
  %v1938 = vmul.f32 %v1490, %v1490
  %v1939 = vmul.f32 %v1491, %v1491
  %v1940 = vmul.f32 %v1492, %v1492
  %v1941 = vmul.f32 %v1493, %v1493
  %v1942 = vmul.f32 %v1494, %v1494
  %v1943 = vmul.f32 %v1495, %v1495
  %v1944 = vmul.f32 %v1496, %v1496
  %v1945 = vmul.f32 %v1497, %v1497
  %v1946 = vmul.f32 %v1498, %v1498
  %v1947 = vmul.f32 %v1499, %v1499
  %v1948 = vmul.f32 %v1500, %v1500
  %v1949 = vmul.f32 %v1501, %v1501
  %v1950 = vmul.f32 %v1502, %v1502
  %v1951 = vmul.f32 %v1503, %v1503
  %v1952 = vmul.f32 %v1504, %v1504
  %v1953 = vmul.f32 %v1505, %v1505
  %v1954 = vmul.f32 %v1506, %v1506
  %v1955 = vmul.f32 %v1507, %v1507
  %v1956 = vmul.f32 %v1508, %v1508
  %v1957 = vmul.f32 %v1509, %v1509
  %v1958 = vmul.f32 %v1510, %v1510
  %v1959 = vmul.f32 %v1511, %v1511
  %v1960 = vmul.f32 %v1512, %v1512
  %v1961 = vmul.f32 %v1513, %v1513
  %v1962 = vmul.f32 %v1514, %v1514
  %v1963 = vmul.f32 %v1515, %v1515
  %v1964 = vmul.f32 %v1516, %v1516
  %v1965 = vmul.f32 %v1517, %v1517
  %v1966 = vmul.f32 %v1518, %v1518
  %v1967 = vmul.f32 %v1519, %v1519
  %v1968 = vmul.f32 %v1520, %v1520
  %v1969 = vmul.f32 %v1521, %v1521
  %v1970 = vmul.f32 %v1522, %v1522
  %v1971 = vmul.f32 %v1523, %v1523
  %v1972 = vmul.f32 %v1524, %v1524
  %v1973 = vmul.f32 %v1525, %v1525
  %v1974 = vmul.f32 %v1526, %v1526
  %v1975 = vmul.f32 %v1527, %v1527
  %v1976 = vmul.f32 %v1528, %v1528
  %v1977 = vmul.f32 %v1529, %v1529
  %v1978 = vmul.f32 %v1530, %v1530
  %v1979 = vmul.f32 %v1531, %v1531
  %v1980 = vmul.f32 %v1532, %v1532
  %v1981 = vmul.f32 %v1533, %v1533
  %v1982 = vmul.f32 %v1534, %v1534
  %v1983 = vmul.f32 %v1535, %v1535
  %v1984 = vmul.f32 %v1536, %v1536
  %v1985 = vmul.f32 %v1537, %v1537
  %v1986 = vmul.f32 %v1538, %v1538
  %v1987 = vmul.f32 %v1539, %v1539
  %v1988 = vmul.f32 %v1540, %v1540
  %v1989 = vmul.f32 %v1541, %v1541
  %v1990 = vmul.f32 %v1542, %v1542
  %v1991 = vmul.f32 %v1543, %v1543
  %v1992 = vmul.f32 %v1544, %v1544
  %v1993 = vmul.f32 %v1545, %v1545
  %v1994 = vmul.f32 %v1546, %v1546
  %v1995 = vmul.f32 %v1547, %v1547
  %v1996 = vmul.f32 %v1548, %v1548
  %v1997 = vmul.f32 %v1549, %v1549
  %v1998 = vmul.f32 %v1550, %v1550
  %v1999 = vmul.f32 %v1551, %v1551
  %v2000 = vmul.f32 %v1552, %v1552
  %v2001 = vmul.f32 %v1553, %v1553
  %v2002 = vmul.f32 %v1554, %v1554
  %v2003 = vmul.f32 %v1555, %v1555
  %v2004 = vmul.f32 %v1556, %v1556
  %v2005 = vmul.f32 %v1557, %v1557
  %v2006 = vmul.f32 %v1558, %v1558
  %v2007 = vmul.f32 %v1559, %v1559
  %v2008 = vmul.f32 %v1560, %v1560
  %v2009 = vmul.f32 %v1561, %v1561
  %v2010 = vmul.f32 %v1562, %v1562
  %v2011 = vmul.f32 %v1563, %v1563
  %v2012 = vmul.f32 %v1564, %v1564
  %v2013 = vmul.f32 %v1565, %v1565
  %v2014 = vmul.f32 %v1566, %v1566
  %v2015 = vmul.f32 %v1567, %v1567
  %v2016 = vmul.f32 %v1568, %v1568
  %v2017 = vmul.f32 %v1569, %v1569
  %v2018 = vmul.f32 %v1570, %v1570
  %v2019 = vmul.f32 %v1571, %v1571
  %v2020 = vmul.f32 %v1572, %v1572
  %v2021 = vmul.f32 %v1573, %v1573
  %v2022 = vmul.f32 %v1574, %v1574
  %v2023 = vmul.f32 %v1575, %v1575
  %v2024 = vmul.f32 %v1576, %v1576
  %v2025 = vmul.f32 %v1577, %v1577
  %v2026 = vmul.f32 %v1578, %v1578
  %v2027 = vmul.f32 %v1579, %v1579
  %v2028 = vmul.f32 %v1580, %v1580
  %v2029 = vmul.f32 %v1581, %v1581
  %v2030 = vmul.f32 %v1582, %v1582
  %v2031 = vmul.f32 %v1583, %v1583
  %v2032 = vmul.f32 %v1584, %v1584
  %v2033 = vmul.f32 %v1585, %v1585
  %v2034 = vmul.f32 %v1586, %v1586
  %v2035 = vmul.f32 %v1587, %v1587
  %v2036 = vmul.f32 %v1588, %v1588
  %v2037 = vmul.f32 %v1589, %v1589
  %v2038 = vmul.f32 %v1590, %v1590
  %v2039 = vmul.f32 %v1591, %v1591
  %v2040 = vmul.f32 %v1592, %v1592
  %v2041 = vmul.f32 %v1593, %v1593
  %v2042 = vmul.f32 %v1594, %v1594
  %v2043 = vmul.f32 %v1595, %v1595
  %v2044 = vmul.f32 %v1596, %v1596
  %v2045 = vmul.f32 %v1597, %v1597
  %v2046 = vmul.f32 %v1598, %v1598
  %v2047 = vmul.f32 %v1599, %v1599
  %v2048 = vmul.f32 %v1600, %v1600
  %v2049 = vmul.f32 %v1601, %v1601
  %v2050 = vmul.f32 %v1602, %v1602
  %v2051 = vmul.f32 %v1603, %v1603
  %v2052 = vmul.f32 %v1604, %v1604
  %v2053 = vmul.f32 %v1605, %v1605
  %v2054 = vmul.f32 %v1606, %v1606
  %v2055 = vmul.f32 %v1607, %v1607
  %v2056 = vmul.f32 %v1608, %v1608
  %v2057 = vmul.f32 %v1609, %v1609
  %v2058 = vmul.f32 %v1610, %v1610
  %v2059 = vmul.f32 %v1611, %v1611
  %v2060 = vmul.f32 %v1612, %v1612
  %v2061 = vmul.f32 %v1613, %v1613
  %v2062 = vmul.f32 %v1614, %v1614
  %v2063 = vmul.f32 %v1615, %v1615
  %v2064 = vmul.f32 %v1616, %v1616
  %v2065 = vmul.f32 %v1617, %v1617
  %v2066 = vmul.f32 %v1618, %v1618
  %v2067 = vadd.f32 %v1619, %v1620
  %v2068 = vadd.f32 %v2067, %v1621
  %v2069 = vadd.f32 %v2068, %v1622
  %v2070 = vadd.f32 %v2069, %v1623
  %v2071 = vadd.f32 %v2070, %v1624
  %v2072 = vsel %vm471, %v1625, 0.0
  %v2073 = vadd.f32 %v2071, %v2072
  %2074 = vadd.xlane.f32.xlu0 %v2073
  %v2075 = vpop.xlane.xlu0 %2074
  %v2076 = vadd.f32 %v1626, %v1627
  %v2077 = vadd.f32 %v2076, %v1628
  %v2078 = vadd.f32 %v2077, %v1629
  %v2079 = vadd.f32 %v2078, %v1630
  %v2080 = vadd.f32 %v2079, %v1631
  %v2081 = vsel %vm471, %v1632, 0.0
  %v2082 = vadd.f32 %v2080, %v2081
  %2083 = vadd.xlane.f32.xlu0 %v2082
  %v2084 = vpop.xlane.xlu0 %2083
  %v2085 = vadd.f32 %v1633, %v1634
  %v2086 = vadd.f32 %v2085, %v1635
  %v2087 = vadd.f32 %v2086, %v1636
  %v2088 = vadd.f32 %v2087, %v1637
  %v2089 = vadd.f32 %v2088, %v1638
  %v2090 = vsel %vm471, %v1639, 0.0
  %v2091 = vadd.f32 %v2089, %v2090
  %2092 = vadd.xlane.f32.xlu0 %v2091
  %v2093 = vpop.xlane.xlu0 %2092
  %v2094 = vadd.f32 %v1640, %v1641
  %v2095 = vadd.f32 %v2094, %v1642
  %v2096 = vadd.f32 %v2095, %v1643
  %v2097 = vadd.f32 %v2096, %v1644
  %v2098 = vadd.f32 %v2097, %v1645
  %v2099 = vsel %vm471, %v1646, 0.0
  %v2100 = vadd.f32 %v2098, %v2099
  %2101 = vadd.xlane.f32.xlu0 %v2100
  %v2102 = vpop.xlane.xlu0 %2101
  %v2103 = vadd.f32 %v1647, %v1648
  %v2104 = vadd.f32 %v2103, %v1649
  %v2105 = vadd.f32 %v2104, %v1650
  %v2106 = vadd.f32 %v2105, %v1651
  %v2107 = vadd.f32 %v2106, %v1652
  %v2108 = vsel %vm471, %v1653, 0.0
  %v2109 = vadd.f32 %v2107, %v2108
  %2110 = vadd.xlane.f32.xlu0 %v2109
  %v2111 = vpop.xlane.xlu0 %2110
  %v2112 = vadd.f32 %v1654, %v1655
  %v2113 = vadd.f32 %v2112, %v1656
  %v2114 = vadd.f32 %v2113, %v1657
  %v2115 = vadd.f32 %v2114, %v1658
  %v2116 = vadd.f32 %v2115, %v1659
  %v2117 = vsel %vm471, %v1660, 0.0
  %v2118 = vadd.f32 %v2116, %v2117
  %2119 = vadd.xlane.f32.xlu0 %v2118
  %v2120 = vpop.xlane.xlu0 %2119
  %v2121 = vadd.f32 %v1661, %v1662
  %v2122 = vadd.f32 %v2121, %v1663
  %v2123 = vadd.f32 %v2122, %v1664
  %v2124 = vadd.f32 %v2123, %v1665
  %v2125 = vadd.f32 %v2124, %v1666
  %v2126 = vsel %vm471, %v1667, 0.0
  %v2127 = vadd.f32 %v2125, %v2126
  %2128 = vadd.xlane.f32.xlu0 %v2127
  %v2129 = vpop.xlane.xlu0 %2128
  %v2130 = vadd.f32 %v1668, %v1669
  %v2131 = vadd.f32 %v2130, %v1670
  %v2132 = vadd.f32 %v2131, %v1671
  %v2133 = vadd.f32 %v2132, %v1672
  %v2134 = vadd.f32 %v2133, %v1673
  %v2135 = vsel %vm471, %v1674, 0.0
  %v2136 = vadd.f32 %v2134, %v2135
  %2137 = vadd.xlane.f32.xlu0 %v2136
  %v2138 = vpop.xlane.xlu0 %2137
  %v2139 = vadd.f32 %v1675, %v1676
  %v2140 = vadd.f32 %v2139, %v1677
  %v2141 = vadd.f32 %v2140, %v1678
  %v2142 = vadd.f32 %v2141, %v1679
  %v2143 = vadd.f32 %v2142, %v1680
  %v2144 = vsel %vm471, %v1681, 0.0
  %v2145 = vadd.f32 %v2143, %v2144
  %2146 = vadd.xlane.f32.xlu0 %v2145
  %v2147 = vpop.xlane.xlu0 %2146
  %v2148 = vadd.f32 %v1682, %v1683
  %v2149 = vadd.f32 %v2148, %v1684
  %v2150 = vadd.f32 %v2149, %v1685
  %v2151 = vadd.f32 %v2150, %v1686
  %v2152 = vadd.f32 %v2151, %v1687
  %v2153 = vsel %vm471, %v1688, 0.0
  %v2154 = vadd.f32 %v2152, %v2153
  %2155 = vadd.xlane.f32.xlu0 %v2154
  %v2156 = vpop.xlane.xlu0 %2155
  %v2157 = vadd.f32 %v1689, %v1690
  %v2158 = vadd.f32 %v2157, %v1691
  %v2159 = vadd.f32 %v2158, %v1692
  %v2160 = vadd.f32 %v2159, %v1693
  %v2161 = vadd.f32 %v2160, %v1694
  %v2162 = vsel %vm471, %v1695, 0.0
  %v2163 = vadd.f32 %v2161, %v2162
  %2164 = vadd.xlane.f32.xlu0 %v2163
  %v2165 = vpop.xlane.xlu0 %2164
  %v2166 = vadd.f32 %v1696, %v1697
  %v2167 = vadd.f32 %v2166, %v1698
  %v2168 = vadd.f32 %v2167, %v1699
  %v2169 = vadd.f32 %v2168, %v1700
  %v2170 = vadd.f32 %v2169, %v1701
  %v2171 = vsel %vm471, %v1702, 0.0
  %v2172 = vadd.f32 %v2170, %v2171
  %2173 = vadd.xlane.f32.xlu0 %v2172
  %v2174 = vpop.xlane.xlu0 %2173
  %v2175 = vadd.f32 %v1703, %v1704
  %v2176 = vadd.f32 %v2175, %v1705
  %v2177 = vadd.f32 %v2176, %v1706
  %v2178 = vadd.f32 %v2177, %v1707
  %v2179 = vadd.f32 %v2178, %v1708
  %v2180 = vsel %vm471, %v1709, 0.0
  %v2181 = vadd.f32 %v2179, %v2180
  %2182 = vadd.xlane.f32.xlu0 %v2181
  %v2183 = vpop.xlane.xlu0 %2182
  %v2184 = vadd.f32 %v1710, %v1711
  %v2185 = vadd.f32 %v2184, %v1712
  %v2186 = vadd.f32 %v2185, %v1713
  %v2187 = vadd.f32 %v2186, %v1714
  %v2188 = vadd.f32 %v2187, %v1715
  %v2189 = vsel %vm471, %v1716, 0.0
  %v2190 = vadd.f32 %v2188, %v2189
  %2191 = vadd.xlane.f32.xlu0 %v2190
  %v2192 = vpop.xlane.xlu0 %2191
  %v2193 = vadd.f32 %v1717, %v1718
  %v2194 = vadd.f32 %v2193, %v1719
  %v2195 = vadd.f32 %v2194, %v1720
  %v2196 = vadd.f32 %v2195, %v1721
  %v2197 = vadd.f32 %v2196, %v1722
  %v2198 = vsel %vm471, %v1723, 0.0
  %v2199 = vadd.f32 %v2197, %v2198
  %2200 = vadd.xlane.f32.xlu0 %v2199
  %v2201 = vpop.xlane.xlu0 %2200
  %v2202 = vadd.f32 %v1724, %v1725
  %v2203 = vadd.f32 %v2202, %v1726
  %v2204 = vadd.f32 %v2203, %v1727
  %v2205 = vadd.f32 %v2204, %v1728
  %v2206 = vadd.f32 %v2205, %v1729
  %v2207 = vsel %vm471, %v1730, 0.0
  %v2208 = vadd.f32 %v2206, %v2207
  %2209 = vadd.xlane.f32.xlu0 %v2208
  %v2210 = vpop.xlane.xlu0 %2209
  %v2211 = vadd.f32 %v1731, %v1732
  %v2212 = vadd.f32 %v2211, %v1733
  %v2213 = vadd.f32 %v2212, %v1734
  %v2214 = vadd.f32 %v2213, %v1735
  %v2215 = vadd.f32 %v2214, %v1736
  %v2216 = vsel %vm471, %v1737, 0.0
  %v2217 = vadd.f32 %v2215, %v2216
  %2218 = vadd.xlane.f32.xlu0 %v2217
  %v2219 = vpop.xlane.xlu0 %2218
  %v2220 = vadd.f32 %v1738, %v1739
  %v2221 = vadd.f32 %v2220, %v1740
  %v2222 = vadd.f32 %v2221, %v1741
  %v2223 = vadd.f32 %v2222, %v1742
  %v2224 = vadd.f32 %v2223, %v1743
  %v2225 = vsel %vm471, %v1744, 0.0
  %v2226 = vadd.f32 %v2224, %v2225
  %2227 = vadd.xlane.f32.xlu0 %v2226
  %v2228 = vpop.xlane.xlu0 %2227
  %v2229 = vadd.f32 %v1745, %v1746
  %v2230 = vadd.f32 %v2229, %v1747
  %v2231 = vadd.f32 %v2230, %v1748
  %v2232 = vadd.f32 %v2231, %v1749
  %v2233 = vadd.f32 %v2232, %v1750
  %v2234 = vsel %vm471, %v1751, 0.0
  %v2235 = vadd.f32 %v2233, %v2234
  %2236 = vadd.xlane.f32.xlu0 %v2235
  %v2237 = vpop.xlane.xlu0 %2236
  %v2238 = vadd.f32 %v1752, %v1753
  %v2239 = vadd.f32 %v2238, %v1754
  %v2240 = vadd.f32 %v2239, %v1755
  %v2241 = vadd.f32 %v2240, %v1756
  %v2242 = vadd.f32 %v2241, %v1757
  %v2243 = vsel %vm471, %v1758, 0.0
  %v2244 = vadd.f32 %v2242, %v2243
  %2245 = vadd.xlane.f32.xlu0 %v2244
  %v2246 = vpop.xlane.xlu0 %2245
  %v2247 = vadd.f32 %v1759, %v1760
  %v2248 = vadd.f32 %v2247, %v1761
  %v2249 = vadd.f32 %v2248, %v1762
  %v2250 = vadd.f32 %v2249, %v1763
  %v2251 = vadd.f32 %v2250, %v1764
  %v2252 = vsel %vm471, %v1765, 0.0
  %v2253 = vadd.f32 %v2251, %v2252
  %2254 = vadd.xlane.f32.xlu0 %v2253
  %v2255 = vpop.xlane.xlu0 %2254
  %v2256 = vadd.f32 %v1766, %v1767
  %v2257 = vadd.f32 %v2256, %v1768
  %v2258 = vadd.f32 %v2257, %v1769
  %v2259 = vadd.f32 %v2258, %v1770
  %v2260 = vadd.f32 %v2259, %v1771
  %v2261 = vsel %vm471, %v1772, 0.0
  %v2262 = vadd.f32 %v2260, %v2261
  %2263 = vadd.xlane.f32.xlu0 %v2262
  %v2264 = vpop.xlane.xlu0 %2263
  %v2265 = vadd.f32 %v1773, %v1774
  %v2266 = vadd.f32 %v2265, %v1775
  %v2267 = vadd.f32 %v2266, %v1776
  %v2268 = vadd.f32 %v2267, %v1777
  %v2269 = vadd.f32 %v2268, %v1778
  %v2270 = vsel %vm471, %v1779, 0.0
  %v2271 = vadd.f32 %v2269, %v2270
  %2272 = vadd.xlane.f32.xlu0 %v2271
  %v2273 = vpop.xlane.xlu0 %2272
  %v2274 = vadd.f32 %v1780, %v1781
  %v2275 = vadd.f32 %v2274, %v1782
  %v2276 = vadd.f32 %v2275, %v1783
  %v2277 = vadd.f32 %v2276, %v1784
  %v2278 = vadd.f32 %v2277, %v1785
  %v2279 = vsel %vm471, %v1786, 0.0
  %v2280 = vadd.f32 %v2278, %v2279
  %2281 = vadd.xlane.f32.xlu0 %v2280
  %v2282 = vpop.xlane.xlu0 %2281
  %v2283 = vadd.f32 %v1787, %v1788
  %v2284 = vadd.f32 %v2283, %v1789
  %v2285 = vadd.f32 %v2284, %v1790
  %v2286 = vadd.f32 %v2285, %v1791
  %v2287 = vadd.f32 %v2286, %v1792
  %v2288 = vsel %vm471, %v1793, 0.0
  %v2289 = vadd.f32 %v2287, %v2288
  %2290 = vadd.xlane.f32.xlu0 %v2289
  %v2291 = vpop.xlane.xlu0 %2290
  %v2292 = vadd.f32 %v1794, %v1795
  %v2293 = vadd.f32 %v2292, %v1796
  %v2294 = vadd.f32 %v2293, %v1797
  %v2295 = vadd.f32 %v2294, %v1798
  %v2296 = vadd.f32 %v2295, %v1799
  %v2297 = vsel %vm471, %v1800, 0.0
  %v2298 = vadd.f32 %v2296, %v2297
  %2299 = vadd.xlane.f32.xlu0 %v2298
  %v2300 = vpop.xlane.xlu0 %2299
  %v2301 = vadd.f32 %v1801, %v1802
  %v2302 = vadd.f32 %v2301, %v1803
  %v2303 = vadd.f32 %v2302, %v1804
  %v2304 = vadd.f32 %v2303, %v1805
  %v2305 = vadd.f32 %v2304, %v1806
  %v2306 = vsel %vm471, %v1807, 0.0
  %v2307 = vadd.f32 %v2305, %v2306
  %2308 = vadd.xlane.f32.xlu0 %v2307
  %v2309 = vpop.xlane.xlu0 %2308
  %v2310 = vadd.f32 %v1808, %v1809
  %v2311 = vadd.f32 %v2310, %v1810
  %v2312 = vadd.f32 %v2311, %v1811
  %v2313 = vadd.f32 %v2312, %v1812
  %v2314 = vadd.f32 %v2313, %v1813
  %v2315 = vsel %vm471, %v1814, 0.0
  %v2316 = vadd.f32 %v2314, %v2315
  %2317 = vadd.xlane.f32.xlu0 %v2316
  %v2318 = vpop.xlane.xlu0 %2317
  %v2319 = vadd.f32 %v1815, %v1816
  %v2320 = vadd.f32 %v2319, %v1817
  %v2321 = vadd.f32 %v2320, %v1818
  %v2322 = vadd.f32 %v2321, %v1819
  %v2323 = vadd.f32 %v2322, %v1820
  %v2324 = vsel %vm471, %v1821, 0.0
  %v2325 = vadd.f32 %v2323, %v2324
  %2326 = vadd.xlane.f32.xlu0 %v2325
  %v2327 = vpop.xlane.xlu0 %2326
  %v2328 = vadd.f32 %v1822, %v1823
  %v2329 = vadd.f32 %v2328, %v1824
  %v2330 = vadd.f32 %v2329, %v1825
  %v2331 = vadd.f32 %v2330, %v1826
  %v2332 = vadd.f32 %v2331, %v1827
  %v2333 = vsel %vm471, %v1828, 0.0
  %v2334 = vadd.f32 %v2332, %v2333
  %2335 = vadd.xlane.f32.xlu0 %v2334
  %v2336 = vpop.xlane.xlu0 %2335
  %v2337 = vadd.f32 %v1829, %v1830
  %v2338 = vadd.f32 %v2337, %v1831
  %v2339 = vadd.f32 %v2338, %v1832
  %v2340 = vadd.f32 %v2339, %v1833
  %v2341 = vadd.f32 %v2340, %v1834
  %v2342 = vsel %vm471, %v1835, 0.0
  %v2343 = vadd.f32 %v2341, %v2342
  %2344 = vadd.xlane.f32.xlu0 %v2343
  %v2345 = vpop.xlane.xlu0 %2344
  %v2346 = vadd.f32 %v1836, %v1837
  %v2347 = vadd.f32 %v2346, %v1838
  %v2348 = vadd.f32 %v2347, %v1839
  %v2349 = vadd.f32 %v2348, %v1840
  %v2350 = vadd.f32 %v2349, %v1841
  %v2351 = vsel %vm471, %v1842, 0.0
  %v2352 = vadd.f32 %v2350, %v2351
  %2353 = vadd.xlane.f32.xlu0 %v2352
  %v2354 = vpop.xlane.xlu0 %2353
  %v2355 = vadd.f32 %v1843, %v1844
  %v2356 = vadd.f32 %v2355, %v1845
  %v2357 = vadd.f32 %v2356, %v1846
  %v2358 = vadd.f32 %v2357, %v1847
  %v2359 = vadd.f32 %v2358, %v1848
  %v2360 = vsel %vm471, %v1849, 0.0
  %v2361 = vadd.f32 %v2359, %v2360
  %2362 = vadd.xlane.f32.xlu0 %v2361
  %v2363 = vpop.xlane.xlu0 %2362
  %v2364 = vadd.f32 %v1850, %v1851
  %v2365 = vadd.f32 %v2364, %v1852
  %v2366 = vadd.f32 %v2365, %v1853
  %v2367 = vadd.f32 %v2366, %v1854
  %v2368 = vadd.f32 %v2367, %v1855
  %v2369 = vsel %vm471, %v1856, 0.0
  %v2370 = vadd.f32 %v2368, %v2369
  %2371 = vadd.xlane.f32.xlu0 %v2370
  %v2372 = vpop.xlane.xlu0 %2371
  %v2373 = vadd.f32 %v1857, %v1858
  %v2374 = vadd.f32 %v2373, %v1859
  %v2375 = vadd.f32 %v2374, %v1860
  %v2376 = vadd.f32 %v2375, %v1861
  %v2377 = vadd.f32 %v2376, %v1862
  %v2378 = vsel %vm471, %v1863, 0.0
  %v2379 = vadd.f32 %v2377, %v2378
  %2380 = vadd.xlane.f32.xlu0 %v2379
  %v2381 = vpop.xlane.xlu0 %2380
  %v2382 = vadd.f32 %v1864, %v1865
  %v2383 = vadd.f32 %v2382, %v1866
  %v2384 = vadd.f32 %v2383, %v1867
  %v2385 = vadd.f32 %v2384, %v1868
  %v2386 = vadd.f32 %v2385, %v1869
  %v2387 = vsel %vm471, %v1870, 0.0
  %v2388 = vadd.f32 %v2386, %v2387
  %2389 = vadd.xlane.f32.xlu0 %v2388
  %v2390 = vpop.xlane.xlu0 %2389
  %v2391 = vadd.f32 %v1871, %v1872
  %v2392 = vadd.f32 %v2391, %v1873
  %v2393 = vadd.f32 %v2392, %v1874
  %v2394 = vadd.f32 %v2393, %v1875
  %v2395 = vadd.f32 %v2394, %v1876
  %v2396 = vsel %vm471, %v1877, 0.0
  %v2397 = vadd.f32 %v2395, %v2396
  %2398 = vadd.xlane.f32.xlu0 %v2397
  %v2399 = vpop.xlane.xlu0 %2398
  %v2400 = vadd.f32 %v1878, %v1879
  %v2401 = vadd.f32 %v2400, %v1880
  %v2402 = vadd.f32 %v2401, %v1881
  %v2403 = vadd.f32 %v2402, %v1882
  %v2404 = vadd.f32 %v2403, %v1883
  %v2405 = vsel %vm471, %v1884, 0.0
  %v2406 = vadd.f32 %v2404, %v2405
  %2407 = vadd.xlane.f32.xlu0 %v2406
  %v2408 = vpop.xlane.xlu0 %2407
  %v2409 = vadd.f32 %v1885, %v1886
  %v2410 = vadd.f32 %v2409, %v1887
  %v2411 = vadd.f32 %v2410, %v1888
  %v2412 = vadd.f32 %v2411, %v1889
  %v2413 = vadd.f32 %v2412, %v1890
  %v2414 = vsel %vm471, %v1891, 0.0
  %v2415 = vadd.f32 %v2413, %v2414
  %2416 = vadd.xlane.f32.xlu0 %v2415
  %v2417 = vpop.xlane.xlu0 %2416
  %v2418 = vadd.f32 %v1892, %v1893
  %v2419 = vadd.f32 %v2418, %v1894
  %v2420 = vadd.f32 %v2419, %v1895
  %v2421 = vadd.f32 %v2420, %v1896
  %v2422 = vadd.f32 %v2421, %v1897
  %v2423 = vsel %vm471, %v1898, 0.0
  %v2424 = vadd.f32 %v2422, %v2423
  %2425 = vadd.xlane.f32.xlu0 %v2424
  %v2426 = vpop.xlane.xlu0 %2425
  %v2427 = vadd.f32 %v1899, %v1900
  %v2428 = vadd.f32 %v2427, %v1901
  %v2429 = vadd.f32 %v2428, %v1902
  %v2430 = vadd.f32 %v2429, %v1903
  %v2431 = vadd.f32 %v2430, %v1904
  %v2432 = vsel %vm471, %v1905, 0.0
  %v2433 = vadd.f32 %v2431, %v2432
  %2434 = vadd.xlane.f32.xlu0 %v2433
  %v2435 = vpop.xlane.xlu0 %2434
  %v2436 = vadd.f32 %v1906, %v1907
  %v2437 = vadd.f32 %v2436, %v1908
  %v2438 = vadd.f32 %v2437, %v1909
  %v2439 = vadd.f32 %v2438, %v1910
  %v2440 = vadd.f32 %v2439, %v1911
  %v2441 = vsel %vm471, %v1912, 0.0
  %v2442 = vadd.f32 %v2440, %v2441
  %2443 = vadd.xlane.f32.xlu0 %v2442
  %v2444 = vpop.xlane.xlu0 %2443
  %v2445 = vadd.f32 %v1913, %v1914
  %v2446 = vadd.f32 %v2445, %v1915
  %v2447 = vadd.f32 %v2446, %v1916
  %v2448 = vadd.f32 %v2447, %v1917
  %v2449 = vadd.f32 %v2448, %v1918
  %v2450 = vsel %vm471, %v1919, 0.0
  %v2451 = vadd.f32 %v2449, %v2450
  %2452 = vadd.xlane.f32.xlu0 %v2451
  %v2453 = vpop.xlane.xlu0 %2452
  %v2454 = vadd.f32 %v1920, %v1921
  %v2455 = vadd.f32 %v2454, %v1922
  %v2456 = vadd.f32 %v2455, %v1923
  %v2457 = vadd.f32 %v2456, %v1924
  %v2458 = vadd.f32 %v2457, %v1925
  %v2459 = vsel %vm471, %v1926, 0.0
  %v2460 = vadd.f32 %v2458, %v2459
  %2461 = vadd.xlane.f32.xlu0 %v2460
  %v2462 = vpop.xlane.xlu0 %2461
  %v2463 = vadd.f32 %v1927, %v1928
  %v2464 = vadd.f32 %v2463, %v1929
  %v2465 = vadd.f32 %v2464, %v1930
  %v2466 = vadd.f32 %v2465, %v1931
  %v2467 = vadd.f32 %v2466, %v1932
  %v2468 = vsel %vm471, %v1933, 0.0
  %v2469 = vadd.f32 %v2467, %v2468
  %2470 = vadd.xlane.f32.xlu0 %v2469
  %v2471 = vpop.xlane.xlu0 %2470
  %v2472 = vadd.f32 %v1934, %v1935
  %v2473 = vadd.f32 %v2472, %v1936
  %v2474 = vadd.f32 %v2473, %v1937
  %v2475 = vadd.f32 %v2474, %v1938
  %v2476 = vadd.f32 %v2475, %v1939
  %v2477 = vsel %vm471, %v1940, 0.0
  %v2478 = vadd.f32 %v2476, %v2477
  %2479 = vadd.xlane.f32.xlu0 %v2478
  %v2480 = vpop.xlane.xlu0 %2479
  %v2481 = vadd.f32 %v1941, %v1942
  %v2482 = vadd.f32 %v2481, %v1943
  %v2483 = vadd.f32 %v2482, %v1944
  %v2484 = vadd.f32 %v2483, %v1945
  %v2485 = vadd.f32 %v2484, %v1946
  %v2486 = vsel %vm471, %v1947, 0.0
  %v2487 = vadd.f32 %v2485, %v2486
  %2488 = vadd.xlane.f32.xlu0 %v2487
  %v2489 = vpop.xlane.xlu0 %2488
  %v2490 = vadd.f32 %v1948, %v1949
  %v2491 = vadd.f32 %v2490, %v1950
  %v2492 = vadd.f32 %v2491, %v1951
  %v2493 = vadd.f32 %v2492, %v1952
  %v2494 = vadd.f32 %v2493, %v1953
  %v2495 = vsel %vm471, %v1954, 0.0
  %v2496 = vadd.f32 %v2494, %v2495
  %2497 = vadd.xlane.f32.xlu0 %v2496
  %v2498 = vpop.xlane.xlu0 %2497
  %v2499 = vadd.f32 %v1955, %v1956
  %v2500 = vadd.f32 %v2499, %v1957
  %v2501 = vadd.f32 %v2500, %v1958
  %v2502 = vadd.f32 %v2501, %v1959
  %v2503 = vadd.f32 %v2502, %v1960
  %v2504 = vsel %vm471, %v1961, 0.0
  %v2505 = vadd.f32 %v2503, %v2504
  %2506 = vadd.xlane.f32.xlu0 %v2505
  %v2507 = vpop.xlane.xlu0 %2506
  %v2508 = vadd.f32 %v1962, %v1963
  %v2509 = vadd.f32 %v2508, %v1964
  %v2510 = vadd.f32 %v2509, %v1965
  %v2511 = vadd.f32 %v2510, %v1966
  %v2512 = vadd.f32 %v2511, %v1967
  %v2513 = vsel %vm471, %v1968, 0.0
  %v2514 = vadd.f32 %v2512, %v2513
  %2515 = vadd.xlane.f32.xlu0 %v2514
  %v2516 = vpop.xlane.xlu0 %2515
  %v2517 = vadd.f32 %v1969, %v1970
  %v2518 = vadd.f32 %v2517, %v1971
  %v2519 = vadd.f32 %v2518, %v1972
  %v2520 = vadd.f32 %v2519, %v1973
  %v2521 = vadd.f32 %v2520, %v1974
  %v2522 = vsel %vm471, %v1975, 0.0
  %v2523 = vadd.f32 %v2521, %v2522
  %2524 = vadd.xlane.f32.xlu0 %v2523
  %v2525 = vpop.xlane.xlu0 %2524
  %v2526 = vadd.f32 %v1976, %v1977
  %v2527 = vadd.f32 %v2526, %v1978
  %v2528 = vadd.f32 %v2527, %v1979
  %v2529 = vadd.f32 %v2528, %v1980
  %v2530 = vadd.f32 %v2529, %v1981
  %v2531 = vsel %vm471, %v1982, 0.0
  %v2532 = vadd.f32 %v2530, %v2531
  %2533 = vadd.xlane.f32.xlu0 %v2532
  %v2534 = vpop.xlane.xlu0 %2533
  %v2535 = vadd.f32 %v1983, %v1984
  %v2536 = vadd.f32 %v2535, %v1985
  %v2537 = vadd.f32 %v2536, %v1986
  %v2538 = vadd.f32 %v2537, %v1987
  %v2539 = vadd.f32 %v2538, %v1988
  %v2540 = vsel %vm471, %v1989, 0.0
  %v2541 = vadd.f32 %v2539, %v2540
  %2542 = vadd.xlane.f32.xlu0 %v2541
  %v2543 = vpop.xlane.xlu0 %2542
  %v2544 = vadd.f32 %v1990, %v1991
  %v2545 = vadd.f32 %v2544, %v1992
  %v2546 = vadd.f32 %v2545, %v1993
  %v2547 = vadd.f32 %v2546, %v1994
  %v2548 = vadd.f32 %v2547, %v1995
  %v2549 = vsel %vm471, %v1996, 0.0
  %v2550 = vadd.f32 %v2548, %v2549
  %2551 = vadd.xlane.f32.xlu0 %v2550
  %v2552 = vpop.xlane.xlu0 %2551
  %v2553 = vadd.f32 %v1997, %v1998
  %v2554 = vadd.f32 %v2553, %v1999
  %v2555 = vadd.f32 %v2554, %v2000
  %v2556 = vadd.f32 %v2555, %v2001
  %v2557 = vadd.f32 %v2556, %v2002
  %v2558 = vsel %vm471, %v2003, 0.0
  %v2559 = vadd.f32 %v2557, %v2558
  %2560 = vadd.xlane.f32.xlu0 %v2559
  %v2561 = vpop.xlane.xlu0 %2560
  %v2562 = vadd.f32 %v2004, %v2005
  %v2563 = vadd.f32 %v2562, %v2006
  %v2564 = vadd.f32 %v2563, %v2007
  %v2565 = vadd.f32 %v2564, %v2008
  %v2566 = vadd.f32 %v2565, %v2009
  %v2567 = vsel %vm471, %v2010, 0.0
  %v2568 = vadd.f32 %v2566, %v2567
  %2569 = vadd.xlane.f32.xlu0 %v2568
  %v2570 = vpop.xlane.xlu0 %2569
  %v2571 = vadd.f32 %v2011, %v2012
  %v2572 = vadd.f32 %v2571, %v2013
  %v2573 = vadd.f32 %v2572, %v2014
  %v2574 = vadd.f32 %v2573, %v2015
  %v2575 = vadd.f32 %v2574, %v2016
  %v2576 = vsel %vm471, %v2017, 0.0
  %v2577 = vadd.f32 %v2575, %v2576
  %2578 = vadd.xlane.f32.xlu0 %v2577
  %v2579 = vpop.xlane.xlu0 %2578
  %v2580 = vadd.f32 %v2018, %v2019
  %v2581 = vadd.f32 %v2580, %v2020
  %v2582 = vadd.f32 %v2581, %v2021
  %v2583 = vadd.f32 %v2582, %v2022
  %v2584 = vadd.f32 %v2583, %v2023
  %v2585 = vsel %vm471, %v2024, 0.0
  %v2586 = vadd.f32 %v2584, %v2585
  %2587 = vadd.xlane.f32.xlu0 %v2586
  %v2588 = vpop.xlane.xlu0 %2587
  %v2589 = vadd.f32 %v2025, %v2026
  %v2590 = vadd.f32 %v2589, %v2027
  %v2591 = vadd.f32 %v2590, %v2028
  %v2592 = vadd.f32 %v2591, %v2029
  %v2593 = vadd.f32 %v2592, %v2030
  %v2594 = vsel %vm471, %v2031, 0.0
  %v2595 = vadd.f32 %v2593, %v2594
  %2596 = vadd.xlane.f32.xlu0 %v2595
  %v2597 = vpop.xlane.xlu0 %2596
  %v2598 = vadd.f32 %v2032, %v2033
  %v2599 = vadd.f32 %v2598, %v2034
  %v2600 = vadd.f32 %v2599, %v2035
  %v2601 = vadd.f32 %v2600, %v2036
  %v2602 = vadd.f32 %v2601, %v2037
  %v2603 = vsel %vm471, %v2038, 0.0
  %v2604 = vadd.f32 %v2602, %v2603
  %2605 = vadd.xlane.f32.xlu0 %v2604
  %v2606 = vpop.xlane.xlu0 %2605
  %v2607 = vadd.f32 %v2039, %v2040
  %v2608 = vadd.f32 %v2607, %v2041
  %v2609 = vadd.f32 %v2608, %v2042
  %v2610 = vadd.f32 %v2609, %v2043
  %v2611 = vadd.f32 %v2610, %v2044
  %v2612 = vsel %vm471, %v2045, 0.0
  %v2613 = vadd.f32 %v2611, %v2612
  %2614 = vadd.xlane.f32.xlu0 %v2613
  %v2615 = vpop.xlane.xlu0 %2614
  %v2616 = vadd.f32 %v2046, %v2047
  %v2617 = vadd.f32 %v2616, %v2048
  %v2618 = vadd.f32 %v2617, %v2049
  %v2619 = vadd.f32 %v2618, %v2050
  %v2620 = vadd.f32 %v2619, %v2051
  %v2621 = vsel %vm471, %v2052, 0.0
  %v2622 = vadd.f32 %v2620, %v2621
  %2623 = vadd.xlane.f32.xlu0 %v2622
  %v2624 = vpop.xlane.xlu0 %2623
  %v2625 = vadd.f32 %v2053, %v2054
  %v2626 = vadd.f32 %v2625, %v2055
  %v2627 = vadd.f32 %v2626, %v2056
  %v2628 = vadd.f32 %v2627, %v2057
  %v2629 = vadd.f32 %v2628, %v2058
  %v2630 = vsel %vm471, %v2059, 0.0
  %v2631 = vadd.f32 %v2629, %v2630
  %2632 = vadd.xlane.f32.xlu0 %v2631
  %v2633 = vpop.xlane.xlu0 %2632
  %v2634 = vadd.f32 %v2060, %v2061
  %v2635 = vadd.f32 %v2634, %v2062
  %v2636 = vadd.f32 %v2635, %v2063
  %v2637 = vadd.f32 %v2636, %v2064
  %v2638 = vadd.f32 %v2637, %v2065
  %v2639 = vsel %vm471, %v2066, 0.0
  %v2640 = vadd.f32 %v2638, %v2639
  %2641 = vadd.xlane.f32.xlu0 %v2640
  %v2642 = vpop.xlane.xlu0 %2641
  %v2643 = vadd.f32 %v2075, 0.0
  %v2644 = vadd.f32 %v2084, 0.0
  %v2645 = vadd.f32 %v2093, 0.0
  %v2646 = vadd.f32 %v2102, 0.0
  %v2647 = vadd.f32 %v2111, 0.0
  %v2648 = vadd.f32 %v2120, 0.0
  %v2649 = vadd.f32 %v2129, 0.0
  %v2650 = vadd.f32 %v2138, 0.0
  %v2651 = vadd.f32 %v2147, 0.0
  %v2652 = vadd.f32 %v2156, 0.0
  %v2653 = vadd.f32 %v2165, 0.0
  %v2654 = vadd.f32 %v2174, 0.0
  %v2655 = vadd.f32 %v2183, 0.0
  %v2656 = vadd.f32 %v2192, 0.0
  %v2657 = vadd.f32 %v2201, 0.0
  %v2658 = vadd.f32 %v2210, 0.0
  %v2659 = vadd.f32 %v2219, 0.0
  %v2660 = vadd.f32 %v2228, 0.0
  %v2661 = vadd.f32 %v2237, 0.0
  %v2662 = vadd.f32 %v2246, 0.0
  %v2663 = vadd.f32 %v2255, 0.0
  %v2664 = vadd.f32 %v2264, 0.0
  %v2665 = vadd.f32 %v2273, 0.0
  %v2666 = vadd.f32 %v2282, 0.0
  %v2667 = vadd.f32 %v2291, 0.0
  %v2668 = vadd.f32 %v2300, 0.0
  %v2669 = vadd.f32 %v2309, 0.0
  %v2670 = vadd.f32 %v2318, 0.0
  %v2671 = vadd.f32 %v2327, 0.0
  %v2672 = vadd.f32 %v2336, 0.0
  %v2673 = vadd.f32 %v2345, 0.0
  %v2674 = vadd.f32 %v2354, 0.0
  %v2675 = vadd.f32 %v2363, 0.0
  %v2676 = vadd.f32 %v2372, 0.0
  %v2677 = vadd.f32 %v2381, 0.0
  %v2678 = vadd.f32 %v2390, 0.0
  %v2679 = vadd.f32 %v2399, 0.0
  %v2680 = vadd.f32 %v2408, 0.0
  %v2681 = vadd.f32 %v2417, 0.0
  %v2682 = vadd.f32 %v2426, 0.0
  %v2683 = vadd.f32 %v2435, 0.0
  %v2684 = vadd.f32 %v2444, 0.0
  %v2685 = vadd.f32 %v2453, 0.0
  %v2686 = vadd.f32 %v2462, 0.0
  %v2687 = vadd.f32 %v2471, 0.0
  %v2688 = vadd.f32 %v2480, 0.0
  %v2689 = vadd.f32 %v2489, 0.0
  %v2690 = vadd.f32 %v2498, 0.0
  %v2691 = vadd.f32 %v2507, 0.0
  %v2692 = vadd.f32 %v2516, 0.0
  %v2693 = vadd.f32 %v2525, 0.0
  %v2694 = vadd.f32 %v2534, 0.0
  %v2695 = vadd.f32 %v2543, 0.0
  %v2696 = vadd.f32 %v2552, 0.0
  %v2697 = vadd.f32 %v2561, 0.0
  %v2698 = vadd.f32 %v2570, 0.0
  %v2699 = vadd.f32 %v2579, 0.0
  %v2700 = vadd.f32 %v2588, 0.0
  %v2701 = vadd.f32 %v2597, 0.0
  %v2702 = vadd.f32 %v2606, 0.0
  %v2703 = vadd.f32 %v2615, 0.0
  %v2704 = vadd.f32 %v2624, 0.0
  %v2705 = vadd.f32 %v2633, 0.0
  %v2706 = vadd.f32 %v2642, 0.0
  %v2707 = vmul.f32 %v2643, 0.0012755102
  %v2708 = vmul.f32 %v2644, 0.0012755102
  %v2709 = vmul.f32 %v2645, 0.0012755102
  %v2710 = vmul.f32 %v2646, 0.0012755102
  %v2711 = vmul.f32 %v2647, 0.0012755102
  %v2712 = vmul.f32 %v2648, 0.0012755102
  %v2713 = vmul.f32 %v2649, 0.0012755102
  %v2714 = vmul.f32 %v2650, 0.0012755102
  %v2715 = vmul.f32 %v2651, 0.0012755102
  %v2716 = vmul.f32 %v2652, 0.0012755102
  %v2717 = vmul.f32 %v2653, 0.0012755102
  %v2718 = vmul.f32 %v2654, 0.0012755102
  %v2719 = vmul.f32 %v2655, 0.0012755102
  %v2720 = vmul.f32 %v2656, 0.0012755102
  %v2721 = vmul.f32 %v2657, 0.0012755102
  %v2722 = vmul.f32 %v2658, 0.0012755102
  %v2723 = vmul.f32 %v2659, 0.0012755102
  %v2724 = vmul.f32 %v2660, 0.0012755102
  %v2725 = vmul.f32 %v2661, 0.0012755102
  %v2726 = vmul.f32 %v2662, 0.0012755102
  %v2727 = vmul.f32 %v2663, 0.0012755102
  %v2728 = vmul.f32 %v2664, 0.0012755102
  %v2729 = vmul.f32 %v2665, 0.0012755102
  %v2730 = vmul.f32 %v2666, 0.0012755102
  %v2731 = vmul.f32 %v2667, 0.0012755102
  %v2732 = vmul.f32 %v2668, 0.0012755102
  %v2733 = vmul.f32 %v2669, 0.0012755102
  %v2734 = vmul.f32 %v2670, 0.0012755102
  %v2735 = vmul.f32 %v2671, 0.0012755102
  %v2736 = vmul.f32 %v2672, 0.0012755102
  %v2737 = vmul.f32 %v2673, 0.0012755102
  %v2738 = vmul.f32 %v2674, 0.0012755102
  %v2739 = vmul.f32 %v2675, 0.0012755102
  %v2740 = vmul.f32 %v2676, 0.0012755102
  %v2741 = vmul.f32 %v2677, 0.0012755102
  %v2742 = vmul.f32 %v2678, 0.0012755102
  %v2743 = vmul.f32 %v2679, 0.0012755102
  %v2744 = vmul.f32 %v2680, 0.0012755102
  %v2745 = vmul.f32 %v2681, 0.0012755102
  %v2746 = vmul.f32 %v2682, 0.0012755102
  %v2747 = vmul.f32 %v2683, 0.0012755102
  %v2748 = vmul.f32 %v2684, 0.0012755102
  %v2749 = vmul.f32 %v2685, 0.0012755102
  %v2750 = vmul.f32 %v2686, 0.0012755102
  %v2751 = vmul.f32 %v2687, 0.0012755102
  %v2752 = vmul.f32 %v2688, 0.0012755102
  %v2753 = vmul.f32 %v2689, 0.0012755102
  %v2754 = vmul.f32 %v2690, 0.0012755102
  %v2755 = vmul.f32 %v2691, 0.0012755102
  %v2756 = vmul.f32 %v2692, 0.0012755102
  %v2757 = vmul.f32 %v2693, 0.0012755102
  %v2758 = vmul.f32 %v2694, 0.0012755102
  %v2759 = vmul.f32 %v2695, 0.0012755102
  %v2760 = vmul.f32 %v2696, 0.0012755102
  %v2761 = vmul.f32 %v2697, 0.0012755102
  %v2762 = vmul.f32 %v2698, 0.0012755102
  %v2763 = vmul.f32 %v2699, 0.0012755102
  %v2764 = vmul.f32 %v2700, 0.0012755102
  %v2765 = vmul.f32 %v2701, 0.0012755102
  %v2766 = vmul.f32 %v2702, 0.0012755102
  %v2767 = vmul.f32 %v2703, 0.0012755102
  %v2768 = vmul.f32 %v2704, 0.0012755102
  %v2769 = vmul.f32 %v2705, 0.0012755102
  %v2770 = vmul.f32 %v2706, 0.0012755102
  %v2771 = vld [vmem:[%s0] sm:$0xff]
  %v2772 = vld [vmem:[%s0 + $0x8] sm:$0xff]
  %v2773 = vld [vmem:[%s0 + $0x10] sm:$0xff]
  %v2774 = vld [vmem:[%s0 + $0x18] sm:$0xff]
  %v2775 = vld [vmem:[%s0 + $0x20] sm:$0xff]
  %v2776 = vld [vmem:[%s0 + $0x28] sm:$0xff]
  %v2777 = vld [vmem:[%s0 + $0x30] sm:$0xff]
  %v2778 = vld [vmem:[%s0 + $0x38] sm:$0xff]
  %v2779 = vld [vmem:[%s0 + $0x40] sm:$0xff]
  %v2780 = vld [vmem:[%s0 + $0x48] sm:$0xff]
  %v2781 = vld [vmem:[%s0 + $0x50] sm:$0xff]
  %v2782 = vld [vmem:[%s0 + $0x58] sm:$0xff]
  %v2783 = vld [vmem:[%s0 + $0x60] sm:$0xff]
  %v2784 = vld [vmem:[%s0 + $0x68] sm:$0xff]
  %v2785 = vld [vmem:[%s0 + $0x70] sm:$0xff]
  %v2786 = vld [vmem:[%s0 + $0x78] sm:$0xff]
  %v2787 = vld [vmem:[%s0 + $0x80] sm:$0xff]
  %v2788 = vld [vmem:[%s0 + $0x88] sm:$0xff]
  %v2789 = vld [vmem:[%s0 + $0x90] sm:$0xff]
  %v2790 = vld [vmem:[%s0 + $0x98] sm:$0xff]
  %v2791 = vld [vmem:[%s0 + $0xa0] sm:$0xff]
  %v2792 = vld [vmem:[%s0 + $0xa8] sm:$0xff]
  %v2793 = vld [vmem:[%s0 + $0xb0] sm:$0xff]
  %v2794 = vld [vmem:[%s0 + $0xb8] sm:$0xff]
  %v2795 = vld [vmem:[%s0 + $0xc0] sm:$0xff]
  %v2796 = vld [vmem:[%s0 + $0xc8] sm:$0xff]
  %v2797 = vld [vmem:[%s0 + $0xd0] sm:$0xff]
  %v2798 = vld [vmem:[%s0 + $0xd8] sm:$0xff]
  %v2799 = vld [vmem:[%s0 + $0xe0] sm:$0xff]
  %v2800 = vld [vmem:[%s0 + $0xe8] sm:$0xff]
  %v2801 = vld [vmem:[%s0 + $0xf0] sm:$0xff]
  %v2802 = vld [vmem:[%s0 + $0xf8] sm:$0xff]
  %v2803 = vld [vmem:[%s0 + $0x100] sm:$0xff]
  %v2804 = vld [vmem:[%s0 + $0x108] sm:$0xff]
  %v2805 = vld [vmem:[%s0 + $0x110] sm:$0xff]
  %v2806 = vld [vmem:[%s0 + $0x118] sm:$0xff]
  %v2807 = vld [vmem:[%s0 + $0x120] sm:$0xff]
  %v2808 = vld [vmem:[%s0 + $0x128] sm:$0xff]
  %v2809 = vld [vmem:[%s0 + $0x130] sm:$0xff]
  %v2810 = vld [vmem:[%s0 + $0x138] sm:$0xff]
  %v2811 = vld [vmem:[%s0 + $0x140] sm:$0xff]
  %v2812 = vld [vmem:[%s0 + $0x148] sm:$0xff]
  %v2813 = vld [vmem:[%s0 + $0x150] sm:$0xff]
  %v2814 = vld [vmem:[%s0 + $0x158] sm:$0xff]
  %v2815 = vld [vmem:[%s0 + $0x160] sm:$0xff]
  %v2816 = vld [vmem:[%s0 + $0x168] sm:$0xff]
  %v2817 = vld [vmem:[%s0 + $0x170] sm:$0xff]
  %v2818 = vld [vmem:[%s0 + $0x178] sm:$0xff]
  %v2819 = vld [vmem:[%s0 + $0x180] sm:$0xff]
  %v2820 = vld [vmem:[%s0 + $0x188] sm:$0xff]
  %v2821 = vld [vmem:[%s0 + $0x190] sm:$0xff]
  %v2822 = vld [vmem:[%s0 + $0x198] sm:$0xff]
  %v2823 = vld [vmem:[%s0 + $0x1a0] sm:$0xff]
  %v2824 = vld [vmem:[%s0 + $0x1a8] sm:$0xff]
  %v2825 = vld [vmem:[%s0 + $0x1b0] sm:$0xff]
  %v2826 = vld [vmem:[%s0 + $0x1b8] sm:$0xff]
  %v2827 = vld [vmem:[%s0 + $0x1c0] sm:$0xff]
  %v2828 = vld [vmem:[%s0 + $0x1c8] sm:$0xff]
  %v2829 = vld [vmem:[%s0 + $0x1d0] sm:$0xff]
  %v2830 = vld [vmem:[%s0 + $0x1d8] sm:$0xff]
  %v2831 = vld [vmem:[%s0 + $0x1e0] sm:$0xff]
  %v2832 = vld [vmem:[%s0 + $0x1e8] sm:$0xff]
  %v2833 = vld [vmem:[%s0 + $0x1f0] sm:$0xff]
  %v2834 = vld [vmem:[%s0 + $0x1f8] sm:$0xff]
  %v2835 = vadd.f32 %v2707, 1e-05
  %v2836 = vadd.f32 %v2708, 1e-05
  %v2837 = vadd.f32 %v2709, 1e-05
  %v2838 = vadd.f32 %v2710, 1e-05
  %v2839 = vadd.f32 %v2711, 1e-05
  %v2840 = vadd.f32 %v2712, 1e-05
  %v2841 = vadd.f32 %v2713, 1e-05
  %v2842 = vadd.f32 %v2714, 1e-05
  %v2843 = vadd.f32 %v2715, 1e-05
  %v2844 = vadd.f32 %v2716, 1e-05
  %v2845 = vadd.f32 %v2717, 1e-05
  %v2846 = vadd.f32 %v2718, 1e-05
  %v2847 = vadd.f32 %v2719, 1e-05
  %v2848 = vadd.f32 %v2720, 1e-05
  %v2849 = vadd.f32 %v2721, 1e-05
  %v2850 = vadd.f32 %v2722, 1e-05
  %v2851 = vadd.f32 %v2723, 1e-05
  %v2852 = vadd.f32 %v2724, 1e-05
  %v2853 = vadd.f32 %v2725, 1e-05
  %v2854 = vadd.f32 %v2726, 1e-05
  %v2855 = vadd.f32 %v2727, 1e-05
  %v2856 = vadd.f32 %v2728, 1e-05
  %v2857 = vadd.f32 %v2729, 1e-05
  %v2858 = vadd.f32 %v2730, 1e-05
  %v2859 = vadd.f32 %v2731, 1e-05
  %v2860 = vadd.f32 %v2732, 1e-05
  %v2861 = vadd.f32 %v2733, 1e-05
  %v2862 = vadd.f32 %v2734, 1e-05
  %v2863 = vadd.f32 %v2735, 1e-05
  %v2864 = vadd.f32 %v2736, 1e-05
  %v2865 = vadd.f32 %v2737, 1e-05
  %v2866 = vadd.f32 %v2738, 1e-05
  %v2867 = vadd.f32 %v2739, 1e-05
  %v2868 = vadd.f32 %v2740, 1e-05
  %v2869 = vadd.f32 %v2741, 1e-05
  %v2870 = vadd.f32 %v2742, 1e-05
  %v2871 = vadd.f32 %v2743, 1e-05
  %v2872 = vadd.f32 %v2744, 1e-05
  %v2873 = vadd.f32 %v2745, 1e-05
  %v2874 = vadd.f32 %v2746, 1e-05
  %v2875 = vadd.f32 %v2747, 1e-05
  %v2876 = vadd.f32 %v2748, 1e-05
  %v2877 = vadd.f32 %v2749, 1e-05
  %v2878 = vadd.f32 %v2750, 1e-05
  %v2879 = vadd.f32 %v2751, 1e-05
  %v2880 = vadd.f32 %v2752, 1e-05
  %v2881 = vadd.f32 %v2753, 1e-05
  %v2882 = vadd.f32 %v2754, 1e-05
  %v2883 = vadd.f32 %v2755, 1e-05
  %v2884 = vadd.f32 %v2756, 1e-05
  %v2885 = vadd.f32 %v2757, 1e-05
  %v2886 = vadd.f32 %v2758, 1e-05
  %v2887 = vadd.f32 %v2759, 1e-05
  %v2888 = vadd.f32 %v2760, 1e-05
  %v2889 = vadd.f32 %v2761, 1e-05
  %v2890 = vadd.f32 %v2762, 1e-05
  %v2891 = vadd.f32 %v2763, 1e-05
  %v2892 = vadd.f32 %v2764, 1e-05
  %v2893 = vadd.f32 %v2765, 1e-05
  %v2894 = vadd.f32 %v2766, 1e-05
  %v2895 = vadd.f32 %v2767, 1e-05
  %v2896 = vadd.f32 %v2768, 1e-05
  %v2897 = vadd.f32 %v2769, 1e-05
  %v2898 = vadd.f32 %v2770, 1e-05
  %v2899 = vrsqrt.pop %v2835
  %v2900 = vrsqrt.pop %v2836
  %v2901 = vrsqrt.pop %v2837
  %v2902 = vrsqrt.pop %v2838
  %v2903 = vrsqrt.pop %v2839
  %v2904 = vrsqrt.pop %v2840
  %v2905 = vrsqrt.pop %v2841
  %v2906 = vrsqrt.pop %v2842
  %v2907 = vrsqrt.pop %v2843
  %v2908 = vrsqrt.pop %v2844
  %v2909 = vrsqrt.pop %v2845
  %v2910 = vrsqrt.pop %v2846
  %v2911 = vrsqrt.pop %v2847
  %v2912 = vrsqrt.pop %v2848
  %v2913 = vrsqrt.pop %v2849
  %v2914 = vrsqrt.pop %v2850
  %v2915 = vrsqrt.pop %v2851
  %v2916 = vrsqrt.pop %v2852
  %v2917 = vrsqrt.pop %v2853
  %v2918 = vrsqrt.pop %v2854
  %v2919 = vrsqrt.pop %v2855
  %v2920 = vrsqrt.pop %v2856
  %v2921 = vrsqrt.pop %v2857
  %v2922 = vrsqrt.pop %v2858
  %v2923 = vrsqrt.pop %v2859
  %v2924 = vrsqrt.pop %v2860
  %v2925 = vrsqrt.pop %v2861
  %v2926 = vrsqrt.pop %v2862
  %v2927 = vrsqrt.pop %v2863
  %v2928 = vrsqrt.pop %v2864
  %v2929 = vrsqrt.pop %v2865
  %v2930 = vrsqrt.pop %v2866
  %v2931 = vrsqrt.pop %v2867
  %v2932 = vrsqrt.pop %v2868
  %v2933 = vrsqrt.pop %v2869
  %v2934 = vrsqrt.pop %v2870
  %v2935 = vrsqrt.pop %v2871
  %v2936 = vrsqrt.pop %v2872
  %v2937 = vrsqrt.pop %v2873
  %v2938 = vrsqrt.pop %v2874
  %v2939 = vrsqrt.pop %v2875
  %v2940 = vrsqrt.pop %v2876
  %v2941 = vrsqrt.pop %v2877
  %v2942 = vrsqrt.pop %v2878
  %v2943 = vrsqrt.pop %v2879
  %v2944 = vrsqrt.pop %v2880
  %v2945 = vrsqrt.pop %v2881
  %v2946 = vrsqrt.pop %v2882
  %v2947 = vrsqrt.pop %v2883
  %v2948 = vrsqrt.pop %v2884
  %v2949 = vrsqrt.pop %v2885
  %v2950 = vrsqrt.pop %v2886
  %v2951 = vrsqrt.pop %v2887
  %v2952 = vrsqrt.pop %v2888
  %v2953 = vrsqrt.pop %v2889
  %v2954 = vrsqrt.pop %v2890
  %v2955 = vrsqrt.pop %v2891
  %v2956 = vrsqrt.pop %v2892
  %v2957 = vrsqrt.pop %v2893
  %v2958 = vrsqrt.pop %v2894
  %v2959 = vrsqrt.pop %v2895
  %v2960 = vrsqrt.pop %v2896
  %v2961 = vrsqrt.pop %v2897
  %v2962 = vrsqrt.pop %v2898
  %v2963 = vmul.f32 %v2771, %v2899
  %v2964 = vmul.f32 %v2772, %v2900
  %v2965 = vmul.f32 %v2773, %v2901
  %v2966 = vmul.f32 %v2774, %v2902
  %v2967 = vmul.f32 %v2775, %v2903
  %v2968 = vmul.f32 %v2776, %v2904
  %v2969 = vmul.f32 %v2777, %v2905
  %v2970 = vmul.f32 %v2778, %v2906
  %v2971 = vmul.f32 %v2779, %v2907
  %v2972 = vmul.f32 %v2780, %v2908
  %v2973 = vmul.f32 %v2781, %v2909
  %v2974 = vmul.f32 %v2782, %v2910
  %v2975 = vmul.f32 %v2783, %v2911
  %v2976 = vmul.f32 %v2784, %v2912
  %v2977 = vmul.f32 %v2785, %v2913
  %v2978 = vmul.f32 %v2786, %v2914
  %v2979 = vmul.f32 %v2787, %v2915
  %v2980 = vmul.f32 %v2788, %v2916
  %v2981 = vmul.f32 %v2789, %v2917
  %v2982 = vmul.f32 %v2790, %v2918
  %v2983 = vmul.f32 %v2791, %v2919
  %v2984 = vmul.f32 %v2792, %v2920
  %v2985 = vmul.f32 %v2793, %v2921
  %v2986 = vmul.f32 %v2794, %v2922
  %v2987 = vmul.f32 %v2795, %v2923
  %v2988 = vmul.f32 %v2796, %v2924
  %v2989 = vmul.f32 %v2797, %v2925
  %v2990 = vmul.f32 %v2798, %v2926
  %v2991 = vmul.f32 %v2799, %v2927
  %v2992 = vmul.f32 %v2800, %v2928
  %v2993 = vmul.f32 %v2801, %v2929
  %v2994 = vmul.f32 %v2802, %v2930
  %v2995 = vmul.f32 %v2803, %v2931
  %v2996 = vmul.f32 %v2804, %v2932
  %v2997 = vmul.f32 %v2805, %v2933
  %v2998 = vmul.f32 %v2806, %v2934
  %v2999 = vmul.f32 %v2807, %v2935
  %v3000 = vmul.f32 %v2808, %v2936
  %v3001 = vmul.f32 %v2809, %v2937
  %v3002 = vmul.f32 %v2810, %v2938
  %v3003 = vmul.f32 %v2811, %v2939
  %v3004 = vmul.f32 %v2812, %v2940
  %v3005 = vmul.f32 %v2813, %v2941
  %v3006 = vmul.f32 %v2814, %v2942
  %v3007 = vmul.f32 %v2815, %v2943
  %v3008 = vmul.f32 %v2816, %v2944
  %v3009 = vmul.f32 %v2817, %v2945
  %v3010 = vmul.f32 %v2818, %v2946
  %v3011 = vmul.f32 %v2819, %v2947
  %v3012 = vmul.f32 %v2820, %v2948
  %v3013 = vmul.f32 %v2821, %v2949
  %v3014 = vmul.f32 %v2822, %v2950
  %v3015 = vmul.f32 %v2823, %v2951
  %v3016 = vmul.f32 %v2824, %v2952
  %v3017 = vmul.f32 %v2825, %v2953
  %v3018 = vmul.f32 %v2826, %v2954
  %v3019 = vmul.f32 %v2827, %v2955
  %v3020 = vmul.f32 %v2828, %v2956
  %v3021 = vmul.f32 %v2829, %v2957
  %v3022 = vmul.f32 %v2830, %v2958
  %v3023 = vmul.f32 %v2831, %v2959
  %v3024 = vmul.f32 %v2832, %v2960
  %v3025 = vmul.f32 %v2833, %v2961
  %v3026 = vmul.f32 %v2834, %v2962
  %3028 = vset.pattern.permute.xlu0 0
  %3029 = vperm.xlu0 %3028, %v2963
  %v3030 = vpop.permute.xlu0 %3029
  %3033 = vset.pattern.permute.xlu0 0
  %3034 = vperm.xlu0 %3033, %v2964
  %v3035 = vpop.permute.xlu0 %3034
  %3038 = vset.pattern.permute.xlu0 0
  %3039 = vperm.xlu0 %3038, %v2965
  %v3040 = vpop.permute.xlu0 %3039
  %3043 = vset.pattern.permute.xlu0 0
  %3044 = vperm.xlu0 %3043, %v2966
  %v3045 = vpop.permute.xlu0 %3044
  %3048 = vset.pattern.permute.xlu0 0
  %3049 = vperm.xlu0 %3048, %v2967
  %v3050 = vpop.permute.xlu0 %3049
  %3053 = vset.pattern.permute.xlu0 0
  %3054 = vperm.xlu0 %3053, %v2968
  %v3055 = vpop.permute.xlu0 %3054
  %3058 = vset.pattern.permute.xlu0 0
  %3059 = vperm.xlu0 %3058, %v2969
  %v3060 = vpop.permute.xlu0 %3059
  %3063 = vset.pattern.permute.xlu0 0
  %3064 = vperm.xlu0 %3063, %v2970
  %v3065 = vpop.permute.xlu0 %3064
  %3068 = vset.pattern.permute.xlu0 0
  %3069 = vperm.xlu0 %3068, %v2971
  %v3070 = vpop.permute.xlu0 %3069
  %3073 = vset.pattern.permute.xlu0 0
  %3074 = vperm.xlu0 %3073, %v2972
  %v3075 = vpop.permute.xlu0 %3074
  %3078 = vset.pattern.permute.xlu0 0
  %3079 = vperm.xlu0 %3078, %v2973
  %v3080 = vpop.permute.xlu0 %3079
  %3083 = vset.pattern.permute.xlu0 0
  %3084 = vperm.xlu0 %3083, %v2974
  %v3085 = vpop.permute.xlu0 %3084
  %3088 = vset.pattern.permute.xlu0 0
  %3089 = vperm.xlu0 %3088, %v2975
  %v3090 = vpop.permute.xlu0 %3089
  %3093 = vset.pattern.permute.xlu0 0
  %3094 = vperm.xlu0 %3093, %v2976
  %v3095 = vpop.permute.xlu0 %3094
  %3098 = vset.pattern.permute.xlu0 0
  %3099 = vperm.xlu0 %3098, %v2977
  %v3100 = vpop.permute.xlu0 %3099
  %3103 = vset.pattern.permute.xlu0 0
  %3104 = vperm.xlu0 %3103, %v2978
  %v3105 = vpop.permute.xlu0 %3104
  %3108 = vset.pattern.permute.xlu0 0
  %3109 = vperm.xlu0 %3108, %v2979
  %v3110 = vpop.permute.xlu0 %3109
  %3113 = vset.pattern.permute.xlu0 0
  %3114 = vperm.xlu0 %3113, %v2980
  %v3115 = vpop.permute.xlu0 %3114
  %3118 = vset.pattern.permute.xlu0 0
  %3119 = vperm.xlu0 %3118, %v2981
  %v3120 = vpop.permute.xlu0 %3119
  %3123 = vset.pattern.permute.xlu0 0
  %3124 = vperm.xlu0 %3123, %v2982
  %v3125 = vpop.permute.xlu0 %3124
  %3128 = vset.pattern.permute.xlu0 0
  %3129 = vperm.xlu0 %3128, %v2983
  %v3130 = vpop.permute.xlu0 %3129
  %3133 = vset.pattern.permute.xlu0 0
  %3134 = vperm.xlu0 %3133, %v2984
  %v3135 = vpop.permute.xlu0 %3134
  %3138 = vset.pattern.permute.xlu0 0
  %3139 = vperm.xlu0 %3138, %v2985
  %v3140 = vpop.permute.xlu0 %3139
  %3143 = vset.pattern.permute.xlu0 0
  %3144 = vperm.xlu0 %3143, %v2986
  %v3145 = vpop.permute.xlu0 %3144
  %3148 = vset.pattern.permute.xlu0 0
  %3149 = vperm.xlu0 %3148, %v2987
  %v3150 = vpop.permute.xlu0 %3149
  %3153 = vset.pattern.permute.xlu0 0
  %3154 = vperm.xlu0 %3153, %v2988
  %v3155 = vpop.permute.xlu0 %3154
  %3158 = vset.pattern.permute.xlu0 0
  %3159 = vperm.xlu0 %3158, %v2989
  %v3160 = vpop.permute.xlu0 %3159
  %3163 = vset.pattern.permute.xlu0 0
  %3164 = vperm.xlu0 %3163, %v2990
  %v3165 = vpop.permute.xlu0 %3164
  %3168 = vset.pattern.permute.xlu0 0
  %3169 = vperm.xlu0 %3168, %v2991
  %v3170 = vpop.permute.xlu0 %3169
  %3173 = vset.pattern.permute.xlu0 0
  %3174 = vperm.xlu0 %3173, %v2992
  %v3175 = vpop.permute.xlu0 %3174
  %3178 = vset.pattern.permute.xlu0 0
  %3179 = vperm.xlu0 %3178, %v2993
  %v3180 = vpop.permute.xlu0 %3179
  %3183 = vset.pattern.permute.xlu0 0
  %3184 = vperm.xlu0 %3183, %v2994
  %v3185 = vpop.permute.xlu0 %3184
  %3188 = vset.pattern.permute.xlu0 0
  %3189 = vperm.xlu0 %3188, %v2995
  %v3190 = vpop.permute.xlu0 %3189
  %3193 = vset.pattern.permute.xlu0 0
  %3194 = vperm.xlu0 %3193, %v2996
  %v3195 = vpop.permute.xlu0 %3194
  %3198 = vset.pattern.permute.xlu0 0
  %3199 = vperm.xlu0 %3198, %v2997
  %v3200 = vpop.permute.xlu0 %3199
  %3203 = vset.pattern.permute.xlu0 0
  %3204 = vperm.xlu0 %3203, %v2998
  %v3205 = vpop.permute.xlu0 %3204
  %3208 = vset.pattern.permute.xlu0 0
  %3209 = vperm.xlu0 %3208, %v2999
  %v3210 = vpop.permute.xlu0 %3209
  %3213 = vset.pattern.permute.xlu0 0
  %3214 = vperm.xlu0 %3213, %v3000
  %v3215 = vpop.permute.xlu0 %3214
  %3218 = vset.pattern.permute.xlu0 0
  %3219 = vperm.xlu0 %3218, %v3001
  %v3220 = vpop.permute.xlu0 %3219
  %3223 = vset.pattern.permute.xlu0 0
  %3224 = vperm.xlu0 %3223, %v3002
  %v3225 = vpop.permute.xlu0 %3224
  %3228 = vset.pattern.permute.xlu0 0
  %3229 = vperm.xlu0 %3228, %v3003
  %v3230 = vpop.permute.xlu0 %3229
  %3233 = vset.pattern.permute.xlu0 0
  %3234 = vperm.xlu0 %3233, %v3004
  %v3235 = vpop.permute.xlu0 %3234
  %3238 = vset.pattern.permute.xlu0 0
  %3239 = vperm.xlu0 %3238, %v3005
  %v3240 = vpop.permute.xlu0 %3239
  %3243 = vset.pattern.permute.xlu0 0
  %3244 = vperm.xlu0 %3243, %v3006
  %v3245 = vpop.permute.xlu0 %3244
  %3248 = vset.pattern.permute.xlu0 0
  %3249 = vperm.xlu0 %3248, %v3007
  %v3250 = vpop.permute.xlu0 %3249
  %3253 = vset.pattern.permute.xlu0 0
  %3254 = vperm.xlu0 %3253, %v3008
  %v3255 = vpop.permute.xlu0 %3254
  %3258 = vset.pattern.permute.xlu0 0
  %3259 = vperm.xlu0 %3258, %v3009
  %v3260 = vpop.permute.xlu0 %3259
  %3263 = vset.pattern.permute.xlu0 0
  %3264 = vperm.xlu0 %3263, %v3010
  %v3265 = vpop.permute.xlu0 %3264
  %3268 = vset.pattern.permute.xlu0 0
  %3269 = vperm.xlu0 %3268, %v3011
  %v3270 = vpop.permute.xlu0 %3269
  %3273 = vset.pattern.permute.xlu0 0
  %3274 = vperm.xlu0 %3273, %v3012
  %v3275 = vpop.permute.xlu0 %3274
  %3278 = vset.pattern.permute.xlu0 0
  %3279 = vperm.xlu0 %3278, %v3013
  %v3280 = vpop.permute.xlu0 %3279
  %3283 = vset.pattern.permute.xlu0 0
  %3284 = vperm.xlu0 %3283, %v3014
  %v3285 = vpop.permute.xlu0 %3284
  %3288 = vset.pattern.permute.xlu0 0
  %3289 = vperm.xlu0 %3288, %v3015
  %v3290 = vpop.permute.xlu0 %3289
  %3293 = vset.pattern.permute.xlu0 0
  %3294 = vperm.xlu0 %3293, %v3016
  %v3295 = vpop.permute.xlu0 %3294
  %3298 = vset.pattern.permute.xlu0 0
  %3299 = vperm.xlu0 %3298, %v3017
  %v3300 = vpop.permute.xlu0 %3299
  %3303 = vset.pattern.permute.xlu0 0
  %3304 = vperm.xlu0 %3303, %v3018
  %v3305 = vpop.permute.xlu0 %3304
  %3308 = vset.pattern.permute.xlu0 0
  %3309 = vperm.xlu0 %3308, %v3019
  %v3310 = vpop.permute.xlu0 %3309
  %3313 = vset.pattern.permute.xlu0 0
  %3314 = vperm.xlu0 %3313, %v3020
  %v3315 = vpop.permute.xlu0 %3314
  %3318 = vset.pattern.permute.xlu0 0
  %3319 = vperm.xlu0 %3318, %v3021
  %v3320 = vpop.permute.xlu0 %3319
  %3323 = vset.pattern.permute.xlu0 0
  %3324 = vperm.xlu0 %3323, %v3022
  %v3325 = vpop.permute.xlu0 %3324
  %3328 = vset.pattern.permute.xlu0 0
  %3329 = vperm.xlu0 %3328, %v3023
  %v3330 = vpop.permute.xlu0 %3329
  %3333 = vset.pattern.permute.xlu0 0
  %3334 = vperm.xlu0 %3333, %v3024
  %v3335 = vpop.permute.xlu0 %3334
  %3338 = vset.pattern.permute.xlu0 0
  %3339 = vperm.xlu0 %3338, %v3025
  %v3340 = vpop.permute.xlu0 %3339
  %3343 = vset.pattern.permute.xlu0 0
  %3344 = vperm.xlu0 %3343, %v3026
  %v3345 = vpop.permute.xlu0 %3344
  %v3347 = vmul.f32 %v1171, %v3030
  %v3348 = vmul.f32 %v1172, %v3030
  %v3349 = vmul.f32 %v1173, %v3030
  %v3350 = vmul.f32 %v1174, %v3030
  %v3351 = vmul.f32 %v1175, %v3030
  %v3352 = vmul.f32 %v1176, %v3030
  %v3353 = vmul.f32 %v1177, %v3030
  %v3354 = vmul.f32 %v1178, %v3035
  %v3355 = vmul.f32 %v1179, %v3035
  %v3356 = vmul.f32 %v1180, %v3035
  %v3357 = vmul.f32 %v1181, %v3035
  %v3358 = vmul.f32 %v1182, %v3035
  %v3359 = vmul.f32 %v1183, %v3035
  %v3360 = vmul.f32 %v1184, %v3035
  %v3361 = vmul.f32 %v1185, %v3040
  %v3362 = vmul.f32 %v1186, %v3040
  %v3363 = vmul.f32 %v1187, %v3040
  %v3364 = vmul.f32 %v1188, %v3040
  %v3365 = vmul.f32 %v1189, %v3040
  %v3366 = vmul.f32 %v1190, %v3040
  %v3367 = vmul.f32 %v1191, %v3040
  %v3368 = vmul.f32 %v1192, %v3045
  %v3369 = vmul.f32 %v1193, %v3045
  %v3370 = vmul.f32 %v1194, %v3045
  %v3371 = vmul.f32 %v1195, %v3045
  %v3372 = vmul.f32 %v1196, %v3045
  %v3373 = vmul.f32 %v1197, %v3045
  %v3374 = vmul.f32 %v1198, %v3045
  %v3375 = vmul.f32 %v1199, %v3050
  %v3376 = vmul.f32 %v1200, %v3050
  %v3377 = vmul.f32 %v1201, %v3050
  %v3378 = vmul.f32 %v1202, %v3050
  %v3379 = vmul.f32 %v1203, %v3050
  %v3380 = vmul.f32 %v1204, %v3050
  %v3381 = vmul.f32 %v1205, %v3050
  %v3382 = vmul.f32 %v1206, %v3055
  %v3383 = vmul.f32 %v1207, %v3055
  %v3384 = vmul.f32 %v1208, %v3055
  %v3385 = vmul.f32 %v1209, %v3055
  %v3386 = vmul.f32 %v1210, %v3055
  %v3387 = vmul.f32 %v1211, %v3055
  %v3388 = vmul.f32 %v1212, %v3055
  %v3389 = vmul.f32 %v1213, %v3060
  %v3390 = vmul.f32 %v1214, %v3060
  %v3391 = vmul.f32 %v1215, %v3060
  %v3392 = vmul.f32 %v1216, %v3060
  %v3393 = vmul.f32 %v1217, %v3060
  %v3394 = vmul.f32 %v1218, %v3060
  %v3395 = vmul.f32 %v1219, %v3060
  %v3396 = vmul.f32 %v1220, %v3065
  %v3397 = vmul.f32 %v1221, %v3065
  %v3398 = vmul.f32 %v1222, %v3065
  %v3399 = vmul.f32 %v1223, %v3065
  %v3400 = vmul.f32 %v1224, %v3065
  %v3401 = vmul.f32 %v1225, %v3065
  %v3402 = vmul.f32 %v1226, %v3065
  %v3403 = vmul.f32 %v1227, %v3070
  %v3404 = vmul.f32 %v1228, %v3070
  %v3405 = vmul.f32 %v1229, %v3070
  %v3406 = vmul.f32 %v1230, %v3070
  %v3407 = vmul.f32 %v1231, %v3070
  %v3408 = vmul.f32 %v1232, %v3070
  %v3409 = vmul.f32 %v1233, %v3070
  %v3410 = vmul.f32 %v1234, %v3075
  %v3411 = vmul.f32 %v1235, %v3075
  %v3412 = vmul.f32 %v1236, %v3075
  %v3413 = vmul.f32 %v1237, %v3075
  %v3414 = vmul.f32 %v1238, %v3075
  %v3415 = vmul.f32 %v1239, %v3075
  %v3416 = vmul.f32 %v1240, %v3075
  %v3417 = vmul.f32 %v1241, %v3080
  %v3418 = vmul.f32 %v1242, %v3080
  %v3419 = vmul.f32 %v1243, %v3080
  %v3420 = vmul.f32 %v1244, %v3080
  %v3421 = vmul.f32 %v1245, %v3080
  %v3422 = vmul.f32 %v1246, %v3080
  %v3423 = vmul.f32 %v1247, %v3080
  %v3424 = vmul.f32 %v1248, %v3085
  %v3425 = vmul.f32 %v1249, %v3085
  %v3426 = vmul.f32 %v1250, %v3085
  %v3427 = vmul.f32 %v1251, %v3085
  %v3428 = vmul.f32 %v1252, %v3085
  %v3429 = vmul.f32 %v1253, %v3085
  %v3430 = vmul.f32 %v1254, %v3085
  %v3431 = vmul.f32 %v1255, %v3090
  %v3432 = vmul.f32 %v1256, %v3090
  %v3433 = vmul.f32 %v1257, %v3090
  %v3434 = vmul.f32 %v1258, %v3090
  %v3435 = vmul.f32 %v1259, %v3090
  %v3436 = vmul.f32 %v1260, %v3090
  %v3437 = vmul.f32 %v1261, %v3090
  %v3438 = vmul.f32 %v1262, %v3095
  %v3439 = vmul.f32 %v1263, %v3095
  %v3440 = vmul.f32 %v1264, %v3095
  %v3441 = vmul.f32 %v1265, %v3095
  %v3442 = vmul.f32 %v1266, %v3095
  %v3443 = vmul.f32 %v1267, %v3095
  %v3444 = vmul.f32 %v1268, %v3095
  %v3445 = vmul.f32 %v1269, %v3100
  %v3446 = vmul.f32 %v1270, %v3100
  %v3447 = vmul.f32 %v1271, %v3100
  %v3448 = vmul.f32 %v1272, %v3100
  %v3449 = vmul.f32 %v1273, %v3100
  %v3450 = vmul.f32 %v1274, %v3100
  %v3451 = vmul.f32 %v1275, %v3100
  %v3452 = vmul.f32 %v1276, %v3105
  %v3453 = vmul.f32 %v1277, %v3105
  %v3454 = vmul.f32 %v1278, %v3105
  %v3455 = vmul.f32 %v1279, %v3105
  %v3456 = vmul.f32 %v1280, %v3105
  %v3457 = vmul.f32 %v1281, %v3105
  %v3458 = vmul.f32 %v1282, %v3105
  %v3459 = vmul.f32 %v1283, %v3110
  %v3460 = vmul.f32 %v1284, %v3110
  %v3461 = vmul.f32 %v1285, %v3110
  %v3462 = vmul.f32 %v1286, %v3110
  %v3463 = vmul.f32 %v1287, %v3110
  %v3464 = vmul.f32 %v1288, %v3110
  %v3465 = vmul.f32 %v1289, %v3110
  %v3466 = vmul.f32 %v1290, %v3115
  %v3467 = vmul.f32 %v1291, %v3115
  %v3468 = vmul.f32 %v1292, %v3115
  %v3469 = vmul.f32 %v1293, %v3115
  %v3470 = vmul.f32 %v1294, %v3115
  %v3471 = vmul.f32 %v1295, %v3115
  %v3472 = vmul.f32 %v1296, %v3115
  %v3473 = vmul.f32 %v1297, %v3120
  %v3474 = vmul.f32 %v1298, %v3120
  %v3475 = vmul.f32 %v1299, %v3120
  %v3476 = vmul.f32 %v1300, %v3120
  %v3477 = vmul.f32 %v1301, %v3120
  %v3478 = vmul.f32 %v1302, %v3120
  %v3479 = vmul.f32 %v1303, %v3120
  %v3480 = vmul.f32 %v1304, %v3125
  %v3481 = vmul.f32 %v1305, %v3125
  %v3482 = vmul.f32 %v1306, %v3125
  %v3483 = vmul.f32 %v1307, %v3125
  %v3484 = vmul.f32 %v1308, %v3125
  %v3485 = vmul.f32 %v1309, %v3125
  %v3486 = vmul.f32 %v1310, %v3125
  %v3487 = vmul.f32 %v1311, %v3130
  %v3488 = vmul.f32 %v1312, %v3130
  %v3489 = vmul.f32 %v1313, %v3130
  %v3490 = vmul.f32 %v1314, %v3130
  %v3491 = vmul.f32 %v1315, %v3130
  %v3492 = vmul.f32 %v1316, %v3130
  %v3493 = vmul.f32 %v1317, %v3130
  %v3494 = vmul.f32 %v1318, %v3135
  %v3495 = vmul.f32 %v1319, %v3135
  %v3496 = vmul.f32 %v1320, %v3135
  %v3497 = vmul.f32 %v1321, %v3135
  %v3498 = vmul.f32 %v1322, %v3135
  %v3499 = vmul.f32 %v1323, %v3135
  %v3500 = vmul.f32 %v1324, %v3135
  %v3501 = vmul.f32 %v1325, %v3140
  %v3502 = vmul.f32 %v1326, %v3140
  %v3503 = vmul.f32 %v1327, %v3140
  %v3504 = vmul.f32 %v1328, %v3140
  %v3505 = vmul.f32 %v1329, %v3140
  %v3506 = vmul.f32 %v1330, %v3140
  %v3507 = vmul.f32 %v1331, %v3140
  %v3508 = vmul.f32 %v1332, %v3145
  %v3509 = vmul.f32 %v1333, %v3145
  %v3510 = vmul.f32 %v1334, %v3145
  %v3511 = vmul.f32 %v1335, %v3145
  %v3512 = vmul.f32 %v1336, %v3145
  %v3513 = vmul.f32 %v1337, %v3145
  %v3514 = vmul.f32 %v1338, %v3145
  %v3515 = vmul.f32 %v1339, %v3150
  %v3516 = vmul.f32 %v1340, %v3150
  %v3517 = vmul.f32 %v1341, %v3150
  %v3518 = vmul.f32 %v1342, %v3150
  %v3519 = vmul.f32 %v1343, %v3150
  %v3520 = vmul.f32 %v1344, %v3150
  %v3521 = vmul.f32 %v1345, %v3150
  %v3522 = vmul.f32 %v1346, %v3155
  %v3523 = vmul.f32 %v1347, %v3155
  %v3524 = vmul.f32 %v1348, %v3155
  %v3525 = vmul.f32 %v1349, %v3155
  %v3526 = vmul.f32 %v1350, %v3155
  %v3527 = vmul.f32 %v1351, %v3155
  %v3528 = vmul.f32 %v1352, %v3155
  %v3529 = vmul.f32 %v1353, %v3160
  %v3530 = vmul.f32 %v1354, %v3160
  %v3531 = vmul.f32 %v1355, %v3160
  %v3532 = vmul.f32 %v1356, %v3160
  %v3533 = vmul.f32 %v1357, %v3160
  %v3534 = vmul.f32 %v1358, %v3160
  %v3535 = vmul.f32 %v1359, %v3160
  %v3536 = vmul.f32 %v1360, %v3165
  %v3537 = vmul.f32 %v1361, %v3165
  %v3538 = vmul.f32 %v1362, %v3165
  %v3539 = vmul.f32 %v1363, %v3165
  %v3540 = vmul.f32 %v1364, %v3165
  %v3541 = vmul.f32 %v1365, %v3165
  %v3542 = vmul.f32 %v1366, %v3165
  %v3543 = vmul.f32 %v1367, %v3170
  %v3544 = vmul.f32 %v1368, %v3170
  %v3545 = vmul.f32 %v1369, %v3170
  %v3546 = vmul.f32 %v1370, %v3170
  %v3547 = vmul.f32 %v1371, %v3170
  %v3548 = vmul.f32 %v1372, %v3170
  %v3549 = vmul.f32 %v1373, %v3170
  %v3550 = vmul.f32 %v1374, %v3175
  %v3551 = vmul.f32 %v1375, %v3175
  %v3552 = vmul.f32 %v1376, %v3175
  %v3553 = vmul.f32 %v1377, %v3175
  %v3554 = vmul.f32 %v1378, %v3175
  %v3555 = vmul.f32 %v1379, %v3175
  %v3556 = vmul.f32 %v1380, %v3175
  %v3557 = vmul.f32 %v1381, %v3180
  %v3558 = vmul.f32 %v1382, %v3180
  %v3559 = vmul.f32 %v1383, %v3180
  %v3560 = vmul.f32 %v1384, %v3180
  %v3561 = vmul.f32 %v1385, %v3180
  %v3562 = vmul.f32 %v1386, %v3180
  %v3563 = vmul.f32 %v1387, %v3180
  %v3564 = vmul.f32 %v1388, %v3185
  %v3565 = vmul.f32 %v1389, %v3185
  %v3566 = vmul.f32 %v1390, %v3185
  %v3567 = vmul.f32 %v1391, %v3185
  %v3568 = vmul.f32 %v1392, %v3185
  %v3569 = vmul.f32 %v1393, %v3185
  %v3570 = vmul.f32 %v1394, %v3185
  %v3571 = vmul.f32 %v1395, %v3190
  %v3572 = vmul.f32 %v1396, %v3190
  %v3573 = vmul.f32 %v1397, %v3190
  %v3574 = vmul.f32 %v1398, %v3190
  %v3575 = vmul.f32 %v1399, %v3190
  %v3576 = vmul.f32 %v1400, %v3190
  %v3577 = vmul.f32 %v1401, %v3190
  %v3578 = vmul.f32 %v1402, %v3195
  %v3579 = vmul.f32 %v1403, %v3195
  %v3580 = vmul.f32 %v1404, %v3195
  %v3581 = vmul.f32 %v1405, %v3195
  %v3582 = vmul.f32 %v1406, %v3195
  %v3583 = vmul.f32 %v1407, %v3195
  %v3584 = vmul.f32 %v1408, %v3195
  %v3585 = vmul.f32 %v1409, %v3200
  %v3586 = vmul.f32 %v1410, %v3200
  %v3587 = vmul.f32 %v1411, %v3200
  %v3588 = vmul.f32 %v1412, %v3200
  %v3589 = vmul.f32 %v1413, %v3200
  %v3590 = vmul.f32 %v1414, %v3200
  %v3591 = vmul.f32 %v1415, %v3200
  %v3592 = vmul.f32 %v1416, %v3205
  %v3593 = vmul.f32 %v1417, %v3205
  %v3594 = vmul.f32 %v1418, %v3205
  %v3595 = vmul.f32 %v1419, %v3205
  %v3596 = vmul.f32 %v1420, %v3205
  %v3597 = vmul.f32 %v1421, %v3205
  %v3598 = vmul.f32 %v1422, %v3205
  %v3599 = vmul.f32 %v1423, %v3210
  %v3600 = vmul.f32 %v1424, %v3210
  %v3601 = vmul.f32 %v1425, %v3210
  %v3602 = vmul.f32 %v1426, %v3210
  %v3603 = vmul.f32 %v1427, %v3210
  %v3604 = vmul.f32 %v1428, %v3210
  %v3605 = vmul.f32 %v1429, %v3210
  %v3606 = vmul.f32 %v1430, %v3215
  %v3607 = vmul.f32 %v1431, %v3215
  %v3608 = vmul.f32 %v1432, %v3215
  %v3609 = vmul.f32 %v1433, %v3215
  %v3610 = vmul.f32 %v1434, %v3215
  %v3611 = vmul.f32 %v1435, %v3215
  %v3612 = vmul.f32 %v1436, %v3215
  %v3613 = vmul.f32 %v1437, %v3220
  %v3614 = vmul.f32 %v1438, %v3220
  %v3615 = vmul.f32 %v1439, %v3220
  %v3616 = vmul.f32 %v1440, %v3220
  %v3617 = vmul.f32 %v1441, %v3220
  %v3618 = vmul.f32 %v1442, %v3220
  %v3619 = vmul.f32 %v1443, %v3220
  %v3620 = vmul.f32 %v1444, %v3225
  %v3621 = vmul.f32 %v1445, %v3225
  %v3622 = vmul.f32 %v1446, %v3225
  %v3623 = vmul.f32 %v1447, %v3225
  %v3624 = vmul.f32 %v1448, %v3225
  %v3625 = vmul.f32 %v1449, %v3225
  %v3626 = vmul.f32 %v1450, %v3225
  %v3627 = vmul.f32 %v1451, %v3230
  %v3628 = vmul.f32 %v1452, %v3230
  %v3629 = vmul.f32 %v1453, %v3230
  %v3630 = vmul.f32 %v1454, %v3230
  %v3631 = vmul.f32 %v1455, %v3230
  %v3632 = vmul.f32 %v1456, %v3230
  %v3633 = vmul.f32 %v1457, %v3230
  %v3634 = vmul.f32 %v1458, %v3235
  %v3635 = vmul.f32 %v1459, %v3235
  %v3636 = vmul.f32 %v1460, %v3235
  %v3637 = vmul.f32 %v1461, %v3235
  %v3638 = vmul.f32 %v1462, %v3235
  %v3639 = vmul.f32 %v1463, %v3235
  %v3640 = vmul.f32 %v1464, %v3235
  %v3641 = vmul.f32 %v1465, %v3240
  %v3642 = vmul.f32 %v1466, %v3240
  %v3643 = vmul.f32 %v1467, %v3240
  %v3644 = vmul.f32 %v1468, %v3240
  %v3645 = vmul.f32 %v1469, %v3240
  %v3646 = vmul.f32 %v1470, %v3240
  %v3647 = vmul.f32 %v1471, %v3240
  %v3648 = vmul.f32 %v1472, %v3245
  %v3649 = vmul.f32 %v1473, %v3245
  %v3650 = vmul.f32 %v1474, %v3245
  %v3651 = vmul.f32 %v1475, %v3245
  %v3652 = vmul.f32 %v1476, %v3245
  %v3653 = vmul.f32 %v1477, %v3245
  %v3654 = vmul.f32 %v1478, %v3245
  %v3655 = vmul.f32 %v1479, %v3250
  %v3656 = vmul.f32 %v1480, %v3250
  %v3657 = vmul.f32 %v1481, %v3250
  %v3658 = vmul.f32 %v1482, %v3250
  %v3659 = vmul.f32 %v1483, %v3250
  %v3660 = vmul.f32 %v1484, %v3250
  %v3661 = vmul.f32 %v1485, %v3250
  %v3662 = vmul.f32 %v1486, %v3255
  %v3663 = vmul.f32 %v1487, %v3255
  %v3664 = vmul.f32 %v1488, %v3255
  %v3665 = vmul.f32 %v1489, %v3255
  %v3666 = vmul.f32 %v1490, %v3255
  %v3667 = vmul.f32 %v1491, %v3255
  %v3668 = vmul.f32 %v1492, %v3255
  %v3669 = vmul.f32 %v1493, %v3260
  %v3670 = vmul.f32 %v1494, %v3260
  %v3671 = vmul.f32 %v1495, %v3260
  %v3672 = vmul.f32 %v1496, %v3260
  %v3673 = vmul.f32 %v1497, %v3260
  %v3674 = vmul.f32 %v1498, %v3260
  %v3675 = vmul.f32 %v1499, %v3260
  %v3676 = vmul.f32 %v1500, %v3265
  %v3677 = vmul.f32 %v1501, %v3265
  %v3678 = vmul.f32 %v1502, %v3265
  %v3679 = vmul.f32 %v1503, %v3265
  %v3680 = vmul.f32 %v1504, %v3265
  %v3681 = vmul.f32 %v1505, %v3265
  %v3682 = vmul.f32 %v1506, %v3265
  %v3683 = vmul.f32 %v1507, %v3270
  %v3684 = vmul.f32 %v1508, %v3270
  %v3685 = vmul.f32 %v1509, %v3270
  %v3686 = vmul.f32 %v1510, %v3270
  %v3687 = vmul.f32 %v1511, %v3270
  %v3688 = vmul.f32 %v1512, %v3270
  %v3689 = vmul.f32 %v1513, %v3270
  %v3690 = vmul.f32 %v1514, %v3275
  %v3691 = vmul.f32 %v1515, %v3275
  %v3692 = vmul.f32 %v1516, %v3275
  %v3693 = vmul.f32 %v1517, %v3275
  %v3694 = vmul.f32 %v1518, %v3275
  %v3695 = vmul.f32 %v1519, %v3275
  %v3696 = vmul.f32 %v1520, %v3275
  %v3697 = vmul.f32 %v1521, %v3280
  %v3698 = vmul.f32 %v1522, %v3280
  %v3699 = vmul.f32 %v1523, %v3280
  %v3700 = vmul.f32 %v1524, %v3280
  %v3701 = vmul.f32 %v1525, %v3280
  %v3702 = vmul.f32 %v1526, %v3280
  %v3703 = vmul.f32 %v1527, %v3280
  %v3704 = vmul.f32 %v1528, %v3285
  %v3705 = vmul.f32 %v1529, %v3285
  %v3706 = vmul.f32 %v1530, %v3285
  %v3707 = vmul.f32 %v1531, %v3285
  %v3708 = vmul.f32 %v1532, %v3285
  %v3709 = vmul.f32 %v1533, %v3285
  %v3710 = vmul.f32 %v1534, %v3285
  %v3711 = vmul.f32 %v1535, %v3290
  %v3712 = vmul.f32 %v1536, %v3290
  %v3713 = vmul.f32 %v1537, %v3290
  %v3714 = vmul.f32 %v1538, %v3290
  %v3715 = vmul.f32 %v1539, %v3290
  %v3716 = vmul.f32 %v1540, %v3290
  %v3717 = vmul.f32 %v1541, %v3290
  %v3718 = vmul.f32 %v1542, %v3295
  %v3719 = vmul.f32 %v1543, %v3295
  %v3720 = vmul.f32 %v1544, %v3295
  %v3721 = vmul.f32 %v1545, %v3295
  %v3722 = vmul.f32 %v1546, %v3295
  %v3723 = vmul.f32 %v1547, %v3295
  %v3724 = vmul.f32 %v1548, %v3295
  %v3725 = vmul.f32 %v1549, %v3300
  %v3726 = vmul.f32 %v1550, %v3300
  %v3727 = vmul.f32 %v1551, %v3300
  %v3728 = vmul.f32 %v1552, %v3300
  %v3729 = vmul.f32 %v1553, %v3300
  %v3730 = vmul.f32 %v1554, %v3300
  %v3731 = vmul.f32 %v1555, %v3300
  %v3732 = vmul.f32 %v1556, %v3305
  %v3733 = vmul.f32 %v1557, %v3305
  %v3734 = vmul.f32 %v1558, %v3305
  %v3735 = vmul.f32 %v1559, %v3305
  %v3736 = vmul.f32 %v1560, %v3305
  %v3737 = vmul.f32 %v1561, %v3305
  %v3738 = vmul.f32 %v1562, %v3305
  %v3739 = vmul.f32 %v1563, %v3310
  %v3740 = vmul.f32 %v1564, %v3310
  %v3741 = vmul.f32 %v1565, %v3310
  %v3742 = vmul.f32 %v1566, %v3310
  %v3743 = vmul.f32 %v1567, %v3310
  %v3744 = vmul.f32 %v1568, %v3310
  %v3745 = vmul.f32 %v1569, %v3310
  %v3746 = vmul.f32 %v1570, %v3315
  %v3747 = vmul.f32 %v1571, %v3315
  %v3748 = vmul.f32 %v1572, %v3315
  %v3749 = vmul.f32 %v1573, %v3315
  %v3750 = vmul.f32 %v1574, %v3315
  %v3751 = vmul.f32 %v1575, %v3315
  %v3752 = vmul.f32 %v1576, %v3315
  %v3753 = vmul.f32 %v1577, %v3320
  %v3754 = vmul.f32 %v1578, %v3320
  %v3755 = vmul.f32 %v1579, %v3320
  %v3756 = vmul.f32 %v1580, %v3320
  %v3757 = vmul.f32 %v1581, %v3320
  %v3758 = vmul.f32 %v1582, %v3320
  %v3759 = vmul.f32 %v1583, %v3320
  %v3760 = vmul.f32 %v1584, %v3325
  %v3761 = vmul.f32 %v1585, %v3325
  %v3762 = vmul.f32 %v1586, %v3325
  %v3763 = vmul.f32 %v1587, %v3325
  %v3764 = vmul.f32 %v1588, %v3325
  %v3765 = vmul.f32 %v1589, %v3325
  %v3766 = vmul.f32 %v1590, %v3325
  %v3767 = vmul.f32 %v1591, %v3330
  %v3768 = vmul.f32 %v1592, %v3330
  %v3769 = vmul.f32 %v1593, %v3330
  %v3770 = vmul.f32 %v1594, %v3330
  %v3771 = vmul.f32 %v1595, %v3330
  %v3772 = vmul.f32 %v1596, %v3330
  %v3773 = vmul.f32 %v1597, %v3330
  %v3774 = vmul.f32 %v1598, %v3335
  %v3775 = vmul.f32 %v1599, %v3335
  %v3776 = vmul.f32 %v1600, %v3335
  %v3777 = vmul.f32 %v1601, %v3335
  %v3778 = vmul.f32 %v1602, %v3335
  %v3779 = vmul.f32 %v1603, %v3335
  %v3780 = vmul.f32 %v1604, %v3335
  %v3781 = vmul.f32 %v1605, %v3340
  %v3782 = vmul.f32 %v1606, %v3340
  %v3783 = vmul.f32 %v1607, %v3340
  %v3784 = vmul.f32 %v1608, %v3340
  %v3785 = vmul.f32 %v1609, %v3340
  %v3786 = vmul.f32 %v1610, %v3340
  %v3787 = vmul.f32 %v1611, %v3340
  %v3788 = vmul.f32 %v1612, %v3345
  %v3789 = vmul.f32 %v1613, %v3345
  %v3790 = vmul.f32 %v1614, %v3345
  %v3791 = vmul.f32 %v1615, %v3345
  %v3792 = vmul.f32 %v1616, %v3345
  %v3793 = vmul.f32 %v1617, %v3345
  %v3794 = vmul.f32 %v1618, %v3345
  %3796 = vset.pattern.permute.xlu0 1
  %3797 = vperm.xlu0 %3796, %v2771
  %v3798 = vpop.permute.xlu0 %3797
  %3801 = vset.pattern.permute.xlu0 1
  %3802 = vperm.xlu0 %3801, %v2772
  %v3803 = vpop.permute.xlu0 %3802
  %3806 = vset.pattern.permute.xlu0 1
  %3807 = vperm.xlu0 %3806, %v2773
  %v3808 = vpop.permute.xlu0 %3807
  %3811 = vset.pattern.permute.xlu0 1
  %3812 = vperm.xlu0 %3811, %v2774
  %v3813 = vpop.permute.xlu0 %3812
  %3816 = vset.pattern.permute.xlu0 1
  %3817 = vperm.xlu0 %3816, %v2775
  %v3818 = vpop.permute.xlu0 %3817
  %3821 = vset.pattern.permute.xlu0 1
  %3822 = vperm.xlu0 %3821, %v2776
  %v3823 = vpop.permute.xlu0 %3822
  %3826 = vset.pattern.permute.xlu0 1
  %3827 = vperm.xlu0 %3826, %v2777
  %v3828 = vpop.permute.xlu0 %3827
  %3831 = vset.pattern.permute.xlu0 1
  %3832 = vperm.xlu0 %3831, %v2778
  %v3833 = vpop.permute.xlu0 %3832
  %3836 = vset.pattern.permute.xlu0 1
  %3837 = vperm.xlu0 %3836, %v2779
  %v3838 = vpop.permute.xlu0 %3837
  %3841 = vset.pattern.permute.xlu0 1
  %3842 = vperm.xlu0 %3841, %v2780
  %v3843 = vpop.permute.xlu0 %3842
  %3846 = vset.pattern.permute.xlu0 1
  %3847 = vperm.xlu0 %3846, %v2781
  %v3848 = vpop.permute.xlu0 %3847
  %3851 = vset.pattern.permute.xlu0 1
  %3852 = vperm.xlu0 %3851, %v2782
  %v3853 = vpop.permute.xlu0 %3852
  %3856 = vset.pattern.permute.xlu0 1
  %3857 = vperm.xlu0 %3856, %v2783
  %v3858 = vpop.permute.xlu0 %3857
  %3861 = vset.pattern.permute.xlu0 1
  %3862 = vperm.xlu0 %3861, %v2784
  %v3863 = vpop.permute.xlu0 %3862
  %3866 = vset.pattern.permute.xlu0 1
  %3867 = vperm.xlu0 %3866, %v2785
  %v3868 = vpop.permute.xlu0 %3867
  %3871 = vset.pattern.permute.xlu0 1
  %3872 = vperm.xlu0 %3871, %v2786
  %v3873 = vpop.permute.xlu0 %3872
  %3876 = vset.pattern.permute.xlu0 1
  %3877 = vperm.xlu0 %3876, %v2787
  %v3878 = vpop.permute.xlu0 %3877
  %3881 = vset.pattern.permute.xlu0 1
  %3882 = vperm.xlu0 %3881, %v2788
  %v3883 = vpop.permute.xlu0 %3882
  %3886 = vset.pattern.permute.xlu0 1
  %3887 = vperm.xlu0 %3886, %v2789
  %v3888 = vpop.permute.xlu0 %3887
  %3891 = vset.pattern.permute.xlu0 1
  %3892 = vperm.xlu0 %3891, %v2790
  %v3893 = vpop.permute.xlu0 %3892
  %3896 = vset.pattern.permute.xlu0 1
  %3897 = vperm.xlu0 %3896, %v2791
  %v3898 = vpop.permute.xlu0 %3897
  %3901 = vset.pattern.permute.xlu0 1
  %3902 = vperm.xlu0 %3901, %v2792
  %v3903 = vpop.permute.xlu0 %3902
  %3906 = vset.pattern.permute.xlu0 1
  %3907 = vperm.xlu0 %3906, %v2793
  %v3908 = vpop.permute.xlu0 %3907
  %3911 = vset.pattern.permute.xlu0 1
  %3912 = vperm.xlu0 %3911, %v2794
  %v3913 = vpop.permute.xlu0 %3912
  %3916 = vset.pattern.permute.xlu0 1
  %3917 = vperm.xlu0 %3916, %v2795
  %v3918 = vpop.permute.xlu0 %3917
  %3921 = vset.pattern.permute.xlu0 1
  %3922 = vperm.xlu0 %3921, %v2796
  %v3923 = vpop.permute.xlu0 %3922
  %3926 = vset.pattern.permute.xlu0 1
  %3927 = vperm.xlu0 %3926, %v2797
  %v3928 = vpop.permute.xlu0 %3927
  %3931 = vset.pattern.permute.xlu0 1
  %3932 = vperm.xlu0 %3931, %v2798
  %v3933 = vpop.permute.xlu0 %3932
  %3936 = vset.pattern.permute.xlu0 1
  %3937 = vperm.xlu0 %3936, %v2799
  %v3938 = vpop.permute.xlu0 %3937
  %3941 = vset.pattern.permute.xlu0 1
  %3942 = vperm.xlu0 %3941, %v2800
  %v3943 = vpop.permute.xlu0 %3942
  %3946 = vset.pattern.permute.xlu0 1
  %3947 = vperm.xlu0 %3946, %v2801
  %v3948 = vpop.permute.xlu0 %3947
  %3951 = vset.pattern.permute.xlu0 1
  %3952 = vperm.xlu0 %3951, %v2802
  %v3953 = vpop.permute.xlu0 %3952
  %3956 = vset.pattern.permute.xlu0 1
  %3957 = vperm.xlu0 %3956, %v2803
  %v3958 = vpop.permute.xlu0 %3957
  %3961 = vset.pattern.permute.xlu0 1
  %3962 = vperm.xlu0 %3961, %v2804
  %v3963 = vpop.permute.xlu0 %3962
  %3966 = vset.pattern.permute.xlu0 1
  %3967 = vperm.xlu0 %3966, %v2805
  %v3968 = vpop.permute.xlu0 %3967
  %3971 = vset.pattern.permute.xlu0 1
  %3972 = vperm.xlu0 %3971, %v2806
  %v3973 = vpop.permute.xlu0 %3972
  %3976 = vset.pattern.permute.xlu0 1
  %3977 = vperm.xlu0 %3976, %v2807
  %v3978 = vpop.permute.xlu0 %3977
  %3981 = vset.pattern.permute.xlu0 1
  %3982 = vperm.xlu0 %3981, %v2808
  %v3983 = vpop.permute.xlu0 %3982
  %3986 = vset.pattern.permute.xlu0 1
  %3987 = vperm.xlu0 %3986, %v2809
  %v3988 = vpop.permute.xlu0 %3987
  %3991 = vset.pattern.permute.xlu0 1
  %3992 = vperm.xlu0 %3991, %v2810
  %v3993 = vpop.permute.xlu0 %3992
  %3996 = vset.pattern.permute.xlu0 1
  %3997 = vperm.xlu0 %3996, %v2811
  %v3998 = vpop.permute.xlu0 %3997
  %4001 = vset.pattern.permute.xlu0 1
  %4002 = vperm.xlu0 %4001, %v2812
  %v4003 = vpop.permute.xlu0 %4002
  %4006 = vset.pattern.permute.xlu0 1
  %4007 = vperm.xlu0 %4006, %v2813
  %v4008 = vpop.permute.xlu0 %4007
  %4011 = vset.pattern.permute.xlu0 1
  %4012 = vperm.xlu0 %4011, %v2814
  %v4013 = vpop.permute.xlu0 %4012
  %4016 = vset.pattern.permute.xlu0 1
  %4017 = vperm.xlu0 %4016, %v2815
  %v4018 = vpop.permute.xlu0 %4017
  %4021 = vset.pattern.permute.xlu0 1
  %4022 = vperm.xlu0 %4021, %v2816
  %v4023 = vpop.permute.xlu0 %4022
  %4026 = vset.pattern.permute.xlu0 1
  %4027 = vperm.xlu0 %4026, %v2817
  %v4028 = vpop.permute.xlu0 %4027
  %4031 = vset.pattern.permute.xlu0 1
  %4032 = vperm.xlu0 %4031, %v2818
  %v4033 = vpop.permute.xlu0 %4032
  %4036 = vset.pattern.permute.xlu0 1
  %4037 = vperm.xlu0 %4036, %v2819
  %v4038 = vpop.permute.xlu0 %4037
  %4041 = vset.pattern.permute.xlu0 1
  %4042 = vperm.xlu0 %4041, %v2820
  %v4043 = vpop.permute.xlu0 %4042
  %4046 = vset.pattern.permute.xlu0 1
  %4047 = vperm.xlu0 %4046, %v2821
  %v4048 = vpop.permute.xlu0 %4047
  %4051 = vset.pattern.permute.xlu0 1
  %4052 = vperm.xlu0 %4051, %v2822
  %v4053 = vpop.permute.xlu0 %4052
  %4056 = vset.pattern.permute.xlu0 1
  %4057 = vperm.xlu0 %4056, %v2823
  %v4058 = vpop.permute.xlu0 %4057
  %4061 = vset.pattern.permute.xlu0 1
  %4062 = vperm.xlu0 %4061, %v2824
  %v4063 = vpop.permute.xlu0 %4062
  %4066 = vset.pattern.permute.xlu0 1
  %4067 = vperm.xlu0 %4066, %v2825
  %v4068 = vpop.permute.xlu0 %4067
  %4071 = vset.pattern.permute.xlu0 1
  %4072 = vperm.xlu0 %4071, %v2826
  %v4073 = vpop.permute.xlu0 %4072
  %4076 = vset.pattern.permute.xlu0 1
  %4077 = vperm.xlu0 %4076, %v2827
  %v4078 = vpop.permute.xlu0 %4077
  %4081 = vset.pattern.permute.xlu0 1
  %4082 = vperm.xlu0 %4081, %v2828
  %v4083 = vpop.permute.xlu0 %4082
  %4086 = vset.pattern.permute.xlu0 1
  %4087 = vperm.xlu0 %4086, %v2829
  %v4088 = vpop.permute.xlu0 %4087
  %4091 = vset.pattern.permute.xlu0 1
  %4092 = vperm.xlu0 %4091, %v2830
  %v4093 = vpop.permute.xlu0 %4092
  %4096 = vset.pattern.permute.xlu0 1
  %4097 = vperm.xlu0 %4096, %v2831
  %v4098 = vpop.permute.xlu0 %4097
  %4101 = vset.pattern.permute.xlu0 1
  %4102 = vperm.xlu0 %4101, %v2832
  %v4103 = vpop.permute.xlu0 %4102
  %4106 = vset.pattern.permute.xlu0 1
  %4107 = vperm.xlu0 %4106, %v2833
  %v4108 = vpop.permute.xlu0 %4107
  %4111 = vset.pattern.permute.xlu0 1
  %4112 = vperm.xlu0 %4111, %v2834
  %v4113 = vpop.permute.xlu0 %4112
  %v4115 = vadd.f32 %v3347, %v3798
  %v4116 = vadd.f32 %v3348, %v3798
  %v4117 = vadd.f32 %v3349, %v3798
  %v4118 = vadd.f32 %v3350, %v3798
  %v4119 = vadd.f32 %v3351, %v3798
  %v4120 = vadd.f32 %v3352, %v3798
  %v4121 = vadd.f32 %v3353, %v3798
  %v4122 = vadd.f32 %v3354, %v3803
  %v4123 = vadd.f32 %v3355, %v3803
  %v4124 = vadd.f32 %v3356, %v3803
  %v4125 = vadd.f32 %v3357, %v3803
  %v4126 = vadd.f32 %v3358, %v3803
  %v4127 = vadd.f32 %v3359, %v3803
  %v4128 = vadd.f32 %v3360, %v3803
  %v4129 = vadd.f32 %v3361, %v3808
  %v4130 = vadd.f32 %v3362, %v3808
  %v4131 = vadd.f32 %v3363, %v3808
  %v4132 = vadd.f32 %v3364, %v3808
  %v4133 = vadd.f32 %v3365, %v3808
  %v4134 = vadd.f32 %v3366, %v3808
  %v4135 = vadd.f32 %v3367, %v3808
  %v4136 = vadd.f32 %v3368, %v3813
  %v4137 = vadd.f32 %v3369, %v3813
  %v4138 = vadd.f32 %v3370, %v3813
  %v4139 = vadd.f32 %v3371, %v3813
  %v4140 = vadd.f32 %v3372, %v3813
  %v4141 = vadd.f32 %v3373, %v3813
  %v4142 = vadd.f32 %v3374, %v3813
  %v4143 = vadd.f32 %v3375, %v3818
  %v4144 = vadd.f32 %v3376, %v3818
  %v4145 = vadd.f32 %v3377, %v3818
  %v4146 = vadd.f32 %v3378, %v3818
  %v4147 = vadd.f32 %v3379, %v3818
  %v4148 = vadd.f32 %v3380, %v3818
  %v4149 = vadd.f32 %v3381, %v3818
  %v4150 = vadd.f32 %v3382, %v3823
  %v4151 = vadd.f32 %v3383, %v3823
  %v4152 = vadd.f32 %v3384, %v3823
  %v4153 = vadd.f32 %v3385, %v3823
  %v4154 = vadd.f32 %v3386, %v3823
  %v4155 = vadd.f32 %v3387, %v3823
  %v4156 = vadd.f32 %v3388, %v3823
  %v4157 = vadd.f32 %v3389, %v3828
  %v4158 = vadd.f32 %v3390, %v3828
  %v4159 = vadd.f32 %v3391, %v3828
  %v4160 = vadd.f32 %v3392, %v3828
  %v4161 = vadd.f32 %v3393, %v3828
  %v4162 = vadd.f32 %v3394, %v3828
  %v4163 = vadd.f32 %v3395, %v3828
  %v4164 = vadd.f32 %v3396, %v3833
  %v4165 = vadd.f32 %v3397, %v3833
  %v4166 = vadd.f32 %v3398, %v3833
  %v4167 = vadd.f32 %v3399, %v3833
  %v4168 = vadd.f32 %v3400, %v3833
  %v4169 = vadd.f32 %v3401, %v3833
  %v4170 = vadd.f32 %v3402, %v3833
  %v4171 = vadd.f32 %v3403, %v3838
  %v4172 = vadd.f32 %v3404, %v3838
  %v4173 = vadd.f32 %v3405, %v3838
  %v4174 = vadd.f32 %v3406, %v3838
  %v4175 = vadd.f32 %v3407, %v3838
  %v4176 = vadd.f32 %v3408, %v3838
  %v4177 = vadd.f32 %v3409, %v3838
  %v4178 = vadd.f32 %v3410, %v3843
  %v4179 = vadd.f32 %v3411, %v3843
  %v4180 = vadd.f32 %v3412, %v3843
  %v4181 = vadd.f32 %v3413, %v3843
  %v4182 = vadd.f32 %v3414, %v3843
  %v4183 = vadd.f32 %v3415, %v3843
  %v4184 = vadd.f32 %v3416, %v3843
  %v4185 = vadd.f32 %v3417, %v3848
  %v4186 = vadd.f32 %v3418, %v3848
  %v4187 = vadd.f32 %v3419, %v3848
  %v4188 = vadd.f32 %v3420, %v3848
  %v4189 = vadd.f32 %v3421, %v3848
  %v4190 = vadd.f32 %v3422, %v3848
  %v4191 = vadd.f32 %v3423, %v3848
  %v4192 = vadd.f32 %v3424, %v3853
  %v4193 = vadd.f32 %v3425, %v3853
  %v4194 = vadd.f32 %v3426, %v3853
  %v4195 = vadd.f32 %v3427, %v3853
  %v4196 = vadd.f32 %v3428, %v3853
  %v4197 = vadd.f32 %v3429, %v3853
  %v4198 = vadd.f32 %v3430, %v3853
  %v4199 = vadd.f32 %v3431, %v3858
  %v4200 = vadd.f32 %v3432, %v3858
  %v4201 = vadd.f32 %v3433, %v3858
  %v4202 = vadd.f32 %v3434, %v3858
  %v4203 = vadd.f32 %v3435, %v3858
  %v4204 = vadd.f32 %v3436, %v3858
  %v4205 = vadd.f32 %v3437, %v3858
  %v4206 = vadd.f32 %v3438, %v3863
  %v4207 = vadd.f32 %v3439, %v3863
  %v4208 = vadd.f32 %v3440, %v3863
  %v4209 = vadd.f32 %v3441, %v3863
  %v4210 = vadd.f32 %v3442, %v3863
  %v4211 = vadd.f32 %v3443, %v3863
  %v4212 = vadd.f32 %v3444, %v3863
  %v4213 = vadd.f32 %v3445, %v3868
  %v4214 = vadd.f32 %v3446, %v3868
  %v4215 = vadd.f32 %v3447, %v3868
  %v4216 = vadd.f32 %v3448, %v3868
  %v4217 = vadd.f32 %v3449, %v3868
  %v4218 = vadd.f32 %v3450, %v3868
  %v4219 = vadd.f32 %v3451, %v3868
  %v4220 = vadd.f32 %v3452, %v3873
  %v4221 = vadd.f32 %v3453, %v3873
  %v4222 = vadd.f32 %v3454, %v3873
  %v4223 = vadd.f32 %v3455, %v3873
  %v4224 = vadd.f32 %v3456, %v3873
  %v4225 = vadd.f32 %v3457, %v3873
  %v4226 = vadd.f32 %v3458, %v3873
  %v4227 = vadd.f32 %v3459, %v3878
  %v4228 = vadd.f32 %v3460, %v3878
  %v4229 = vadd.f32 %v3461, %v3878
  %v4230 = vadd.f32 %v3462, %v3878
  %v4231 = vadd.f32 %v3463, %v3878
  %v4232 = vadd.f32 %v3464, %v3878
  %v4233 = vadd.f32 %v3465, %v3878
  %v4234 = vadd.f32 %v3466, %v3883
  %v4235 = vadd.f32 %v3467, %v3883
  %v4236 = vadd.f32 %v3468, %v3883
  %v4237 = vadd.f32 %v3469, %v3883
  %v4238 = vadd.f32 %v3470, %v3883
  %v4239 = vadd.f32 %v3471, %v3883
  %v4240 = vadd.f32 %v3472, %v3883
  %v4241 = vadd.f32 %v3473, %v3888
  %v4242 = vadd.f32 %v3474, %v3888
  %v4243 = vadd.f32 %v3475, %v3888
  %v4244 = vadd.f32 %v3476, %v3888
  %v4245 = vadd.f32 %v3477, %v3888
  %v4246 = vadd.f32 %v3478, %v3888
  %v4247 = vadd.f32 %v3479, %v3888
  %v4248 = vadd.f32 %v3480, %v3893
  %v4249 = vadd.f32 %v3481, %v3893
  %v4250 = vadd.f32 %v3482, %v3893
  %v4251 = vadd.f32 %v3483, %v3893
  %v4252 = vadd.f32 %v3484, %v3893
  %v4253 = vadd.f32 %v3485, %v3893
  %v4254 = vadd.f32 %v3486, %v3893
  %v4255 = vadd.f32 %v3487, %v3898
  %v4256 = vadd.f32 %v3488, %v3898
  %v4257 = vadd.f32 %v3489, %v3898
  %v4258 = vadd.f32 %v3490, %v3898
  %v4259 = vadd.f32 %v3491, %v3898
  %v4260 = vadd.f32 %v3492, %v3898
  %v4261 = vadd.f32 %v3493, %v3898
  %v4262 = vadd.f32 %v3494, %v3903
  %v4263 = vadd.f32 %v3495, %v3903
  %v4264 = vadd.f32 %v3496, %v3903
  %v4265 = vadd.f32 %v3497, %v3903
  %v4266 = vadd.f32 %v3498, %v3903
  %v4267 = vadd.f32 %v3499, %v3903
  %v4268 = vadd.f32 %v3500, %v3903
  %v4269 = vadd.f32 %v3501, %v3908
  %v4270 = vadd.f32 %v3502, %v3908
  %v4271 = vadd.f32 %v3503, %v3908
  %v4272 = vadd.f32 %v3504, %v3908
  %v4273 = vadd.f32 %v3505, %v3908
  %v4274 = vadd.f32 %v3506, %v3908
  %v4275 = vadd.f32 %v3507, %v3908
  %v4276 = vadd.f32 %v3508, %v3913
  %v4277 = vadd.f32 %v3509, %v3913
  %v4278 = vadd.f32 %v3510, %v3913
  %v4279 = vadd.f32 %v3511, %v3913
  %v4280 = vadd.f32 %v3512, %v3913
  %v4281 = vadd.f32 %v3513, %v3913
  %v4282 = vadd.f32 %v3514, %v3913
  %v4283 = vadd.f32 %v3515, %v3918
  %v4284 = vadd.f32 %v3516, %v3918
  %v4285 = vadd.f32 %v3517, %v3918
  %v4286 = vadd.f32 %v3518, %v3918
  %v4287 = vadd.f32 %v3519, %v3918
  %v4288 = vadd.f32 %v3520, %v3918
  %v4289 = vadd.f32 %v3521, %v3918
  %v4290 = vadd.f32 %v3522, %v3923
  %v4291 = vadd.f32 %v3523, %v3923
  %v4292 = vadd.f32 %v3524, %v3923
  %v4293 = vadd.f32 %v3525, %v3923
  %v4294 = vadd.f32 %v3526, %v3923
  %v4295 = vadd.f32 %v3527, %v3923
  %v4296 = vadd.f32 %v3528, %v3923
  %v4297 = vadd.f32 %v3529, %v3928
  %v4298 = vadd.f32 %v3530, %v3928
  %v4299 = vadd.f32 %v3531, %v3928
  %v4300 = vadd.f32 %v3532, %v3928
  %v4301 = vadd.f32 %v3533, %v3928
  %v4302 = vadd.f32 %v3534, %v3928
  %v4303 = vadd.f32 %v3535, %v3928
  %v4304 = vadd.f32 %v3536, %v3933
  %v4305 = vadd.f32 %v3537, %v3933
  %v4306 = vadd.f32 %v3538, %v3933
  %v4307 = vadd.f32 %v3539, %v3933
  %v4308 = vadd.f32 %v3540, %v3933
  %v4309 = vadd.f32 %v3541, %v3933
  %v4310 = vadd.f32 %v3542, %v3933
  %v4311 = vadd.f32 %v3543, %v3938
  %v4312 = vadd.f32 %v3544, %v3938
  %v4313 = vadd.f32 %v3545, %v3938
  %v4314 = vadd.f32 %v3546, %v3938
  %v4315 = vadd.f32 %v3547, %v3938
  %v4316 = vadd.f32 %v3548, %v3938
  %v4317 = vadd.f32 %v3549, %v3938
  %v4318 = vadd.f32 %v3550, %v3943
  %v4319 = vadd.f32 %v3551, %v3943
  %v4320 = vadd.f32 %v3552, %v3943
  %v4321 = vadd.f32 %v3553, %v3943
  %v4322 = vadd.f32 %v3554, %v3943
  %v4323 = vadd.f32 %v3555, %v3943
  %v4324 = vadd.f32 %v3556, %v3943
  %v4325 = vadd.f32 %v3557, %v3948
  %v4326 = vadd.f32 %v3558, %v3948
  %v4327 = vadd.f32 %v3559, %v3948
  %v4328 = vadd.f32 %v3560, %v3948
  %v4329 = vadd.f32 %v3561, %v3948
  %v4330 = vadd.f32 %v3562, %v3948
  %v4331 = vadd.f32 %v3563, %v3948
  %v4332 = vadd.f32 %v3564, %v3953
  %v4333 = vadd.f32 %v3565, %v3953
  %v4334 = vadd.f32 %v3566, %v3953
  %v4335 = vadd.f32 %v3567, %v3953
  %v4336 = vadd.f32 %v3568, %v3953
  %v4337 = vadd.f32 %v3569, %v3953
  %v4338 = vadd.f32 %v3570, %v3953
  %v4339 = vadd.f32 %v3571, %v3958
  %v4340 = vadd.f32 %v3572, %v3958
  %v4341 = vadd.f32 %v3573, %v3958
  %v4342 = vadd.f32 %v3574, %v3958
  %v4343 = vadd.f32 %v3575, %v3958
  %v4344 = vadd.f32 %v3576, %v3958
  %v4345 = vadd.f32 %v3577, %v3958
  %v4346 = vadd.f32 %v3578, %v3963
  %v4347 = vadd.f32 %v3579, %v3963
  %v4348 = vadd.f32 %v3580, %v3963
  %v4349 = vadd.f32 %v3581, %v3963
  %v4350 = vadd.f32 %v3582, %v3963
  %v4351 = vadd.f32 %v3583, %v3963
  %v4352 = vadd.f32 %v3584, %v3963
  %v4353 = vadd.f32 %v3585, %v3968
  %v4354 = vadd.f32 %v3586, %v3968
  %v4355 = vadd.f32 %v3587, %v3968
  %v4356 = vadd.f32 %v3588, %v3968
  %v4357 = vadd.f32 %v3589, %v3968
  %v4358 = vadd.f32 %v3590, %v3968
  %v4359 = vadd.f32 %v3591, %v3968
  %v4360 = vadd.f32 %v3592, %v3973
  %v4361 = vadd.f32 %v3593, %v3973
  %v4362 = vadd.f32 %v3594, %v3973
  %v4363 = vadd.f32 %v3595, %v3973
  %v4364 = vadd.f32 %v3596, %v3973
  %v4365 = vadd.f32 %v3597, %v3973
  %v4366 = vadd.f32 %v3598, %v3973
  %v4367 = vadd.f32 %v3599, %v3978
  %v4368 = vadd.f32 %v3600, %v3978
  %v4369 = vadd.f32 %v3601, %v3978
  %v4370 = vadd.f32 %v3602, %v3978
  %v4371 = vadd.f32 %v3603, %v3978
  %v4372 = vadd.f32 %v3604, %v3978
  %v4373 = vadd.f32 %v3605, %v3978
  %v4374 = vadd.f32 %v3606, %v3983
  %v4375 = vadd.f32 %v3607, %v3983
  %v4376 = vadd.f32 %v3608, %v3983
  %v4377 = vadd.f32 %v3609, %v3983
  %v4378 = vadd.f32 %v3610, %v3983
  %v4379 = vadd.f32 %v3611, %v3983
  %v4380 = vadd.f32 %v3612, %v3983
  %v4381 = vadd.f32 %v3613, %v3988
  %v4382 = vadd.f32 %v3614, %v3988
  %v4383 = vadd.f32 %v3615, %v3988
  %v4384 = vadd.f32 %v3616, %v3988
  %v4385 = vadd.f32 %v3617, %v3988
  %v4386 = vadd.f32 %v3618, %v3988
  %v4387 = vadd.f32 %v3619, %v3988
  %v4388 = vadd.f32 %v3620, %v3993
  %v4389 = vadd.f32 %v3621, %v3993
  %v4390 = vadd.f32 %v3622, %v3993
  %v4391 = vadd.f32 %v3623, %v3993
  %v4392 = vadd.f32 %v3624, %v3993
  %v4393 = vadd.f32 %v3625, %v3993
  %v4394 = vadd.f32 %v3626, %v3993
  %v4395 = vadd.f32 %v3627, %v3998
  %v4396 = vadd.f32 %v3628, %v3998
  %v4397 = vadd.f32 %v3629, %v3998
  %v4398 = vadd.f32 %v3630, %v3998
  %v4399 = vadd.f32 %v3631, %v3998
  %v4400 = vadd.f32 %v3632, %v3998
  %v4401 = vadd.f32 %v3633, %v3998
  %v4402 = vadd.f32 %v3634, %v4003
  %v4403 = vadd.f32 %v3635, %v4003
  %v4404 = vadd.f32 %v3636, %v4003
  %v4405 = vadd.f32 %v3637, %v4003
  %v4406 = vadd.f32 %v3638, %v4003
  %v4407 = vadd.f32 %v3639, %v4003
  %v4408 = vadd.f32 %v3640, %v4003
  %v4409 = vadd.f32 %v3641, %v4008
  %v4410 = vadd.f32 %v3642, %v4008
  %v4411 = vadd.f32 %v3643, %v4008
  %v4412 = vadd.f32 %v3644, %v4008
  %v4413 = vadd.f32 %v3645, %v4008
  %v4414 = vadd.f32 %v3646, %v4008
  %v4415 = vadd.f32 %v3647, %v4008
  %v4416 = vadd.f32 %v3648, %v4013
  %v4417 = vadd.f32 %v3649, %v4013
  %v4418 = vadd.f32 %v3650, %v4013
  %v4419 = vadd.f32 %v3651, %v4013
  %v4420 = vadd.f32 %v3652, %v4013
  %v4421 = vadd.f32 %v3653, %v4013
  %v4422 = vadd.f32 %v3654, %v4013
  %v4423 = vadd.f32 %v3655, %v4018
  %v4424 = vadd.f32 %v3656, %v4018
  %v4425 = vadd.f32 %v3657, %v4018
  %v4426 = vadd.f32 %v3658, %v4018
  %v4427 = vadd.f32 %v3659, %v4018
  %v4428 = vadd.f32 %v3660, %v4018
  %v4429 = vadd.f32 %v3661, %v4018
  %v4430 = vadd.f32 %v3662, %v4023
  %v4431 = vadd.f32 %v3663, %v4023
  %v4432 = vadd.f32 %v3664, %v4023
  %v4433 = vadd.f32 %v3665, %v4023
  %v4434 = vadd.f32 %v3666, %v4023
  %v4435 = vadd.f32 %v3667, %v4023
  %v4436 = vadd.f32 %v3668, %v4023
  %v4437 = vadd.f32 %v3669, %v4028
  %v4438 = vadd.f32 %v3670, %v4028
  %v4439 = vadd.f32 %v3671, %v4028
  %v4440 = vadd.f32 %v3672, %v4028
  %v4441 = vadd.f32 %v3673, %v4028
  %v4442 = vadd.f32 %v3674, %v4028
  %v4443 = vadd.f32 %v3675, %v4028
  %v4444 = vadd.f32 %v3676, %v4033
  %v4445 = vadd.f32 %v3677, %v4033
  %v4446 = vadd.f32 %v3678, %v4033
  %v4447 = vadd.f32 %v3679, %v4033
  %v4448 = vadd.f32 %v3680, %v4033
  %v4449 = vadd.f32 %v3681, %v4033
  %v4450 = vadd.f32 %v3682, %v4033
  %v4451 = vadd.f32 %v3683, %v4038
  %v4452 = vadd.f32 %v3684, %v4038
  %v4453 = vadd.f32 %v3685, %v4038
  %v4454 = vadd.f32 %v3686, %v4038
  %v4455 = vadd.f32 %v3687, %v4038
  %v4456 = vadd.f32 %v3688, %v4038
  %v4457 = vadd.f32 %v3689, %v4038
  %v4458 = vadd.f32 %v3690, %v4043
  %v4459 = vadd.f32 %v3691, %v4043
  %v4460 = vadd.f32 %v3692, %v4043
  %v4461 = vadd.f32 %v3693, %v4043
  %v4462 = vadd.f32 %v3694, %v4043
  %v4463 = vadd.f32 %v3695, %v4043
  %v4464 = vadd.f32 %v3696, %v4043
  %v4465 = vadd.f32 %v3697, %v4048
  %v4466 = vadd.f32 %v3698, %v4048
  %v4467 = vadd.f32 %v3699, %v4048
  %v4468 = vadd.f32 %v3700, %v4048
  %v4469 = vadd.f32 %v3701, %v4048
  %v4470 = vadd.f32 %v3702, %v4048
  %v4471 = vadd.f32 %v3703, %v4048
  %v4472 = vadd.f32 %v3704, %v4053
  %v4473 = vadd.f32 %v3705, %v4053
  %v4474 = vadd.f32 %v3706, %v4053
  %v4475 = vadd.f32 %v3707, %v4053
  %v4476 = vadd.f32 %v3708, %v4053
  %v4477 = vadd.f32 %v3709, %v4053
  %v4478 = vadd.f32 %v3710, %v4053
  %v4479 = vadd.f32 %v3711, %v4058
  %v4480 = vadd.f32 %v3712, %v4058
  %v4481 = vadd.f32 %v3713, %v4058
  %v4482 = vadd.f32 %v3714, %v4058
  %v4483 = vadd.f32 %v3715, %v4058
  %v4484 = vadd.f32 %v3716, %v4058
  %v4485 = vadd.f32 %v3717, %v4058
  %v4486 = vadd.f32 %v3718, %v4063
  %v4487 = vadd.f32 %v3719, %v4063
  %v4488 = vadd.f32 %v3720, %v4063
  %v4489 = vadd.f32 %v3721, %v4063
  %v4490 = vadd.f32 %v3722, %v4063
  %v4491 = vadd.f32 %v3723, %v4063
  %v4492 = vadd.f32 %v3724, %v4063
  %v4493 = vadd.f32 %v3725, %v4068
  %v4494 = vadd.f32 %v3726, %v4068
  %v4495 = vadd.f32 %v3727, %v4068
  %v4496 = vadd.f32 %v3728, %v4068
  %v4497 = vadd.f32 %v3729, %v4068
  %v4498 = vadd.f32 %v3730, %v4068
  %v4499 = vadd.f32 %v3731, %v4068
  %v4500 = vadd.f32 %v3732, %v4073
  %v4501 = vadd.f32 %v3733, %v4073
  %v4502 = vadd.f32 %v3734, %v4073
  %v4503 = vadd.f32 %v3735, %v4073
  %v4504 = vadd.f32 %v3736, %v4073
  %v4505 = vadd.f32 %v3737, %v4073
  %v4506 = vadd.f32 %v3738, %v4073
  %v4507 = vadd.f32 %v3739, %v4078
  %v4508 = vadd.f32 %v3740, %v4078
  %v4509 = vadd.f32 %v3741, %v4078
  %v4510 = vadd.f32 %v3742, %v4078
  %v4511 = vadd.f32 %v3743, %v4078
  %v4512 = vadd.f32 %v3744, %v4078
  %v4513 = vadd.f32 %v3745, %v4078
  %v4514 = vadd.f32 %v3746, %v4083
  %v4515 = vadd.f32 %v3747, %v4083
  %v4516 = vadd.f32 %v3748, %v4083
  %v4517 = vadd.f32 %v3749, %v4083
  %v4518 = vadd.f32 %v3750, %v4083
  %v4519 = vadd.f32 %v3751, %v4083
  %v4520 = vadd.f32 %v3752, %v4083
  %v4521 = vadd.f32 %v3753, %v4088
  %v4522 = vadd.f32 %v3754, %v4088
  %v4523 = vadd.f32 %v3755, %v4088
  %v4524 = vadd.f32 %v3756, %v4088
  %v4525 = vadd.f32 %v3757, %v4088
  %v4526 = vadd.f32 %v3758, %v4088
  %v4527 = vadd.f32 %v3759, %v4088
  %v4528 = vadd.f32 %v3760, %v4093
  %v4529 = vadd.f32 %v3761, %v4093
  %v4530 = vadd.f32 %v3762, %v4093
  %v4531 = vadd.f32 %v3763, %v4093
  %v4532 = vadd.f32 %v3764, %v4093
  %v4533 = vadd.f32 %v3765, %v4093
  %v4534 = vadd.f32 %v3766, %v4093
  %v4535 = vadd.f32 %v3767, %v4098
  %v4536 = vadd.f32 %v3768, %v4098
  %v4537 = vadd.f32 %v3769, %v4098
  %v4538 = vadd.f32 %v3770, %v4098
  %v4539 = vadd.f32 %v3771, %v4098
  %v4540 = vadd.f32 %v3772, %v4098
  %v4541 = vadd.f32 %v3773, %v4098
  %v4542 = vadd.f32 %v3774, %v4103
  %v4543 = vadd.f32 %v3775, %v4103
  %v4544 = vadd.f32 %v3776, %v4103
  %v4545 = vadd.f32 %v3777, %v4103
  %v4546 = vadd.f32 %v3778, %v4103
  %v4547 = vadd.f32 %v3779, %v4103
  %v4548 = vadd.f32 %v3780, %v4103
  %v4549 = vadd.f32 %v3781, %v4108
  %v4550 = vadd.f32 %v3782, %v4108
  %v4551 = vadd.f32 %v3783, %v4108
  %v4552 = vadd.f32 %v3784, %v4108
  %v4553 = vadd.f32 %v3785, %v4108
  %v4554 = vadd.f32 %v3786, %v4108
  %v4555 = vadd.f32 %v3787, %v4108
  %v4556 = vadd.f32 %v3788, %v4113
  %v4557 = vadd.f32 %v3789, %v4113
  %v4558 = vadd.f32 %v3790, %v4113
  %v4559 = vadd.f32 %v3791, %v4113
  %v4560 = vadd.f32 %v3792, %v4113
  %v4561 = vadd.f32 %v3793, %v4113
  %v4562 = vadd.f32 %v3794, %v4113
  %v4563 = vld [vmem:[%s3] sm:$0xff]
  %v4564 = vld [vmem:[%s3 + $0x8] sm:$0xff]
  %v4565 = vld [vmem:[%s3 + $0x10] sm:$0xff]
  %v4566 = vld [vmem:[%s3 + $0x18] sm:$0xff]
  %v4567 = vld [vmem:[%s3 + $0x20] sm:$0xff]
  %v4568 = vld [vmem:[%s3 + $0x28] sm:$0xff]
  %v4569 = vld [vmem:[%s3 + $0x30] sm:$0xff]
  %v4570 = vld [vmem:[%s3 + $0x38] sm:$0xff]
  %v4571 = vld [vmem:[%s3 + $0x40] sm:$0xff]
  %v4572 = vld [vmem:[%s3 + $0x48] sm:$0xff]
  %v4573 = vld [vmem:[%s3 + $0x50] sm:$0xff]
  %v4574 = vld [vmem:[%s3 + $0x58] sm:$0xff]
  %v4575 = vld [vmem:[%s3 + $0x60] sm:$0xff]
  %v4576 = vld [vmem:[%s3 + $0x68] sm:$0xff]
  %v4577 = vld [vmem:[%s3 + $0x70] sm:$0xff]
  %v4578 = vld [vmem:[%s3 + $0x78] sm:$0xff]
  %v4579 = vld [vmem:[%s3 + $0x80] sm:$0xff]
  %v4580 = vld [vmem:[%s3 + $0x88] sm:$0xff]
  %v4581 = vld [vmem:[%s3 + $0x90] sm:$0xff]
  %v4582 = vld [vmem:[%s3 + $0x98] sm:$0xff]
  %v4583 = vld [vmem:[%s3 + $0xa0] sm:$0xff]
  %v4584 = vld [vmem:[%s3 + $0xa8] sm:$0xff]
  %v4585 = vld [vmem:[%s3 + $0xb0] sm:$0xff]
  %v4586 = vld [vmem:[%s3 + $0xb8] sm:$0xff]
  %v4587 = vld [vmem:[%s3 + $0xc0] sm:$0xff]
  %v4588 = vld [vmem:[%s3 + $0xc8] sm:$0xff]
  %v4589 = vld [vmem:[%s3 + $0xd0] sm:$0xff]
  %v4590 = vld [vmem:[%s3 + $0xd8] sm:$0xff]
  %v4591 = vld [vmem:[%s3 + $0xe0] sm:$0xff]
  %v4592 = vld [vmem:[%s3 + $0xe8] sm:$0xff]
  %v4593 = vld [vmem:[%s3 + $0xf0] sm:$0xff]
  %v4594 = vld [vmem:[%s3 + $0xf8] sm:$0xff]
  %v4595 = vld [vmem:[%s3 + $0x100] sm:$0xff]
  %v4596 = vld [vmem:[%s3 + $0x108] sm:$0xff]
  %v4597 = vld [vmem:[%s3 + $0x110] sm:$0xff]
  %v4598 = vld [vmem:[%s3 + $0x118] sm:$0xff]
  %v4599 = vld [vmem:[%s3 + $0x120] sm:$0xff]
  %v4600 = vld [vmem:[%s3 + $0x128] sm:$0xff]
  %v4601 = vld [vmem:[%s3 + $0x130] sm:$0xff]
  %v4602 = vld [vmem:[%s3 + $0x138] sm:$0xff]
  %v4603 = vld [vmem:[%s3 + $0x140] sm:$0xff]
  %v4604 = vld [vmem:[%s3 + $0x148] sm:$0xff]
  %v4605 = vld [vmem:[%s3 + $0x150] sm:$0xff]
  %v4606 = vld [vmem:[%s3 + $0x158] sm:$0xff]
  %v4607 = vld [vmem:[%s3 + $0x160] sm:$0xff]
  %v4608 = vld [vmem:[%s3 + $0x168] sm:$0xff]
  %v4609 = vld [vmem:[%s3 + $0x170] sm:$0xff]
  %v4610 = vld [vmem:[%s3 + $0x178] sm:$0xff]
  %v4611 = vld [vmem:[%s3 + $0x180] sm:$0xff]
  %v4612 = vld [vmem:[%s3 + $0x188] sm:$0xff]
  %v4613 = vld [vmem:[%s3 + $0x190] sm:$0xff]
  %v4614 = vld [vmem:[%s3 + $0x198] sm:$0xff]
  %v4615 = vld [vmem:[%s3 + $0x1a0] sm:$0xff]
  %v4616 = vld [vmem:[%s3 + $0x1a8] sm:$0xff]
  %v4617 = vld [vmem:[%s3 + $0x1b0] sm:$0xff]
  %v4618 = vld [vmem:[%s3 + $0x1b8] sm:$0xff]
  %v4619 = vld [vmem:[%s3 + $0x1c0] sm:$0xff]
  %v4620 = vld [vmem:[%s3 + $0x1c8] sm:$0xff]
  %v4621 = vld [vmem:[%s3 + $0x1d0] sm:$0xff]
  %v4622 = vld [vmem:[%s3 + $0x1d8] sm:$0xff]
  %v4623 = vld [vmem:[%s3 + $0x1e0] sm:$0xff]
  %v4624 = vld [vmem:[%s3 + $0x1e8] sm:$0xff]
  %v4625 = vld [vmem:[%s3 + $0x1f0] sm:$0xff]
  %v4626 = vld [vmem:[%s3 + $0x1f8] sm:$0xff]
  %v4627 = vld [vmem:[%s3 + $0x200] sm:$0xff]
  %v4628 = vld [vmem:[%s3 + $0x208] sm:$0xff]
  %v4629 = vld [vmem:[%s3 + $0x210] sm:$0xff]
  %v4630 = vld [vmem:[%s3 + $0x218] sm:$0xff]
  %v4631 = vld [vmem:[%s3 + $0x220] sm:$0xff]
  %v4632 = vld [vmem:[%s3 + $0x228] sm:$0xff]
  %v4633 = vld [vmem:[%s3 + $0x230] sm:$0xff]
  %v4634 = vld [vmem:[%s3 + $0x238] sm:$0xff]
  %v4635 = vld [vmem:[%s3 + $0x240] sm:$0xff]
  %v4636 = vld [vmem:[%s3 + $0x248] sm:$0xff]
  %v4637 = vld [vmem:[%s3 + $0x250] sm:$0xff]
  %v4638 = vld [vmem:[%s3 + $0x258] sm:$0xff]
  %v4639 = vld [vmem:[%s3 + $0x260] sm:$0xff]
  %v4640 = vld [vmem:[%s3 + $0x268] sm:$0xff]
  %v4641 = vld [vmem:[%s3 + $0x270] sm:$0xff]
  %v4642 = vld [vmem:[%s3 + $0x278] sm:$0xff]
  %v4643 = vld [vmem:[%s3 + $0x280] sm:$0xff]
  %v4644 = vld [vmem:[%s3 + $0x288] sm:$0xff]
  %v4645 = vld [vmem:[%s3 + $0x290] sm:$0xff]
  %v4646 = vld [vmem:[%s3 + $0x298] sm:$0xff]
  %v4647 = vld [vmem:[%s3 + $0x2a0] sm:$0xff]
  %v4648 = vld [vmem:[%s3 + $0x2a8] sm:$0xff]
  %v4649 = vld [vmem:[%s3 + $0x2b0] sm:$0xff]
  %v4650 = vld [vmem:[%s3 + $0x2b8] sm:$0xff]
  %v4651 = vld [vmem:[%s3 + $0x2c0] sm:$0xff]
  %v4652 = vld [vmem:[%s3 + $0x2c8] sm:$0xff]
  %v4653 = vld [vmem:[%s3 + $0x2d0] sm:$0xff]
  %v4654 = vld [vmem:[%s3 + $0x2d8] sm:$0xff]
  %v4655 = vld [vmem:[%s3 + $0x2e0] sm:$0xff]
  %v4656 = vld [vmem:[%s3 + $0x2e8] sm:$0xff]
  %v4657 = vld [vmem:[%s3 + $0x2f0] sm:$0xff]
  %v4658 = vld [vmem:[%s3 + $0x2f8] sm:$0xff]
  %v4659 = vld [vmem:[%s3 + $0x300] sm:$0xff]
  %v4660 = vld [vmem:[%s3 + $0x308] sm:$0xff]
  %v4661 = vld [vmem:[%s3 + $0x310] sm:$0xff]
  %v4662 = vld [vmem:[%s3 + $0x318] sm:$0xff]
  %v4663 = vld [vmem:[%s3 + $0x320] sm:$0xff]
  %v4664 = vld [vmem:[%s3 + $0x328] sm:$0xff]
  %v4665 = vld [vmem:[%s3 + $0x330] sm:$0xff]
  %v4666 = vld [vmem:[%s3 + $0x338] sm:$0xff]
  %v4667 = vld [vmem:[%s3 + $0x340] sm:$0xff]
  %v4668 = vld [vmem:[%s3 + $0x348] sm:$0xff]
  %v4669 = vld [vmem:[%s3 + $0x350] sm:$0xff]
  %v4670 = vld [vmem:[%s3 + $0x358] sm:$0xff]
  %v4671 = vld [vmem:[%s3 + $0x360] sm:$0xff]
  %v4672 = vld [vmem:[%s3 + $0x368] sm:$0xff]
  %v4673 = vld [vmem:[%s3 + $0x370] sm:$0xff]
  %v4674 = vld [vmem:[%s3 + $0x378] sm:$0xff]
  %v4675 = vld [vmem:[%s3 + $0x380] sm:$0xff]
  %v4676 = vld [vmem:[%s3 + $0x388] sm:$0xff]
  %v4677 = vld [vmem:[%s3 + $0x390] sm:$0xff]
  %v4678 = vld [vmem:[%s3 + $0x398] sm:$0xff]
  %v4679 = vld [vmem:[%s3 + $0x3a0] sm:$0xff]
  %v4680 = vld [vmem:[%s3 + $0x3a8] sm:$0xff]
  %v4681 = vld [vmem:[%s3 + $0x3b0] sm:$0xff]
  %v4682 = vld [vmem:[%s3 + $0x3b8] sm:$0xff]
  %v4683 = vld [vmem:[%s3 + $0x3c0] sm:$0xff]
  %v4684 = vld [vmem:[%s3 + $0x3c8] sm:$0xff]
  %v4685 = vld [vmem:[%s3 + $0x3d0] sm:$0xff]
  %v4686 = vld [vmem:[%s3 + $0x3d8] sm:$0xff]
  %v4687 = vld [vmem:[%s3 + $0x3e0] sm:$0xff]
  %v4688 = vld [vmem:[%s3 + $0x3e8] sm:$0xff]
  %v4689 = vld [vmem:[%s3 + $0x3f0] sm:$0xff]
  %v4690 = vld [vmem:[%s3 + $0x3f8] sm:$0xff]
  %v4691 = vld [vmem:[%s3 + $0x400] sm:$0xff]
  %v4692 = vld [vmem:[%s3 + $0x408] sm:$0xff]
  %v4693 = vld [vmem:[%s3 + $0x410] sm:$0xff]
  %v4694 = vld [vmem:[%s3 + $0x418] sm:$0xff]
  %v4695 = vld [vmem:[%s3 + $0x420] sm:$0xff]
  %v4696 = vld [vmem:[%s3 + $0x428] sm:$0xff]
  %v4697 = vld [vmem:[%s3 + $0x430] sm:$0xff]
  %v4698 = vld [vmem:[%s3 + $0x438] sm:$0xff]
  %v4699 = vld [vmem:[%s3 + $0x440] sm:$0xff]
  %v4700 = vld [vmem:[%s3 + $0x448] sm:$0xff]
  %v4701 = vld [vmem:[%s3 + $0x450] sm:$0xff]
  %v4702 = vld [vmem:[%s3 + $0x458] sm:$0xff]
  %v4703 = vld [vmem:[%s3 + $0x460] sm:$0xff]
  %v4704 = vld [vmem:[%s3 + $0x468] sm:$0xff]
  %v4705 = vld [vmem:[%s3 + $0x470] sm:$0xff]
  %v4706 = vld [vmem:[%s3 + $0x478] sm:$0xff]
  %v4707 = vld [vmem:[%s3 + $0x480] sm:$0xff]
  %v4708 = vld [vmem:[%s3 + $0x488] sm:$0xff]
  %v4709 = vld [vmem:[%s3 + $0x490] sm:$0xff]
  %v4710 = vld [vmem:[%s3 + $0x498] sm:$0xff]
  %v4711 = vld [vmem:[%s3 + $0x4a0] sm:$0xff]
  %v4712 = vld [vmem:[%s3 + $0x4a8] sm:$0xff]
  %v4713 = vld [vmem:[%s3 + $0x4b0] sm:$0xff]
  %v4714 = vld [vmem:[%s3 + $0x4b8] sm:$0xff]
  %v4715 = vld [vmem:[%s3 + $0x4c0] sm:$0xff]
  %v4716 = vld [vmem:[%s3 + $0x4c8] sm:$0xff]
  %v4717 = vld [vmem:[%s3 + $0x4d0] sm:$0xff]
  %v4718 = vld [vmem:[%s3 + $0x4d8] sm:$0xff]
  %v4719 = vld [vmem:[%s3 + $0x4e0] sm:$0xff]
  %v4720 = vld [vmem:[%s3 + $0x4e8] sm:$0xff]
  %v4721 = vld [vmem:[%s3 + $0x4f0] sm:$0xff]
  %v4722 = vld [vmem:[%s3 + $0x4f8] sm:$0xff]
  %v4723 = vld [vmem:[%s3 + $0x500] sm:$0xff]
  %v4724 = vld [vmem:[%s3 + $0x508] sm:$0xff]
  %v4725 = vld [vmem:[%s3 + $0x510] sm:$0xff]
  %v4726 = vld [vmem:[%s3 + $0x518] sm:$0xff]
  %v4727 = vld [vmem:[%s3 + $0x520] sm:$0xff]
  %v4728 = vld [vmem:[%s3 + $0x528] sm:$0xff]
  %v4729 = vld [vmem:[%s3 + $0x530] sm:$0xff]
  %v4730 = vld [vmem:[%s3 + $0x538] sm:$0xff]
  %v4731 = vld [vmem:[%s3 + $0x540] sm:$0xff]
  %v4732 = vld [vmem:[%s3 + $0x548] sm:$0xff]
  %v4733 = vld [vmem:[%s3 + $0x550] sm:$0xff]
  %v4734 = vld [vmem:[%s3 + $0x558] sm:$0xff]
  %v4735 = vld [vmem:[%s3 + $0x560] sm:$0xff]
  %v4736 = vld [vmem:[%s3 + $0x568] sm:$0xff]
  %v4737 = vld [vmem:[%s3 + $0x570] sm:$0xff]
  %v4738 = vld [vmem:[%s3 + $0x578] sm:$0xff]
  %v4739 = vld [vmem:[%s3 + $0x580] sm:$0xff]
  %v4740 = vld [vmem:[%s3 + $0x588] sm:$0xff]
  %v4741 = vld [vmem:[%s3 + $0x590] sm:$0xff]
  %v4742 = vld [vmem:[%s3 + $0x598] sm:$0xff]
  %v4743 = vld [vmem:[%s3 + $0x5a0] sm:$0xff]
  %v4744 = vld [vmem:[%s3 + $0x5a8] sm:$0xff]
  %v4745 = vld [vmem:[%s3 + $0x5b0] sm:$0xff]
  %v4746 = vld [vmem:[%s3 + $0x5b8] sm:$0xff]
  %v4747 = vld [vmem:[%s3 + $0x5c0] sm:$0xff]
  %v4748 = vld [vmem:[%s3 + $0x5c8] sm:$0xff]
  %v4749 = vld [vmem:[%s3 + $0x5d0] sm:$0xff]
  %v4750 = vld [vmem:[%s3 + $0x5d8] sm:$0xff]
  %v4751 = vld [vmem:[%s3 + $0x5e0] sm:$0xff]
  %v4752 = vld [vmem:[%s3 + $0x5e8] sm:$0xff]
  %v4753 = vld [vmem:[%s3 + $0x5f0] sm:$0xff]
  %v4754 = vld [vmem:[%s3 + $0x5f8] sm:$0xff]
  %v4755 = vld [vmem:[%s3 + $0x600] sm:$0xff]
  %v4756 = vld [vmem:[%s3 + $0x608] sm:$0xff]
  %v4757 = vld [vmem:[%s3 + $0x610] sm:$0xff]
  %v4758 = vld [vmem:[%s3 + $0x618] sm:$0xff]
  %v4759 = vld [vmem:[%s3 + $0x620] sm:$0xff]
  %v4760 = vld [vmem:[%s3 + $0x628] sm:$0xff]
  %v4761 = vld [vmem:[%s3 + $0x630] sm:$0xff]
  %v4762 = vld [vmem:[%s3 + $0x638] sm:$0xff]
  %v4763 = vld [vmem:[%s3 + $0x640] sm:$0xff]
  %v4764 = vld [vmem:[%s3 + $0x648] sm:$0xff]
  %v4765 = vld [vmem:[%s3 + $0x650] sm:$0xff]
  %v4766 = vld [vmem:[%s3 + $0x658] sm:$0xff]
  %v4767 = vld [vmem:[%s3 + $0x660] sm:$0xff]
  %v4768 = vld [vmem:[%s3 + $0x668] sm:$0xff]
  %v4769 = vld [vmem:[%s3 + $0x670] sm:$0xff]
  %v4770 = vld [vmem:[%s3 + $0x678] sm:$0xff]
  %v4771 = vld [vmem:[%s3 + $0x680] sm:$0xff]
  %v4772 = vld [vmem:[%s3 + $0x688] sm:$0xff]
  %v4773 = vld [vmem:[%s3 + $0x690] sm:$0xff]
  %v4774 = vld [vmem:[%s3 + $0x698] sm:$0xff]
  %v4775 = vld [vmem:[%s3 + $0x6a0] sm:$0xff]
  %v4776 = vld [vmem:[%s3 + $0x6a8] sm:$0xff]
  %v4777 = vld [vmem:[%s3 + $0x6b0] sm:$0xff]
  %v4778 = vld [vmem:[%s3 + $0x6b8] sm:$0xff]
  %v4779 = vld [vmem:[%s3 + $0x6c0] sm:$0xff]
  %v4780 = vld [vmem:[%s3 + $0x6c8] sm:$0xff]
  %v4781 = vld [vmem:[%s3 + $0x6d0] sm:$0xff]
  %v4782 = vld [vmem:[%s3 + $0x6d8] sm:$0xff]
  %v4783 = vld [vmem:[%s3 + $0x6e0] sm:$0xff]
  %v4784 = vld [vmem:[%s3 + $0x6e8] sm:$0xff]
  %v4785 = vld [vmem:[%s3 + $0x6f0] sm:$0xff]
  %v4786 = vld [vmem:[%s3 + $0x6f8] sm:$0xff]
  %v4787 = vld [vmem:[%s3 + $0x700] sm:$0xff]
  %v4788 = vld [vmem:[%s3 + $0x708] sm:$0xff]
  %v4789 = vld [vmem:[%s3 + $0x710] sm:$0xff]
  %v4790 = vld [vmem:[%s3 + $0x718] sm:$0xff]
  %v4791 = vld [vmem:[%s3 + $0x720] sm:$0xff]
  %v4792 = vld [vmem:[%s3 + $0x728] sm:$0xff]
  %v4793 = vld [vmem:[%s3 + $0x730] sm:$0xff]
  %v4794 = vld [vmem:[%s3 + $0x738] sm:$0xff]
  %v4795 = vld [vmem:[%s3 + $0x740] sm:$0xff]
  %v4796 = vld [vmem:[%s3 + $0x748] sm:$0xff]
  %v4797 = vld [vmem:[%s3 + $0x750] sm:$0xff]
  %v4798 = vld [vmem:[%s3 + $0x758] sm:$0xff]
  %v4799 = vld [vmem:[%s3 + $0x760] sm:$0xff]
  %v4800 = vld [vmem:[%s3 + $0x768] sm:$0xff]
  %v4801 = vld [vmem:[%s3 + $0x770] sm:$0xff]
  %v4802 = vld [vmem:[%s3 + $0x778] sm:$0xff]
  %v4803 = vld [vmem:[%s3 + $0x780] sm:$0xff]
  %v4804 = vld [vmem:[%s3 + $0x788] sm:$0xff]
  %v4805 = vld [vmem:[%s3 + $0x790] sm:$0xff]
  %v4806 = vld [vmem:[%s3 + $0x798] sm:$0xff]
  %v4807 = vld [vmem:[%s3 + $0x7a0] sm:$0xff]
  %v4808 = vld [vmem:[%s3 + $0x7a8] sm:$0xff]
  %v4809 = vld [vmem:[%s3 + $0x7b0] sm:$0xff]
  %v4810 = vld [vmem:[%s3 + $0x7b8] sm:$0xff]
  %v4811 = vld [vmem:[%s3 + $0x7c0] sm:$0xff]
  %v4812 = vld [vmem:[%s3 + $0x7c8] sm:$0xff]
  %v4813 = vld [vmem:[%s3 + $0x7d0] sm:$0xff]
  %v4814 = vld [vmem:[%s3 + $0x7d8] sm:$0xff]
  %v4815 = vld [vmem:[%s3 + $0x7e0] sm:$0xff]
  %v4816 = vld [vmem:[%s3 + $0x7e8] sm:$0xff]
  %v4817 = vld [vmem:[%s3 + $0x7f0] sm:$0xff]
  %v4818 = vld [vmem:[%s3 + $0x7f8] sm:$0xff]
  %v4819 = vld [vmem:[%s3 + $0x800] sm:$0xff]
  %v4820 = vld [vmem:[%s3 + $0x808] sm:$0xff]
  %v4821 = vld [vmem:[%s3 + $0x810] sm:$0xff]
  %v4822 = vld [vmem:[%s3 + $0x818] sm:$0xff]
  %v4823 = vld [vmem:[%s3 + $0x820] sm:$0xff]
  %v4824 = vld [vmem:[%s3 + $0x828] sm:$0xff]
  %v4825 = vld [vmem:[%s3 + $0x830] sm:$0xff]
  %v4826 = vld [vmem:[%s3 + $0x838] sm:$0xff]
  %v4827 = vld [vmem:[%s3 + $0x840] sm:$0xff]
  %v4828 = vld [vmem:[%s3 + $0x848] sm:$0xff]
  %v4829 = vld [vmem:[%s3 + $0x850] sm:$0xff]
  %v4830 = vld [vmem:[%s3 + $0x858] sm:$0xff]
  %v4831 = vld [vmem:[%s3 + $0x860] sm:$0xff]
  %v4832 = vld [vmem:[%s3 + $0x868] sm:$0xff]
  %v4833 = vld [vmem:[%s3 + $0x870] sm:$0xff]
  %v4834 = vld [vmem:[%s3 + $0x878] sm:$0xff]
  %v4835 = vld [vmem:[%s3 + $0x880] sm:$0xff]
  %v4836 = vld [vmem:[%s3 + $0x888] sm:$0xff]
  %v4837 = vld [vmem:[%s3 + $0x890] sm:$0xff]
  %v4838 = vld [vmem:[%s3 + $0x898] sm:$0xff]
  %v4839 = vld [vmem:[%s3 + $0x8a0] sm:$0xff]
  %v4840 = vld [vmem:[%s3 + $0x8a8] sm:$0xff]
  %v4841 = vld [vmem:[%s3 + $0x8b0] sm:$0xff]
  %v4842 = vld [vmem:[%s3 + $0x8b8] sm:$0xff]
  %v4843 = vld [vmem:[%s3 + $0x8c0] sm:$0xff]
  %v4844 = vld [vmem:[%s3 + $0x8c8] sm:$0xff]
  %v4845 = vld [vmem:[%s3 + $0x8d0] sm:$0xff]
  %v4846 = vld [vmem:[%s3 + $0x8d8] sm:$0xff]
  %v4847 = vld [vmem:[%s3 + $0x8e0] sm:$0xff]
  %v4848 = vld [vmem:[%s3 + $0x8e8] sm:$0xff]
  %v4849 = vld [vmem:[%s3 + $0x8f0] sm:$0xff]
  %v4850 = vld [vmem:[%s3 + $0x8f8] sm:$0xff]
  %v4851 = vld [vmem:[%s3 + $0x900] sm:$0xff]
  %v4852 = vld [vmem:[%s3 + $0x908] sm:$0xff]
  %v4853 = vld [vmem:[%s3 + $0x910] sm:$0xff]
  %v4854 = vld [vmem:[%s3 + $0x918] sm:$0xff]
  %v4855 = vld [vmem:[%s3 + $0x920] sm:$0xff]
  %v4856 = vld [vmem:[%s3 + $0x928] sm:$0xff]
  %v4857 = vld [vmem:[%s3 + $0x930] sm:$0xff]
  %v4858 = vld [vmem:[%s3 + $0x938] sm:$0xff]
  %v4859 = vld [vmem:[%s3 + $0x940] sm:$0xff]
  %v4860 = vld [vmem:[%s3 + $0x948] sm:$0xff]
  %v4861 = vld [vmem:[%s3 + $0x950] sm:$0xff]
  %v4862 = vld [vmem:[%s3 + $0x958] sm:$0xff]
  %v4863 = vld [vmem:[%s3 + $0x960] sm:$0xff]
  %v4864 = vld [vmem:[%s3 + $0x968] sm:$0xff]
  %v4865 = vld [vmem:[%s3 + $0x970] sm:$0xff]
  %v4866 = vld [vmem:[%s3 + $0x978] sm:$0xff]
  %v4867 = vld [vmem:[%s3 + $0x980] sm:$0xff]
  %v4868 = vld [vmem:[%s3 + $0x988] sm:$0xff]
  %v4869 = vld [vmem:[%s3 + $0x990] sm:$0xff]
  %v4870 = vld [vmem:[%s3 + $0x998] sm:$0xff]
  %v4871 = vld [vmem:[%s3 + $0x9a0] sm:$0xff]
  %v4872 = vld [vmem:[%s3 + $0x9a8] sm:$0xff]
  %v4873 = vld [vmem:[%s3 + $0x9b0] sm:$0xff]
  %v4874 = vld [vmem:[%s3 + $0x9b8] sm:$0xff]
  %v4875 = vld [vmem:[%s3 + $0x9c0] sm:$0xff]
  %v4876 = vld [vmem:[%s3 + $0x9c8] sm:$0xff]
  %v4877 = vld [vmem:[%s3 + $0x9d0] sm:$0xff]
  %v4878 = vld [vmem:[%s3 + $0x9d8] sm:$0xff]
  %v4879 = vld [vmem:[%s3 + $0x9e0] sm:$0xff]
  %v4880 = vld [vmem:[%s3 + $0x9e8] sm:$0xff]
  %v4881 = vld [vmem:[%s3 + $0x9f0] sm:$0xff]
  %v4882 = vld [vmem:[%s3 + $0x9f8] sm:$0xff]
  %v4883 = vld [vmem:[%s3 + $0xa00] sm:$0xff]
  %v4884 = vld [vmem:[%s3 + $0xa08] sm:$0xff]
  %v4885 = vld [vmem:[%s3 + $0xa10] sm:$0xff]
  %v4886 = vld [vmem:[%s3 + $0xa18] sm:$0xff]
  %v4887 = vld [vmem:[%s3 + $0xa20] sm:$0xff]
  %v4888 = vld [vmem:[%s3 + $0xa28] sm:$0xff]
  %v4889 = vld [vmem:[%s3 + $0xa30] sm:$0xff]
  %v4890 = vld [vmem:[%s3 + $0xa38] sm:$0xff]
  %v4891 = vld [vmem:[%s3 + $0xa40] sm:$0xff]
  %v4892 = vld [vmem:[%s3 + $0xa48] sm:$0xff]
  %v4893 = vld [vmem:[%s3 + $0xa50] sm:$0xff]
  %v4894 = vld [vmem:[%s3 + $0xa58] sm:$0xff]
  %v4895 = vld [vmem:[%s3 + $0xa60] sm:$0xff]
  %v4896 = vld [vmem:[%s3 + $0xa68] sm:$0xff]
  %v4897 = vld [vmem:[%s3 + $0xa70] sm:$0xff]
  %v4898 = vld [vmem:[%s3 + $0xa78] sm:$0xff]
  %v4899 = vld [vmem:[%s3 + $0xa80] sm:$0xff]
  %v4900 = vld [vmem:[%s3 + $0xa88] sm:$0xff]
  %v4901 = vld [vmem:[%s3 + $0xa90] sm:$0xff]
  %v4902 = vld [vmem:[%s3 + $0xa98] sm:$0xff]
  %v4903 = vld [vmem:[%s3 + $0xaa0] sm:$0xff]
  %v4904 = vld [vmem:[%s3 + $0xaa8] sm:$0xff]
  %v4905 = vld [vmem:[%s3 + $0xab0] sm:$0xff]
  %v4906 = vld [vmem:[%s3 + $0xab8] sm:$0xff]
  %v4907 = vld [vmem:[%s3 + $0xac0] sm:$0xff]
  %v4908 = vld [vmem:[%s3 + $0xac8] sm:$0xff]
  %v4909 = vld [vmem:[%s3 + $0xad0] sm:$0xff]
  %v4910 = vld [vmem:[%s3 + $0xad8] sm:$0xff]
  %v4911 = vld [vmem:[%s3 + $0xae0] sm:$0xff]
  %v4912 = vld [vmem:[%s3 + $0xae8] sm:$0xff]
  %v4913 = vld [vmem:[%s3 + $0xaf0] sm:$0xff]
  %v4914 = vld [vmem:[%s3 + $0xaf8] sm:$0xff]
  %v4915 = vld [vmem:[%s3 + $0xb00] sm:$0xff]
  %v4916 = vld [vmem:[%s3 + $0xb08] sm:$0xff]
  %v4917 = vld [vmem:[%s3 + $0xb10] sm:$0xff]
  %v4918 = vld [vmem:[%s3 + $0xb18] sm:$0xff]
  %v4919 = vld [vmem:[%s3 + $0xb20] sm:$0xff]
  %v4920 = vld [vmem:[%s3 + $0xb28] sm:$0xff]
  %v4921 = vld [vmem:[%s3 + $0xb30] sm:$0xff]
  %v4922 = vld [vmem:[%s3 + $0xb38] sm:$0xff]
  %v4923 = vld [vmem:[%s3 + $0xb40] sm:$0xff]
  %v4924 = vld [vmem:[%s3 + $0xb48] sm:$0xff]
  %v4925 = vld [vmem:[%s3 + $0xb50] sm:$0xff]
  %v4926 = vld [vmem:[%s3 + $0xb58] sm:$0xff]
  %v4927 = vld [vmem:[%s3 + $0xb60] sm:$0xff]
  %v4928 = vld [vmem:[%s3 + $0xb68] sm:$0xff]
  %v4929 = vld [vmem:[%s3 + $0xb70] sm:$0xff]
  %v4930 = vld [vmem:[%s3 + $0xb78] sm:$0xff]
  %v4931 = vld [vmem:[%s3 + $0xb80] sm:$0xff]
  %v4932 = vld [vmem:[%s3 + $0xb88] sm:$0xff]
  %v4933 = vld [vmem:[%s3 + $0xb90] sm:$0xff]
  %v4934 = vld [vmem:[%s3 + $0xb98] sm:$0xff]
  %v4935 = vld [vmem:[%s3 + $0xba0] sm:$0xff]
  %v4936 = vld [vmem:[%s3 + $0xba8] sm:$0xff]
  %v4937 = vld [vmem:[%s3 + $0xbb0] sm:$0xff]
  %v4938 = vld [vmem:[%s3 + $0xbb8] sm:$0xff]
  %v4939 = vld [vmem:[%s3 + $0xbc0] sm:$0xff]
  %v4940 = vld [vmem:[%s3 + $0xbc8] sm:$0xff]
  %v4941 = vld [vmem:[%s3 + $0xbd0] sm:$0xff]
  %v4942 = vld [vmem:[%s3 + $0xbd8] sm:$0xff]
  %v4943 = vld [vmem:[%s3 + $0xbe0] sm:$0xff]
  %v4944 = vld [vmem:[%s3 + $0xbe8] sm:$0xff]
  %v4945 = vld [vmem:[%s3 + $0xbf0] sm:$0xff]
  %v4946 = vld [vmem:[%s3 + $0xbf8] sm:$0xff]
  %v4947 = vld [vmem:[%s3 + $0xc00] sm:$0xff]
  %v4948 = vld [vmem:[%s3 + $0xc08] sm:$0xff]
  %v4949 = vld [vmem:[%s3 + $0xc10] sm:$0xff]
  %v4950 = vld [vmem:[%s3 + $0xc18] sm:$0xff]
  %v4951 = vld [vmem:[%s3 + $0xc20] sm:$0xff]
  %v4952 = vld [vmem:[%s3 + $0xc28] sm:$0xff]
  %v4953 = vld [vmem:[%s3 + $0xc30] sm:$0xff]
  %v4954 = vld [vmem:[%s3 + $0xc38] sm:$0xff]
  %v4955 = vld [vmem:[%s3 + $0xc40] sm:$0xff]
  %v4956 = vld [vmem:[%s3 + $0xc48] sm:$0xff]
  %v4957 = vld [vmem:[%s3 + $0xc50] sm:$0xff]
  %v4958 = vld [vmem:[%s3 + $0xc58] sm:$0xff]
  %v4959 = vld [vmem:[%s3 + $0xc60] sm:$0xff]
  %v4960 = vld [vmem:[%s3 + $0xc68] sm:$0xff]
  %v4961 = vld [vmem:[%s3 + $0xc70] sm:$0xff]
  %v4962 = vld [vmem:[%s3 + $0xc78] sm:$0xff]
  %v4963 = vld [vmem:[%s3 + $0xc80] sm:$0xff]
  %v4964 = vld [vmem:[%s3 + $0xc88] sm:$0xff]
  %v4965 = vld [vmem:[%s3 + $0xc90] sm:$0xff]
  %v4966 = vld [vmem:[%s3 + $0xc98] sm:$0xff]
  %v4967 = vld [vmem:[%s3 + $0xca0] sm:$0xff]
  %v4968 = vld [vmem:[%s3 + $0xca8] sm:$0xff]
  %v4969 = vld [vmem:[%s3 + $0xcb0] sm:$0xff]
  %v4970 = vld [vmem:[%s3 + $0xcb8] sm:$0xff]
  %v4971 = vld [vmem:[%s3 + $0xcc0] sm:$0xff]
  %v4972 = vld [vmem:[%s3 + $0xcc8] sm:$0xff]
  %v4973 = vld [vmem:[%s3 + $0xcd0] sm:$0xff]
  %v4974 = vld [vmem:[%s3 + $0xcd8] sm:$0xff]
  %v4975 = vld [vmem:[%s3 + $0xce0] sm:$0xff]
  %v4976 = vld [vmem:[%s3 + $0xce8] sm:$0xff]
  %v4977 = vld [vmem:[%s3 + $0xcf0] sm:$0xff]
  %v4978 = vld [vmem:[%s3 + $0xcf8] sm:$0xff]
  %v4979 = vld [vmem:[%s3 + $0xd00] sm:$0xff]
  %v4980 = vld [vmem:[%s3 + $0xd08] sm:$0xff]
  %v4981 = vld [vmem:[%s3 + $0xd10] sm:$0xff]
  %v4982 = vld [vmem:[%s3 + $0xd18] sm:$0xff]
  %v4983 = vld [vmem:[%s3 + $0xd20] sm:$0xff]
  %v4984 = vld [vmem:[%s3 + $0xd28] sm:$0xff]
  %v4985 = vld [vmem:[%s3 + $0xd30] sm:$0xff]
  %v4986 = vld [vmem:[%s3 + $0xd38] sm:$0xff]
  %v4987 = vld [vmem:[%s3 + $0xd40] sm:$0xff]
  %v4988 = vld [vmem:[%s3 + $0xd48] sm:$0xff]
  %v4989 = vld [vmem:[%s3 + $0xd50] sm:$0xff]
  %v4990 = vld [vmem:[%s3 + $0xd58] sm:$0xff]
  %v4991 = vld [vmem:[%s3 + $0xd60] sm:$0xff]
  %v4992 = vld [vmem:[%s3 + $0xd68] sm:$0xff]
  %v4993 = vld [vmem:[%s3 + $0xd70] sm:$0xff]
  %v4994 = vld [vmem:[%s3 + $0xd78] sm:$0xff]
  %v4995 = vld [vmem:[%s3 + $0xd80] sm:$0xff]
  %v4996 = vld [vmem:[%s3 + $0xd88] sm:$0xff]
  %v4997 = vld [vmem:[%s3 + $0xd90] sm:$0xff]
  %v4998 = vld [vmem:[%s3 + $0xd98] sm:$0xff]
  %v4999 = vld [vmem:[%s3 + $0xda0] sm:$0xff]
  %v5000 = vld [vmem:[%s3 + $0xda8] sm:$0xff]
  %v5001 = vld [vmem:[%s3 + $0xdb0] sm:$0xff]
  %v5002 = vld [vmem:[%s3 + $0xdb8] sm:$0xff]
  %v5003 = vld [vmem:[%s3 + $0xdc0] sm:$0xff]
  %v5004 = vld [vmem:[%s3 + $0xdc8] sm:$0xff]
  %v5005 = vld [vmem:[%s3 + $0xdd0] sm:$0xff]
  %v5006 = vld [vmem:[%s3 + $0xdd8] sm:$0xff]
  %v5007 = vld [vmem:[%s3 + $0xde0] sm:$0xff]
  %v5008 = vld [vmem:[%s3 + $0xde8] sm:$0xff]
  %v5009 = vld [vmem:[%s3 + $0xdf0] sm:$0xff]
  %v5010 = vld [vmem:[%s3 + $0xdf8] sm:$0xff]
  %v5011 = vadd.f32 %v4115, %v4563
  %v5012 = vadd.f32 %v4116, %v4564
  %v5013 = vadd.f32 %v4117, %v4565
  %v5014 = vadd.f32 %v4118, %v4566
  %v5015 = vadd.f32 %v4119, %v4567
  %v5016 = vadd.f32 %v4120, %v4568
  %v5017 = vadd.f32 %v4121, %v4569
  %v5018 = vadd.f32 %v4122, %v4570
  %v5019 = vadd.f32 %v4123, %v4571
  %v5020 = vadd.f32 %v4124, %v4572
  %v5021 = vadd.f32 %v4125, %v4573
  %v5022 = vadd.f32 %v4126, %v4574
  %v5023 = vadd.f32 %v4127, %v4575
  %v5024 = vadd.f32 %v4128, %v4576
  %v5025 = vadd.f32 %v4129, %v4577
  %v5026 = vadd.f32 %v4130, %v4578
  %v5027 = vadd.f32 %v4131, %v4579
  %v5028 = vadd.f32 %v4132, %v4580
  %v5029 = vadd.f32 %v4133, %v4581
  %v5030 = vadd.f32 %v4134, %v4582
  %v5031 = vadd.f32 %v4135, %v4583
  %v5032 = vadd.f32 %v4136, %v4584
  %v5033 = vadd.f32 %v4137, %v4585
  %v5034 = vadd.f32 %v4138, %v4586
  %v5035 = vadd.f32 %v4139, %v4587
  %v5036 = vadd.f32 %v4140, %v4588
  %v5037 = vadd.f32 %v4141, %v4589
  %v5038 = vadd.f32 %v4142, %v4590
  %v5039 = vadd.f32 %v4143, %v4591
  %v5040 = vadd.f32 %v4144, %v4592
  %v5041 = vadd.f32 %v4145, %v4593
  %v5042 = vadd.f32 %v4146, %v4594
  %v5043 = vadd.f32 %v4147, %v4595
  %v5044 = vadd.f32 %v4148, %v4596
  %v5045 = vadd.f32 %v4149, %v4597
  %v5046 = vadd.f32 %v4150, %v4598
  %v5047 = vadd.f32 %v4151, %v4599
  %v5048 = vadd.f32 %v4152, %v4600
  %v5049 = vadd.f32 %v4153, %v4601
  %v5050 = vadd.f32 %v4154, %v4602
  %v5051 = vadd.f32 %v4155, %v4603
  %v5052 = vadd.f32 %v4156, %v4604
  %v5053 = vadd.f32 %v4157, %v4605
  %v5054 = vadd.f32 %v4158, %v4606
  %v5055 = vadd.f32 %v4159, %v4607
  %v5056 = vadd.f32 %v4160, %v4608
  %v5057 = vadd.f32 %v4161, %v4609
  %v5058 = vadd.f32 %v4162, %v4610
  %v5059 = vadd.f32 %v4163, %v4611
  %v5060 = vadd.f32 %v4164, %v4612
  %v5061 = vadd.f32 %v4165, %v4613
  %v5062 = vadd.f32 %v4166, %v4614
  %v5063 = vadd.f32 %v4167, %v4615
  %v5064 = vadd.f32 %v4168, %v4616
  %v5065 = vadd.f32 %v4169, %v4617
  %v5066 = vadd.f32 %v4170, %v4618
  %v5067 = vadd.f32 %v4171, %v4619
  %v5068 = vadd.f32 %v4172, %v4620
  %v5069 = vadd.f32 %v4173, %v4621
  %v5070 = vadd.f32 %v4174, %v4622
  %v5071 = vadd.f32 %v4175, %v4623
  %v5072 = vadd.f32 %v4176, %v4624
  %v5073 = vadd.f32 %v4177, %v4625
  %v5074 = vadd.f32 %v4178, %v4626
  %v5075 = vadd.f32 %v4179, %v4627
  %v5076 = vadd.f32 %v4180, %v4628
  %v5077 = vadd.f32 %v4181, %v4629
  %v5078 = vadd.f32 %v4182, %v4630
  %v5079 = vadd.f32 %v4183, %v4631
  %v5080 = vadd.f32 %v4184, %v4632
  %v5081 = vadd.f32 %v4185, %v4633
  %v5082 = vadd.f32 %v4186, %v4634
  %v5083 = vadd.f32 %v4187, %v4635
  %v5084 = vadd.f32 %v4188, %v4636
  %v5085 = vadd.f32 %v4189, %v4637
  %v5086 = vadd.f32 %v4190, %v4638
  %v5087 = vadd.f32 %v4191, %v4639
  %v5088 = vadd.f32 %v4192, %v4640
  %v5089 = vadd.f32 %v4193, %v4641
  %v5090 = vadd.f32 %v4194, %v4642
  %v5091 = vadd.f32 %v4195, %v4643
  %v5092 = vadd.f32 %v4196, %v4644
  %v5093 = vadd.f32 %v4197, %v4645
  %v5094 = vadd.f32 %v4198, %v4646
  %v5095 = vadd.f32 %v4199, %v4647
  %v5096 = vadd.f32 %v4200, %v4648
  %v5097 = vadd.f32 %v4201, %v4649
  %v5098 = vadd.f32 %v4202, %v4650
  %v5099 = vadd.f32 %v4203, %v4651
  %v5100 = vadd.f32 %v4204, %v4652
  %v5101 = vadd.f32 %v4205, %v4653
  %v5102 = vadd.f32 %v4206, %v4654
  %v5103 = vadd.f32 %v4207, %v4655
  %v5104 = vadd.f32 %v4208, %v4656
  %v5105 = vadd.f32 %v4209, %v4657
  %v5106 = vadd.f32 %v4210, %v4658
  %v5107 = vadd.f32 %v4211, %v4659
  %v5108 = vadd.f32 %v4212, %v4660
  %v5109 = vadd.f32 %v4213, %v4661
  %v5110 = vadd.f32 %v4214, %v4662
  %v5111 = vadd.f32 %v4215, %v4663
  %v5112 = vadd.f32 %v4216, %v4664
  %v5113 = vadd.f32 %v4217, %v4665
  %v5114 = vadd.f32 %v4218, %v4666
  %v5115 = vadd.f32 %v4219, %v4667
  %v5116 = vadd.f32 %v4220, %v4668
  %v5117 = vadd.f32 %v4221, %v4669
  %v5118 = vadd.f32 %v4222, %v4670
  %v5119 = vadd.f32 %v4223, %v4671
  %v5120 = vadd.f32 %v4224, %v4672
  %v5121 = vadd.f32 %v4225, %v4673
  %v5122 = vadd.f32 %v4226, %v4674
  %v5123 = vadd.f32 %v4227, %v4675
  %v5124 = vadd.f32 %v4228, %v4676
  %v5125 = vadd.f32 %v4229, %v4677
  %v5126 = vadd.f32 %v4230, %v4678
  %v5127 = vadd.f32 %v4231, %v4679
  %v5128 = vadd.f32 %v4232, %v4680
  %v5129 = vadd.f32 %v4233, %v4681
  %v5130 = vadd.f32 %v4234, %v4682
  %v5131 = vadd.f32 %v4235, %v4683
  %v5132 = vadd.f32 %v4236, %v4684
  %v5133 = vadd.f32 %v4237, %v4685
  %v5134 = vadd.f32 %v4238, %v4686
  %v5135 = vadd.f32 %v4239, %v4687
  %v5136 = vadd.f32 %v4240, %v4688
  %v5137 = vadd.f32 %v4241, %v4689
  %v5138 = vadd.f32 %v4242, %v4690
  %v5139 = vadd.f32 %v4243, %v4691
  %v5140 = vadd.f32 %v4244, %v4692
  %v5141 = vadd.f32 %v4245, %v4693
  %v5142 = vadd.f32 %v4246, %v4694
  %v5143 = vadd.f32 %v4247, %v4695
  %v5144 = vadd.f32 %v4248, %v4696
  %v5145 = vadd.f32 %v4249, %v4697
  %v5146 = vadd.f32 %v4250, %v4698
  %v5147 = vadd.f32 %v4251, %v4699
  %v5148 = vadd.f32 %v4252, %v4700
  %v5149 = vadd.f32 %v4253, %v4701
  %v5150 = vadd.f32 %v4254, %v4702
  %v5151 = vadd.f32 %v4255, %v4703
  %v5152 = vadd.f32 %v4256, %v4704
  %v5153 = vadd.f32 %v4257, %v4705
  %v5154 = vadd.f32 %v4258, %v4706
  %v5155 = vadd.f32 %v4259, %v4707
  %v5156 = vadd.f32 %v4260, %v4708
  %v5157 = vadd.f32 %v4261, %v4709
  %v5158 = vadd.f32 %v4262, %v4710
  %v5159 = vadd.f32 %v4263, %v4711
  %v5160 = vadd.f32 %v4264, %v4712
  %v5161 = vadd.f32 %v4265, %v4713
  %v5162 = vadd.f32 %v4266, %v4714
  %v5163 = vadd.f32 %v4267, %v4715
  %v5164 = vadd.f32 %v4268, %v4716
  %v5165 = vadd.f32 %v4269, %v4717
  %v5166 = vadd.f32 %v4270, %v4718
  %v5167 = vadd.f32 %v4271, %v4719
  %v5168 = vadd.f32 %v4272, %v4720
  %v5169 = vadd.f32 %v4273, %v4721
  %v5170 = vadd.f32 %v4274, %v4722
  %v5171 = vadd.f32 %v4275, %v4723
  %v5172 = vadd.f32 %v4276, %v4724
  %v5173 = vadd.f32 %v4277, %v4725
  %v5174 = vadd.f32 %v4278, %v4726
  %v5175 = vadd.f32 %v4279, %v4727
  %v5176 = vadd.f32 %v4280, %v4728
  %v5177 = vadd.f32 %v4281, %v4729
  %v5178 = vadd.f32 %v4282, %v4730
  %v5179 = vadd.f32 %v4283, %v4731
  %v5180 = vadd.f32 %v4284, %v4732
  %v5181 = vadd.f32 %v4285, %v4733
  %v5182 = vadd.f32 %v4286, %v4734
  %v5183 = vadd.f32 %v4287, %v4735
  %v5184 = vadd.f32 %v4288, %v4736
  %v5185 = vadd.f32 %v4289, %v4737
  %v5186 = vadd.f32 %v4290, %v4738
  %v5187 = vadd.f32 %v4291, %v4739
  %v5188 = vadd.f32 %v4292, %v4740
  %v5189 = vadd.f32 %v4293, %v4741
  %v5190 = vadd.f32 %v4294, %v4742
  %v5191 = vadd.f32 %v4295, %v4743
  %v5192 = vadd.f32 %v4296, %v4744
  %v5193 = vadd.f32 %v4297, %v4745
  %v5194 = vadd.f32 %v4298, %v4746
  %v5195 = vadd.f32 %v4299, %v4747
  %v5196 = vadd.f32 %v4300, %v4748
  %v5197 = vadd.f32 %v4301, %v4749
  %v5198 = vadd.f32 %v4302, %v4750
  %v5199 = vadd.f32 %v4303, %v4751
  %v5200 = vadd.f32 %v4304, %v4752
  %v5201 = vadd.f32 %v4305, %v4753
  %v5202 = vadd.f32 %v4306, %v4754
  %v5203 = vadd.f32 %v4307, %v4755
  %v5204 = vadd.f32 %v4308, %v4756
  %v5205 = vadd.f32 %v4309, %v4757
  %v5206 = vadd.f32 %v4310, %v4758
  %v5207 = vadd.f32 %v4311, %v4759
  %v5208 = vadd.f32 %v4312, %v4760
  %v5209 = vadd.f32 %v4313, %v4761
  %v5210 = vadd.f32 %v4314, %v4762
  %v5211 = vadd.f32 %v4315, %v4763
  %v5212 = vadd.f32 %v4316, %v4764
  %v5213 = vadd.f32 %v4317, %v4765
  %v5214 = vadd.f32 %v4318, %v4766
  %v5215 = vadd.f32 %v4319, %v4767
  %v5216 = vadd.f32 %v4320, %v4768
  %v5217 = vadd.f32 %v4321, %v4769
  %v5218 = vadd.f32 %v4322, %v4770
  %v5219 = vadd.f32 %v4323, %v4771
  %v5220 = vadd.f32 %v4324, %v4772
  %v5221 = vadd.f32 %v4325, %v4773
  %v5222 = vadd.f32 %v4326, %v4774
  %v5223 = vadd.f32 %v4327, %v4775
  %v5224 = vadd.f32 %v4328, %v4776
  %v5225 = vadd.f32 %v4329, %v4777
  %v5226 = vadd.f32 %v4330, %v4778
  %v5227 = vadd.f32 %v4331, %v4779
  %v5228 = vadd.f32 %v4332, %v4780
  %v5229 = vadd.f32 %v4333, %v4781
  %v5230 = vadd.f32 %v4334, %v4782
  %v5231 = vadd.f32 %v4335, %v4783
  %v5232 = vadd.f32 %v4336, %v4784
  %v5233 = vadd.f32 %v4337, %v4785
  %v5234 = vadd.f32 %v4338, %v4786
  %v5235 = vadd.f32 %v4339, %v4787
  %v5236 = vadd.f32 %v4340, %v4788
  %v5237 = vadd.f32 %v4341, %v4789
  %v5238 = vadd.f32 %v4342, %v4790
  %v5239 = vadd.f32 %v4343, %v4791
  %v5240 = vadd.f32 %v4344, %v4792
  %v5241 = vadd.f32 %v4345, %v4793
  %v5242 = vadd.f32 %v4346, %v4794
  %v5243 = vadd.f32 %v4347, %v4795
  %v5244 = vadd.f32 %v4348, %v4796
  %v5245 = vadd.f32 %v4349, %v4797
  %v5246 = vadd.f32 %v4350, %v4798
  %v5247 = vadd.f32 %v4351, %v4799
  %v5248 = vadd.f32 %v4352, %v4800
  %v5249 = vadd.f32 %v4353, %v4801
  %v5250 = vadd.f32 %v4354, %v4802
  %v5251 = vadd.f32 %v4355, %v4803
  %v5252 = vadd.f32 %v4356, %v4804
  %v5253 = vadd.f32 %v4357, %v4805
  %v5254 = vadd.f32 %v4358, %v4806
  %v5255 = vadd.f32 %v4359, %v4807
  %v5256 = vadd.f32 %v4360, %v4808
  %v5257 = vadd.f32 %v4361, %v4809
  %v5258 = vadd.f32 %v4362, %v4810
  %v5259 = vadd.f32 %v4363, %v4811
  %v5260 = vadd.f32 %v4364, %v4812
  %v5261 = vadd.f32 %v4365, %v4813
  %v5262 = vadd.f32 %v4366, %v4814
  %v5263 = vadd.f32 %v4367, %v4815
  %v5264 = vadd.f32 %v4368, %v4816
  %v5265 = vadd.f32 %v4369, %v4817
  %v5266 = vadd.f32 %v4370, %v4818
  %v5267 = vadd.f32 %v4371, %v4819
  %v5268 = vadd.f32 %v4372, %v4820
  %v5269 = vadd.f32 %v4373, %v4821
  %v5270 = vadd.f32 %v4374, %v4822
  %v5271 = vadd.f32 %v4375, %v4823
  %v5272 = vadd.f32 %v4376, %v4824
  %v5273 = vadd.f32 %v4377, %v4825
  %v5274 = vadd.f32 %v4378, %v4826
  %v5275 = vadd.f32 %v4379, %v4827
  %v5276 = vadd.f32 %v4380, %v4828
  %v5277 = vadd.f32 %v4381, %v4829
  %v5278 = vadd.f32 %v4382, %v4830
  %v5279 = vadd.f32 %v4383, %v4831
  %v5280 = vadd.f32 %v4384, %v4832
  %v5281 = vadd.f32 %v4385, %v4833
  %v5282 = vadd.f32 %v4386, %v4834
  %v5283 = vadd.f32 %v4387, %v4835
  %v5284 = vadd.f32 %v4388, %v4836
  %v5285 = vadd.f32 %v4389, %v4837
  %v5286 = vadd.f32 %v4390, %v4838
  %v5287 = vadd.f32 %v4391, %v4839
  %v5288 = vadd.f32 %v4392, %v4840
  %v5289 = vadd.f32 %v4393, %v4841
  %v5290 = vadd.f32 %v4394, %v4842
  %v5291 = vadd.f32 %v4395, %v4843
  %v5292 = vadd.f32 %v4396, %v4844
  %v5293 = vadd.f32 %v4397, %v4845
  %v5294 = vadd.f32 %v4398, %v4846
  %v5295 = vadd.f32 %v4399, %v4847
  %v5296 = vadd.f32 %v4400, %v4848
  %v5297 = vadd.f32 %v4401, %v4849
  %v5298 = vadd.f32 %v4402, %v4850
  %v5299 = vadd.f32 %v4403, %v4851
  %v5300 = vadd.f32 %v4404, %v4852
  %v5301 = vadd.f32 %v4405, %v4853
  %v5302 = vadd.f32 %v4406, %v4854
  %v5303 = vadd.f32 %v4407, %v4855
  %v5304 = vadd.f32 %v4408, %v4856
  %v5305 = vadd.f32 %v4409, %v4857
  %v5306 = vadd.f32 %v4410, %v4858
  %v5307 = vadd.f32 %v4411, %v4859
  %v5308 = vadd.f32 %v4412, %v4860
  %v5309 = vadd.f32 %v4413, %v4861
  %v5310 = vadd.f32 %v4414, %v4862
  %v5311 = vadd.f32 %v4415, %v4863
  %v5312 = vadd.f32 %v4416, %v4864
  %v5313 = vadd.f32 %v4417, %v4865
  %v5314 = vadd.f32 %v4418, %v4866
  %v5315 = vadd.f32 %v4419, %v4867
  %v5316 = vadd.f32 %v4420, %v4868
  %v5317 = vadd.f32 %v4421, %v4869
  %v5318 = vadd.f32 %v4422, %v4870
  %v5319 = vadd.f32 %v4423, %v4871
  %v5320 = vadd.f32 %v4424, %v4872
  %v5321 = vadd.f32 %v4425, %v4873
  %v5322 = vadd.f32 %v4426, %v4874
  %v5323 = vadd.f32 %v4427, %v4875
  %v5324 = vadd.f32 %v4428, %v4876
  %v5325 = vadd.f32 %v4429, %v4877
  %v5326 = vadd.f32 %v4430, %v4878
  %v5327 = vadd.f32 %v4431, %v4879
  %v5328 = vadd.f32 %v4432, %v4880
  %v5329 = vadd.f32 %v4433, %v4881
  %v5330 = vadd.f32 %v4434, %v4882
  %v5331 = vadd.f32 %v4435, %v4883
  %v5332 = vadd.f32 %v4436, %v4884
  %v5333 = vadd.f32 %v4437, %v4885
  %v5334 = vadd.f32 %v4438, %v4886
  %v5335 = vadd.f32 %v4439, %v4887
  %v5336 = vadd.f32 %v4440, %v4888
  %v5337 = vadd.f32 %v4441, %v4889
  %v5338 = vadd.f32 %v4442, %v4890
  %v5339 = vadd.f32 %v4443, %v4891
  %v5340 = vadd.f32 %v4444, %v4892
  %v5341 = vadd.f32 %v4445, %v4893
  %v5342 = vadd.f32 %v4446, %v4894
  %v5343 = vadd.f32 %v4447, %v4895
  %v5344 = vadd.f32 %v4448, %v4896
  %v5345 = vadd.f32 %v4449, %v4897
  %v5346 = vadd.f32 %v4450, %v4898
  %v5347 = vadd.f32 %v4451, %v4899
  %v5348 = vadd.f32 %v4452, %v4900
  %v5349 = vadd.f32 %v4453, %v4901
  %v5350 = vadd.f32 %v4454, %v4902
  %v5351 = vadd.f32 %v4455, %v4903
  %v5352 = vadd.f32 %v4456, %v4904
  %v5353 = vadd.f32 %v4457, %v4905
  %v5354 = vadd.f32 %v4458, %v4906
  %v5355 = vadd.f32 %v4459, %v4907
  %v5356 = vadd.f32 %v4460, %v4908
  %v5357 = vadd.f32 %v4461, %v4909
  %v5358 = vadd.f32 %v4462, %v4910
  %v5359 = vadd.f32 %v4463, %v4911
  %v5360 = vadd.f32 %v4464, %v4912
  %v5361 = vadd.f32 %v4465, %v4913
  %v5362 = vadd.f32 %v4466, %v4914
  %v5363 = vadd.f32 %v4467, %v4915
  %v5364 = vadd.f32 %v4468, %v4916
  %v5365 = vadd.f32 %v4469, %v4917
  %v5366 = vadd.f32 %v4470, %v4918
  %v5367 = vadd.f32 %v4471, %v4919
  %v5368 = vadd.f32 %v4472, %v4920
  %v5369 = vadd.f32 %v4473, %v4921
  %v5370 = vadd.f32 %v4474, %v4922
  %v5371 = vadd.f32 %v4475, %v4923
  %v5372 = vadd.f32 %v4476, %v4924
  %v5373 = vadd.f32 %v4477, %v4925
  %v5374 = vadd.f32 %v4478, %v4926
  %v5375 = vadd.f32 %v4479, %v4927
  %v5376 = vadd.f32 %v4480, %v4928
  %v5377 = vadd.f32 %v4481, %v4929
  %v5378 = vadd.f32 %v4482, %v4930
  %v5379 = vadd.f32 %v4483, %v4931
  %v5380 = vadd.f32 %v4484, %v4932
  %v5381 = vadd.f32 %v4485, %v4933
  %v5382 = vadd.f32 %v4486, %v4934
  %v5383 = vadd.f32 %v4487, %v4935
  %v5384 = vadd.f32 %v4488, %v4936
  %v5385 = vadd.f32 %v4489, %v4937
  %v5386 = vadd.f32 %v4490, %v4938
  %v5387 = vadd.f32 %v4491, %v4939
  %v5388 = vadd.f32 %v4492, %v4940
  %v5389 = vadd.f32 %v4493, %v4941
  %v5390 = vadd.f32 %v4494, %v4942
  %v5391 = vadd.f32 %v4495, %v4943
  %v5392 = vadd.f32 %v4496, %v4944
  %v5393 = vadd.f32 %v4497, %v4945
  %v5394 = vadd.f32 %v4498, %v4946
  %v5395 = vadd.f32 %v4499, %v4947
  %v5396 = vadd.f32 %v4500, %v4948
  %v5397 = vadd.f32 %v4501, %v4949
  %v5398 = vadd.f32 %v4502, %v4950
  %v5399 = vadd.f32 %v4503, %v4951
  %v5400 = vadd.f32 %v4504, %v4952
  %v5401 = vadd.f32 %v4505, %v4953
  %v5402 = vadd.f32 %v4506, %v4954
  %v5403 = vadd.f32 %v4507, %v4955
  %v5404 = vadd.f32 %v4508, %v4956
  %v5405 = vadd.f32 %v4509, %v4957
  %v5406 = vadd.f32 %v4510, %v4958
  %v5407 = vadd.f32 %v4511, %v4959
  %v5408 = vadd.f32 %v4512, %v4960
  %v5409 = vadd.f32 %v4513, %v4961
  %v5410 = vadd.f32 %v4514, %v4962
  %v5411 = vadd.f32 %v4515, %v4963
  %v5412 = vadd.f32 %v4516, %v4964
  %v5413 = vadd.f32 %v4517, %v4965
  %v5414 = vadd.f32 %v4518, %v4966
  %v5415 = vadd.f32 %v4519, %v4967
  %v5416 = vadd.f32 %v4520, %v4968
  %v5417 = vadd.f32 %v4521, %v4969
  %v5418 = vadd.f32 %v4522, %v4970
  %v5419 = vadd.f32 %v4523, %v4971
  %v5420 = vadd.f32 %v4524, %v4972
  %v5421 = vadd.f32 %v4525, %v4973
  %v5422 = vadd.f32 %v4526, %v4974
  %v5423 = vadd.f32 %v4527, %v4975
  %v5424 = vadd.f32 %v4528, %v4976
  %v5425 = vadd.f32 %v4529, %v4977
  %v5426 = vadd.f32 %v4530, %v4978
  %v5427 = vadd.f32 %v4531, %v4979
  %v5428 = vadd.f32 %v4532, %v4980
  %v5429 = vadd.f32 %v4533, %v4981
  %v5430 = vadd.f32 %v4534, %v4982
  %v5431 = vadd.f32 %v4535, %v4983
  %v5432 = vadd.f32 %v4536, %v4984
  %v5433 = vadd.f32 %v4537, %v4985
  %v5434 = vadd.f32 %v4538, %v4986
  %v5435 = vadd.f32 %v4539, %v4987
  %v5436 = vadd.f32 %v4540, %v4988
  %v5437 = vadd.f32 %v4541, %v4989
  %v5438 = vadd.f32 %v4542, %v4990
  %v5439 = vadd.f32 %v4543, %v4991
  %v5440 = vadd.f32 %v4544, %v4992
  %v5441 = vadd.f32 %v4545, %v4993
  %v5442 = vadd.f32 %v4546, %v4994
  %v5443 = vadd.f32 %v4547, %v4995
  %v5444 = vadd.f32 %v4548, %v4996
  %v5445 = vadd.f32 %v4549, %v4997
  %v5446 = vadd.f32 %v4550, %v4998
  %v5447 = vadd.f32 %v4551, %v4999
  %v5448 = vadd.f32 %v4552, %v5000
  %v5449 = vadd.f32 %v4553, %v5001
  %v5450 = vadd.f32 %v4554, %v5002
  %v5451 = vadd.f32 %v4555, %v5003
  %v5452 = vadd.f32 %v4556, %v5004
  %v5453 = vadd.f32 %v4557, %v5005
  %v5454 = vadd.f32 %v4558, %v5006
  %v5455 = vadd.f32 %v4559, %v5007
  %v5456 = vadd.f32 %v4560, %v5008
  %v5457 = vadd.f32 %v4561, %v5009
  %v5458 = vadd.f32 %v4562, %v5010
  %v5459 = vmax.f32 %v5011, 0.0
  %v5460 = vmax.f32 %v5012, 0.0
  %v5461 = vmax.f32 %v5013, 0.0
  %v5462 = vmax.f32 %v5014, 0.0
  %v5463 = vmax.f32 %v5015, 0.0
  %v5464 = vmax.f32 %v5016, 0.0
  %v5465 = vmax.f32 %v5017, 0.0
  %v5466 = vmax.f32 %v5018, 0.0
  %v5467 = vmax.f32 %v5019, 0.0
  %v5468 = vmax.f32 %v5020, 0.0
  %v5469 = vmax.f32 %v5021, 0.0
  %v5470 = vmax.f32 %v5022, 0.0
  %v5471 = vmax.f32 %v5023, 0.0
  %v5472 = vmax.f32 %v5024, 0.0
  %v5473 = vmax.f32 %v5025, 0.0
  %v5474 = vmax.f32 %v5026, 0.0
  %v5475 = vmax.f32 %v5027, 0.0
  %v5476 = vmax.f32 %v5028, 0.0
  %v5477 = vmax.f32 %v5029, 0.0
  %v5478 = vmax.f32 %v5030, 0.0
  %v5479 = vmax.f32 %v5031, 0.0
  %v5480 = vmax.f32 %v5032, 0.0
  %v5481 = vmax.f32 %v5033, 0.0
  %v5482 = vmax.f32 %v5034, 0.0
  %v5483 = vmax.f32 %v5035, 0.0
  %v5484 = vmax.f32 %v5036, 0.0
  %v5485 = vmax.f32 %v5037, 0.0
  %v5486 = vmax.f32 %v5038, 0.0
  %v5487 = vmax.f32 %v5039, 0.0
  %v5488 = vmax.f32 %v5040, 0.0
  %v5489 = vmax.f32 %v5041, 0.0
  %v5490 = vmax.f32 %v5042, 0.0
  %v5491 = vmax.f32 %v5043, 0.0
  %v5492 = vmax.f32 %v5044, 0.0
  %v5493 = vmax.f32 %v5045, 0.0
  %v5494 = vmax.f32 %v5046, 0.0
  %v5495 = vmax.f32 %v5047, 0.0
  %v5496 = vmax.f32 %v5048, 0.0
  %v5497 = vmax.f32 %v5049, 0.0
  %v5498 = vmax.f32 %v5050, 0.0
  %v5499 = vmax.f32 %v5051, 0.0
  %v5500 = vmax.f32 %v5052, 0.0
  %v5501 = vmax.f32 %v5053, 0.0
  %v5502 = vmax.f32 %v5054, 0.0
  %v5503 = vmax.f32 %v5055, 0.0
  %v5504 = vmax.f32 %v5056, 0.0
  %v5505 = vmax.f32 %v5057, 0.0
  %v5506 = vmax.f32 %v5058, 0.0
  %v5507 = vmax.f32 %v5059, 0.0
  %v5508 = vmax.f32 %v5060, 0.0
  %v5509 = vmax.f32 %v5061, 0.0
  %v5510 = vmax.f32 %v5062, 0.0
  %v5511 = vmax.f32 %v5063, 0.0
  %v5512 = vmax.f32 %v5064, 0.0
  %v5513 = vmax.f32 %v5065, 0.0
  %v5514 = vmax.f32 %v5066, 0.0
  %v5515 = vmax.f32 %v5067, 0.0
  %v5516 = vmax.f32 %v5068, 0.0
  %v5517 = vmax.f32 %v5069, 0.0
  %v5518 = vmax.f32 %v5070, 0.0
  %v5519 = vmax.f32 %v5071, 0.0
  %v5520 = vmax.f32 %v5072, 0.0
  %v5521 = vmax.f32 %v5073, 0.0
  %v5522 = vmax.f32 %v5074, 0.0
  %v5523 = vmax.f32 %v5075, 0.0
  %v5524 = vmax.f32 %v5076, 0.0
  %v5525 = vmax.f32 %v5077, 0.0
  %v5526 = vmax.f32 %v5078, 0.0
  %v5527 = vmax.f32 %v5079, 0.0
  %v5528 = vmax.f32 %v5080, 0.0
  %v5529 = vmax.f32 %v5081, 0.0
  %v5530 = vmax.f32 %v5082, 0.0
  %v5531 = vmax.f32 %v5083, 0.0
  %v5532 = vmax.f32 %v5084, 0.0
  %v5533 = vmax.f32 %v5085, 0.0
  %v5534 = vmax.f32 %v5086, 0.0
  %v5535 = vmax.f32 %v5087, 0.0
  %v5536 = vmax.f32 %v5088, 0.0
  %v5537 = vmax.f32 %v5089, 0.0
  %v5538 = vmax.f32 %v5090, 0.0
  %v5539 = vmax.f32 %v5091, 0.0
  %v5540 = vmax.f32 %v5092, 0.0
  %v5541 = vmax.f32 %v5093, 0.0
  %v5542 = vmax.f32 %v5094, 0.0
  %v5543 = vmax.f32 %v5095, 0.0
  %v5544 = vmax.f32 %v5096, 0.0
  %v5545 = vmax.f32 %v5097, 0.0
  %v5546 = vmax.f32 %v5098, 0.0
  %v5547 = vmax.f32 %v5099, 0.0
  %v5548 = vmax.f32 %v5100, 0.0
  %v5549 = vmax.f32 %v5101, 0.0
  %v5550 = vmax.f32 %v5102, 0.0
  %v5551 = vmax.f32 %v5103, 0.0
  %v5552 = vmax.f32 %v5104, 0.0
  %v5553 = vmax.f32 %v5105, 0.0
  %v5554 = vmax.f32 %v5106, 0.0
  %v5555 = vmax.f32 %v5107, 0.0
  %v5556 = vmax.f32 %v5108, 0.0
  %v5557 = vmax.f32 %v5109, 0.0
  %v5558 = vmax.f32 %v5110, 0.0
  %v5559 = vmax.f32 %v5111, 0.0
  %v5560 = vmax.f32 %v5112, 0.0
  %v5561 = vmax.f32 %v5113, 0.0
  %v5562 = vmax.f32 %v5114, 0.0
  %v5563 = vmax.f32 %v5115, 0.0
  %v5564 = vmax.f32 %v5116, 0.0
  %v5565 = vmax.f32 %v5117, 0.0
  %v5566 = vmax.f32 %v5118, 0.0
  %v5567 = vmax.f32 %v5119, 0.0
  %v5568 = vmax.f32 %v5120, 0.0
  %v5569 = vmax.f32 %v5121, 0.0
  %v5570 = vmax.f32 %v5122, 0.0
  %v5571 = vmax.f32 %v5123, 0.0
  %v5572 = vmax.f32 %v5124, 0.0
  %v5573 = vmax.f32 %v5125, 0.0
  %v5574 = vmax.f32 %v5126, 0.0
  %v5575 = vmax.f32 %v5127, 0.0
  %v5576 = vmax.f32 %v5128, 0.0
  %v5577 = vmax.f32 %v5129, 0.0
  %v5578 = vmax.f32 %v5130, 0.0
  %v5579 = vmax.f32 %v5131, 0.0
  %v5580 = vmax.f32 %v5132, 0.0
  %v5581 = vmax.f32 %v5133, 0.0
  %v5582 = vmax.f32 %v5134, 0.0
  %v5583 = vmax.f32 %v5135, 0.0
  %v5584 = vmax.f32 %v5136, 0.0
  %v5585 = vmax.f32 %v5137, 0.0
  %v5586 = vmax.f32 %v5138, 0.0
  %v5587 = vmax.f32 %v5139, 0.0
  %v5588 = vmax.f32 %v5140, 0.0
  %v5589 = vmax.f32 %v5141, 0.0
  %v5590 = vmax.f32 %v5142, 0.0
  %v5591 = vmax.f32 %v5143, 0.0
  %v5592 = vmax.f32 %v5144, 0.0
  %v5593 = vmax.f32 %v5145, 0.0
  %v5594 = vmax.f32 %v5146, 0.0
  %v5595 = vmax.f32 %v5147, 0.0
  %v5596 = vmax.f32 %v5148, 0.0
  %v5597 = vmax.f32 %v5149, 0.0
  %v5598 = vmax.f32 %v5150, 0.0
  %v5599 = vmax.f32 %v5151, 0.0
  %v5600 = vmax.f32 %v5152, 0.0
  %v5601 = vmax.f32 %v5153, 0.0
  %v5602 = vmax.f32 %v5154, 0.0
  %v5603 = vmax.f32 %v5155, 0.0
  %v5604 = vmax.f32 %v5156, 0.0
  %v5605 = vmax.f32 %v5157, 0.0
  %v5606 = vmax.f32 %v5158, 0.0
  %v5607 = vmax.f32 %v5159, 0.0
  %v5608 = vmax.f32 %v5160, 0.0
  %v5609 = vmax.f32 %v5161, 0.0
  %v5610 = vmax.f32 %v5162, 0.0
  %v5611 = vmax.f32 %v5163, 0.0
  %v5612 = vmax.f32 %v5164, 0.0
  %v5613 = vmax.f32 %v5165, 0.0
  %v5614 = vmax.f32 %v5166, 0.0
  %v5615 = vmax.f32 %v5167, 0.0
  %v5616 = vmax.f32 %v5168, 0.0
  %v5617 = vmax.f32 %v5169, 0.0
  %v5618 = vmax.f32 %v5170, 0.0
  %v5619 = vmax.f32 %v5171, 0.0
  %v5620 = vmax.f32 %v5172, 0.0
  %v5621 = vmax.f32 %v5173, 0.0
  %v5622 = vmax.f32 %v5174, 0.0
  %v5623 = vmax.f32 %v5175, 0.0
  %v5624 = vmax.f32 %v5176, 0.0
  %v5625 = vmax.f32 %v5177, 0.0
  %v5626 = vmax.f32 %v5178, 0.0
  %v5627 = vmax.f32 %v5179, 0.0
  %v5628 = vmax.f32 %v5180, 0.0
  %v5629 = vmax.f32 %v5181, 0.0
  %v5630 = vmax.f32 %v5182, 0.0
  %v5631 = vmax.f32 %v5183, 0.0
  %v5632 = vmax.f32 %v5184, 0.0
  %v5633 = vmax.f32 %v5185, 0.0
  %v5634 = vmax.f32 %v5186, 0.0
  %v5635 = vmax.f32 %v5187, 0.0
  %v5636 = vmax.f32 %v5188, 0.0
  %v5637 = vmax.f32 %v5189, 0.0
  %v5638 = vmax.f32 %v5190, 0.0
  %v5639 = vmax.f32 %v5191, 0.0
  %v5640 = vmax.f32 %v5192, 0.0
  %v5641 = vmax.f32 %v5193, 0.0
  %v5642 = vmax.f32 %v5194, 0.0
  %v5643 = vmax.f32 %v5195, 0.0
  %v5644 = vmax.f32 %v5196, 0.0
  %v5645 = vmax.f32 %v5197, 0.0
  %v5646 = vmax.f32 %v5198, 0.0
  %v5647 = vmax.f32 %v5199, 0.0
  %v5648 = vmax.f32 %v5200, 0.0
  %v5649 = vmax.f32 %v5201, 0.0
  %v5650 = vmax.f32 %v5202, 0.0
  %v5651 = vmax.f32 %v5203, 0.0
  %v5652 = vmax.f32 %v5204, 0.0
  %v5653 = vmax.f32 %v5205, 0.0
  %v5654 = vmax.f32 %v5206, 0.0
  %v5655 = vmax.f32 %v5207, 0.0
  %v5656 = vmax.f32 %v5208, 0.0
  %v5657 = vmax.f32 %v5209, 0.0
  %v5658 = vmax.f32 %v5210, 0.0
  %v5659 = vmax.f32 %v5211, 0.0
  %v5660 = vmax.f32 %v5212, 0.0
  %v5661 = vmax.f32 %v5213, 0.0
  %v5662 = vmax.f32 %v5214, 0.0
  %v5663 = vmax.f32 %v5215, 0.0
  %v5664 = vmax.f32 %v5216, 0.0
  %v5665 = vmax.f32 %v5217, 0.0
  %v5666 = vmax.f32 %v5218, 0.0
  %v5667 = vmax.f32 %v5219, 0.0
  %v5668 = vmax.f32 %v5220, 0.0
  %v5669 = vmax.f32 %v5221, 0.0
  %v5670 = vmax.f32 %v5222, 0.0
  %v5671 = vmax.f32 %v5223, 0.0
  %v5672 = vmax.f32 %v5224, 0.0
  %v5673 = vmax.f32 %v5225, 0.0
  %v5674 = vmax.f32 %v5226, 0.0
  %v5675 = vmax.f32 %v5227, 0.0
  %v5676 = vmax.f32 %v5228, 0.0
  %v5677 = vmax.f32 %v5229, 0.0
  %v5678 = vmax.f32 %v5230, 0.0
  %v5679 = vmax.f32 %v5231, 0.0
  %v5680 = vmax.f32 %v5232, 0.0
  %v5681 = vmax.f32 %v5233, 0.0
  %v5682 = vmax.f32 %v5234, 0.0
  %v5683 = vmax.f32 %v5235, 0.0
  %v5684 = vmax.f32 %v5236, 0.0
  %v5685 = vmax.f32 %v5237, 0.0
  %v5686 = vmax.f32 %v5238, 0.0
  %v5687 = vmax.f32 %v5239, 0.0
  %v5688 = vmax.f32 %v5240, 0.0
  %v5689 = vmax.f32 %v5241, 0.0
  %v5690 = vmax.f32 %v5242, 0.0
  %v5691 = vmax.f32 %v5243, 0.0
  %v5692 = vmax.f32 %v5244, 0.0
  %v5693 = vmax.f32 %v5245, 0.0
  %v5694 = vmax.f32 %v5246, 0.0
  %v5695 = vmax.f32 %v5247, 0.0
  %v5696 = vmax.f32 %v5248, 0.0
  %v5697 = vmax.f32 %v5249, 0.0
  %v5698 = vmax.f32 %v5250, 0.0
  %v5699 = vmax.f32 %v5251, 0.0
  %v5700 = vmax.f32 %v5252, 0.0
  %v5701 = vmax.f32 %v5253, 0.0
  %v5702 = vmax.f32 %v5254, 0.0
  %v5703 = vmax.f32 %v5255, 0.0
  %v5704 = vmax.f32 %v5256, 0.0
  %v5705 = vmax.f32 %v5257, 0.0
  %v5706 = vmax.f32 %v5258, 0.0
  %v5707 = vmax.f32 %v5259, 0.0
  %v5708 = vmax.f32 %v5260, 0.0
  %v5709 = vmax.f32 %v5261, 0.0
  %v5710 = vmax.f32 %v5262, 0.0
  %v5711 = vmax.f32 %v5263, 0.0
  %v5712 = vmax.f32 %v5264, 0.0
  %v5713 = vmax.f32 %v5265, 0.0
  %v5714 = vmax.f32 %v5266, 0.0
  %v5715 = vmax.f32 %v5267, 0.0
  %v5716 = vmax.f32 %v5268, 0.0
  %v5717 = vmax.f32 %v5269, 0.0
  %v5718 = vmax.f32 %v5270, 0.0
  %v5719 = vmax.f32 %v5271, 0.0
  %v5720 = vmax.f32 %v5272, 0.0
  %v5721 = vmax.f32 %v5273, 0.0
  %v5722 = vmax.f32 %v5274, 0.0
  %v5723 = vmax.f32 %v5275, 0.0
  %v5724 = vmax.f32 %v5276, 0.0
  %v5725 = vmax.f32 %v5277, 0.0
  %v5726 = vmax.f32 %v5278, 0.0
  %v5727 = vmax.f32 %v5279, 0.0
  %v5728 = vmax.f32 %v5280, 0.0
  %v5729 = vmax.f32 %v5281, 0.0
  %v5730 = vmax.f32 %v5282, 0.0
  %v5731 = vmax.f32 %v5283, 0.0
  %v5732 = vmax.f32 %v5284, 0.0
  %v5733 = vmax.f32 %v5285, 0.0
  %v5734 = vmax.f32 %v5286, 0.0
  %v5735 = vmax.f32 %v5287, 0.0
  %v5736 = vmax.f32 %v5288, 0.0
  %v5737 = vmax.f32 %v5289, 0.0
  %v5738 = vmax.f32 %v5290, 0.0
  %v5739 = vmax.f32 %v5291, 0.0
  %v5740 = vmax.f32 %v5292, 0.0
  %v5741 = vmax.f32 %v5293, 0.0
  %v5742 = vmax.f32 %v5294, 0.0
  %v5743 = vmax.f32 %v5295, 0.0
  %v5744 = vmax.f32 %v5296, 0.0
  %v5745 = vmax.f32 %v5297, 0.0
  %v5746 = vmax.f32 %v5298, 0.0
  %v5747 = vmax.f32 %v5299, 0.0
  %v5748 = vmax.f32 %v5300, 0.0
  %v5749 = vmax.f32 %v5301, 0.0
  %v5750 = vmax.f32 %v5302, 0.0
  %v5751 = vmax.f32 %v5303, 0.0
  %v5752 = vmax.f32 %v5304, 0.0
  %v5753 = vmax.f32 %v5305, 0.0
  %v5754 = vmax.f32 %v5306, 0.0
  %v5755 = vmax.f32 %v5307, 0.0
  %v5756 = vmax.f32 %v5308, 0.0
  %v5757 = vmax.f32 %v5309, 0.0
  %v5758 = vmax.f32 %v5310, 0.0
  %v5759 = vmax.f32 %v5311, 0.0
  %v5760 = vmax.f32 %v5312, 0.0
  %v5761 = vmax.f32 %v5313, 0.0
  %v5762 = vmax.f32 %v5314, 0.0
  %v5763 = vmax.f32 %v5315, 0.0
  %v5764 = vmax.f32 %v5316, 0.0
  %v5765 = vmax.f32 %v5317, 0.0
  %v5766 = vmax.f32 %v5318, 0.0
  %v5767 = vmax.f32 %v5319, 0.0
  %v5768 = vmax.f32 %v5320, 0.0
  %v5769 = vmax.f32 %v5321, 0.0
  %v5770 = vmax.f32 %v5322, 0.0
  %v5771 = vmax.f32 %v5323, 0.0
  %v5772 = vmax.f32 %v5324, 0.0
  %v5773 = vmax.f32 %v5325, 0.0
  %v5774 = vmax.f32 %v5326, 0.0
  %v5775 = vmax.f32 %v5327, 0.0
  %v5776 = vmax.f32 %v5328, 0.0
  %v5777 = vmax.f32 %v5329, 0.0
  %v5778 = vmax.f32 %v5330, 0.0
  %v5779 = vmax.f32 %v5331, 0.0
  %v5780 = vmax.f32 %v5332, 0.0
  %v5781 = vmax.f32 %v5333, 0.0
  %v5782 = vmax.f32 %v5334, 0.0
  %v5783 = vmax.f32 %v5335, 0.0
  %v5784 = vmax.f32 %v5336, 0.0
  %v5785 = vmax.f32 %v5337, 0.0
  %v5786 = vmax.f32 %v5338, 0.0
  %v5787 = vmax.f32 %v5339, 0.0
  %v5788 = vmax.f32 %v5340, 0.0
  %v5789 = vmax.f32 %v5341, 0.0
  %v5790 = vmax.f32 %v5342, 0.0
  %v5791 = vmax.f32 %v5343, 0.0
  %v5792 = vmax.f32 %v5344, 0.0
  %v5793 = vmax.f32 %v5345, 0.0
  %v5794 = vmax.f32 %v5346, 0.0
  %v5795 = vmax.f32 %v5347, 0.0
  %v5796 = vmax.f32 %v5348, 0.0
  %v5797 = vmax.f32 %v5349, 0.0
  %v5798 = vmax.f32 %v5350, 0.0
  %v5799 = vmax.f32 %v5351, 0.0
  %v5800 = vmax.f32 %v5352, 0.0
  %v5801 = vmax.f32 %v5353, 0.0
  %v5802 = vmax.f32 %v5354, 0.0
  %v5803 = vmax.f32 %v5355, 0.0
  %v5804 = vmax.f32 %v5356, 0.0
  %v5805 = vmax.f32 %v5357, 0.0
  %v5806 = vmax.f32 %v5358, 0.0
  %v5807 = vmax.f32 %v5359, 0.0
  %v5808 = vmax.f32 %v5360, 0.0
  %v5809 = vmax.f32 %v5361, 0.0
  %v5810 = vmax.f32 %v5362, 0.0
  %v5811 = vmax.f32 %v5363, 0.0
  %v5812 = vmax.f32 %v5364, 0.0
  %v5813 = vmax.f32 %v5365, 0.0
  %v5814 = vmax.f32 %v5366, 0.0
  %v5815 = vmax.f32 %v5367, 0.0
  %v5816 = vmax.f32 %v5368, 0.0
  %v5817 = vmax.f32 %v5369, 0.0
  %v5818 = vmax.f32 %v5370, 0.0
  %v5819 = vmax.f32 %v5371, 0.0
  %v5820 = vmax.f32 %v5372, 0.0
  %v5821 = vmax.f32 %v5373, 0.0
  %v5822 = vmax.f32 %v5374, 0.0
  %v5823 = vmax.f32 %v5375, 0.0
  %v5824 = vmax.f32 %v5376, 0.0
  %v5825 = vmax.f32 %v5377, 0.0
  %v5826 = vmax.f32 %v5378, 0.0
  %v5827 = vmax.f32 %v5379, 0.0
  %v5828 = vmax.f32 %v5380, 0.0
  %v5829 = vmax.f32 %v5381, 0.0
  %v5830 = vmax.f32 %v5382, 0.0
  %v5831 = vmax.f32 %v5383, 0.0
  %v5832 = vmax.f32 %v5384, 0.0
  %v5833 = vmax.f32 %v5385, 0.0
  %v5834 = vmax.f32 %v5386, 0.0
  %v5835 = vmax.f32 %v5387, 0.0
  %v5836 = vmax.f32 %v5388, 0.0
  %v5837 = vmax.f32 %v5389, 0.0
  %v5838 = vmax.f32 %v5390, 0.0
  %v5839 = vmax.f32 %v5391, 0.0
  %v5840 = vmax.f32 %v5392, 0.0
  %v5841 = vmax.f32 %v5393, 0.0
  %v5842 = vmax.f32 %v5394, 0.0
  %v5843 = vmax.f32 %v5395, 0.0
  %v5844 = vmax.f32 %v5396, 0.0
  %v5845 = vmax.f32 %v5397, 0.0
  %v5846 = vmax.f32 %v5398, 0.0
  %v5847 = vmax.f32 %v5399, 0.0
  %v5848 = vmax.f32 %v5400, 0.0
  %v5849 = vmax.f32 %v5401, 0.0
  %v5850 = vmax.f32 %v5402, 0.0
  %v5851 = vmax.f32 %v5403, 0.0
  %v5852 = vmax.f32 %v5404, 0.0
  %v5853 = vmax.f32 %v5405, 0.0
  %v5854 = vmax.f32 %v5406, 0.0
  %v5855 = vmax.f32 %v5407, 0.0
  %v5856 = vmax.f32 %v5408, 0.0
  %v5857 = vmax.f32 %v5409, 0.0
  %v5858 = vmax.f32 %v5410, 0.0
  %v5859 = vmax.f32 %v5411, 0.0
  %v5860 = vmax.f32 %v5412, 0.0
  %v5861 = vmax.f32 %v5413, 0.0
  %v5862 = vmax.f32 %v5414, 0.0
  %v5863 = vmax.f32 %v5415, 0.0
  %v5864 = vmax.f32 %v5416, 0.0
  %v5865 = vmax.f32 %v5417, 0.0
  %v5866 = vmax.f32 %v5418, 0.0
  %v5867 = vmax.f32 %v5419, 0.0
  %v5868 = vmax.f32 %v5420, 0.0
  %v5869 = vmax.f32 %v5421, 0.0
  %v5870 = vmax.f32 %v5422, 0.0
  %v5871 = vmax.f32 %v5423, 0.0
  %v5872 = vmax.f32 %v5424, 0.0
  %v5873 = vmax.f32 %v5425, 0.0
  %v5874 = vmax.f32 %v5426, 0.0
  %v5875 = vmax.f32 %v5427, 0.0
  %v5876 = vmax.f32 %v5428, 0.0
  %v5877 = vmax.f32 %v5429, 0.0
  %v5878 = vmax.f32 %v5430, 0.0
  %v5879 = vmax.f32 %v5431, 0.0
  %v5880 = vmax.f32 %v5432, 0.0
  %v5881 = vmax.f32 %v5433, 0.0
  %v5882 = vmax.f32 %v5434, 0.0
  %v5883 = vmax.f32 %v5435, 0.0
  %v5884 = vmax.f32 %v5436, 0.0
  %v5885 = vmax.f32 %v5437, 0.0
  %v5886 = vmax.f32 %v5438, 0.0
  %v5887 = vmax.f32 %v5439, 0.0
  %v5888 = vmax.f32 %v5440, 0.0
  %v5889 = vmax.f32 %v5441, 0.0
  %v5890 = vmax.f32 %v5442, 0.0
  %v5891 = vmax.f32 %v5443, 0.0
  %v5892 = vmax.f32 %v5444, 0.0
  %v5893 = vmax.f32 %v5445, 0.0
  %v5894 = vmax.f32 %v5446, 0.0
  %v5895 = vmax.f32 %v5447, 0.0
  %v5896 = vmax.f32 %v5448, 0.0
  %v5897 = vmax.f32 %v5449, 0.0
  %v5898 = vmax.f32 %v5450, 0.0
  %v5899 = vmax.f32 %v5451, 0.0
  %v5900 = vmax.f32 %v5452, 0.0
  %v5901 = vmax.f32 %v5453, 0.0
  %v5902 = vmax.f32 %v5454, 0.0
  %v5903 = vmax.f32 %v5455, 0.0
  %v5904 = vmax.f32 %v5456, 0.0
  %v5905 = vmax.f32 %v5457, 0.0
  %v5906 = vmax.f32 %v5458, 0.0
  %v5907 = vpack.c.bf16 %v5466, %v5459
  %v5908 = vpack.c.bf16 %v5467, %v5460
  %v5909 = vpack.c.bf16 %v5468, %v5461
  %v5910 = vpack.c.bf16 %v5469, %v5462
  %v5911 = vpack.c.bf16 %v5470, %v5463
  %v5912 = vpack.c.bf16 %v5471, %v5464
  %v5913 = vpack.c.bf16 %v5472, %v5465
  %v5914 = vpack.c.bf16 %v5480, %v5473
  %v5915 = vpack.c.bf16 %v5481, %v5474
  %v5916 = vpack.c.bf16 %v5482, %v5475
  %v5917 = vpack.c.bf16 %v5483, %v5476
  %v5918 = vpack.c.bf16 %v5484, %v5477
  %v5919 = vpack.c.bf16 %v5485, %v5478
  %v5920 = vpack.c.bf16 %v5486, %v5479
  %v5921 = vpack.c.bf16 %v5494, %v5487
  %v5922 = vpack.c.bf16 %v5495, %v5488
  %v5923 = vpack.c.bf16 %v5496, %v5489
  %v5924 = vpack.c.bf16 %v5497, %v5490
  %v5925 = vpack.c.bf16 %v5498, %v5491
  %v5926 = vpack.c.bf16 %v5499, %v5492
  %v5927 = vpack.c.bf16 %v5500, %v5493
  %v5928 = vpack.c.bf16 %v5508, %v5501
  %v5929 = vpack.c.bf16 %v5509, %v5502
  %v5930 = vpack.c.bf16 %v5510, %v5503
  %v5931 = vpack.c.bf16 %v5511, %v5504
  %v5932 = vpack.c.bf16 %v5512, %v5505
  %v5933 = vpack.c.bf16 %v5513, %v5506
  %v5934 = vpack.c.bf16 %v5514, %v5507
  %v5935 = vpack.c.bf16 %v5522, %v5515
  %v5936 = vpack.c.bf16 %v5523, %v5516
  %v5937 = vpack.c.bf16 %v5524, %v5517
  %v5938 = vpack.c.bf16 %v5525, %v5518
  %v5939 = vpack.c.bf16 %v5526, %v5519
  %v5940 = vpack.c.bf16 %v5527, %v5520
  %v5941 = vpack.c.bf16 %v5528, %v5521
  %v5942 = vpack.c.bf16 %v5536, %v5529
  %v5943 = vpack.c.bf16 %v5537, %v5530
  %v5944 = vpack.c.bf16 %v5538, %v5531
  %v5945 = vpack.c.bf16 %v5539, %v5532
  %v5946 = vpack.c.bf16 %v5540, %v5533
  %v5947 = vpack.c.bf16 %v5541, %v5534
  %v5948 = vpack.c.bf16 %v5542, %v5535
  %v5949 = vpack.c.bf16 %v5550, %v5543
  %v5950 = vpack.c.bf16 %v5551, %v5544
  %v5951 = vpack.c.bf16 %v5552, %v5545
  %v5952 = vpack.c.bf16 %v5553, %v5546
  %v5953 = vpack.c.bf16 %v5554, %v5547
  %v5954 = vpack.c.bf16 %v5555, %v5548
  %v5955 = vpack.c.bf16 %v5556, %v5549
  %v5956 = vpack.c.bf16 %v5564, %v5557
  %v5957 = vpack.c.bf16 %v5565, %v5558
  %v5958 = vpack.c.bf16 %v5566, %v5559
  %v5959 = vpack.c.bf16 %v5567, %v5560
  %v5960 = vpack.c.bf16 %v5568, %v5561
  %v5961 = vpack.c.bf16 %v5569, %v5562
  %v5962 = vpack.c.bf16 %v5570, %v5563
  %v5963 = vpack.c.bf16 %v5578, %v5571
  %v5964 = vpack.c.bf16 %v5579, %v5572
  %v5965 = vpack.c.bf16 %v5580, %v5573
  %v5966 = vpack.c.bf16 %v5581, %v5574
  %v5967 = vpack.c.bf16 %v5582, %v5575
  %v5968 = vpack.c.bf16 %v5583, %v5576
  %v5969 = vpack.c.bf16 %v5584, %v5577
  %v5970 = vpack.c.bf16 %v5592, %v5585
  %v5971 = vpack.c.bf16 %v5593, %v5586
  %v5972 = vpack.c.bf16 %v5594, %v5587
  %v5973 = vpack.c.bf16 %v5595, %v5588
  %v5974 = vpack.c.bf16 %v5596, %v5589
  %v5975 = vpack.c.bf16 %v5597, %v5590
  %v5976 = vpack.c.bf16 %v5598, %v5591
  %v5977 = vpack.c.bf16 %v5606, %v5599
  %v5978 = vpack.c.bf16 %v5607, %v5600
  %v5979 = vpack.c.bf16 %v5608, %v5601
  %v5980 = vpack.c.bf16 %v5609, %v5602
  %v5981 = vpack.c.bf16 %v5610, %v5603
  %v5982 = vpack.c.bf16 %v5611, %v5604
  %v5983 = vpack.c.bf16 %v5612, %v5605
  %v5984 = vpack.c.bf16 %v5620, %v5613
  %v5985 = vpack.c.bf16 %v5621, %v5614
  %v5986 = vpack.c.bf16 %v5622, %v5615
  %v5987 = vpack.c.bf16 %v5623, %v5616
  %v5988 = vpack.c.bf16 %v5624, %v5617
  %v5989 = vpack.c.bf16 %v5625, %v5618
  %v5990 = vpack.c.bf16 %v5626, %v5619
  %v5991 = vpack.c.bf16 %v5634, %v5627
  %v5992 = vpack.c.bf16 %v5635, %v5628
  %v5993 = vpack.c.bf16 %v5636, %v5629
  %v5994 = vpack.c.bf16 %v5637, %v5630
  %v5995 = vpack.c.bf16 %v5638, %v5631
  %v5996 = vpack.c.bf16 %v5639, %v5632
  %v5997 = vpack.c.bf16 %v5640, %v5633
  %v5998 = vpack.c.bf16 %v5648, %v5641
  %v5999 = vpack.c.bf16 %v5649, %v5642
  %v6000 = vpack.c.bf16 %v5650, %v5643
  %v6001 = vpack.c.bf16 %v5651, %v5644
  %v6002 = vpack.c.bf16 %v5652, %v5645
  %v6003 = vpack.c.bf16 %v5653, %v5646
  %v6004 = vpack.c.bf16 %v5654, %v5647
  %v6005 = vpack.c.bf16 %v5662, %v5655
  %v6006 = vpack.c.bf16 %v5663, %v5656
  %v6007 = vpack.c.bf16 %v5664, %v5657
  %v6008 = vpack.c.bf16 %v5665, %v5658
  %v6009 = vpack.c.bf16 %v5666, %v5659
  %v6010 = vpack.c.bf16 %v5667, %v5660
  %v6011 = vpack.c.bf16 %v5668, %v5661
  %v6012 = vpack.c.bf16 %v5676, %v5669
  %v6013 = vpack.c.bf16 %v5677, %v5670
  %v6014 = vpack.c.bf16 %v5678, %v5671
  %v6015 = vpack.c.bf16 %v5679, %v5672
  %v6016 = vpack.c.bf16 %v5680, %v5673
  %v6017 = vpack.c.bf16 %v5681, %v5674
  %v6018 = vpack.c.bf16 %v5682, %v5675
  %v6019 = vpack.c.bf16 %v5690, %v5683
  %v6020 = vpack.c.bf16 %v5691, %v5684
  %v6021 = vpack.c.bf16 %v5692, %v5685
  %v6022 = vpack.c.bf16 %v5693, %v5686
  %v6023 = vpack.c.bf16 %v5694, %v5687
  %v6024 = vpack.c.bf16 %v5695, %v5688
  %v6025 = vpack.c.bf16 %v5696, %v5689
  %v6026 = vpack.c.bf16 %v5704, %v5697
  %v6027 = vpack.c.bf16 %v5705, %v5698
  %v6028 = vpack.c.bf16 %v5706, %v5699
  %v6029 = vpack.c.bf16 %v5707, %v5700
  %v6030 = vpack.c.bf16 %v5708, %v5701
  %v6031 = vpack.c.bf16 %v5709, %v5702
  %v6032 = vpack.c.bf16 %v5710, %v5703
  %v6033 = vpack.c.bf16 %v5718, %v5711
  %v6034 = vpack.c.bf16 %v5719, %v5712
  %v6035 = vpack.c.bf16 %v5720, %v5713
  %v6036 = vpack.c.bf16 %v5721, %v5714
  %v6037 = vpack.c.bf16 %v5722, %v5715
  %v6038 = vpack.c.bf16 %v5723, %v5716
  %v6039 = vpack.c.bf16 %v5724, %v5717
  %v6040 = vpack.c.bf16 %v5732, %v5725
  %v6041 = vpack.c.bf16 %v5733, %v5726
  %v6042 = vpack.c.bf16 %v5734, %v5727
  %v6043 = vpack.c.bf16 %v5735, %v5728
  %v6044 = vpack.c.bf16 %v5736, %v5729
  %v6045 = vpack.c.bf16 %v5737, %v5730
  %v6046 = vpack.c.bf16 %v5738, %v5731
  %v6047 = vpack.c.bf16 %v5746, %v5739
  %v6048 = vpack.c.bf16 %v5747, %v5740
  %v6049 = vpack.c.bf16 %v5748, %v5741
  %v6050 = vpack.c.bf16 %v5749, %v5742
  %v6051 = vpack.c.bf16 %v5750, %v5743
  %v6052 = vpack.c.bf16 %v5751, %v5744
  %v6053 = vpack.c.bf16 %v5752, %v5745
  %v6054 = vpack.c.bf16 %v5760, %v5753
  %v6055 = vpack.c.bf16 %v5761, %v5754
  %v6056 = vpack.c.bf16 %v5762, %v5755
  %v6057 = vpack.c.bf16 %v5763, %v5756
  %v6058 = vpack.c.bf16 %v5764, %v5757
  %v6059 = vpack.c.bf16 %v5765, %v5758
  %v6060 = vpack.c.bf16 %v5766, %v5759
  %v6061 = vpack.c.bf16 %v5774, %v5767
  %v6062 = vpack.c.bf16 %v5775, %v5768
  %v6063 = vpack.c.bf16 %v5776, %v5769
  %v6064 = vpack.c.bf16 %v5777, %v5770
  %v6065 = vpack.c.bf16 %v5778, %v5771
  %v6066 = vpack.c.bf16 %v5779, %v5772
  %v6067 = vpack.c.bf16 %v5780, %v5773
  %v6068 = vpack.c.bf16 %v5788, %v5781
  %v6069 = vpack.c.bf16 %v5789, %v5782
  %v6070 = vpack.c.bf16 %v5790, %v5783
  %v6071 = vpack.c.bf16 %v5791, %v5784
  %v6072 = vpack.c.bf16 %v5792, %v5785
  %v6073 = vpack.c.bf16 %v5793, %v5786
  %v6074 = vpack.c.bf16 %v5794, %v5787
  %v6075 = vpack.c.bf16 %v5802, %v5795
  %v6076 = vpack.c.bf16 %v5803, %v5796
  %v6077 = vpack.c.bf16 %v5804, %v5797
  %v6078 = vpack.c.bf16 %v5805, %v5798
  %v6079 = vpack.c.bf16 %v5806, %v5799
  %v6080 = vpack.c.bf16 %v5807, %v5800
  %v6081 = vpack.c.bf16 %v5808, %v5801
  %v6082 = vpack.c.bf16 %v5816, %v5809
  %v6083 = vpack.c.bf16 %v5817, %v5810
  %v6084 = vpack.c.bf16 %v5818, %v5811
  %v6085 = vpack.c.bf16 %v5819, %v5812
  %v6086 = vpack.c.bf16 %v5820, %v5813
  %v6087 = vpack.c.bf16 %v5821, %v5814
  %v6088 = vpack.c.bf16 %v5822, %v5815
  %v6089 = vpack.c.bf16 %v5830, %v5823
  %v6090 = vpack.c.bf16 %v5831, %v5824
  %v6091 = vpack.c.bf16 %v5832, %v5825
  %v6092 = vpack.c.bf16 %v5833, %v5826
  %v6093 = vpack.c.bf16 %v5834, %v5827
  %v6094 = vpack.c.bf16 %v5835, %v5828
  %v6095 = vpack.c.bf16 %v5836, %v5829
  %v6096 = vpack.c.bf16 %v5844, %v5837
  %v6097 = vpack.c.bf16 %v5845, %v5838
  %v6098 = vpack.c.bf16 %v5846, %v5839
  %v6099 = vpack.c.bf16 %v5847, %v5840
  %v6100 = vpack.c.bf16 %v5848, %v5841
  %v6101 = vpack.c.bf16 %v5849, %v5842
  %v6102 = vpack.c.bf16 %v5850, %v5843
  %v6103 = vpack.c.bf16 %v5858, %v5851
  %v6104 = vpack.c.bf16 %v5859, %v5852
  %v6105 = vpack.c.bf16 %v5860, %v5853
  %v6106 = vpack.c.bf16 %v5861, %v5854
  %v6107 = vpack.c.bf16 %v5862, %v5855
  %v6108 = vpack.c.bf16 %v5863, %v5856
  %v6109 = vpack.c.bf16 %v5864, %v5857
  %v6110 = vpack.c.bf16 %v5872, %v5865
  %v6111 = vpack.c.bf16 %v5873, %v5866
  %v6112 = vpack.c.bf16 %v5874, %v5867
  %v6113 = vpack.c.bf16 %v5875, %v5868
  %v6114 = vpack.c.bf16 %v5876, %v5869
  %v6115 = vpack.c.bf16 %v5877, %v5870
  %v6116 = vpack.c.bf16 %v5878, %v5871
  %v6117 = vpack.c.bf16 %v5886, %v5879
  %v6118 = vpack.c.bf16 %v5887, %v5880
  %v6119 = vpack.c.bf16 %v5888, %v5881
  %v6120 = vpack.c.bf16 %v5889, %v5882
  %v6121 = vpack.c.bf16 %v5890, %v5883
  %v6122 = vpack.c.bf16 %v5891, %v5884
  %v6123 = vpack.c.bf16 %v5892, %v5885
  %v6124 = vpack.c.bf16 %v5900, %v5893
  %v6125 = vpack.c.bf16 %v5901, %v5894
  %v6126 = vpack.c.bf16 %v5902, %v5895
  %v6127 = vpack.c.bf16 %v5903, %v5896
  %v6128 = vpack.c.bf16 %v5904, %v5897
  %v6129 = vpack.c.bf16 %v5905, %v5898
  %v6130 = vpack.c.bf16 %v5906, %v5899
  %v6131 = vld [vmem:[%s1] sm:$0xff]
  %v6132 = vld [vmem:[%s1 + $0x8] sm:$0xff]
  %v6133 = vld [vmem:[%s1 + $0x10] sm:$0xff]
  %v6134 = vld [vmem:[%s1 + $0x18] sm:$0xff]
  %v6135 = vld [vmem:[%s1 + $0x20] sm:$0xff]
  %v6136 = vld [vmem:[%s1 + $0x28] sm:$0xff]
  %v6137 = vld [vmem:[%s1 + $0x30] sm:$0xff]
  %v6138 = vld [vmem:[%s1 + $0x38] sm:$0xff]
  %v6139 = vld [vmem:[%s1 + $0x40] sm:$0xff]
  %v6140 = vld [vmem:[%s1 + $0x48] sm:$0xff]
  %v6141 = vld [vmem:[%s1 + $0x50] sm:$0xff]
  %v6142 = vld [vmem:[%s1 + $0x58] sm:$0xff]
  %v6143 = vld [vmem:[%s1 + $0x60] sm:$0xff]
  %v6144 = vld [vmem:[%s1 + $0x68] sm:$0xff]
  %v6145 = vld [vmem:[%s1 + $0x70] sm:$0xff]
  %v6146 = vld [vmem:[%s1 + $0x78] sm:$0xff]
  %v6147 = vld [vmem:[%s1 + $0x80] sm:$0xff]
  %v6148 = vld [vmem:[%s1 + $0x88] sm:$0xff]
  %v6149 = vld [vmem:[%s1 + $0x90] sm:$0xff]
  %v6150 = vld [vmem:[%s1 + $0x98] sm:$0xff]
  %v6151 = vld [vmem:[%s1 + $0xa0] sm:$0xff]
  %v6152 = vld [vmem:[%s1 + $0xa8] sm:$0xff]
  %v6153 = vld [vmem:[%s1 + $0xb0] sm:$0xff]
  %v6154 = vld [vmem:[%s1 + $0xb8] sm:$0xff]
  %v6155 = vld [vmem:[%s1 + $0xc0] sm:$0xff]
  %v6156 = vld [vmem:[%s1 + $0xc8] sm:$0xff]
  %v6157 = vld [vmem:[%s1 + $0xd0] sm:$0xff]
  %v6158 = vld [vmem:[%s1 + $0xd8] sm:$0xff]
  %v6159 = vld [vmem:[%s1 + $0xe0] sm:$0xff]
  %v6160 = vld [vmem:[%s1 + $0xe8] sm:$0xff]
  %v6161 = vld [vmem:[%s1 + $0xf0] sm:$0xff]
  %v6162 = vld [vmem:[%s1 + $0xf8] sm:$0xff]
  %v6195 = vunpack.c.l.b16 %v6131
  %v6196 = vunpack.c.h.b16 %v6131
  %v6197 = vunpack.c.l.b16 %v6132
  %v6198 = vunpack.c.h.b16 %v6132
  %v6199 = vunpack.c.l.b16 %v6133
  %v6200 = vunpack.c.h.b16 %v6133
  %v6201 = vunpack.c.l.b16 %v6134
  %v6202 = vunpack.c.h.b16 %v6134
  %v6203 = vunpack.c.l.b16 %v6135
  %v6204 = vunpack.c.h.b16 %v6135
  %v6205 = vunpack.c.l.b16 %v6136
  %v6206 = vunpack.c.h.b16 %v6136
  %v6207 = vunpack.c.l.b16 %v6137
  %v6208 = vunpack.c.h.b16 %v6137
  %v6209 = vunpack.c.l.b16 %v6138
  %v6210 = vunpack.c.h.b16 %v6138
  %v6211 = vunpack.c.l.b16 %v6139
  %v6212 = vunpack.c.h.b16 %v6139
  %v6213 = vunpack.c.l.b16 %v6140
  %v6214 = vunpack.c.h.b16 %v6140
  %v6215 = vunpack.c.l.b16 %v6141
  %v6216 = vunpack.c.h.b16 %v6141
  %v6217 = vunpack.c.l.b16 %v6142
  %v6218 = vunpack.c.h.b16 %v6142
  %v6219 = vunpack.c.l.b16 %v6143
  %v6220 = vunpack.c.h.b16 %v6143
  %v6221 = vunpack.c.l.b16 %v6144
  %v6222 = vunpack.c.h.b16 %v6144
  %v6223 = vunpack.c.l.b16 %v6145
  %v6224 = vunpack.c.h.b16 %v6145
  %v6225 = vunpack.c.l.b16 %v6146
  %v6226 = vunpack.c.h.b16 %v6146
  %v6227 = vunpack.c.l.b16 %v6147
  %v6228 = vunpack.c.h.b16 %v6147
  %v6229 = vunpack.c.l.b16 %v6148
  %v6230 = vunpack.c.h.b16 %v6148
  %v6231 = vunpack.c.l.b16 %v6149
  %v6232 = vunpack.c.h.b16 %v6149
  %v6233 = vunpack.c.l.b16 %v6150
  %v6234 = vunpack.c.h.b16 %v6150
  %v6235 = vunpack.c.l.b16 %v6151
  %v6236 = vunpack.c.h.b16 %v6151
  %v6237 = vunpack.c.l.b16 %v6152
  %v6238 = vunpack.c.h.b16 %v6152
  %v6239 = vunpack.c.l.b16 %v6153
  %v6240 = vunpack.c.h.b16 %v6153
  %v6241 = vunpack.c.l.b16 %v6154
  %v6242 = vunpack.c.h.b16 %v6154
  %v6243 = vunpack.c.l.b16 %v6155
  %v6244 = vunpack.c.h.b16 %v6155
  %v6245 = vunpack.c.l.b16 %v6156
  %v6246 = vunpack.c.h.b16 %v6156
  %v6247 = vunpack.c.l.b16 %v6157
  %v6248 = vunpack.c.h.b16 %v6157
  %v6249 = vunpack.c.l.b16 %v6158
  %v6250 = vunpack.c.h.b16 %v6158
  %v6251 = vunpack.c.l.b16 %v6159
  %v6252 = vunpack.c.h.b16 %v6159
  %v6253 = vunpack.c.l.b16 %v6160
  %v6254 = vunpack.c.h.b16 %v6160
  %v6255 = vunpack.c.l.b16 %v6161
  %v6256 = vunpack.c.h.b16 %v6161
  %v6257 = vunpack.c.l.b16 %v6162
  %v6258 = vunpack.c.h.b16 %v6162
  %v6259 = vpack.c.b16 %v6199, %v6195
  %v6260 = vpack.c.b16 %v6200, %v6196
  %v6261 = vpack.c.b16 %v6201, %v6197
  %v6262 = vpack.c.b16 %v6202, %v6198
  %v6263 = vpack.c.b16 %v6207, %v6203
  %v6264 = vpack.c.b16 %v6208, %v6204
  %v6265 = vpack.c.b16 %v6209, %v6205
  %v6266 = vpack.c.b16 %v6210, %v6206
  %v6267 = vpack.c.b16 %v6215, %v6211
  %v6268 = vpack.c.b16 %v6216, %v6212
  %v6269 = vpack.c.b16 %v6217, %v6213
  %v6270 = vpack.c.b16 %v6218, %v6214
  %v6271 = vpack.c.b16 %v6223, %v6219
  %v6272 = vpack.c.b16 %v6224, %v6220
  %v6273 = vpack.c.b16 %v6225, %v6221
  %v6274 = vpack.c.b16 %v6226, %v6222
  %v6275 = vpack.c.b16 %v6231, %v6227
  %v6276 = vpack.c.b16 %v6232, %v6228
  %v6277 = vpack.c.b16 %v6233, %v6229
  %v6278 = vpack.c.b16 %v6234, %v6230
  %v6279 = vpack.c.b16 %v6239, %v6235
  %v6280 = vpack.c.b16 %v6240, %v6236
  %v6281 = vpack.c.b16 %v6241, %v6237
  %v6282 = vpack.c.b16 %v6242, %v6238
  %v6283 = vpack.c.b16 %v6247, %v6243
  %v6284 = vpack.c.b16 %v6248, %v6244
  %v6285 = vpack.c.b16 %v6249, %v6245
  %v6286 = vpack.c.b16 %v6250, %v6246
  %v6287 = vpack.c.b16 %v6255, %v6251
  %v6288 = vpack.c.b16 %v6256, %v6252
  %v6289 = vpack.c.b16 %v6257, %v6253
  %v6290 = vpack.c.b16 %v6258, %v6254
  %6323 = vmatprep.subr.bf16.mxu0 %v5908
  %6324 = vmatpush1.bf16.msra.mxu0 %v5907
  %6325 = vmatprep.subr.bf16.mxu0 %v5915
  %6326 = vmatpush1.bf16.msra.mxu0 %v5914
  %6327 = vmatprep.subr.bf16.mxu0 %v5922
  %6328 = vmatpush1.bf16.msra.mxu0 %v5921
  %6329 = vmatprep.subr.bf16.mxu0 %v5929
  %6330 = vmatpush1.bf16.msra.mxu0 %v5928
  %6331 = vmatprep.subr.bf16.mxu0 %v5936
  %6332 = vmatpush1.bf16.msra.mxu0 %v5935
  %6333 = vmatprep.subr.bf16.mxu0 %v5943
  %6334 = vmatpush1.bf16.msra.mxu0 %v5942
  %6335 = vmatprep.subr.bf16.mxu0 %v5950
  %6336 = vmatpush1.bf16.msra.mxu0 %v5949
  %6337 = vmatprep.subr.bf16.mxu0 %v5957
  %6338 = vmatpush1.bf16.msra.mxu0 %v5956
  %6339 = vmatprep.subr.bf16.mxu0 %v5964
  %6340 = vmatpush1.bf16.msra.mxu0 %v5963
  %6341 = vmatprep.subr.bf16.mxu0 %v5971
  %6342 = vmatpush1.bf16.msra.mxu0 %v5970
  %6343 = vmatprep.subr.bf16.mxu0 %v5978
  %6344 = vmatpush1.bf16.msra.mxu0 %v5977
  %6345 = vmatprep.subr.bf16.mxu0 %v5985
  %6346 = vmatpush1.bf16.msra.mxu0 %v5984
  %6347 = vmatprep.subr.bf16.mxu0 %v5992
  %6348 = vmatpush1.bf16.msra.mxu0 %v5991
  %6349 = vmatprep.subr.bf16.mxu0 %v5999
  %6350 = vmatpush1.bf16.msra.mxu0 %v5998
  %6351 = vmatprep.subr.bf16.mxu0 %v6006
  %6352 = vmatpush1.bf16.msra.mxu0 %v6005
  %6353 = vmatprep.subr.bf16.mxu0 %v6013
  %6354 = vmatpush1.bf16.msra.mxu0 %v6012
  %6355 = vmatprep.mubr.bf16.mxu0 %v6260
  %6356 = vmatmul.mubr.bf16.gmra.mrb[0].mxu0 %v6259
  %v6357 = vpop.f32.mrb[0].mxu0
  %v6358 = vadd.f32 0.0, %v6357
  %v6359 = vpop.f32.mrb[0].mxu0
  %v6360 = vadd.f32 0.0, %v6359
  %v6361 = vpop.f32.mrb[0].mxu0
  %v6362 = vadd.f32 0.0, %v6361
  %v6363 = vpop.f32.mrb[0].mxu0
  %v6364 = vadd.f32 0.0, %v6363
  %6365 = vmatprep.mubr.bf16.mxu0 %v6264
  %6366 = vmatmul.mubr.bf16.gmra.mrb[0].mxu0 %v6263
  %v6367 = vpop.f32.mrb[0].mxu0
  %v6368 = vadd.f32 0.0, %v6367
  %v6369 = vpop.f32.mrb[0].mxu0
  %v6370 = vadd.f32 0.0, %v6369
  %v6371 = vpop.f32.mrb[0].mxu0
  %v6372 = vadd.f32 0.0, %v6371
  %v6373 = vpop.f32.mrb[0].mxu0
  %v6374 = vadd.f32 0.0, %v6373
  %6375 = vmatprep.mubr.bf16.mxu0 %v6268
  %6376 = vmatmul.mubr.bf16.gmra.mrb[0].mxu0 %v6267
  %v6377 = vpop.f32.mrb[0].mxu0
  %v6378 = vadd.f32 0.0, %v6377
  %v6379 = vpop.f32.mrb[0].mxu0
  %v6380 = vadd.f32 0.0, %v6379
  %v6381 = vpop.f32.mrb[0].mxu0
  %v6382 = vadd.f32 0.0, %v6381
  %v6383 = vpop.f32.mrb[0].mxu0
  %v6384 = vadd.f32 0.0, %v6383
  %6385 = vmatprep.mubr.bf16.mxu0 %v6272
  %6386 = vmatmul.mubr.bf16.gmra.mrb[0].mxu0 %v6271
  %v6387 = vpop.f32.mrb[0].mxu0
  %v6388 = vadd.f32 0.0, %v6387
  %v6389 = vpop.f32.mrb[0].mxu0
  %v6390 = vadd.f32 0.0, %v6389
  %v6391 = vpop.f32.mrb[0].mxu0
  %v6392 = vadd.f32 0.0, %v6391
  %v6393 = vpop.f32.mrb[0].mxu0
  %v6394 = vadd.f32 0.0, %v6393
  %6395 = vmatprep.mubr.bf16.mxu0 %v6276
  %6396 = vmatmul.mubr.bf16.gmra.mrb[0].mxu0 %v6275
  %v6397 = vpop.f32.mrb[0].mxu0
  %v6398 = vadd.f32 0.0, %v6397
  %v6399 = vpop.f32.mrb[0].mxu0
  %v6400 = vadd.f32 0.0, %v6399
  %v6401 = vpop.f32.mrb[0].mxu0
  %v6402 = vadd.f32 0.0, %v6401
  %v6403 = vpop.f32.mrb[0].mxu0
  %v6404 = vadd.f32 0.0, %v6403
  %6405 = vmatprep.mubr.bf16.mxu0 %v6280
  %6406 = vmatmul.mubr.bf16.gmra.mrb[0].mxu0 %v6279
  %v6407 = vpop.f32.mrb[0].mxu0
  %v6408 = vadd.f32 0.0, %v6407
  %v6409 = vpop.f32.mrb[0].mxu0
  %v6410 = vadd.f32 0.0, %v6409
  %v6411 = vpop.f32.mrb[0].mxu0
  %v6412 = vadd.f32 0.0, %v6411
  %v6413 = vpop.f32.mrb[0].mxu0
  %v6414 = vadd.f32 0.0, %v6413
  %6415 = vmatprep.mubr.bf16.mxu0 %v6284
  %6416 = vmatmul.mubr.bf16.gmra.mrb[0].mxu0 %v6283
  %v6417 = vpop.f32.mrb[0].mxu0
  %v6418 = vadd.f32 0.0, %v6417
  %v6419 = vpop.f32.mrb[0].mxu0
  %v6420 = vadd.f32 0.0, %v6419
  %v6421 = vpop.f32.mrb[0].mxu0
  %v6422 = vadd.f32 0.0, %v6421
  %v6423 = vpop.f32.mrb[0].mxu0
  %v6424 = vadd.f32 0.0, %v6423
  %6425 = vmatprep.mubr.bf16.mxu0 %v6288
  %6426 = vmatmul.mubr.bf16.gmra.mrb[0].mxu0 %v6287
  %v6427 = vpop.f32.mrb[0].mxu0
  %v6428 = vadd.f32 0.0, %v6427
  %v6429 = vpop.f32.mrb[0].mxu0
  %v6430 = vadd.f32 0.0, %v6429
  %v6431 = vpop.f32.mrb[0].mxu0
  %v6432 = vadd.f32 0.0, %v6431
  %v6433 = vpop.f32.mrb[0].mxu0
  %v6434 = vadd.f32 0.0, %v6433
  %6435 = vdwg.mxu0
  %6436 = vmatprep.subr.bf16.mxu0 %v6020
  %6437 = vmatpush1.bf16.msra.mxu0 %v6019
  %6438 = vmatprep.subr.bf16.mxu0 %v6027
  %6439 = vmatpush1.bf16.msra.mxu0 %v6026
  %6440 = vmatprep.subr.bf16.mxu0 %v6034
  %6441 = vmatpush1.bf16.msra.mxu0 %v6033
  %6442 = vmatprep.subr.bf16.mxu0 %v6041
  %6443 = vmatpush1.bf16.msra.mxu0 %v6040
  %6444 = vmatprep.subr.bf16.mxu0 %v6048
  %6445 = vmatpush1.bf16.msra.mxu0 %v6047
  %6446 = vmatprep.subr.bf16.mxu0 %v6055
  %6447 = vmatpush1.bf16.msra.mxu0 %v6054
  %6448 = vmatprep.subr.bf16.mxu0 %v6062
  %6449 = vmatpush1.bf16.msra.mxu0 %v6061
  %6450 = vmatprep.subr.bf16.mxu0 %v6069
  %6451 = vmatpush1.bf16.msra.mxu0 %v6068
  %6452 = vmatprep.subr.bf16.mxu0 %v6076
  %6453 = vmatpush1.bf16.msra.mxu0 %v6075
  %6454 = vmatprep.subr.bf16.mxu0 %v6083
  %6455 = vmatpush1.bf16.msra.mxu0 %v6082
  %6456 = vmatprep.subr.bf16.mxu0 %v6090
  %6457 = vmatpush1.bf16.msra.mxu0 %v6089
  %6458 = vmatprep.subr.bf16.mxu0 %v6097
  %6459 = vmatpush1.bf16.msra.mxu0 %v6096
  %6460 = vmatprep.subr.bf16.mxu0 %v6104
  %6461 = vmatpush1.bf16.msra.mxu0 %v6103
  %6462 = vmatprep.subr.bf16.mxu0 %v6111
  %6463 = vmatpush1.bf16.msra.mxu0 %v6110
  %6464 = vmatprep.subr.bf16.mxu0 %v6118
  %6465 = vmatpush1.bf16.msra.mxu0 %v6117
  %6466 = vmatprep.subr.bf16.mxu0 %v6125
  %6467 = vmatpush1.bf16.msra.mxu0 %v6124
  %6468 = vmatprep.mubr.bf16.mxu0 %v6262
  %6469 = vmatmul.mubr.bf16.gmra.mrb[0].mxu0 %v6261
  %v6470 = vpop.f32.mrb[0].mxu0
  %v6471 = vadd.f32 %v6358, %v6470
  %v6472 = vpop.f32.mrb[0].mxu0
  %v6473 = vadd.f32 %v6360, %v6472
  %v6474 = vpop.f32.mrb[0].mxu0
  %v6475 = vadd.f32 %v6362, %v6474
  %v6476 = vpop.f32.mrb[0].mxu0
  %v6477 = vadd.f32 %v6364, %v6476
  %6478 = vmatprep.mubr.bf16.mxu0 %v6266
  %6479 = vmatmul.mubr.bf16.gmra.mrb[0].mxu0 %v6265
  %v6480 = vpop.f32.mrb[0].mxu0
  %v6481 = vadd.f32 %v6368, %v6480
  %v6482 = vpop.f32.mrb[0].mxu0
  %v6483 = vadd.f32 %v6370, %v6482
  %v6484 = vpop.f32.mrb[0].mxu0
  %v6485 = vadd.f32 %v6372, %v6484
  %v6486 = vpop.f32.mrb[0].mxu0
  %v6487 = vadd.f32 %v6374, %v6486
  %6488 = vmatprep.mubr.bf16.mxu0 %v6270
  %6489 = vmatmul.mubr.bf16.gmra.mrb[0].mxu0 %v6269
  %v6490 = vpop.f32.mrb[0].mxu0
  %v6491 = vadd.f32 %v6378, %v6490
  %v6492 = vpop.f32.mrb[0].mxu0
  %v6493 = vadd.f32 %v6380, %v6492
  %v6494 = vpop.f32.mrb[0].mxu0
  %v6495 = vadd.f32 %v6382, %v6494
  %v6496 = vpop.f32.mrb[0].mxu0
  %v6497 = vadd.f32 %v6384, %v6496
  %6498 = vmatprep.mubr.bf16.mxu0 %v6274
  %6499 = vmatmul.mubr.bf16.gmra.mrb[0].mxu0 %v6273
  %v6500 = vpop.f32.mrb[0].mxu0
  %v6501 = vadd.f32 %v6388, %v6500
  %v6502 = vpop.f32.mrb[0].mxu0
  %v6503 = vadd.f32 %v6390, %v6502
  %v6504 = vpop.f32.mrb[0].mxu0
  %v6505 = vadd.f32 %v6392, %v6504
  %v6506 = vpop.f32.mrb[0].mxu0
  %v6507 = vadd.f32 %v6394, %v6506
  %6508 = vmatprep.mubr.bf16.mxu0 %v6278
  %6509 = vmatmul.mubr.bf16.gmra.mrb[0].mxu0 %v6277
  %v6510 = vpop.f32.mrb[0].mxu0
  %v6511 = vadd.f32 %v6398, %v6510
  %v6512 = vpop.f32.mrb[0].mxu0
  %v6513 = vadd.f32 %v6400, %v6512
  %v6514 = vpop.f32.mrb[0].mxu0
  %v6515 = vadd.f32 %v6402, %v6514
  %v6516 = vpop.f32.mrb[0].mxu0
  %v6517 = vadd.f32 %v6404, %v6516
  %6518 = vmatprep.mubr.bf16.mxu0 %v6282
  %6519 = vmatmul.mubr.bf16.gmra.mrb[0].mxu0 %v6281
  %v6520 = vpop.f32.mrb[0].mxu0
  %v6521 = vadd.f32 %v6408, %v6520
  %v6522 = vpop.f32.mrb[0].mxu0
  %v6523 = vadd.f32 %v6410, %v6522
  %v6524 = vpop.f32.mrb[0].mxu0
  %v6525 = vadd.f32 %v6412, %v6524
  %v6526 = vpop.f32.mrb[0].mxu0
  %v6527 = vadd.f32 %v6414, %v6526
  %6528 = vmatprep.mubr.bf16.mxu0 %v6286
  %6529 = vmatmul.mubr.bf16.gmra.mrb[0].mxu0 %v6285
  %v6530 = vpop.f32.mrb[0].mxu0
  %v6531 = vadd.f32 %v6418, %v6530
  %v6532 = vpop.f32.mrb[0].mxu0
  %v6533 = vadd.f32 %v6420, %v6532
  %v6534 = vpop.f32.mrb[0].mxu0
  %v6535 = vadd.f32 %v6422, %v6534
  %v6536 = vpop.f32.mrb[0].mxu0
  %v6537 = vadd.f32 %v6424, %v6536
  %6538 = vmatprep.mubr.bf16.mxu0 %v6290
  %6539 = vmatmul.mubr.bf16.gmra.mrb[0].mxu0 %v6289
  %v6540 = vpop.f32.mrb[0].mxu0
  %v6541 = vadd.f32 %v6428, %v6540
  %v6542 = vpop.f32.mrb[0].mxu0
  %v6543 = vadd.f32 %v6430, %v6542
  %v6544 = vpop.f32.mrb[0].mxu0
  %v6545 = vadd.f32 %v6432, %v6544
  %v6546 = vpop.f32.mrb[0].mxu0
  %v6547 = vadd.f32 %v6434, %v6546
  %6548 = vdwg.mxu0
  %6549 = vmatprep.subr.bf16.mxu0 %v5910
  %6550 = vmatpush1.bf16.msra.mxu0 %v5909
  %6551 = vmatprep.subr.bf16.mxu0 %v5917
  %6552 = vmatpush1.bf16.msra.mxu0 %v5916
  %6553 = vmatprep.subr.bf16.mxu0 %v5924
  %6554 = vmatpush1.bf16.msra.mxu0 %v5923
  %6555 = vmatprep.subr.bf16.mxu0 %v5931
  %6556 = vmatpush1.bf16.msra.mxu0 %v5930
  %6557 = vmatprep.subr.bf16.mxu0 %v5938
  %6558 = vmatpush1.bf16.msra.mxu0 %v5937
  %6559 = vmatprep.subr.bf16.mxu0 %v5945
  %6560 = vmatpush1.bf16.msra.mxu0 %v5944
  %6561 = vmatprep.subr.bf16.mxu0 %v5952
  %6562 = vmatpush1.bf16.msra.mxu0 %v5951
  %6563 = vmatprep.subr.bf16.mxu0 %v5959
  %6564 = vmatpush1.bf16.msra.mxu0 %v5958
  %6565 = vmatprep.subr.bf16.mxu0 %v5966
  %6566 = vmatpush1.bf16.msra.mxu0 %v5965
  %6567 = vmatprep.subr.bf16.mxu0 %v5973
  %6568 = vmatpush1.bf16.msra.mxu0 %v5972
  %6569 = vmatprep.subr.bf16.mxu0 %v5980
  %6570 = vmatpush1.bf16.msra.mxu0 %v5979
  %6571 = vmatprep.subr.bf16.mxu0 %v5987
  %6572 = vmatpush1.bf16.msra.mxu0 %v5986
  %6573 = vmatprep.subr.bf16.mxu0 %v5994
  %6574 = vmatpush1.bf16.msra.mxu0 %v5993
  %6575 = vmatprep.subr.bf16.mxu0 %v6001
  %6576 = vmatpush1.bf16.msra.mxu0 %v6000
  %6577 = vmatprep.subr.bf16.mxu0 %v6008
  %6578 = vmatpush1.bf16.msra.mxu0 %v6007
  %6579 = vmatprep.subr.bf16.mxu0 %v6015
  %6580 = vmatpush1.bf16.msra.mxu0 %v6014
  %6581 = vmatprep.mubr.bf16.mxu0 %v6260
  %6582 = vmatmul.mubr.bf16.gmra.mrb[0].mxu0 %v6259
  %v6583 = vpop.f32.mrb[0].mxu0
  %v6584 = vadd.f32 0.0, %v6583
  %v6585 = vpop.f32.mrb[0].mxu0
  %v6586 = vadd.f32 0.0, %v6585
  %v6587 = vpop.f32.mrb[0].mxu0
  %v6588 = vadd.f32 0.0, %v6587
  %v6589 = vpop.f32.mrb[0].mxu0
  %v6590 = vadd.f32 0.0, %v6589
  %6591 = vmatprep.mubr.bf16.mxu0 %v6264
  %6592 = vmatmul.mubr.bf16.gmra.mrb[0].mxu0 %v6263
  %v6593 = vpop.f32.mrb[0].mxu0
  %v6594 = vadd.f32 0.0, %v6593
  %v6595 = vpop.f32.mrb[0].mxu0
  %v6596 = vadd.f32 0.0, %v6595
  %v6597 = vpop.f32.mrb[0].mxu0
  %v6598 = vadd.f32 0.0, %v6597
  %v6599 = vpop.f32.mrb[0].mxu0
  %v6600 = vadd.f32 0.0, %v6599
  %6601 = vmatprep.mubr.bf16.mxu0 %v6268
  %6602 = vmatmul.mubr.bf16.gmra.mrb[0].mxu0 %v6267
  %v6603 = vpop.f32.mrb[0].mxu0
  %v6604 = vadd.f32 0.0, %v6603
  %v6605 = vpop.f32.mrb[0].mxu0
  %v6606 = vadd.f32 0.0, %v6605
  %v6607 = vpop.f32.mrb[0].mxu0
  %v6608 = vadd.f32 0.0, %v6607
  %v6609 = vpop.f32.mrb[0].mxu0
  %v6610 = vadd.f32 0.0, %v6609
  %6611 = vmatprep.mubr.bf16.mxu0 %v6272
  %6612 = vmatmul.mubr.bf16.gmra.mrb[0].mxu0 %v6271
  %v6613 = vpop.f32.mrb[0].mxu0
  %v6614 = vadd.f32 0.0, %v6613
  %v6615 = vpop.f32.mrb[0].mxu0
  %v6616 = vadd.f32 0.0, %v6615
  %v6617 = vpop.f32.mrb[0].mxu0
  %v6618 = vadd.f32 0.0, %v6617
  %v6619 = vpop.f32.mrb[0].mxu0
  %v6620 = vadd.f32 0.0, %v6619
  %6621 = vmatprep.mubr.bf16.mxu0 %v6276
  %6622 = vmatmul.mubr.bf16.gmra.mrb[0].mxu0 %v6275
  %v6623 = vpop.f32.mrb[0].mxu0
  %v6624 = vadd.f32 0.0, %v6623
  %v6625 = vpop.f32.mrb[0].mxu0
  %v6626 = vadd.f32 0.0, %v6625
  %v6627 = vpop.f32.mrb[0].mxu0
  %v6628 = vadd.f32 0.0, %v6627
  %v6629 = vpop.f32.mrb[0].mxu0
  %v6630 = vadd.f32 0.0, %v6629
  %6631 = vmatprep.mubr.bf16.mxu0 %v6280
  %6632 = vmatmul.mubr.bf16.gmra.mrb[0].mxu0 %v6279
  %v6633 = vpop.f32.mrb[0].mxu0
  %v6634 = vadd.f32 0.0, %v6633
  %v6635 = vpop.f32.mrb[0].mxu0
  %v6636 = vadd.f32 0.0, %v6635
  %v6637 = vpop.f32.mrb[0].mxu0
  %v6638 = vadd.f32 0.0, %v6637
  %v6639 = vpop.f32.mrb[0].mxu0
  %v6640 = vadd.f32 0.0, %v6639
  %6641 = vmatprep.mubr.bf16.mxu0 %v6284
  %6642 = vmatmul.mubr.bf16.gmra.mrb[0].mxu0 %v6283
  %v6643 = vpop.f32.mrb[0].mxu0
  %v6644 = vadd.f32 0.0, %v6643
  %v6645 = vpop.f32.mrb[0].mxu0
  %v6646 = vadd.f32 0.0, %v6645
  %v6647 = vpop.f32.mrb[0].mxu0
  %v6648 = vadd.f32 0.0, %v6647
  %v6649 = vpop.f32.mrb[0].mxu0
  %v6650 = vadd.f32 0.0, %v6649
  %6651 = vmatprep.mubr.bf16.mxu0 %v6288
  %6652 = vmatmul.mubr.bf16.gmra.mrb[0].mxu0 %v6287
  %v6653 = vpop.f32.mrb[0].mxu0
  %v6654 = vadd.f32 0.0, %v6653
  %v6655 = vpop.f32.mrb[0].mxu0
  %v6656 = vadd.f32 0.0, %v6655
  %v6657 = vpop.f32.mrb[0].mxu0
  %v6658 = vadd.f32 0.0, %v6657
  %v6659 = vpop.f32.mrb[0].mxu0
  %v6660 = vadd.f32 0.0, %v6659
  %6661 = vdwg.mxu0
  %6662 = vmatprep.subr.bf16.mxu0 %v6022
  %6663 = vmatpush1.bf16.msra.mxu0 %v6021
  %6664 = vmatprep.subr.bf16.mxu0 %v6029
  %6665 = vmatpush1.bf16.msra.mxu0 %v6028
  %6666 = vmatprep.subr.bf16.mxu0 %v6036
  %6667 = vmatpush1.bf16.msra.mxu0 %v6035
  %6668 = vmatprep.subr.bf16.mxu0 %v6043
  %6669 = vmatpush1.bf16.msra.mxu0 %v6042
  %6670 = vmatprep.subr.bf16.mxu0 %v6050
  %6671 = vmatpush1.bf16.msra.mxu0 %v6049
  %6672 = vmatprep.subr.bf16.mxu0 %v6057
  %6673 = vmatpush1.bf16.msra.mxu0 %v6056
  %6674 = vmatprep.subr.bf16.mxu0 %v6064
  %6675 = vmatpush1.bf16.msra.mxu0 %v6063
  %6676 = vmatprep.subr.bf16.mxu0 %v6071
  %6677 = vmatpush1.bf16.msra.mxu0 %v6070
  %6678 = vmatprep.subr.bf16.mxu0 %v6078
  %6679 = vmatpush1.bf16.msra.mxu0 %v6077
  %6680 = vmatprep.subr.bf16.mxu0 %v6085
  %6681 = vmatpush1.bf16.msra.mxu0 %v6084
  %6682 = vmatprep.subr.bf16.mxu0 %v6092
  %6683 = vmatpush1.bf16.msra.mxu0 %v6091
  %6684 = vmatprep.subr.bf16.mxu0 %v6099
  %6685 = vmatpush1.bf16.msra.mxu0 %v6098
  %6686 = vmatprep.subr.bf16.mxu0 %v6106
  %6687 = vmatpush1.bf16.msra.mxu0 %v6105
  %6688 = vmatprep.subr.bf16.mxu0 %v6113
  %6689 = vmatpush1.bf16.msra.mxu0 %v6112
  %6690 = vmatprep.subr.bf16.mxu0 %v6120
  %6691 = vmatpush1.bf16.msra.mxu0 %v6119
  %6692 = vmatprep.subr.bf16.mxu0 %v6127
  %6693 = vmatpush1.bf16.msra.mxu0 %v6126
  %6694 = vmatprep.mubr.bf16.mxu0 %v6262
  %6695 = vmatmul.mubr.bf16.gmra.mrb[0].mxu0 %v6261
  %v6696 = vpop.f32.mrb[0].mxu0
  %v6697 = vadd.f32 %v6584, %v6696
  %v6698 = vpop.f32.mrb[0].mxu0
  %v6699 = vadd.f32 %v6586, %v6698
  %v6700 = vpop.f32.mrb[0].mxu0
  %v6701 = vadd.f32 %v6588, %v6700
  %v6702 = vpop.f32.mrb[0].mxu0
  %v6703 = vadd.f32 %v6590, %v6702
  %6704 = vmatprep.mubr.bf16.mxu0 %v6266
  %6705 = vmatmul.mubr.bf16.gmra.mrb[0].mxu0 %v6265
  %v6706 = vpop.f32.mrb[0].mxu0
  %v6707 = vadd.f32 %v6594, %v6706
  %v6708 = vpop.f32.mrb[0].mxu0
  %v6709 = vadd.f32 %v6596, %v6708
  %v6710 = vpop.f32.mrb[0].mxu0
  %v6711 = vadd.f32 %v6598, %v6710
  %v6712 = vpop.f32.mrb[0].mxu0
  %v6713 = vadd.f32 %v6600, %v6712
  %6714 = vmatprep.mubr.bf16.mxu0 %v6270
  %6715 = vmatmul.mubr.bf16.gmra.mrb[0].mxu0 %v6269
  %v6716 = vpop.f32.mrb[0].mxu0
  %v6717 = vadd.f32 %v6604, %v6716
  %v6718 = vpop.f32.mrb[0].mxu0
  %v6719 = vadd.f32 %v6606, %v6718
  %v6720 = vpop.f32.mrb[0].mxu0
  %v6721 = vadd.f32 %v6608, %v6720
  %v6722 = vpop.f32.mrb[0].mxu0
  %v6723 = vadd.f32 %v6610, %v6722
  %6724 = vmatprep.mubr.bf16.mxu0 %v6274
  %6725 = vmatmul.mubr.bf16.gmra.mrb[0].mxu0 %v6273
  %v6726 = vpop.f32.mrb[0].mxu0
  %v6727 = vadd.f32 %v6614, %v6726
  %v6728 = vpop.f32.mrb[0].mxu0
  %v6729 = vadd.f32 %v6616, %v6728
  %v6730 = vpop.f32.mrb[0].mxu0
  %v6731 = vadd.f32 %v6618, %v6730
  %v6732 = vpop.f32.mrb[0].mxu0
  %v6733 = vadd.f32 %v6620, %v6732
  %6734 = vmatprep.mubr.bf16.mxu0 %v6278
  %6735 = vmatmul.mubr.bf16.gmra.mrb[0].mxu0 %v6277
  %v6736 = vpop.f32.mrb[0].mxu0
  %v6737 = vadd.f32 %v6624, %v6736
  %v6738 = vpop.f32.mrb[0].mxu0
  %v6739 = vadd.f32 %v6626, %v6738
  %v6740 = vpop.f32.mrb[0].mxu0
  %v6741 = vadd.f32 %v6628, %v6740
  %v6742 = vpop.f32.mrb[0].mxu0
  %v6743 = vadd.f32 %v6630, %v6742
  %6744 = vmatprep.mubr.bf16.mxu0 %v6282
  %6745 = vmatmul.mubr.bf16.gmra.mrb[0].mxu0 %v6281
  %v6746 = vpop.f32.mrb[0].mxu0
  %v6747 = vadd.f32 %v6634, %v6746
  %v6748 = vpop.f32.mrb[0].mxu0
  %v6749 = vadd.f32 %v6636, %v6748
  %v6750 = vpop.f32.mrb[0].mxu0
  %v6751 = vadd.f32 %v6638, %v6750
  %v6752 = vpop.f32.mrb[0].mxu0
  %v6753 = vadd.f32 %v6640, %v6752
  %6754 = vmatprep.mubr.bf16.mxu0 %v6286
  %6755 = vmatmul.mubr.bf16.gmra.mrb[0].mxu0 %v6285
  %v6756 = vpop.f32.mrb[0].mxu0
  %v6757 = vadd.f32 %v6644, %v6756
  %v6758 = vpop.f32.mrb[0].mxu0
  %v6759 = vadd.f32 %v6646, %v6758
  %v6760 = vpop.f32.mrb[0].mxu0
  %v6761 = vadd.f32 %v6648, %v6760
  %v6762 = vpop.f32.mrb[0].mxu0
  %v6763 = vadd.f32 %v6650, %v6762
  %6764 = vmatprep.mubr.bf16.mxu0 %v6290
  %6765 = vmatmul.mubr.bf16.gmra.mrb[0].mxu0 %v6289
  %v6766 = vpop.f32.mrb[0].mxu0
  %v6767 = vadd.f32 %v6654, %v6766
  %v6768 = vpop.f32.mrb[0].mxu0
  %v6769 = vadd.f32 %v6656, %v6768
  %v6770 = vpop.f32.mrb[0].mxu0
  %v6771 = vadd.f32 %v6658, %v6770
  %v6772 = vpop.f32.mrb[0].mxu0
  %v6773 = vadd.f32 %v6660, %v6772
  %6774 = vdwg.mxu0
  %6775 = vmatprep.subr.bf16.mxu0 %v5912
  %6776 = vmatpush1.bf16.msra.mxu0 %v5911
  %6777 = vmatprep.subr.bf16.mxu0 %v5919
  %6778 = vmatpush1.bf16.msra.mxu0 %v5918
  %6779 = vmatprep.subr.bf16.mxu0 %v5926
  %6780 = vmatpush1.bf16.msra.mxu0 %v5925
  %6781 = vmatprep.subr.bf16.mxu0 %v5933
  %6782 = vmatpush1.bf16.msra.mxu0 %v5932
  %6783 = vmatprep.subr.bf16.mxu0 %v5940
  %6784 = vmatpush1.bf16.msra.mxu0 %v5939
  %6785 = vmatprep.subr.bf16.mxu0 %v5947
  %6786 = vmatpush1.bf16.msra.mxu0 %v5946
  %6787 = vmatprep.subr.bf16.mxu0 %v5954
  %6788 = vmatpush1.bf16.msra.mxu0 %v5953
  %6789 = vmatprep.subr.bf16.mxu0 %v5961
  %6790 = vmatpush1.bf16.msra.mxu0 %v5960
  %6791 = vmatprep.subr.bf16.mxu0 %v5968
  %6792 = vmatpush1.bf16.msra.mxu0 %v5967
  %6793 = vmatprep.subr.bf16.mxu0 %v5975
  %6794 = vmatpush1.bf16.msra.mxu0 %v5974
  %6795 = vmatprep.subr.bf16.mxu0 %v5982
  %6796 = vmatpush1.bf16.msra.mxu0 %v5981
  %6797 = vmatprep.subr.bf16.mxu0 %v5989
  %6798 = vmatpush1.bf16.msra.mxu0 %v5988
  %6799 = vmatprep.subr.bf16.mxu0 %v5996
  %6800 = vmatpush1.bf16.msra.mxu0 %v5995
  %6801 = vmatprep.subr.bf16.mxu0 %v6003
  %6802 = vmatpush1.bf16.msra.mxu0 %v6002
  %6803 = vmatprep.subr.bf16.mxu0 %v6010
  %6804 = vmatpush1.bf16.msra.mxu0 %v6009
  %6805 = vmatprep.subr.bf16.mxu0 %v6017
  %6806 = vmatpush1.bf16.msra.mxu0 %v6016
  %6807 = vmatprep.mubr.bf16.mxu0 %v6260
  %6808 = vmatmul.mubr.bf16.gmra.mrb[0].mxu0 %v6259
  %v6809 = vpop.f32.mrb[0].mxu0
  %v6810 = vadd.f32 0.0, %v6809
  %v6811 = vpop.f32.mrb[0].mxu0
  %v6812 = vadd.f32 0.0, %v6811
  %v6813 = vpop.f32.mrb[0].mxu0
  %v6814 = vadd.f32 0.0, %v6813
  %v6815 = vpop.f32.mrb[0].mxu0
  %v6816 = vadd.f32 0.0, %v6815
  %6817 = vmatprep.mubr.bf16.mxu0 %v6264
  %6818 = vmatmul.mubr.bf16.gmra.mrb[0].mxu0 %v6263
  %v6819 = vpop.f32.mrb[0].mxu0
  %v6820 = vadd.f32 0.0, %v6819
  %v6821 = vpop.f32.mrb[0].mxu0
  %v6822 = vadd.f32 0.0, %v6821
  %v6823 = vpop.f32.mrb[0].mxu0
  %v6824 = vadd.f32 0.0, %v6823
  %v6825 = vpop.f32.mrb[0].mxu0
  %v6826 = vadd.f32 0.0, %v6825
  %6827 = vmatprep.mubr.bf16.mxu0 %v6268
  %6828 = vmatmul.mubr.bf16.gmra.mrb[0].mxu0 %v6267
  %v6829 = vpop.f32.mrb[0].mxu0
  %v6830 = vadd.f32 0.0, %v6829
  %v6831 = vpop.f32.mrb[0].mxu0
  %v6832 = vadd.f32 0.0, %v6831
  %v6833 = vpop.f32.mrb[0].mxu0
  %v6834 = vadd.f32 0.0, %v6833
  %v6835 = vpop.f32.mrb[0].mxu0
  %v6836 = vadd.f32 0.0, %v6835
  %6837 = vmatprep.mubr.bf16.mxu0 %v6272
  %6838 = vmatmul.mubr.bf16.gmra.mrb[0].mxu0 %v6271
  %v6839 = vpop.f32.mrb[0].mxu0
  %v6840 = vadd.f32 0.0, %v6839
  %v6841 = vpop.f32.mrb[0].mxu0
  %v6842 = vadd.f32 0.0, %v6841
  %v6843 = vpop.f32.mrb[0].mxu0
  %v6844 = vadd.f32 0.0, %v6843
  %v6845 = vpop.f32.mrb[0].mxu0
  %v6846 = vadd.f32 0.0, %v6845
  %6847 = vmatprep.mubr.bf16.mxu0 %v6276
  %6848 = vmatmul.mubr.bf16.gmra.mrb[0].mxu0 %v6275
  %v6849 = vpop.f32.mrb[0].mxu0
  %v6850 = vadd.f32 0.0, %v6849
  %v6851 = vpop.f32.mrb[0].mxu0
  %v6852 = vadd.f32 0.0, %v6851
  %v6853 = vpop.f32.mrb[0].mxu0
  %v6854 = vadd.f32 0.0, %v6853
  %v6855 = vpop.f32.mrb[0].mxu0
  %v6856 = vadd.f32 0.0, %v6855
  %6857 = vmatprep.mubr.bf16.mxu0 %v6280
  %6858 = vmatmul.mubr.bf16.gmra.mrb[0].mxu0 %v6279
  %v6859 = vpop.f32.mrb[0].mxu0
  %v6860 = vadd.f32 0.0, %v6859
  %v6861 = vpop.f32.mrb[0].mxu0
  %v6862 = vadd.f32 0.0, %v6861
  %v6863 = vpop.f32.mrb[0].mxu0
  %v6864 = vadd.f32 0.0, %v6863
  %v6865 = vpop.f32.mrb[0].mxu0
  %v6866 = vadd.f32 0.0, %v6865
  %6867 = vmatprep.mubr.bf16.mxu0 %v6284
  %6868 = vmatmul.mubr.bf16.gmra.mrb[0].mxu0 %v6283
  %v6869 = vpop.f32.mrb[0].mxu0
  %v6870 = vadd.f32 0.0, %v6869
  %v6871 = vpop.f32.mrb[0].mxu0
  %v6872 = vadd.f32 0.0, %v6871
  %v6873 = vpop.f32.mrb[0].mxu0
  %v6874 = vadd.f32 0.0, %v6873
  %v6875 = vpop.f32.mrb[0].mxu0
  %v6876 = vadd.f32 0.0, %v6875
  %6877 = vmatprep.mubr.bf16.mxu0 %v6288
  %6878 = vmatmul.mubr.bf16.gmra.mrb[0].mxu0 %v6287
  %v6879 = vpop.f32.mrb[0].mxu0
  %v6880 = vadd.f32 0.0, %v6879
  %v6881 = vpop.f32.mrb[0].mxu0
  %v6882 = vadd.f32 0.0, %v6881
  %v6883 = vpop.f32.mrb[0].mxu0
  %v6884 = vadd.f32 0.0, %v6883
  %v6885 = vpop.f32.mrb[0].mxu0
  %v6886 = vadd.f32 0.0, %v6885
  %6887 = vdwg.mxu0
  %6888 = vmatprep.subr.bf16.mxu0 %v6024
  %6889 = vmatpush1.bf16.msra.mxu0 %v6023
  %6890 = vmatprep.subr.bf16.mxu0 %v6031
  %6891 = vmatpush1.bf16.msra.mxu0 %v6030
  %6892 = vmatprep.subr.bf16.mxu0 %v6038
  %6893 = vmatpush1.bf16.msra.mxu0 %v6037
  %6894 = vmatprep.subr.bf16.mxu0 %v6045
  %6895 = vmatpush1.bf16.msra.mxu0 %v6044
  %6896 = vmatprep.subr.bf16.mxu0 %v6052
  %6897 = vmatpush1.bf16.msra.mxu0 %v6051
  %6898 = vmatprep.subr.bf16.mxu0 %v6059
  %6899 = vmatpush1.bf16.msra.mxu0 %v6058
  %6900 = vmatprep.subr.bf16.mxu0 %v6066
  %6901 = vmatpush1.bf16.msra.mxu0 %v6065
  %6902 = vmatprep.subr.bf16.mxu0 %v6073
  %6903 = vmatpush1.bf16.msra.mxu0 %v6072
  %6904 = vmatprep.subr.bf16.mxu0 %v6080
  %6905 = vmatpush1.bf16.msra.mxu0 %v6079
  %6906 = vmatprep.subr.bf16.mxu0 %v6087
  %6907 = vmatpush1.bf16.msra.mxu0 %v6086
  %6908 = vmatprep.subr.bf16.mxu0 %v6094
  %6909 = vmatpush1.bf16.msra.mxu0 %v6093
  %6910 = vmatprep.subr.bf16.mxu0 %v6101
  %6911 = vmatpush1.bf16.msra.mxu0 %v6100
  %6912 = vmatprep.subr.bf16.mxu0 %v6108
  %6913 = vmatpush1.bf16.msra.mxu0 %v6107
  %6914 = vmatprep.subr.bf16.mxu0 %v6115
  %6915 = vmatpush1.bf16.msra.mxu0 %v6114
  %6916 = vmatprep.subr.bf16.mxu0 %v6122
  %6917 = vmatpush1.bf16.msra.mxu0 %v6121
  %6918 = vmatprep.subr.bf16.mxu0 %v6129
  %6919 = vmatpush1.bf16.msra.mxu0 %v6128
  %6920 = vmatprep.mubr.bf16.mxu0 %v6262
  %6921 = vmatmul.mubr.bf16.gmra.mrb[0].mxu0 %v6261
  %v6922 = vpop.f32.mrb[0].mxu0
  %v6923 = vadd.f32 %v6810, %v6922
  %v6924 = vpop.f32.mrb[0].mxu0
  %v6925 = vadd.f32 %v6812, %v6924
  %v6926 = vpop.f32.mrb[0].mxu0
  %v6927 = vadd.f32 %v6814, %v6926
  %v6928 = vpop.f32.mrb[0].mxu0
  %v6929 = vadd.f32 %v6816, %v6928
  %6930 = vmatprep.mubr.bf16.mxu0 %v6266
  %6931 = vmatmul.mubr.bf16.gmra.mrb[0].mxu0 %v6265
  %v6932 = vpop.f32.mrb[0].mxu0
  %v6933 = vadd.f32 %v6820, %v6932
  %v6934 = vpop.f32.mrb[0].mxu0
  %v6935 = vadd.f32 %v6822, %v6934
  %v6936 = vpop.f32.mrb[0].mxu0
  %v6937 = vadd.f32 %v6824, %v6936
  %v6938 = vpop.f32.mrb[0].mxu0
  %v6939 = vadd.f32 %v6826, %v6938
  %6940 = vmatprep.mubr.bf16.mxu0 %v6270
  %6941 = vmatmul.mubr.bf16.gmra.mrb[0].mxu0 %v6269
  %v6942 = vpop.f32.mrb[0].mxu0
  %v6943 = vadd.f32 %v6830, %v6942
  %v6944 = vpop.f32.mrb[0].mxu0
  %v6945 = vadd.f32 %v6832, %v6944
  %v6946 = vpop.f32.mrb[0].mxu0
  %v6947 = vadd.f32 %v6834, %v6946
  %v6948 = vpop.f32.mrb[0].mxu0
  %v6949 = vadd.f32 %v6836, %v6948
  %6950 = vmatprep.mubr.bf16.mxu0 %v6274
  %6951 = vmatmul.mubr.bf16.gmra.mrb[0].mxu0 %v6273
  %v6952 = vpop.f32.mrb[0].mxu0
  %v6953 = vadd.f32 %v6840, %v6952
  %v6954 = vpop.f32.mrb[0].mxu0
  %v6955 = vadd.f32 %v6842, %v6954
  %v6956 = vpop.f32.mrb[0].mxu0
  %v6957 = vadd.f32 %v6844, %v6956
  %v6958 = vpop.f32.mrb[0].mxu0
  %v6959 = vadd.f32 %v6846, %v6958
  %6960 = vmatprep.mubr.bf16.mxu0 %v6278
  %6961 = vmatmul.mubr.bf16.gmra.mrb[0].mxu0 %v6277
  %v6962 = vpop.f32.mrb[0].mxu0
  %v6963 = vadd.f32 %v6850, %v6962
  %v6964 = vpop.f32.mrb[0].mxu0
  %v6965 = vadd.f32 %v6852, %v6964
  %v6966 = vpop.f32.mrb[0].mxu0
  %v6967 = vadd.f32 %v6854, %v6966
  %v6968 = vpop.f32.mrb[0].mxu0
  %v6969 = vadd.f32 %v6856, %v6968
  %6970 = vmatprep.mubr.bf16.mxu0 %v6282
  %6971 = vmatmul.mubr.bf16.gmra.mrb[0].mxu0 %v6281
  %v6972 = vpop.f32.mrb[0].mxu0
  %v6973 = vadd.f32 %v6860, %v6972
  %v6974 = vpop.f32.mrb[0].mxu0
  %v6975 = vadd.f32 %v6862, %v6974
  %v6976 = vpop.f32.mrb[0].mxu0
  %v6977 = vadd.f32 %v6864, %v6976
  %v6978 = vpop.f32.mrb[0].mxu0
  %v6979 = vadd.f32 %v6866, %v6978
  %6980 = vmatprep.mubr.bf16.mxu0 %v6286
  %6981 = vmatmul.mubr.bf16.gmra.mrb[0].mxu0 %v6285
  %v6982 = vpop.f32.mrb[0].mxu0
  %v6983 = vadd.f32 %v6870, %v6982
  %v6984 = vpop.f32.mrb[0].mxu0
  %v6985 = vadd.f32 %v6872, %v6984
  %v6986 = vpop.f32.mrb[0].mxu0
  %v6987 = vadd.f32 %v6874, %v6986
  %v6988 = vpop.f32.mrb[0].mxu0
  %v6989 = vadd.f32 %v6876, %v6988
  %6990 = vmatprep.mubr.bf16.mxu0 %v6290
  %6991 = vmatmul.mubr.bf16.gmra.mrb[0].mxu0 %v6289
  %v6992 = vpop.f32.mrb[0].mxu0
  %v6993 = vadd.f32 %v6880, %v6992
  %v6994 = vpop.f32.mrb[0].mxu0
  %v6995 = vadd.f32 %v6882, %v6994
  %v6996 = vpop.f32.mrb[0].mxu0
  %v6997 = vadd.f32 %v6884, %v6996
  %v6998 = vpop.f32.mrb[0].mxu0
  %v6999 = vadd.f32 %v6886, %v6998
  %7000 = vdwg.mxu0
  %7001 = vmatprep.subr.bf16.mxu0 0
  %7002 = vmatpush1.bf16.msra.mxu0 %v5913
  %7003 = vmatprep.subr.bf16.mxu0 0
  %7004 = vmatpush1.bf16.msra.mxu0 %v5920
  %7005 = vmatprep.subr.bf16.mxu0 0
  %7006 = vmatpush1.bf16.msra.mxu0 %v5927
  %7007 = vmatprep.subr.bf16.mxu0 0
  %7008 = vmatpush1.bf16.msra.mxu0 %v5934
  %7009 = vmatprep.subr.bf16.mxu0 0
  %7010 = vmatpush1.bf16.msra.mxu0 %v5941
  %7011 = vmatprep.subr.bf16.mxu0 0
  %7012 = vmatpush1.bf16.msra.mxu0 %v5948
  %7013 = vmatprep.subr.bf16.mxu0 0
  %7014 = vmatpush1.bf16.msra.mxu0 %v5955
  %7015 = vmatprep.subr.bf16.mxu0 0
  %7016 = vmatpush1.bf16.msra.mxu0 %v5962
  %7017 = vmatprep.subr.bf16.mxu0 0
  %7018 = vmatpush1.bf16.msra.mxu0 %v5969
  %7019 = vmatprep.subr.bf16.mxu0 0
  %7020 = vmatpush1.bf16.msra.mxu0 %v5976
  %7021 = vmatprep.subr.bf16.mxu0 0
  %7022 = vmatpush1.bf16.msra.mxu0 %v5983
  %7023 = vmatprep.subr.bf16.mxu0 0
  %7024 = vmatpush1.bf16.msra.mxu0 %v5990
  %7025 = vmatprep.subr.bf16.mxu0 0
  %7026 = vmatpush1.bf16.msra.mxu0 %v5997
  %7027 = vmatprep.subr.bf16.mxu0 0
  %7028 = vmatpush1.bf16.msra.mxu0 %v6004
  %7029 = vmatprep.subr.bf16.mxu0 0
  %7030 = vmatpush1.bf16.msra.mxu0 %v6011
  %7031 = vmatprep.subr.bf16.mxu0 0
  %7032 = vmatpush1.bf16.msra.mxu0 %v6018
  %7033 = vmatprep.mubr.bf16.mxu0 %v6260
  %7034 = vmatmul.mubr.bf16.gmra.mrb[0].mxu0 %v6259
  %v7035 = vpop.f32.mrb[0].mxu0
  %v7036 = vadd.f32 0.0, %v7035
  %v7037 = vpop.f32.mrb[0].mxu0
  %v7038 = vpop.f32.mrb[0].mxu0
  %v7039 = vadd.f32 0.0, %v7038
  %v7040 = vpop.f32.mrb[0].mxu0
  %7041 = vmatprep.mubr.bf16.mxu0 %v6264
  %7042 = vmatmul.mubr.bf16.gmra.mrb[0].mxu0 %v6263
  %v7043 = vpop.f32.mrb[0].mxu0
  %v7044 = vadd.f32 0.0, %v7043
  %v7045 = vpop.f32.mrb[0].mxu0
  %v7046 = vpop.f32.mrb[0].mxu0
  %v7047 = vadd.f32 0.0, %v7046
  %v7048 = vpop.f32.mrb[0].mxu0
  %7049 = vmatprep.mubr.bf16.mxu0 %v6268
  %7050 = vmatmul.mubr.bf16.gmra.mrb[0].mxu0 %v6267
  %v7051 = vpop.f32.mrb[0].mxu0
  %v7052 = vadd.f32 0.0, %v7051
  %v7053 = vpop.f32.mrb[0].mxu0
  %v7054 = vpop.f32.mrb[0].mxu0
  %v7055 = vadd.f32 0.0, %v7054
  %v7056 = vpop.f32.mrb[0].mxu0
  %7057 = vmatprep.mubr.bf16.mxu0 %v6272
  %7058 = vmatmul.mubr.bf16.gmra.mrb[0].mxu0 %v6271
  %v7059 = vpop.f32.mrb[0].mxu0
  %v7060 = vadd.f32 0.0, %v7059
  %v7061 = vpop.f32.mrb[0].mxu0
  %v7062 = vpop.f32.mrb[0].mxu0
  %v7063 = vadd.f32 0.0, %v7062
  %v7064 = vpop.f32.mrb[0].mxu0
  %7065 = vmatprep.mubr.bf16.mxu0 %v6276
  %7066 = vmatmul.mubr.bf16.gmra.mrb[0].mxu0 %v6275
  %v7067 = vpop.f32.mrb[0].mxu0
  %v7068 = vadd.f32 0.0, %v7067
  %v7069 = vpop.f32.mrb[0].mxu0
  %v7070 = vpop.f32.mrb[0].mxu0
  %v7071 = vadd.f32 0.0, %v7070
  %v7072 = vpop.f32.mrb[0].mxu0
  %7073 = vmatprep.mubr.bf16.mxu0 %v6280
  %7074 = vmatmul.mubr.bf16.gmra.mrb[0].mxu0 %v6279
  %v7075 = vpop.f32.mrb[0].mxu0
  %v7076 = vadd.f32 0.0, %v7075
  %v7077 = vpop.f32.mrb[0].mxu0
  %v7078 = vpop.f32.mrb[0].mxu0
  %v7079 = vadd.f32 0.0, %v7078
  %v7080 = vpop.f32.mrb[0].mxu0
  %7081 = vmatprep.mubr.bf16.mxu0 %v6284
  %7082 = vmatmul.mubr.bf16.gmra.mrb[0].mxu0 %v6283
  %v7083 = vpop.f32.mrb[0].mxu0
  %v7084 = vadd.f32 0.0, %v7083
  %v7085 = vpop.f32.mrb[0].mxu0
  %v7086 = vpop.f32.mrb[0].mxu0
  %v7087 = vadd.f32 0.0, %v7086
  %v7088 = vpop.f32.mrb[0].mxu0
  %7089 = vmatprep.mubr.bf16.mxu0 %v6288
  %7090 = vmatmul.mubr.bf16.gmra.mrb[0].mxu0 %v6287
  %v7091 = vpop.f32.mrb[0].mxu0
  %v7092 = vadd.f32 0.0, %v7091
  %v7093 = vpop.f32.mrb[0].mxu0
  %v7094 = vpop.f32.mrb[0].mxu0
  %v7095 = vadd.f32 0.0, %v7094
  %v7096 = vpop.f32.mrb[0].mxu0
  %7097 = vdwg.mxu0
  %7098 = vmatprep.subr.bf16.mxu0 0
  %7099 = vmatpush1.bf16.msra.mxu0 %v6025
  %7100 = vmatprep.subr.bf16.mxu0 0
  %7101 = vmatpush1.bf16.msra.mxu0 %v6032
  %7102 = vmatprep.subr.bf16.mxu0 0
  %7103 = vmatpush1.bf16.msra.mxu0 %v6039
  %7104 = vmatprep.subr.bf16.mxu0 0
  %7105 = vmatpush1.bf16.msra.mxu0 %v6046
  %7106 = vmatprep.subr.bf16.mxu0 0
  %7107 = vmatpush1.bf16.msra.mxu0 %v6053
  %7108 = vmatprep.subr.bf16.mxu0 0
  %7109 = vmatpush1.bf16.msra.mxu0 %v6060
  %7110 = vmatprep.subr.bf16.mxu0 0
  %7111 = vmatpush1.bf16.msra.mxu0 %v6067
  %7112 = vmatprep.subr.bf16.mxu0 0
  %7113 = vmatpush1.bf16.msra.mxu0 %v6074
  %7114 = vmatprep.subr.bf16.mxu0 0
  %7115 = vmatpush1.bf16.msra.mxu0 %v6081
  %7116 = vmatprep.subr.bf16.mxu0 0
  %7117 = vmatpush1.bf16.msra.mxu0 %v6088
  %7118 = vmatprep.subr.bf16.mxu0 0
  %7119 = vmatpush1.bf16.msra.mxu0 %v6095
  %7120 = vmatprep.subr.bf16.mxu0 0
  %7121 = vmatpush1.bf16.msra.mxu0 %v6102
  %7122 = vmatprep.subr.bf16.mxu0 0
  %7123 = vmatpush1.bf16.msra.mxu0 %v6109
  %7124 = vmatprep.subr.bf16.mxu0 0
  %7125 = vmatpush1.bf16.msra.mxu0 %v6116
  %7126 = vmatprep.subr.bf16.mxu0 0
  %7127 = vmatpush1.bf16.msra.mxu0 %v6123
  %7128 = vmatprep.subr.bf16.mxu0 0
  %7129 = vmatpush1.bf16.msra.mxu0 %v6130
  %7130 = vmatprep.mubr.bf16.mxu0 %v6262
  %7131 = vmatmul.mubr.bf16.gmra.mrb[0].mxu0 %v6261
  %v7132 = vpop.f32.mrb[0].mxu0
  %v7133 = vadd.f32 %v7036, %v7132
  %v7134 = vpop.f32.mrb[0].mxu0
  %v7135 = vpop.f32.mrb[0].mxu0
  %v7136 = vadd.f32 %v7039, %v7135
  %v7137 = vpop.f32.mrb[0].mxu0
  %7138 = vmatprep.mubr.bf16.mxu0 %v6266
  %7139 = vmatmul.mubr.bf16.gmra.mrb[0].mxu0 %v6265
  %v7140 = vpop.f32.mrb[0].mxu0
  %v7141 = vadd.f32 %v7044, %v7140
  %v7142 = vpop.f32.mrb[0].mxu0
  %v7143 = vpop.f32.mrb[0].mxu0
  %v7144 = vadd.f32 %v7047, %v7143
  %v7145 = vpop.f32.mrb[0].mxu0
  %7146 = vmatprep.mubr.bf16.mxu0 %v6270
  %7147 = vmatmul.mubr.bf16.gmra.mrb[0].mxu0 %v6269
  %v7148 = vpop.f32.mrb[0].mxu0
  %v7149 = vadd.f32 %v7052, %v7148
  %v7150 = vpop.f32.mrb[0].mxu0
  %v7151 = vpop.f32.mrb[0].mxu0
  %v7152 = vadd.f32 %v7055, %v7151
  %v7153 = vpop.f32.mrb[0].mxu0
  %7154 = vmatprep.mubr.bf16.mxu0 %v6274
  %7155 = vmatmul.mubr.bf16.gmra.mrb[0].mxu0 %v6273
  %v7156 = vpop.f32.mrb[0].mxu0
  %v7157 = vadd.f32 %v7060, %v7156
  %v7158 = vpop.f32.mrb[0].mxu0
  %v7159 = vpop.f32.mrb[0].mxu0
  %v7160 = vadd.f32 %v7063, %v7159
  %v7161 = vpop.f32.mrb[0].mxu0
  %7162 = vmatprep.mubr.bf16.mxu0 %v6278
  %7163 = vmatmul.mubr.bf16.gmra.mrb[0].mxu0 %v6277
  %v7164 = vpop.f32.mrb[0].mxu0
  %v7165 = vadd.f32 %v7068, %v7164
  %v7166 = vpop.f32.mrb[0].mxu0
  %v7167 = vpop.f32.mrb[0].mxu0
  %v7168 = vadd.f32 %v7071, %v7167
  %v7169 = vpop.f32.mrb[0].mxu0
  %7170 = vmatprep.mubr.bf16.mxu0 %v6282
  %7171 = vmatmul.mubr.bf16.gmra.mrb[0].mxu0 %v6281
  %v7172 = vpop.f32.mrb[0].mxu0
  %v7173 = vadd.f32 %v7076, %v7172
  %v7174 = vpop.f32.mrb[0].mxu0
  %v7175 = vpop.f32.mrb[0].mxu0
  %v7176 = vadd.f32 %v7079, %v7175
  %v7177 = vpop.f32.mrb[0].mxu0
  %7178 = vmatprep.mubr.bf16.mxu0 %v6286
  %7179 = vmatmul.mubr.bf16.gmra.mrb[0].mxu0 %v6285
  %v7180 = vpop.f32.mrb[0].mxu0
  %v7181 = vadd.f32 %v7084, %v7180
  %v7182 = vpop.f32.mrb[0].mxu0
  %v7183 = vpop.f32.mrb[0].mxu0
  %v7184 = vadd.f32 %v7087, %v7183
  %v7185 = vpop.f32.mrb[0].mxu0
  %7186 = vmatprep.mubr.bf16.mxu0 %v6290
  %7187 = vmatmul.mubr.bf16.gmra.mrb[0].mxu0 %v6289
  %v7188 = vpop.f32.mrb[0].mxu0
  %v7189 = vadd.f32 %v7092, %v7188
  %v7190 = vpop.f32.mrb[0].mxu0
  %v7191 = vpop.f32.mrb[0].mxu0
  %v7192 = vadd.f32 %v7095, %v7191
  %v7193 = vpop.f32.mrb[0].mxu0
  %7194 = vdwg.mxu0
  %7195 = vst [vmem:[%s4] sm:$0xff] %v6471
  %7196 = vst [vmem:[%s4 + $0x8] sm:$0xff] %v6473
  %7197 = vst [vmem:[%s4 + $0x10] sm:$0xff] %v6697
  %7198 = vst [vmem:[%s4 + $0x18] sm:$0xff] %v6699
  %7199 = vst [vmem:[%s4 + $0x20] sm:$0xff] %v6923
  %7200 = vst [vmem:[%s4 + $0x28] sm:$0xff] %v6925
  %7201 = vst.msk [vmem:[%s4 + $0x30] sm:$0xff] %vm471, %v7133
  %7202 = vst [vmem:[%s4 + $0x38] sm:$0xff] %v6475
  %7203 = vst [vmem:[%s4 + $0x40] sm:$0xff] %v6477
  %7204 = vst [vmem:[%s4 + $0x48] sm:$0xff] %v6701
  %7205 = vst [vmem:[%s4 + $0x50] sm:$0xff] %v6703
  %7206 = vst [vmem:[%s4 + $0x58] sm:$0xff] %v6927
  %7207 = vst [vmem:[%s4 + $0x60] sm:$0xff] %v6929
  %7208 = vst.msk [vmem:[%s4 + $0x68] sm:$0xff] %vm471, %v7136
  %7209 = vst [vmem:[%s4 + $0x70] sm:$0xff] %v6481
  %7210 = vst [vmem:[%s4 + $0x78] sm:$0xff] %v6483
  %7211 = vst [vmem:[%s4 + $0x80] sm:$0xff] %v6707
  %7212 = vst [vmem:[%s4 + $0x88] sm:$0xff] %v6709
  %7213 = vst [vmem:[%s4 + $0x90] sm:$0xff] %v6933
  %7214 = vst [vmem:[%s4 + $0x98] sm:$0xff] %v6935
  %7215 = vst.msk [vmem:[%s4 + $0xa0] sm:$0xff] %vm471, %v7141
  %7216 = vst [vmem:[%s4 + $0xa8] sm:$0xff] %v6485
  %7217 = vst [vmem:[%s4 + $0xb0] sm:$0xff] %v6487
  %7218 = vst [vmem:[%s4 + $0xb8] sm:$0xff] %v6711
  %7219 = vst [vmem:[%s4 + $0xc0] sm:$0xff] %v6713
  %7220 = vst [vmem:[%s4 + $0xc8] sm:$0xff] %v6937
  %7221 = vst [vmem:[%s4 + $0xd0] sm:$0xff] %v6939
  %7222 = vst.msk [vmem:[%s4 + $0xd8] sm:$0xff] %vm471, %v7144
  %7223 = vst [vmem:[%s4 + $0xe0] sm:$0xff] %v6491
  %7224 = vst [vmem:[%s4 + $0xe8] sm:$0xff] %v6493
  %7225 = vst [vmem:[%s4 + $0xf0] sm:$0xff] %v6717
  %7226 = vst [vmem:[%s4 + $0xf8] sm:$0xff] %v6719
  %7227 = vst [vmem:[%s4 + $0x100] sm:$0xff] %v6943
  %7228 = vst [vmem:[%s4 + $0x108] sm:$0xff] %v6945
  %7229 = vst.msk [vmem:[%s4 + $0x110] sm:$0xff] %vm471, %v7149
  %7230 = vst [vmem:[%s4 + $0x118] sm:$0xff] %v6495
  %7231 = vst [vmem:[%s4 + $0x120] sm:$0xff] %v6497
  %7232 = vst [vmem:[%s4 + $0x128] sm:$0xff] %v6721
  %7233 = vst [vmem:[%s4 + $0x130] sm:$0xff] %v6723
  %7234 = vst [vmem:[%s4 + $0x138] sm:$0xff] %v6947
  %7235 = vst [vmem:[%s4 + $0x140] sm:$0xff] %v6949
  %7236 = vst.msk [vmem:[%s4 + $0x148] sm:$0xff] %vm471, %v7152
  %7237 = vst [vmem:[%s4 + $0x150] sm:$0xff] %v6501
  %7238 = vst [vmem:[%s4 + $0x158] sm:$0xff] %v6503
  %7239 = vst [vmem:[%s4 + $0x160] sm:$0xff] %v6727
  %7240 = vst [vmem:[%s4 + $0x168] sm:$0xff] %v6729
  %7241 = vst [vmem:[%s4 + $0x170] sm:$0xff] %v6953
  %7242 = vst [vmem:[%s4 + $0x178] sm:$0xff] %v6955
  %7243 = vst.msk [vmem:[%s4 + $0x180] sm:$0xff] %vm471, %v7157
  %7244 = vst [vmem:[%s4 + $0x188] sm:$0xff] %v6505
  %7245 = vst [vmem:[%s4 + $0x190] sm:$0xff] %v6507
  %7246 = vst [vmem:[%s4 + $0x198] sm:$0xff] %v6731
  %7247 = vst [vmem:[%s4 + $0x1a0] sm:$0xff] %v6733
  %7248 = vst [vmem:[%s4 + $0x1a8] sm:$0xff] %v6957
  %7249 = vst [vmem:[%s4 + $0x1b0] sm:$0xff] %v6959
  %7250 = vst.msk [vmem:[%s4 + $0x1b8] sm:$0xff] %vm471, %v7160
  %7251 = vst [vmem:[%s4 + $0x1c0] sm:$0xff] %v6511
  %7252 = vst [vmem:[%s4 + $0x1c8] sm:$0xff] %v6513
  %7253 = vst [vmem:[%s4 + $0x1d0] sm:$0xff] %v6737
  %7254 = vst [vmem:[%s4 + $0x1d8] sm:$0xff] %v6739
  %7255 = vst [vmem:[%s4 + $0x1e0] sm:$0xff] %v6963
  %7256 = vst [vmem:[%s4 + $0x1e8] sm:$0xff] %v6965
  %7257 = vst.msk [vmem:[%s4 + $0x1f0] sm:$0xff] %vm471, %v7165
  %7258 = vst [vmem:[%s4 + $0x1f8] sm:$0xff] %v6515
  %7259 = vst [vmem:[%s4 + $0x200] sm:$0xff] %v6517
  %7260 = vst [vmem:[%s4 + $0x208] sm:$0xff] %v6741
  %7261 = vst [vmem:[%s4 + $0x210] sm:$0xff] %v6743
  %7262 = vst [vmem:[%s4 + $0x218] sm:$0xff] %v6967
  %7263 = vst [vmem:[%s4 + $0x220] sm:$0xff] %v6969
  %7264 = vst.msk [vmem:[%s4 + $0x228] sm:$0xff] %vm471, %v7168
  %7265 = vst [vmem:[%s4 + $0x230] sm:$0xff] %v6521
  %7266 = vst [vmem:[%s4 + $0x238] sm:$0xff] %v6523
  %7267 = vst [vmem:[%s4 + $0x240] sm:$0xff] %v6747
  %7268 = vst [vmem:[%s4 + $0x248] sm:$0xff] %v6749
  %7269 = vst [vmem:[%s4 + $0x250] sm:$0xff] %v6973
  %7270 = vst [vmem:[%s4 + $0x258] sm:$0xff] %v6975
  %7271 = vst.msk [vmem:[%s4 + $0x260] sm:$0xff] %vm471, %v7173
  %7272 = vst [vmem:[%s4 + $0x268] sm:$0xff] %v6525
  %7273 = vst [vmem:[%s4 + $0x270] sm:$0xff] %v6527
  %7274 = vst [vmem:[%s4 + $0x278] sm:$0xff] %v6751
  %7275 = vst [vmem:[%s4 + $0x280] sm:$0xff] %v6753
  %7276 = vst [vmem:[%s4 + $0x288] sm:$0xff] %v6977
  %7277 = vst [vmem:[%s4 + $0x290] sm:$0xff] %v6979
  %7278 = vst.msk [vmem:[%s4 + $0x298] sm:$0xff] %vm471, %v7176
  %7279 = vst [vmem:[%s4 + $0x2a0] sm:$0xff] %v6531
  %7280 = vst [vmem:[%s4 + $0x2a8] sm:$0xff] %v6533
  %7281 = vst [vmem:[%s4 + $0x2b0] sm:$0xff] %v6757
  %7282 = vst [vmem:[%s4 + $0x2b8] sm:$0xff] %v6759
  %7283 = vst [vmem:[%s4 + $0x2c0] sm:$0xff] %v6983
  %7284 = vst [vmem:[%s4 + $0x2c8] sm:$0xff] %v6985
  %7285 = vst.msk [vmem:[%s4 + $0x2d0] sm:$0xff] %vm471, %v7181
  %7286 = vst [vmem:[%s4 + $0x2d8] sm:$0xff] %v6535
  %7287 = vst [vmem:[%s4 + $0x2e0] sm:$0xff] %v6537
  %7288 = vst [vmem:[%s4 + $0x2e8] sm:$0xff] %v6761
  %7289 = vst [vmem:[%s4 + $0x2f0] sm:$0xff] %v6763
  %7290 = vst [vmem:[%s4 + $0x2f8] sm:$0xff] %v6987
  %7291 = vst [vmem:[%s4 + $0x300] sm:$0xff] %v6989
  %7292 = vst.msk [vmem:[%s4 + $0x308] sm:$0xff] %vm471, %v7184
  %7293 = vst [vmem:[%s4 + $0x310] sm:$0xff] %v6541
  %7294 = vst [vmem:[%s4 + $0x318] sm:$0xff] %v6543
  %7295 = vst [vmem:[%s4 + $0x320] sm:$0xff] %v6767
  %7296 = vst [vmem:[%s4 + $0x328] sm:$0xff] %v6769
  %7297 = vst [vmem:[%s4 + $0x330] sm:$0xff] %v6993
  %7298 = vst [vmem:[%s4 + $0x338] sm:$0xff] %v6995
  %7299 = vst.msk [vmem:[%s4 + $0x340] sm:$0xff] %vm471, %v7189
  %7300 = vst [vmem:[%s4 + $0x348] sm:$0xff] %v6545
  %7301 = vst [vmem:[%s4 + $0x350] sm:$0xff] %v6547
  %7302 = vst [vmem:[%s4 + $0x358] sm:$0xff] %v6771
  %7303 = vst [vmem:[%s4 + $0x360] sm:$0xff] %v6773
  %7304 = vst [vmem:[%s4 + $0x368] sm:$0xff] %v6997
  %7305 = vst [vmem:[%s4 + $0x370] sm:$0xff] %v6999
  %7306 = vst.msk [vmem:[%s4 + $0x378] sm:$0xff] %vm471, %v7192
  // Predicated region
  $region18: #{bn_add_relu_conv.1} parent=0 // pred_check
    _
  $region19: #{bn_add_relu_conv.1} parent=0 // pred_check_branch
    %7308 = sbr.rel (0) target = $region21
  $region20: #{bn_add_relu_conv.1} parent=0 // pred_region
    _
  $region21: #{bn_add_relu_conv.1} parent=0 // pred_fallthru
    _
  // Predicated region
  $region22: #{bn_add_relu_conv.1} parent=0 // pred_check
    _
  $region23: #{bn_add_relu_conv.1} parent=0 // pred_check_branch
    %7310 = sbr.rel (0) target = $region25
  $region24: #{bn_add_relu_conv.1} parent=0 // pred_region
    _
  $region25: #{bn_add_relu_conv.1} parent=0 // pred_fallthru
    _

</llo_original>
